<compile_context>
chip_gen: v5e
topology: v5e:2x2
jax: 0.10.0
libtpu: 0.0.40
codegen_flags: <defaults>
</compile_context>

<pallas_src>
import jax
import jax.numpy as jnp
from jax.experimental import pallas as pl
from jax.experimental.pallas import tpu as pltpu


IN_DIM = 1024
H1, H2, H3 = 1024, 512, 256
VIEWS = 33
OUT_PAD = 128          # views padded up to one full lane width
BATCH_TILE = 128       # rows per grid step (MXU-friendly M)
EPS = 1e-5


def decoder_kernel(x_ref,
                   w1_ref, t1_ref,
                   w2_ref, t2_ref,
                   w3_ref, t3_ref,
                   w4_ref, b4_ref,
                   o_ref):
    # Layers 1..3: folded-BN linear + ReLU.  bf16 MXU matmul, f32 accumulate.
    h = jnp.dot(x_ref[...].astype(jnp.bfloat16), w1_ref[...],
                preferred_element_type=jnp.float32)
    h = jnp.maximum(h + t1_ref[...], 0.0)

    h = jnp.dot(h.astype(jnp.bfloat16), w2_ref[...],
                preferred_element_type=jnp.float32)
    h = jnp.maximum(h + t2_ref[...], 0.0)

    h = jnp.dot(h.astype(jnp.bfloat16), w3_ref[...],
                preferred_element_type=jnp.float32)
    h = jnp.maximum(h + t3_ref[...], 0.0)

    # Layer 4: plain linear (no BN / ReLU); output columns zero-padded to 128.
    v = jnp.dot(h.astype(jnp.bfloat16), w4_ref[...],
                preferred_element_type=jnp.float32)
    o_ref[...] = v + b4_ref[...]


def decoder_forward(x, kp, views=VIEWS):
    """x: (B, 1024) float32.  kp: folded kernel params (see fold_params)."""
    B = x.shape[0]
    B_pad = ((B + BATCH_TILE - 1) // BATCH_TILE) * BATCH_TILE
    if B_pad != B:
        x = jnp.pad(x, ((0, B_pad - B), (0, 0)))
    grid = (B_pad // BATCH_TILE,)

    operands = (x,
                kp["w1"], kp["t1"],
                kp["w2"], kp["t2"],
                kp["w3"], kp["t3"],
                kp["w4"], kp["b4"])

    def const_spec(a):
        # Full-array block; constant block index -> DMA'd once, VMEM-resident
        # across all batch-grid steps.
        return pl.BlockSpec(a.shape, lambda i: (0, 0))

    in_specs = ([pl.BlockSpec((BATCH_TILE, IN_DIM), lambda i: (i, 0))]
                + [const_spec(a) for a in operands[1:]])
    out_specs = pl.BlockSpec((BATCH_TILE, OUT_PAD), lambda i: (i, 0))

    weight_elems = IN_DIM * H1 + H1 * H2 + H2 * H3 + H3 * OUT_PAD
    flops = 2 * B_pad * weight_elems
    bytes_accessed = (2 * weight_elems                       # bf16 weights
                      + 4 * (H1 + H2 + H3 + OUT_PAD)         # f32 shifts / bias
                      + 4 * B_pad * IN_DIM                   # f32 input
                      + 4 * B_pad * OUT_PAD)                 # f32 output

    out = pl.pallas_call(
        decoder_kernel,
        out_shape=jax.ShapeDtypeStruct((B_pad, OUT_PAD), jnp.float32),
        grid=grid,
        in_specs=in_specs,
        out_specs=out_specs,
        compiler_params=pltpu.CompilerParams(
            dimension_semantics=("parallel",),
            vmem_limit_bytes=32 * 1024 * 1024),
        cost_estimate=pl.CostEstimate(flops=flops,
                                      transcendentals=0,
                                      bytes_accessed=bytes_accessed),
    )(*operands)
    return out[:B, :views]


def make_raw_params(key, views=VIEWS):
    """Synthetic parameters in the original (unfolded) module form.

    Linear weights are stored (in_features, out_features), i.e. already the
    transpose of PyTorch's (out, in) layout.
    """
    dims = [(IN_DIM, H1), (H1, H2), (H2, H3), (H3, views)]
    keys = jax.random.split(key, 16)
    p = {}
    k = 0
    for i, (fin, fout) in enumerate(dims, start=1):
        p[f"w{i}"] = jax.random.normal(keys[k], (fin, fout), jnp.float32) * 0.02
        k += 1
        p[f"b{i}"] = jax.random.normal(keys[k], (1, fout), jnp.float32) * 0.01
        k += 1
        if i < 4:
            p[f"gamma{i}"] = 1.0 + 0.1 * jax.random.normal(
                keys[k], (1, fout), jnp.float32)
            k += 1
            p[f"beta{i}"] = 0.1 * jax.random.normal(keys[k], (1, fout), jnp.float32)
            k += 1
            p[f"mean{i}"] = (0.05 * jnp.arange(fout, dtype=jnp.float32)
                             .reshape(1, fout) / fout)
            p[f"var{i}"] = (1.0 + 0.01 * jnp.arange(fout, dtype=jnp.float32)
                            .reshape(1, fout) / fout)
    return p


def fold_params(raw, views=VIEWS, eps=EPS):
    """Fold inference-mode BatchNorm into the linear weights; bf16 weights."""
    kp = {}
    for i in range(1, 4):
        s = raw[f"gamma{i}"] / jnp.sqrt(raw[f"var{i}"] + eps)     # (1, fout)
        kp[f"w{i}"] = (raw[f"w{i}"] * s).astype(jnp.bfloat16)     # per-column scale
        kp[f"t{i}"] = (raw[f"b{i}"] * s
                       + raw[f"beta{i}"] - raw[f"mean{i}"] * s)   # f32 shift
    # Layer 4: pad output columns to 128 lanes.
    w4p = jnp.zeros((H3, OUT_PAD), jnp.float32).at[:, :views].set(raw["w4"])
    b4p = jnp.zeros((1, OUT_PAD), jnp.float32).at[:, :views].set(raw["b4"])
    kp["w4"] = w4p.astype(jnp.bfloat16)
    kp["b4"] = b4p
    return kp


def reference_forward_matched(x, kp, views=VIEWS):
    """Pure-JAX reference using the same folded bf16 weights / f32 accumulation."""
    h = x
    for i in range(1, 4):
        h = jnp.dot(h.astype(jnp.bfloat16), kp[f"w{i}"],
                    preferred_element_type=jnp.float32)
        h = jnp.maximum(h + kp[f"t{i}"], 0.0)
    v = jnp.dot(h.astype(jnp.bfloat16), kp["w4"],
                preferred_element_type=jnp.float32) + kp["b4"]
    return v[:, :views]


def reference_forward_f32(x, raw, views=VIEWS, eps=EPS):
    """Unfolded f32 reference matching the PyTorch op ordering (inference BN)."""
    h = x
    for i in range(1, 4):
        h = h @ raw[f"w{i}"] + raw[f"b{i}"]
        s = raw[f"gamma{i}"] / jnp.sqrt(raw[f"var{i}"] + eps)
        h = jnp.maximum((h - raw[f"mean{i}"]) * s + raw[f"beta{i}"], 0.0)
    return h @ raw["w4"] + raw["b4"]


if __name__ == "__main__":
    key = jax.random.PRNGKey(0)
    k_x, k_p = jax.random.split(key)

    B = 256  # two 128-row batch tiles -> exercises the grid / weight residency
    x = jax.random.normal(k_x, (B, IN_DIM), jnp.float32)

    raw = make_raw_params(k_p, views=VIEWS)
    kp = fold_params(raw, views=VIEWS)

    out = decoder_forward(x, kp, views=VIEWS)
    out = jax.block_until_ready(out)
    assert out.shape == (B, VIEWS), out.shape

    # Bit-for-bit-level check against a reference doing the same folded bf16 math.
    ref_bf16 = reference_forward_matched(x, kp, views=VIEWS)
    assert jnp.allclose(out, ref_bf16, atol=2e-3, rtol=2e-3), (
        "mismatch vs matched bf16 reference: "
        f"max_abs_diff={float(jnp.max(jnp.abs(out - ref_bf16)))}")

    # Looser sanity check against the unfolded f32 module semantics
    # (bf16 weight quantization is the only source of deviation).
    ref_f32 = reference_forward_f32(x, raw, views=VIEWS)
    assert jnp.allclose(out, ref_f32, atol=5e-2, rtol=5e-2), (
        "mismatch vs f32 reference: "
        f"max_abs_diff={float(jnp.max(jnp.abs(out - ref_f32)))}")

    print("KERNEL_OK")
</pallas_src>

<mosaic_0001>
module attributes {stable_mosaic.version = 11 : i64} {
  func.func @decoder_kernel(%arg0: i32, %arg1: memref<128x1024xf32, #tpu.memory_space<vmem>>, %arg2: memref<1024x1024xbf16, #tpu.memory_space<vmem>>, %arg3: memref<1x1024xf32, #tpu.memory_space<vmem>>, %arg4: memref<1024x512xbf16, #tpu.memory_space<vmem>>, %arg5: memref<1x512xf32, #tpu.memory_space<vmem>>, %arg6: memref<512x256xbf16, #tpu.memory_space<vmem>>, %arg7: memref<1x256xf32, #tpu.memory_space<vmem>>, %arg8: memref<256x128xbf16, #tpu.memory_space<vmem>>, %arg9: memref<1x128xf32, #tpu.memory_space<vmem>>, %arg10: memref<128x128xf32, #tpu.memory_space<vmem>>) attributes {dimension_semantics = [#tpu.dimension_semantics<parallel>], iteration_bounds = array<i64: 2>, scalar_prefetch = 0 : i64, scratch_operands = 0 : i64, tpu.core_type = #tpu.core_type<tc>, window_params = [{transform_indices = @transform_0, window_bounds = array<i64: 128, 1024>}, {pipeline_mode = #tpu.pipeline_mode<synchronous>, transform_indices = @transform_1, window_bounds = array<i64: 1024, 1024>}, {pipeline_mode = #tpu.pipeline_mode<synchronous>, transform_indices = @transform_2, window_bounds = array<i64: 1, 1024>}, {pipeline_mode = #tpu.pipeline_mode<synchronous>, transform_indices = @transform_3, window_bounds = array<i64: 1024, 512>}, {pipeline_mode = #tpu.pipeline_mode<synchronous>, transform_indices = @transform_4, window_bounds = array<i64: 1, 512>}, {pipeline_mode = #tpu.pipeline_mode<synchronous>, transform_indices = @transform_5, window_bounds = array<i64: 512, 256>}, {pipeline_mode = #tpu.pipeline_mode<synchronous>, transform_indices = @transform_6, window_bounds = array<i64: 1, 256>}, {pipeline_mode = #tpu.pipeline_mode<synchronous>, transform_indices = @transform_7, window_bounds = array<i64: 256, 128>}, {pipeline_mode = #tpu.pipeline_mode<synchronous>, transform_indices = @transform_8, window_bounds = array<i64: 1, 128>}, {transform_indices = @transform_9, window_bounds = array<i64: 128, 128>}]} {
    %c0 = arith.constant 0 : index
    %c0_0 = arith.constant 0 : index
    %0 = vector.load %arg1[%c0, %c0_0] : memref<128x1024xf32, #tpu.memory_space<vmem>>, vector<128x1024xf32>
    %1 = arith.truncf %0 : vector<128x1024xf32> to vector<128x1024xbf16>
    %c0_1 = arith.constant 0 : index
    %c0_2 = arith.constant 0 : index
    %2 = vector.load %arg2[%c0_1, %c0_2] : memref<1024x1024xbf16, #tpu.memory_space<vmem>>, vector<1024x1024xbf16>
    %cst = arith.constant dense<0.000000e+00> : vector<128x1024xf32>
    %3 = tpu.matmul %1, %2, %cst {dimension_numbers = #tpu.dot_dimension_numbers<[1], [0], [0], [1], [0, 0, 1, 1], [], []>} : vector<128x1024xbf16>, vector<1024x1024xbf16>, vector<128x1024xf32> -> vector<128x1024xf32>
    %c0_3 = arith.constant 0 : index
    %c0_4 = arith.constant 0 : index
    %4 = vector.load %arg3[%c0_3, %c0_4] : memref<1x1024xf32, #tpu.memory_space<vmem>>, vector<1x1024xf32>
    %5 = vector.broadcast %4 : vector<1x1024xf32> to vector<128x1024xf32>
    %6 = arith.addf %3, %5 : vector<128x1024xf32>
    %cst_5 = arith.constant 0.000000e+00 : f32
    %7 = vector.broadcast %cst_5 : f32 to vector<128x1024xf32>
    %8 = arith.maximumf %6, %7 : vector<128x1024xf32>
    %9 = arith.truncf %8 : vector<128x1024xf32> to vector<128x1024xbf16>
    %c0_6 = arith.constant 0 : index
    %c0_7 = arith.constant 0 : index
    %10 = vector.load %arg4[%c0_6, %c0_7] : memref<1024x512xbf16, #tpu.memory_space<vmem>>, vector<1024x512xbf16>
    %cst_8 = arith.constant dense<0.000000e+00> : vector<128x512xf32>
    %11 = tpu.matmul %9, %10, %cst_8 {dimension_numbers = #tpu.dot_dimension_numbers<[1], [0], [0], [1], [0, 0, 1, 1], [], []>} : vector<128x1024xbf16>, vector<1024x512xbf16>, vector<128x512xf32> -> vector<128x512xf32>
    %c0_9 = arith.constant 0 : index
    %c0_10 = arith.constant 0 : index
    %12 = vector.load %arg5[%c0_9, %c0_10] : memref<1x512xf32, #tpu.memory_space<vmem>>, vector<1x512xf32>
    %13 = vector.broadcast %12 : vector<1x512xf32> to vector<128x512xf32>
    %14 = arith.addf %11, %13 : vector<128x512xf32>
    %cst_11 = arith.constant 0.000000e+00 : f32
    %15 = vector.broadcast %cst_11 : f32 to vector<128x512xf32>
    %16 = arith.maximumf %14, %15 : vector<128x512xf32>
    %17 = arith.truncf %16 : vector<128x512xf32> to vector<128x512xbf16>
    %c0_12 = arith.constant 0 : index
    %c0_13 = arith.constant 0 : index
    %18 = vector.load %arg6[%c0_12, %c0_13] : memref<512x256xbf16, #tpu.memory_space<vmem>>, vector<512x256xbf16>
    %cst_14 = arith.constant dense<0.000000e+00> : vector<128x256xf32>
    %19 = tpu.matmul %17, %18, %cst_14 {dimension_numbers = #tpu.dot_dimension_numbers<[1], [0], [0], [1], [0, 0, 1, 1], [], []>} : vector<128x512xbf16>, vector<512x256xbf16>, vector<128x256xf32> -> vector<128x256xf32>
    %c0_15 = arith.constant 0 : index
    %c0_16 = arith.constant 0 : index
    %20 = vector.load %arg7[%c0_15, %c0_16] : memref<1x256xf32, #tpu.memory_space<vmem>>, vector<1x256xf32>
    %21 = vector.broadcast %20 : vector<1x256xf32> to vector<128x256xf32>
    %22 = arith.addf %19, %21 : vector<128x256xf32>
    %cst_17 = arith.constant 0.000000e+00 : f32
    %23 = vector.broadcast %cst_17 : f32 to vector<128x256xf32>
    %24 = arith.maximumf %22, %23 : vector<128x256xf32>
    %25 = arith.truncf %24 : vector<128x256xf32> to vector<128x256xbf16>
    %c0_18 = arith.constant 0 : index
    %c0_19 = arith.constant 0 : index
    %26 = vector.load %arg8[%c0_18, %c0_19] : memref<256x128xbf16, #tpu.memory_space<vmem>>, vector<256x128xbf16>
    %cst_20 = arith.constant dense<0.000000e+00> : vector<128x128xf32>
    %27 = tpu.matmul %25, %26, %cst_20 {dimension_numbers = #tpu.dot_dimension_numbers<[1], [0], [0], [1], [0, 0, 1, 1], [], []>} : vector<128x256xbf16>, vector<256x128xbf16>, vector<128x128xf32> -> vector<128x128xf32>
    %c0_21 = arith.constant 0 : index
    %c0_22 = arith.constant 0 : index
    %28 = vector.load %arg9[%c0_21, %c0_22] : memref<1x128xf32, #tpu.memory_space<vmem>>, vector<1x128xf32>
    %29 = vector.broadcast %28 : vector<1x128xf32> to vector<128x128xf32>
    %30 = arith.addf %27, %29 : vector<128x128xf32>
    %c0_23 = arith.constant 0 : index
    %c0_24 = arith.constant 0 : index
    %31 = vector.load %arg10[%c0_23, %c0_24] : memref<128x128xf32, #tpu.memory_space<vmem>>, vector<128x128xf32>
    tpu.vector_store %arg10[%c0_23, %c0_24], %30 {strides = array<i32>} : memref<128x128xf32, #tpu.memory_space<vmem>>, vector<128x128xf32>,
    return
  }
  func.func @transform_0(%arg0: i32) -> (i32, i32) {
    %c0_i32 = arith.constant 0 : i32
    %c0_i32_0 = arith.constant 0 : i32
    return %arg0, %c0_i32 : i32, i32
  }
  func.func @transform_1(%arg0: i32) -> (i32, i32) {
    %c0_i32 = arith.constant 0 : i32
    %c0_i32_0 = arith.constant 0 : i32
    %c0_i32_1 = arith.constant 0 : i32
    return %c0_i32, %c0_i32_0 : i32, i32
  }
  func.func @transform_2(%arg0: i32) -> (i32, i32) {
    %c0_i32 = arith.constant 0 : i32
    %c0_i32_0 = arith.constant 0 : i32
    %c0_i32_1 = arith.constant 0 : i32
    return %c0_i32, %c0_i32_0 : i32, i32
  }
  func.func @transform_3(%arg0: i32) -> (i32, i32) {
    %c0_i32 = arith.constant 0 : i32
    %c0_i32_0 = arith.constant 0 : i32
    %c0_i32_1 = arith.constant 0 : i32
    return %c0_i32, %c0_i32_0 : i32, i32
  }
  func.func @transform_4(%arg0: i32) -> (i32, i32) {
    %c0_i32 = arith.constant 0 : i32
    %c0_i32_0 = arith.constant 0 : i32
    %c0_i32_1 = arith.constant 0 : i32
    return %c0_i32, %c0_i32_0 : i32, i32
  }
  func.func @transform_5(%arg0: i32) -> (i32, i32) {
    %c0_i32 = arith.constant 0 : i32
    %c0_i32_0 = arith.constant 0 : i32
    %c0_i32_1 = arith.constant 0 : i32
    return %c0_i32, %c0_i32_0 : i32, i32
  }
  func.func @transform_6(%arg0: i32) -> (i32, i32) {
    %c0_i32 = arith.constant 0 : i32
    %c0_i32_0 = arith.constant 0 : i32
    %c0_i32_1 = arith.constant 0 : i32
    return %c0_i32, %c0_i32_0 : i32, i32
  }
  func.func @transform_7(%arg0: i32) -> (i32, i32) {
    %c0_i32 = arith.constant 0 : i32
    %c0_i32_0 = arith.constant 0 : i32
    %c0_i32_1 = arith.constant 0 : i32
    return %c0_i32, %c0_i32_0 : i32, i32
  }
  func.func @transform_8(%arg0: i32) -> (i32, i32) {
    %c0_i32 = arith.constant 0 : i32
    %c0_i32_0 = arith.constant 0 : i32
    %c0_i32_1 = arith.constant 0 : i32
    return %c0_i32, %c0_i32_0 : i32, i32
  }
  func.func @transform_9(%arg0: i32) -> (i32, i32) {
    %c0_i32 = arith.constant 0 : i32
    %c0_i32_0 = arith.constant 0 : i32
    return %arg0, %c0_i32 : i32, i32
  }
}

</mosaic_0001>

<llo_original>
// kernel: tpu_custom_call.1
$region0: #{tpu_custom_call.1}
  #allocation0 [shape = 'u32[]', space=smem, size = 0x4, offset = 0x4, fixed_abs, tag = 'smem constant byte address 0x4 - core index']
  #allocation1 [shape = 'u32[72,128]{1,0:T(1,128)}', space=vmem, size = 0x9000, scoped, tag = 'internal scratch']
  %s0 = inlined_call_operand.hbm [shape: f32[256,1024], index: 0, kind: input, shape index: {}]
  %s1 = inlined_call_operand.hbm [shape: bf16[1024,1024], index: 1, kind: input, shape index: {}]
  %s2 = inlined_call_operand.hbm [shape: f32[1,1024], index: 2, kind: input, shape index: {}]
  %s3 = inlined_call_operand.hbm [shape: bf16[1024,512], index: 3, kind: input, shape index: {}]
  %s4 = inlined_call_operand.hbm [shape: f32[1,512], index: 4, kind: input, shape index: {}]
  %s5 = inlined_call_operand.hbm [shape: bf16[512,256], index: 5, kind: input, shape index: {}]
  %s6 = inlined_call_operand.hbm [shape: f32[1,256], index: 6, kind: input, shape index: {}]
  %s7 = inlined_call_operand.hbm [shape: bf16[256,128], index: 7, kind: input, shape index: {}]
  %s8 = inlined_call_operand.hbm [shape: f32[1,128], index: 8, kind: input, shape index: {}]
  %s9 = inlined_call_operand.hbm [shape: f32[256,128], index: 9, kind: output, shape index: {}]
  %s10 = sld [smem:[#allocation0]]
  $region105: #{tpu_custom_call.1} parent=0
    _
  %s12 = ssub.s32 1, %s10
  %s13 = scalar_select 0, %s12, %s10
  $region1: #{tpu_custom_call.1} parent=0
    #allocation2 [shape = 'u8[1048576]{0}', space=vmem, size = 0x100000, scoped, tag = 'input window, operand 0']
    #allocation3 [shape = 's32[2]{0}', space=sflag, size = 0x8, scoped, tag = 'scoped memory for tpu_custom_call.1']
    #allocation4 [shape = 's32[2]{0}', space=sflag, size = 0x8, scoped, tag = 'scoped memory for tpu_custom_call.1']
    #allocation5 [shape = 'u8[2097152]{0}', space=vmem, size = 0x200000, scoped, tag = 'input window, operand 1, single buffered']
    #allocation6 [shape = 's32[1]{0}', space=sflag, size = 0x4, scoped, tag = 'scoped memory for tpu_custom_call.1']
    #allocation7 [shape = 'u8[4096]{0}', space=vmem, size = 0x1000, scoped, tag = 'input window, operand 2, single buffered']
    #allocation8 [shape = 'u8[1048576]{0}', space=vmem, size = 0x100000, scoped, tag = 'input window, operand 3, single buffered']
    #allocation9 [shape = 's32[1]{0}', space=sflag, size = 0x4, scoped, tag = 'scoped memory for tpu_custom_call.1']
    #allocation10 [shape = 'u8[2048]{0}', space=vmem, size = 0x800, scoped, tag = 'input window, operand 4, single buffered']
    #allocation11 [shape = 'u8[262144]{0}', space=vmem, size = 0x40000, scoped, tag = 'input window, operand 5, single buffered']
    #allocation12 [shape = 's32[1]{0}', space=sflag, size = 0x4, scoped, tag = 'scoped memory for tpu_custom_call.1']
    #allocation13 [shape = 'u8[1024]{0}', space=vmem, size = 0x400, scoped, tag = 'input window, operand 6, single buffered']
    #allocation14 [shape = 'u8[65536]{0}', space=vmem, size = 0x10000, scoped, tag = 'input window, operand 7, single buffered']
    #allocation15 [shape = 's32[1]{0}', space=sflag, size = 0x4, scoped, tag = 'scoped memory for tpu_custom_call.1']
    #allocation16 [shape = 'u8[512]{0}', space=vmem, size = 0x400, scoped, tag = 'input window, operand 8, single buffered']
    #allocation17 [shape = 'u8[131072]{0}', space=vmem, size = 0x20000, scoped, tag = 'output window, operand 0']
    %14 = vsyncpa [#allocation3], 0
    %s15 = scalar_lea.sflag [#allocation3], 1
    %16 = vsyncpa %s15, 0
    %17 = vsyncpa [#allocation6], 0
    %18 = vsyncpa [#allocation9], 0
    %19 = vsyncpa [#allocation12], 0
    %20 = vsyncpa [#allocation15], 0
    %21 = vsyncpa [#allocation4], 0
    %s22 = scalar_lea.sflag [#allocation4], 1
    %23 = vsyncpa %s22, 0
    loop: start=0, step=1, limit=4
    $region2: #{tpu_custom_call.1} parent=1 // loop_pre_header
      _
    $region3: #{tpu_custom_call.1} parent=1 // loop_header
      %s25 = sphi 0, %s29
      %p26 = scmp.ge.s32.totalorder %s25, 4
      %s35 = sphi 0, %s37
      %s38 = sphi 0, %s35
      %s39 = sphi 0, %s38
      %s55 = sphi 0, %s39
      %s59 = sphi 0, %s59
      %s61 = sphi 0, %s59
      %s62 = sphi 0, %s61
      %s76 = sphi 0, %s62
      %s80 = sphi 0, %s80
      %s82 = sphi 0, %s80
      %s83 = sphi 0, %s82
      %s97 = sphi 0, %s83
      %s101 = sphi 0, %s101
      %s103 = sphi 0, %s101
      %s104 = sphi 0, %s103
      %s118 = sphi 0, %s104
      %s122 = sphi 0, %s122
      %s124 = sphi 0, %s122
      %s125 = sphi 0, %s124
      %s139 = sphi 0, %s125
      %s143 = sphi 0, %s143
      %s145 = sphi 0, %s143
      %s146 = sphi 0, %s145
      %s160 = sphi 0, %s146
      %s164 = sphi 0, %s164
      %s166 = sphi 0, %s164
      %s167 = sphi 0, %s166
      %s181 = sphi 0, %s167
      %s185 = sphi 0, %s185
      %s187 = sphi 0, %s185
      %s188 = sphi 0, %s187
      %s202 = sphi 0, %s188
      %s206 = sphi 0, %s206
      %s208 = sphi 0, %s206
      %s209 = sphi 0, %s208
      %s223 = sphi 0, %s209
      %s229 = sphi 0, %s231
      %s232 = sphi 0, %s229
      %s233 = sphi 0, %s232
      %s249 = sphi 0, %s233
    $region4: #{tpu_custom_call.1} parent=1 // loop_header_branch
      %28 = sbr.rel (%p26) target = $region8
    $region5: #{tpu_custom_call.1} parent=1 // loop_body
      %s30 = ssub.s32 %s25, 1
      %s31 = ssub.s32 %s25, 2
      %s32 = sadd.s32 %s25, 1
      %s33 = ssub.s32 %s25, %s32
      %p34 = scmp.eq.s32.totalorder %s33, 0
      %s36 = sadd.s32 %s35, 1
      %s37 = scalar_select %p34, %s35, %s36
      %p40 = pneg %p34
      %p41 = scmp.eq.s32.totalorder %s25, 1
      %p42 = por %p40, %p41
      %p43 = scmp.ne.s32.totalorder %s35, %s38
      %p44 = scmp.eq.s32.totalorder %s25, 0
      %p45 = por %p43, %p44
      %p46 = scmp.ne.s32.totalorder %s35, %s38
      %p47 = scmp.eq.s32.totalorder %s30, 1
      %p48 = por %p46, %p47
      %p49 = scmp.ne.s32.totalorder %s38, %s39
      %p50 = scmp.eq.s32.totalorder %s30, 0
      %p51 = por %p49, %p50
      %p52 = scmp.ne.s32.totalorder %s38, %s39
      %p53 = scmp.eq.s32.totalorder %s31, 1
      %p54 = por %p52, %p53
      %p56 = scmp.ne.s32.totalorder %s39, %s55
      %p57 = scmp.eq.s32.totalorder %s31, 0
      %p58 = por %p56, %p57
      %s60 = sadd.s32 %s59, 1
      %p63 = scmp.eq.s32.totalorder %s25, 1
      %p64 = scmp.ne.s32.totalorder %s59, %s61
      %p65 = scmp.eq.s32.totalorder %s25, 0
      %p66 = por %p64, %p65
      %p67 = scmp.ne.s32.totalorder %s59, %s61
      %p68 = scmp.eq.s32.totalorder %s30, 1
      %p69 = por %p67, %p68
      %p70 = scmp.ne.s32.totalorder %s61, %s62
      %p71 = scmp.eq.s32.totalorder %s30, 0
      %p72 = por %p70, %p71
      %p73 = scmp.ne.s32.totalorder %s61, %s62
      %p74 = scmp.eq.s32.totalorder %s31, 1
      %p75 = por %p73, %p74
      %p77 = scmp.ne.s32.totalorder %s62, %s76
      %p78 = scmp.eq.s32.totalorder %s31, 0
      %p79 = por %p77, %p78
      %s81 = sadd.s32 %s80, 1
      %p84 = scmp.eq.s32.totalorder %s25, 1
      %p85 = scmp.ne.s32.totalorder %s80, %s82
      %p86 = scmp.eq.s32.totalorder %s25, 0
      %p87 = por %p85, %p86
      %p88 = scmp.ne.s32.totalorder %s80, %s82
      %p89 = scmp.eq.s32.totalorder %s30, 1
      %p90 = por %p88, %p89
      %p91 = scmp.ne.s32.totalorder %s82, %s83
      %p92 = scmp.eq.s32.totalorder %s30, 0
      %p93 = por %p91, %p92
      %p94 = scmp.ne.s32.totalorder %s82, %s83
      %p95 = scmp.eq.s32.totalorder %s31, 1
      %p96 = por %p94, %p95
      %p98 = scmp.ne.s32.totalorder %s83, %s97
      %p99 = scmp.eq.s32.totalorder %s31, 0
      %p100 = por %p98, %p99
      %s102 = sadd.s32 %s101, 1
      %p105 = scmp.eq.s32.totalorder %s25, 1
      %p106 = scmp.ne.s32.totalorder %s101, %s103
      %p107 = scmp.eq.s32.totalorder %s25, 0
      %p108 = por %p106, %p107
      %p109 = scmp.ne.s32.totalorder %s101, %s103
      %p110 = scmp.eq.s32.totalorder %s30, 1
      %p111 = por %p109, %p110
      %p112 = scmp.ne.s32.totalorder %s103, %s104
      %p113 = scmp.eq.s32.totalorder %s30, 0
      %p114 = por %p112, %p113
      %p115 = scmp.ne.s32.totalorder %s103, %s104
      %p116 = scmp.eq.s32.totalorder %s31, 1
      %p117 = por %p115, %p116
      %p119 = scmp.ne.s32.totalorder %s104, %s118
      %p120 = scmp.eq.s32.totalorder %s31, 0
      %p121 = por %p119, %p120
      %s123 = sadd.s32 %s122, 1
      %p126 = scmp.eq.s32.totalorder %s25, 1
      %p127 = scmp.ne.s32.totalorder %s122, %s124
      %p128 = scmp.eq.s32.totalorder %s25, 0
      %p129 = por %p127, %p128
      %p130 = scmp.ne.s32.totalorder %s122, %s124
      %p131 = scmp.eq.s32.totalorder %s30, 1
      %p132 = por %p130, %p131
      %p133 = scmp.ne.s32.totalorder %s124, %s125
      %p134 = scmp.eq.s32.totalorder %s30, 0
      %p135 = por %p133, %p134
      %p136 = scmp.ne.s32.totalorder %s124, %s125
      %p137 = scmp.eq.s32.totalorder %s31, 1
      %p138 = por %p136, %p137
      %p140 = scmp.ne.s32.totalorder %s125, %s139
      %p141 = scmp.eq.s32.totalorder %s31, 0
      %p142 = por %p140, %p141
      %s144 = sadd.s32 %s143, 1
      %p147 = scmp.eq.s32.totalorder %s25, 1
      %p148 = scmp.ne.s32.totalorder %s143, %s145
      %p149 = scmp.eq.s32.totalorder %s25, 0
      %p150 = por %p148, %p149
      %p151 = scmp.ne.s32.totalorder %s143, %s145
      %p152 = scmp.eq.s32.totalorder %s30, 1
      %p153 = por %p151, %p152
      %p154 = scmp.ne.s32.totalorder %s145, %s146
      %p155 = scmp.eq.s32.totalorder %s30, 0
      %p156 = por %p154, %p155
      %p157 = scmp.ne.s32.totalorder %s145, %s146
      %p158 = scmp.eq.s32.totalorder %s31, 1
      %p159 = por %p157, %p158
      %p161 = scmp.ne.s32.totalorder %s146, %s160
      %p162 = scmp.eq.s32.totalorder %s31, 0
      %p163 = por %p161, %p162
      %s165 = sadd.s32 %s164, 1
      %p168 = scmp.eq.s32.totalorder %s25, 1
      %p169 = scmp.ne.s32.totalorder %s164, %s166
      %p170 = scmp.eq.s32.totalorder %s25, 0
      %p171 = por %p169, %p170
      %p172 = scmp.ne.s32.totalorder %s164, %s166
      %p173 = scmp.eq.s32.totalorder %s30, 1
      %p174 = por %p172, %p173
      %p175 = scmp.ne.s32.totalorder %s166, %s167
      %p176 = scmp.eq.s32.totalorder %s30, 0
      %p177 = por %p175, %p176
      %p178 = scmp.ne.s32.totalorder %s166, %s167
      %p179 = scmp.eq.s32.totalorder %s31, 1
      %p180 = por %p178, %p179
      %p182 = scmp.ne.s32.totalorder %s167, %s181
      %p183 = scmp.eq.s32.totalorder %s31, 0
      %p184 = por %p182, %p183
      %s186 = sadd.s32 %s185, 1
      %p189 = scmp.eq.s32.totalorder %s25, 1
      %p190 = scmp.ne.s32.totalorder %s185, %s187
      %p191 = scmp.eq.s32.totalorder %s25, 0
      %p192 = por %p190, %p191
      %p193 = scmp.ne.s32.totalorder %s185, %s187
      %p194 = scmp.eq.s32.totalorder %s30, 1
      %p195 = por %p193, %p194
      %p196 = scmp.ne.s32.totalorder %s187, %s188
      %p197 = scmp.eq.s32.totalorder %s30, 0
      %p198 = por %p196, %p197
      %p199 = scmp.ne.s32.totalorder %s187, %s188
      %p200 = scmp.eq.s32.totalorder %s31, 1
      %p201 = por %p199, %p200
      %p203 = scmp.ne.s32.totalorder %s188, %s202
      %p204 = scmp.eq.s32.totalorder %s31, 0
      %p205 = por %p203, %p204
      %s207 = sadd.s32 %s206, 1
      %p210 = scmp.eq.s32.totalorder %s25, 1
      %p211 = scmp.ne.s32.totalorder %s206, %s208
      %p212 = scmp.eq.s32.totalorder %s25, 0
      %p213 = por %p211, %p212
      %p214 = scmp.ne.s32.totalorder %s206, %s208
      %p215 = scmp.eq.s32.totalorder %s30, 1
      %p216 = por %p214, %p215
      %p217 = scmp.ne.s32.totalorder %s208, %s209
      %p218 = scmp.eq.s32.totalorder %s30, 0
      %p219 = por %p217, %p218
      %p220 = scmp.ne.s32.totalorder %s208, %s209
      %p221 = scmp.eq.s32.totalorder %s31, 1
      %p222 = por %p220, %p221
      %p224 = scmp.ne.s32.totalorder %s209, %s223
      %p225 = scmp.eq.s32.totalorder %s31, 0
      %p226 = por %p224, %p225
      %s227 = ssub.s32 %s25, %s32
      %p228 = scmp.eq.s32.totalorder %s227, 0
      %s230 = sadd.s32 %s229, 1
      %s231 = scalar_select %p228, %s229, %s230
      %p234 = pneg %p228
      %p235 = scmp.eq.s32.totalorder %s25, 1
      %p236 = por %p234, %p235
      %p237 = scmp.ne.s32.totalorder %s229, %s232
      %p238 = scmp.eq.s32.totalorder %s25, 0
      %p239 = por %p237, %p238
      %p240 = scmp.ne.s32.totalorder %s229, %s232
      %p241 = scmp.eq.s32.totalorder %s30, 1
      %p242 = por %p240, %p241
      %p243 = scmp.ne.s32.totalorder %s232, %s233
      %p244 = scmp.eq.s32.totalorder %s30, 0
      %p245 = por %p243, %p244
      %p246 = scmp.ne.s32.totalorder %s232, %s233
      %p247 = scmp.eq.s32.totalorder %s31, 1
      %p248 = por %p246, %p247
      %p250 = scmp.ne.s32.totalorder %s233, %s249
      %p251 = scmp.eq.s32.totalorder %s31, 0
      %p252 = por %p250, %p251
      %p253 = scmp.le.s32.totalorder 1, %s25
      %p254 = scmp.lt.s32.totalorder %s25, 3
      %p255 = pnand %p253, %p254
      %p256 = pneg %p255
      // Predicated region
      $region9: #{tpu_custom_call.1} parent=5 // pred_check
        _
      $region10: #{tpu_custom_call.1} parent=5 // pred_check_branch
        %258 = sbr.rel (%p255) target = $region12
      $region11: #{tpu_custom_call.1} parent=5 // pred_region
        %s259 = ssub.s32 %s25, 1
        // Predicated region
        $region13: #{tpu_custom_call.1} parent=11 // pred_check
          %p260 = pneg %p72
        $region14: #{tpu_custom_call.1} parent=11 // pred_check_branch
          %262 = sbr.rel (%p260) target = $region16
        $region15: #{tpu_custom_call.1} parent=11 // pred_region
          %264 = vsyncadd [#allocation6], 0
          %s265 = sshll.u32 %s1, 4
          %s266 = int_to_ptr.hbm [resolvable:$true] %s265
          %s267 = sshll.u32 [#allocation5], 4
          %s268 = int_to_ptr.vmem [resolvable:$true] %s267
          %273 = dma.hbm_to_vmem [thread:$0]  %s266, 65536, %s268, [#allocation6], 512, 512, 32
        $region16: #{tpu_custom_call.1} parent=11 // pred_fallthru
          _
        // Predicated region
        $region17: #{tpu_custom_call.1} parent=11 // pred_check
          %p274 = pneg %p93
        $region18: #{tpu_custom_call.1} parent=11 // pred_check_branch
          %276 = sbr.rel (%p274) target = $region20
        $region19: #{tpu_custom_call.1} parent=11 // pred_region
          %278 = vsyncadd [#allocation6], 0
          %s280 = sshll.u32 %s2, 4
          %s281 = int_to_ptr.hbm [resolvable:$true] %s280
          %s282 = sshll.u32 [#allocation7], 4
          %s283 = int_to_ptr.vmem [resolvable:$true] %s282
          %285 = dma.hbm_to_vmem [thread:$0]  %s281, 128, %s283, [#allocation6]
        $region20: #{tpu_custom_call.1} parent=11 // pred_fallthru
          _
        // Predicated region
        $region21: #{tpu_custom_call.1} parent=11 // pred_check
          %p286 = pneg %p114
        $region22: #{tpu_custom_call.1} parent=11 // pred_check_branch
          %288 = sbr.rel (%p286) target = $region24
        $region23: #{tpu_custom_call.1} parent=11 // pred_region
          %290 = vsyncadd [#allocation9], 0
          %s291 = sshll.u32 %s3, 4
          %s292 = int_to_ptr.hbm [resolvable:$true] %s291
          %s293 = sshll.u32 [#allocation8], 4
          %s294 = int_to_ptr.vmem [resolvable:$true] %s293
          %299 = dma.hbm_to_vmem [thread:$0]  %s292, 32768, %s294, [#allocation9], 256, 256, 16
        $region24: #{tpu_custom_call.1} parent=11 // pred_fallthru
          _
        // Predicated region
        $region25: #{tpu_custom_call.1} parent=11 // pred_check
          %p300 = pneg %p135
        $region26: #{tpu_custom_call.1} parent=11 // pred_check_branch
          %302 = sbr.rel (%p300) target = $region28
        $region27: #{tpu_custom_call.1} parent=11 // pred_region
          %304 = vsyncadd [#allocation9], 0
          %s306 = sshll.u32 %s4, 4
          %s307 = int_to_ptr.hbm [resolvable:$true] %s306
          %s308 = sshll.u32 [#allocation10], 4
          %s309 = int_to_ptr.vmem [resolvable:$true] %s308
          %311 = dma.hbm_to_vmem [thread:$0]  %s307, 64, %s309, [#allocation9]
        $region28: #{tpu_custom_call.1} parent=11 // pred_fallthru
          _
        // Predicated region
        $region29: #{tpu_custom_call.1} parent=11 // pred_check
          %p312 = pneg %p156
        $region30: #{tpu_custom_call.1} parent=11 // pred_check_branch
          %314 = sbr.rel (%p312) target = $region32
        $region31: #{tpu_custom_call.1} parent=11 // pred_region
          %316 = vsyncadd [#allocation12], 0
          %s317 = sshll.u32 %s5, 4
          %s318 = int_to_ptr.hbm [resolvable:$true] %s317
          %s319 = sshll.u32 [#allocation11], 4
          %s320 = int_to_ptr.vmem [resolvable:$true] %s319
          %325 = dma.hbm_to_vmem [thread:$0]  %s318, 8192, %s320, [#allocation12], 128, 128, 8
        $region32: #{tpu_custom_call.1} parent=11 // pred_fallthru
          _
        // Predicated region
        $region33: #{tpu_custom_call.1} parent=11 // pred_check
          %p326 = pneg %p177
        $region34: #{tpu_custom_call.1} parent=11 // pred_check_branch
          %328 = sbr.rel (%p326) target = $region36
        $region35: #{tpu_custom_call.1} parent=11 // pred_region
          %330 = vsyncadd [#allocation12], 0
          %s332 = sshll.u32 %s6, 4
          %s333 = int_to_ptr.hbm [resolvable:$true] %s332
          %s334 = sshll.u32 [#allocation13], 4
          %s335 = int_to_ptr.vmem [resolvable:$true] %s334
          %337 = dma.hbm_to_vmem [thread:$0]  %s333, 32, %s335, [#allocation12]
        $region36: #{tpu_custom_call.1} parent=11 // pred_fallthru
          _
        // Predicated region
        $region37: #{tpu_custom_call.1} parent=11 // pred_check
          %p338 = pneg %p198
        $region38: #{tpu_custom_call.1} parent=11 // pred_check_branch
          %340 = sbr.rel (%p338) target = $region40
        $region39: #{tpu_custom_call.1} parent=11 // pred_region
          %342 = vsyncadd [#allocation15], 0
          %s343 = sshll.u32 %s7, 4
          %s344 = int_to_ptr.hbm [resolvable:$true] %s343
          %s345 = sshll.u32 [#allocation14], 4
          %s346 = int_to_ptr.vmem [resolvable:$true] %s345
          %351 = dma.hbm_to_vmem [thread:$0]  %s344, 2048, %s346, [#allocation15], 64, 64, 4
        $region40: #{tpu_custom_call.1} parent=11 // pred_fallthru
          _
        // Predicated region
        $region41: #{tpu_custom_call.1} parent=11 // pred_check
          %p352 = pneg %p219
        $region42: #{tpu_custom_call.1} parent=11 // pred_check_branch
          %354 = sbr.rel (%p352) target = $region44
        $region43: #{tpu_custom_call.1} parent=11 // pred_region
          %356 = vsyncadd [#allocation15], 0
          %s358 = sshll.u32 %s8, 4
          %s359 = int_to_ptr.hbm [resolvable:$true] %s358
          %s360 = sshll.u32 [#allocation16], 4
          %s361 = int_to_ptr.vmem [resolvable:$true] %s360
          %363 = dma.hbm_to_vmem [thread:$0]  %s359, 16, %s361, [#allocation15]
        $region44: #{tpu_custom_call.1} parent=11 // pred_fallthru
          _
      $region12: #{tpu_custom_call.1} parent=5 // pred_fallthru
        _
      %p364 = scmp.lt.s32.totalorder %s25, 2
      // Predicated region
      $region45: #{tpu_custom_call.1} parent=5 // pred_check
        %p365 = pneg %p364
      $region46: #{tpu_custom_call.1} parent=5 // pred_check_branch
        %367 = sbr.rel (%p365) target = $region48
      $region47: #{tpu_custom_call.1} parent=5 // pred_region
        // Predicated region
        $region49: #{tpu_custom_call.1} parent=47 // pred_check
          %p368 = pneg %p45
        $region50: #{tpu_custom_call.1} parent=47 // pred_check_branch
          %370 = sbr.rel (%p368) target = $region52
        $region51: #{tpu_custom_call.1} parent=47 // pred_region
          %s371 = sand.u32 %s35, 1
          %s372 = scalar_lea.sflag [#allocation3], %s371
          %s373 = sand.u32 %s35, 1
          %s374 = smul.addr %s373, 1024
          %s375 = scalar_lea.vmem [#allocation2], %s374
          %s376 = smul.u32 16, %s25
          %378 = vsyncadd %s372, 0
          %s379 = smul.addr %s376, 8
          %s380 = smul.addr %s379, 8
          %s381 = scalar_lea.hbm %s0, %s380
          %s382 = sshll.u32 %s381, 4
          %s383 = int_to_ptr.hbm [resolvable:$true] %s382
          %s384 = sshll.u32 %s375, 4
          %s385 = int_to_ptr.vmem [resolvable:$true] %s384
          %390 = dma.hbm_to_vmem [thread:$0]  %s383, 16384, %s385, %s372, 1024, 1024, 64
        $region52: #{tpu_custom_call.1} parent=47 // pred_fallthru
          _
      $region48: #{tpu_custom_call.1} parent=5 // pred_fallthru
        _
      %p391 = scmp.le.s32.totalorder 1, %s25
      %p392 = scmp.lt.s32.totalorder %s25, 3
      %p393 = pnand %p391, %p392
      %p394 = pneg %p393
      // Predicated region
      $region53: #{tpu_custom_call.1} parent=5 // pred_check
        _
      $region54: #{tpu_custom_call.1} parent=5 // pred_check_branch
        %396 = sbr.rel (%p393) target = $region56
      $region55: #{tpu_custom_call.1} parent=5 // pred_region
        %s397 = ssub.s32 %s25, 1
        %s398 = sand.u32 %s38, 1
        %s399 = scalar_lea.sflag [#allocation3], %s398
        %s400 = sand.u32 %s38, 1
        %s401 = smul.addr %s400, 1024
        %s402 = scalar_lea.vmem [#allocation2], %s401
        // Predicated region
        $region57: #{tpu_custom_call.1} parent=55 // pred_check
          %p403 = pneg %p51
        $region58: #{tpu_custom_call.1} parent=55 // pred_check_branch
          %405 = sbr.rel (%p403) target = $region60
        $region59: #{tpu_custom_call.1} parent=55 // pred_region
          %407 = dma.done %s399, 16384
        $region60: #{tpu_custom_call.1} parent=55 // pred_fallthru
          _
        // Predicated region
        $region61: #{tpu_custom_call.1} parent=55 // pred_check
          %p408 = pneg %p72
        $region62: #{tpu_custom_call.1} parent=55 // pred_check_branch
          %410 = sbr.rel (%p408) target = $region64
        $region63: #{tpu_custom_call.1} parent=55 // pred_region
          %412 = dma.done [#allocation6], 65536
        $region64: #{tpu_custom_call.1} parent=55 // pred_fallthru
          _
        // Predicated region
        $region65: #{tpu_custom_call.1} parent=55 // pred_check
          %p413 = pneg %p93
        $region66: #{tpu_custom_call.1} parent=55 // pred_check_branch
          %415 = sbr.rel (%p413) target = $region68
        $region67: #{tpu_custom_call.1} parent=55 // pred_region
          %417 = dma.done [#allocation6], 128
        $region68: #{tpu_custom_call.1} parent=55 // pred_fallthru
          _
        // Predicated region
        $region69: #{tpu_custom_call.1} parent=55 // pred_check
          %p418 = pneg %p114
        $region70: #{tpu_custom_call.1} parent=55 // pred_check_branch
          %420 = sbr.rel (%p418) target = $region72
        $region71: #{tpu_custom_call.1} parent=55 // pred_region
          %422 = dma.done [#allocation9], 32768
        $region72: #{tpu_custom_call.1} parent=55 // pred_fallthru
          _
        // Predicated region
        $region73: #{tpu_custom_call.1} parent=55 // pred_check
          %p423 = pneg %p135
        $region74: #{tpu_custom_call.1} parent=55 // pred_check_branch
          %425 = sbr.rel (%p423) target = $region76
        $region75: #{tpu_custom_call.1} parent=55 // pred_region
          %427 = dma.done [#allocation9], 64
        $region76: #{tpu_custom_call.1} parent=55 // pred_fallthru
          _
        // Predicated region
        $region77: #{tpu_custom_call.1} parent=55 // pred_check
          %p428 = pneg %p156
        $region78: #{tpu_custom_call.1} parent=55 // pred_check_branch
          %430 = sbr.rel (%p428) target = $region80
        $region79: #{tpu_custom_call.1} parent=55 // pred_region
          %432 = dma.done [#allocation12], 8192
        $region80: #{tpu_custom_call.1} parent=55 // pred_fallthru
          _
        // Predicated region
        $region81: #{tpu_custom_call.1} parent=55 // pred_check
          %p433 = pneg %p177
        $region82: #{tpu_custom_call.1} parent=55 // pred_check_branch
          %435 = sbr.rel (%p433) target = $region84
        $region83: #{tpu_custom_call.1} parent=55 // pred_region
          %437 = dma.done [#allocation12], 32
        $region84: #{tpu_custom_call.1} parent=55 // pred_fallthru
          _
        // Predicated region
        $region85: #{tpu_custom_call.1} parent=55 // pred_check
          %p438 = pneg %p198
        $region86: #{tpu_custom_call.1} parent=55 // pred_check_branch
          %440 = sbr.rel (%p438) target = $region88
        $region87: #{tpu_custom_call.1} parent=55 // pred_region
          %442 = dma.done [#allocation15], 2048
        $region88: #{tpu_custom_call.1} parent=55 // pred_fallthru
          _
        // Predicated region
        $region89: #{tpu_custom_call.1} parent=55 // pred_check
          %p443 = pneg %p219
        $region90: #{tpu_custom_call.1} parent=55 // pred_check_branch
          %445 = sbr.rel (%p443) target = $region92
        $region91: #{tpu_custom_call.1} parent=55 // pred_region
          %447 = dma.done [#allocation15], 16
        $region92: #{tpu_custom_call.1} parent=55 // pred_fallthru
          _
        %s448 = sand.u32 %s38, 1
        %s449 = scalar_lea.sflag [#allocation3], %s448
        %s450 = sand.u32 %s38, 1
        %s451 = smul.addr %s450, 1024
        %s452 = scalar_lea.vmem [#allocation2], %s451
        %p453 = pneg %p51
        %p454 = pneg %p48
        %p455 = pneg %p72
        %p456 = pneg %p69
        %p457 = pneg %p93
        %p458 = pneg %p90
        %p459 = pneg %p114
        %p460 = pneg %p111
        %p461 = pneg %p135
        %p462 = pneg %p132
        %p463 = pneg %p156
        %p464 = pneg %p153
        %p465 = pneg %p177
        %p466 = pneg %p174
        %p467 = pneg %p198
        %p468 = pneg %p195
        %p469 = pneg %p219
        %p470 = pneg %p216
        %p471 = pneg %p245
        %p472 = pneg %p242
        %s473 = sand.u32 %s232, 1
        %s474 = scalar_lea.sflag [#allocation4], %s473
        %s475 = sand.u32 %s232, 1
        %s476 = smul.addr %s475, 128
        %s477 = scalar_lea.vmem [#allocation17], %s476
        %s478 = smul.u32 16, %s30
        %s479 = smul.u32 16, %s30
        %v480 = vld [vmem:[%s402] sm:$0xff]
        %v481 = vld [vmem:[%s402 + $0x8] sm:$0xff]
        %v482 = vld [vmem:[%s402 + $0x10] sm:$0xff]
        %v483 = vld [vmem:[%s402 + $0x18] sm:$0xff]
        %v484 = vld [vmem:[%s402 + $0x20] sm:$0xff]
        %v485 = vld [vmem:[%s402 + $0x28] sm:$0xff]
        %v486 = vld [vmem:[%s402 + $0x30] sm:$0xff]
        %v487 = vld [vmem:[%s402 + $0x38] sm:$0xff]
        %v488 = vld [vmem:[%s402 + $0x40] sm:$0xff]
        %v489 = vld [vmem:[%s402 + $0x48] sm:$0xff]
        %v490 = vld [vmem:[%s402 + $0x50] sm:$0xff]
        %v491 = vld [vmem:[%s402 + $0x58] sm:$0xff]
        %v492 = vld [vmem:[%s402 + $0x60] sm:$0xff]
        %v493 = vld [vmem:[%s402 + $0x68] sm:$0xff]
        %v494 = vld [vmem:[%s402 + $0x70] sm:$0xff]
        %v495 = vld [vmem:[%s402 + $0x78] sm:$0xff]
        %v496 = vld [vmem:[%s402 + $0x80] sm:$0xff]
        %v497 = vld [vmem:[%s402 + $0x88] sm:$0xff]
        %v498 = vld [vmem:[%s402 + $0x90] sm:$0xff]
        %v499 = vld [vmem:[%s402 + $0x98] sm:$0xff]
        %v500 = vld [vmem:[%s402 + $0xa0] sm:$0xff]
        %v501 = vld [vmem:[%s402 + $0xa8] sm:$0xff]
        %v502 = vld [vmem:[%s402 + $0xb0] sm:$0xff]
        %v503 = vld [vmem:[%s402 + $0xb8] sm:$0xff]
        %v504 = vld [vmem:[%s402 + $0xc0] sm:$0xff]
        %v505 = vld [vmem:[%s402 + $0xc8] sm:$0xff]
        %v506 = vld [vmem:[%s402 + $0xd0] sm:$0xff]
        %v507 = vld [vmem:[%s402 + $0xd8] sm:$0xff]
        %v508 = vld [vmem:[%s402 + $0xe0] sm:$0xff]
        %v509 = vld [vmem:[%s402 + $0xe8] sm:$0xff]
        %v510 = vld [vmem:[%s402 + $0xf0] sm:$0xff]
        %v511 = vld [vmem:[%s402 + $0xf8] sm:$0xff]
        %v512 = vld [vmem:[%s402 + $0x100] sm:$0xff]
        %v513 = vld [vmem:[%s402 + $0x108] sm:$0xff]
        %v514 = vld [vmem:[%s402 + $0x110] sm:$0xff]
        %v515 = vld [vmem:[%s402 + $0x118] sm:$0xff]
        %v516 = vld [vmem:[%s402 + $0x120] sm:$0xff]
        %v517 = vld [vmem:[%s402 + $0x128] sm:$0xff]
        %v518 = vld [vmem:[%s402 + $0x130] sm:$0xff]
        %v519 = vld [vmem:[%s402 + $0x138] sm:$0xff]
        %v520 = vld [vmem:[%s402 + $0x140] sm:$0xff]
        %v521 = vld [vmem:[%s402 + $0x148] sm:$0xff]
        %v522 = vld [vmem:[%s402 + $0x150] sm:$0xff]
        %v523 = vld [vmem:[%s402 + $0x158] sm:$0xff]
        %v524 = vld [vmem:[%s402 + $0x160] sm:$0xff]
        %v525 = vld [vmem:[%s402 + $0x168] sm:$0xff]
        %v526 = vld [vmem:[%s402 + $0x170] sm:$0xff]
        %v527 = vld [vmem:[%s402 + $0x178] sm:$0xff]
        %v528 = vld [vmem:[%s402 + $0x180] sm:$0xff]
        %v529 = vld [vmem:[%s402 + $0x188] sm:$0xff]
        %v530 = vld [vmem:[%s402 + $0x190] sm:$0xff]
        %v531 = vld [vmem:[%s402 + $0x198] sm:$0xff]
        %v532 = vld [vmem:[%s402 + $0x1a0] sm:$0xff]
        %v533 = vld [vmem:[%s402 + $0x1a8] sm:$0xff]
        %v534 = vld [vmem:[%s402 + $0x1b0] sm:$0xff]
        %v535 = vld [vmem:[%s402 + $0x1b8] sm:$0xff]
        %v536 = vld [vmem:[%s402 + $0x1c0] sm:$0xff]
        %v537 = vld [vmem:[%s402 + $0x1c8] sm:$0xff]
        %v538 = vld [vmem:[%s402 + $0x1d0] sm:$0xff]
        %v539 = vld [vmem:[%s402 + $0x1d8] sm:$0xff]
        %v540 = vld [vmem:[%s402 + $0x1e0] sm:$0xff]
        %v541 = vld [vmem:[%s402 + $0x1e8] sm:$0xff]
        %v542 = vld [vmem:[%s402 + $0x1f0] sm:$0xff]
        %v543 = vld [vmem:[%s402 + $0x1f8] sm:$0xff]
        %v544 = vld [vmem:[%s402 + $0x200] sm:$0xff]
        %v545 = vld [vmem:[%s402 + $0x208] sm:$0xff]
        %v546 = vld [vmem:[%s402 + $0x210] sm:$0xff]
        %v547 = vld [vmem:[%s402 + $0x218] sm:$0xff]
        %v548 = vld [vmem:[%s402 + $0x220] sm:$0xff]
        %v549 = vld [vmem:[%s402 + $0x228] sm:$0xff]
        %v550 = vld [vmem:[%s402 + $0x230] sm:$0xff]
        %v551 = vld [vmem:[%s402 + $0x238] sm:$0xff]
        %v552 = vld [vmem:[%s402 + $0x240] sm:$0xff]
        %v553 = vld [vmem:[%s402 + $0x248] sm:$0xff]
        %v554 = vld [vmem:[%s402 + $0x250] sm:$0xff]
        %v555 = vld [vmem:[%s402 + $0x258] sm:$0xff]
        %v556 = vld [vmem:[%s402 + $0x260] sm:$0xff]
        %v557 = vld [vmem:[%s402 + $0x268] sm:$0xff]
        %v558 = vld [vmem:[%s402 + $0x270] sm:$0xff]
        %v559 = vld [vmem:[%s402 + $0x278] sm:$0xff]
        %v560 = vld [vmem:[%s402 + $0x280] sm:$0xff]
        %v561 = vld [vmem:[%s402 + $0x288] sm:$0xff]
        %v562 = vld [vmem:[%s402 + $0x290] sm:$0xff]
        %v563 = vld [vmem:[%s402 + $0x298] sm:$0xff]
        %v564 = vld [vmem:[%s402 + $0x2a0] sm:$0xff]
        %v565 = vld [vmem:[%s402 + $0x2a8] sm:$0xff]
        %v566 = vld [vmem:[%s402 + $0x2b0] sm:$0xff]
        %v567 = vld [vmem:[%s402 + $0x2b8] sm:$0xff]
        %v568 = vld [vmem:[%s402 + $0x2c0] sm:$0xff]
        %v569 = vld [vmem:[%s402 + $0x2c8] sm:$0xff]
        %v570 = vld [vmem:[%s402 + $0x2d0] sm:$0xff]
        %v571 = vld [vmem:[%s402 + $0x2d8] sm:$0xff]
        %v572 = vld [vmem:[%s402 + $0x2e0] sm:$0xff]
        %v573 = vld [vmem:[%s402 + $0x2e8] sm:$0xff]
        %v574 = vld [vmem:[%s402 + $0x2f0] sm:$0xff]
        %v575 = vld [vmem:[%s402 + $0x2f8] sm:$0xff]
        %v576 = vld [vmem:[%s402 + $0x300] sm:$0xff]
        %v577 = vld [vmem:[%s402 + $0x308] sm:$0xff]
        %v578 = vld [vmem:[%s402 + $0x310] sm:$0xff]
        %v579 = vld [vmem:[%s402 + $0x318] sm:$0xff]
        %v580 = vld [vmem:[%s402 + $0x320] sm:$0xff]
        %v581 = vld [vmem:[%s402 + $0x328] sm:$0xff]
        %v582 = vld [vmem:[%s402 + $0x330] sm:$0xff]
        %v583 = vld [vmem:[%s402 + $0x338] sm:$0xff]
        %v584 = vld [vmem:[%s402 + $0x340] sm:$0xff]
        %v585 = vld [vmem:[%s402 + $0x348] sm:$0xff]
        %v586 = vld [vmem:[%s402 + $0x350] sm:$0xff]
        %v587 = vld [vmem:[%s402 + $0x358] sm:$0xff]
        %v588 = vld [vmem:[%s402 + $0x360] sm:$0xff]
        %v589 = vld [vmem:[%s402 + $0x368] sm:$0xff]
        %v590 = vld [vmem:[%s402 + $0x370] sm:$0xff]
        %v591 = vld [vmem:[%s402 + $0x378] sm:$0xff]
        %v592 = vld [vmem:[%s402 + $0x380] sm:$0xff]
        %v593 = vld [vmem:[%s402 + $0x388] sm:$0xff]
        %v594 = vld [vmem:[%s402 + $0x390] sm:$0xff]
        %v595 = vld [vmem:[%s402 + $0x398] sm:$0xff]
        %v596 = vld [vmem:[%s402 + $0x3a0] sm:$0xff]
        %v597 = vld [vmem:[%s402 + $0x3a8] sm:$0xff]
        %v598 = vld [vmem:[%s402 + $0x3b0] sm:$0xff]
        %v599 = vld [vmem:[%s402 + $0x3b8] sm:$0xff]
        %v600 = vld [vmem:[%s402 + $0x3c0] sm:$0xff]
        %v601 = vld [vmem:[%s402 + $0x3c8] sm:$0xff]
        %v602 = vld [vmem:[%s402 + $0x3d0] sm:$0xff]
        %v603 = vld [vmem:[%s402 + $0x3d8] sm:$0xff]
        %v604 = vld [vmem:[%s402 + $0x3e0] sm:$0xff]
        %v605 = vld [vmem:[%s402 + $0x3e8] sm:$0xff]
        %v606 = vld [vmem:[%s402 + $0x3f0] sm:$0xff]
        %v607 = vld [vmem:[%s402 + $0x3f8] sm:$0xff]
        %v608 = vpack.c.bf16 %v488, %v480
        %v609 = vpack.c.bf16 %v489, %v481
        %v610 = vpack.c.bf16 %v490, %v482
        %v611 = vpack.c.bf16 %v491, %v483
        %v612 = vpack.c.bf16 %v492, %v484
        %v613 = vpack.c.bf16 %v493, %v485
        %v614 = vpack.c.bf16 %v494, %v486
        %v615 = vpack.c.bf16 %v495, %v487
        %v616 = vpack.c.bf16 %v504, %v496
        %v617 = vpack.c.bf16 %v505, %v497
        %v618 = vpack.c.bf16 %v506, %v498
        %v619 = vpack.c.bf16 %v507, %v499
        %v620 = vpack.c.bf16 %v508, %v500
        %v621 = vpack.c.bf16 %v509, %v501
        %v622 = vpack.c.bf16 %v510, %v502
        %v623 = vpack.c.bf16 %v511, %v503
        %v624 = vpack.c.bf16 %v520, %v512
        %v625 = vpack.c.bf16 %v521, %v513
        %v626 = vpack.c.bf16 %v522, %v514
        %v627 = vpack.c.bf16 %v523, %v515
        %v628 = vpack.c.bf16 %v524, %v516
        %v629 = vpack.c.bf16 %v525, %v517
        %v630 = vpack.c.bf16 %v526, %v518
        %v631 = vpack.c.bf16 %v527, %v519
        %v632 = vpack.c.bf16 %v536, %v528
        %v633 = vpack.c.bf16 %v537, %v529
        %v634 = vpack.c.bf16 %v538, %v530
        %v635 = vpack.c.bf16 %v539, %v531
        %v636 = vpack.c.bf16 %v540, %v532
        %v637 = vpack.c.bf16 %v541, %v533
        %v638 = vpack.c.bf16 %v542, %v534
        %v639 = vpack.c.bf16 %v543, %v535
        %v640 = vpack.c.bf16 %v552, %v544
        %v641 = vpack.c.bf16 %v553, %v545
        %v642 = vpack.c.bf16 %v554, %v546
        %v643 = vpack.c.bf16 %v555, %v547
        %v644 = vpack.c.bf16 %v556, %v548
        %v645 = vpack.c.bf16 %v557, %v549
        %v646 = vpack.c.bf16 %v558, %v550
        %v647 = vpack.c.bf16 %v559, %v551
        %v648 = vpack.c.bf16 %v568, %v560
        %v649 = vpack.c.bf16 %v569, %v561
        %v650 = vpack.c.bf16 %v570, %v562
        %v651 = vpack.c.bf16 %v571, %v563
        %v652 = vpack.c.bf16 %v572, %v564
        %v653 = vpack.c.bf16 %v573, %v565
        %v654 = vpack.c.bf16 %v574, %v566
        %v655 = vpack.c.bf16 %v575, %v567
        %v656 = vpack.c.bf16 %v584, %v576
        %v657 = vpack.c.bf16 %v585, %v577
        %v658 = vpack.c.bf16 %v586, %v578
        %v659 = vpack.c.bf16 %v587, %v579
        %v660 = vpack.c.bf16 %v588, %v580
        %v661 = vpack.c.bf16 %v589, %v581
        %v662 = vpack.c.bf16 %v590, %v582
        %v663 = vpack.c.bf16 %v591, %v583
        %v664 = vpack.c.bf16 %v600, %v592
        %v665 = vpack.c.bf16 %v601, %v593
        %v666 = vpack.c.bf16 %v602, %v594
        %v667 = vpack.c.bf16 %v603, %v595
        %v668 = vpack.c.bf16 %v604, %v596
        %v669 = vpack.c.bf16 %v605, %v597
        %v670 = vpack.c.bf16 %v606, %v598
        %v671 = vpack.c.bf16 %v607, %v599
        %v672 = vld [vmem:[#allocation5] sm:$0xff]
        %v673 = vld [vmem:[#allocation5 + $0x8] sm:$0xff]
        %v674 = vld [vmem:[#allocation5 + $0x10] sm:$0xff]
        %v675 = vld [vmem:[#allocation5 + $0x18] sm:$0xff]
        %v676 = vld [vmem:[#allocation5 + $0x20] sm:$0xff]
        %v677 = vld [vmem:[#allocation5 + $0x28] sm:$0xff]
        %v678 = vld [vmem:[#allocation5 + $0x30] sm:$0xff]
        %v679 = vld [vmem:[#allocation5 + $0x38] sm:$0xff]
        %v680 = vld [vmem:[#allocation5 + $0x40] sm:$0xff]
        %v681 = vld [vmem:[#allocation5 + $0x48] sm:$0xff]
        %v682 = vld [vmem:[#allocation5 + $0x50] sm:$0xff]
        %v683 = vld [vmem:[#allocation5 + $0x58] sm:$0xff]
        %v684 = vld [vmem:[#allocation5 + $0x60] sm:$0xff]
        %v685 = vld [vmem:[#allocation5 + $0x68] sm:$0xff]
        %v686 = vld [vmem:[#allocation5 + $0x70] sm:$0xff]
        %v687 = vld [vmem:[#allocation5 + $0x78] sm:$0xff]
        %v688 = vld [vmem:[#allocation5 + $0x80] sm:$0xff]
        %v689 = vld [vmem:[#allocation5 + $0x88] sm:$0xff]
        %v690 = vld [vmem:[#allocation5 + $0x90] sm:$0xff]
        %v691 = vld [vmem:[#allocation5 + $0x98] sm:$0xff]
        %v692 = vld [vmem:[#allocation5 + $0xa0] sm:$0xff]
        %v693 = vld [vmem:[#allocation5 + $0xa8] sm:$0xff]
        %v694 = vld [vmem:[#allocation5 + $0xb0] sm:$0xff]
        %v695 = vld [vmem:[#allocation5 + $0xb8] sm:$0xff]
        %v696 = vld [vmem:[#allocation5 + $0xc0] sm:$0xff]
        %v697 = vld [vmem:[#allocation5 + $0xc8] sm:$0xff]
        %v698 = vld [vmem:[#allocation5 + $0xd0] sm:$0xff]
        %v699 = vld [vmem:[#allocation5 + $0xd8] sm:$0xff]
        %v700 = vld [vmem:[#allocation5 + $0xe0] sm:$0xff]
        %v701 = vld [vmem:[#allocation5 + $0xe8] sm:$0xff]
        %v702 = vld [vmem:[#allocation5 + $0xf0] sm:$0xff]
        %v703 = vld [vmem:[#allocation5 + $0xf8] sm:$0xff]
        %v704 = vld [vmem:[#allocation5 + $0x100] sm:$0xff]
        %v705 = vld [vmem:[#allocation5 + $0x108] sm:$0xff]
        %v706 = vld [vmem:[#allocation5 + $0x110] sm:$0xff]
        %v707 = vld [vmem:[#allocation5 + $0x118] sm:$0xff]
        %v708 = vld [vmem:[#allocation5 + $0x120] sm:$0xff]
        %v709 = vld [vmem:[#allocation5 + $0x128] sm:$0xff]
        %v710 = vld [vmem:[#allocation5 + $0x130] sm:$0xff]
        %v711 = vld [vmem:[#allocation5 + $0x138] sm:$0xff]
        %v712 = vld [vmem:[#allocation5 + $0x140] sm:$0xff]
        %v713 = vld [vmem:[#allocation5 + $0x148] sm:$0xff]
        %v714 = vld [vmem:[#allocation5 + $0x150] sm:$0xff]
        %v715 = vld [vmem:[#allocation5 + $0x158] sm:$0xff]
        %v716 = vld [vmem:[#allocation5 + $0x160] sm:$0xff]
        %v717 = vld [vmem:[#allocation5 + $0x168] sm:$0xff]
        %v718 = vld [vmem:[#allocation5 + $0x170] sm:$0xff]
        %v719 = vld [vmem:[#allocation5 + $0x178] sm:$0xff]
        %v720 = vld [vmem:[#allocation5 + $0x180] sm:$0xff]
        %v721 = vld [vmem:[#allocation5 + $0x188] sm:$0xff]
        %v722 = vld [vmem:[#allocation5 + $0x190] sm:$0xff]
        %v723 = vld [vmem:[#allocation5 + $0x198] sm:$0xff]
        %v724 = vld [vmem:[#allocation5 + $0x1a0] sm:$0xff]
        %v725 = vld [vmem:[#allocation5 + $0x1a8] sm:$0xff]
        %v726 = vld [vmem:[#allocation5 + $0x1b0] sm:$0xff]
        %v727 = vld [vmem:[#allocation5 + $0x1b8] sm:$0xff]
        %v728 = vld [vmem:[#allocation5 + $0x1c0] sm:$0xff]
        %v729 = vld [vmem:[#allocation5 + $0x1c8] sm:$0xff]
        %v730 = vld [vmem:[#allocation5 + $0x1d0] sm:$0xff]
        %v731 = vld [vmem:[#allocation5 + $0x1d8] sm:$0xff]
        %v732 = vld [vmem:[#allocation5 + $0x1e0] sm:$0xff]
        %v733 = vld [vmem:[#allocation5 + $0x1e8] sm:$0xff]
        %v734 = vld [vmem:[#allocation5 + $0x1f0] sm:$0xff]
        %v735 = vld [vmem:[#allocation5 + $0x1f8] sm:$0xff]
        %v736 = vld [vmem:[#allocation5 + $0x200] sm:$0xff]
        %v737 = vld [vmem:[#allocation5 + $0x208] sm:$0xff]
        %v738 = vld [vmem:[#allocation5 + $0x210] sm:$0xff]
        %v739 = vld [vmem:[#allocation5 + $0x218] sm:$0xff]
        %v740 = vld [vmem:[#allocation5 + $0x220] sm:$0xff]
        %v741 = vld [vmem:[#allocation5 + $0x228] sm:$0xff]
        %v742 = vld [vmem:[#allocation5 + $0x230] sm:$0xff]
        %v743 = vld [vmem:[#allocation5 + $0x238] sm:$0xff]
        %v744 = vld [vmem:[#allocation5 + $0x240] sm:$0xff]
        %v745 = vld [vmem:[#allocation5 + $0x248] sm:$0xff]
        %v746 = vld [vmem:[#allocation5 + $0x250] sm:$0xff]
        %v747 = vld [vmem:[#allocation5 + $0x258] sm:$0xff]
        %v748 = vld [vmem:[#allocation5 + $0x260] sm:$0xff]
        %v749 = vld [vmem:[#allocation5 + $0x268] sm:$0xff]
        %v750 = vld [vmem:[#allocation5 + $0x270] sm:$0xff]
        %v751 = vld [vmem:[#allocation5 + $0x278] sm:$0xff]
        %v752 = vld [vmem:[#allocation5 + $0x280] sm:$0xff]
        %v753 = vld [vmem:[#allocation5 + $0x288] sm:$0xff]
        %v754 = vld [vmem:[#allocation5 + $0x290] sm:$0xff]
        %v755 = vld [vmem:[#allocation5 + $0x298] sm:$0xff]
        %v756 = vld [vmem:[#allocation5 + $0x2a0] sm:$0xff]
        %v757 = vld [vmem:[#allocation5 + $0x2a8] sm:$0xff]
        %v758 = vld [vmem:[#allocation5 + $0x2b0] sm:$0xff]
        %v759 = vld [vmem:[#allocation5 + $0x2b8] sm:$0xff]
        %v760 = vld [vmem:[#allocation5 + $0x2c0] sm:$0xff]
        %v761 = vld [vmem:[#allocation5 + $0x2c8] sm:$0xff]
        %v762 = vld [vmem:[#allocation5 + $0x2d0] sm:$0xff]
        %v763 = vld [vmem:[#allocation5 + $0x2d8] sm:$0xff]
        %v764 = vld [vmem:[#allocation5 + $0x2e0] sm:$0xff]
        %v765 = vld [vmem:[#allocation5 + $0x2e8] sm:$0xff]
        %v766 = vld [vmem:[#allocation5 + $0x2f0] sm:$0xff]
        %v767 = vld [vmem:[#allocation5 + $0x2f8] sm:$0xff]
        %v768 = vld [vmem:[#allocation5 + $0x300] sm:$0xff]
        %v769 = vld [vmem:[#allocation5 + $0x308] sm:$0xff]
        %v770 = vld [vmem:[#allocation5 + $0x310] sm:$0xff]
        %v771 = vld [vmem:[#allocation5 + $0x318] sm:$0xff]
        %v772 = vld [vmem:[#allocation5 + $0x320] sm:$0xff]
        %v773 = vld [vmem:[#allocation5 + $0x328] sm:$0xff]
        %v774 = vld [vmem:[#allocation5 + $0x330] sm:$0xff]
        %v775 = vld [vmem:[#allocation5 + $0x338] sm:$0xff]
        %v776 = vld [vmem:[#allocation5 + $0x340] sm:$0xff]
        %v777 = vld [vmem:[#allocation5 + $0x348] sm:$0xff]
        %v778 = vld [vmem:[#allocation5 + $0x350] sm:$0xff]
        %v779 = vld [vmem:[#allocation5 + $0x358] sm:$0xff]
        %v780 = vld [vmem:[#allocation5 + $0x360] sm:$0xff]
        %v781 = vld [vmem:[#allocation5 + $0x368] sm:$0xff]
        %v782 = vld [vmem:[#allocation5 + $0x370] sm:$0xff]
        %v783 = vld [vmem:[#allocation5 + $0x378] sm:$0xff]
        %v784 = vld [vmem:[#allocation5 + $0x380] sm:$0xff]
        %v785 = vld [vmem:[#allocation5 + $0x388] sm:$0xff]
        %v786 = vld [vmem:[#allocation5 + $0x390] sm:$0xff]
        %v787 = vld [vmem:[#allocation5 + $0x398] sm:$0xff]
        %v788 = vld [vmem:[#allocation5 + $0x3a0] sm:$0xff]
        %v789 = vld [vmem:[#allocation5 + $0x3a8] sm:$0xff]
        %v790 = vld [vmem:[#allocation5 + $0x3b0] sm:$0xff]
        %v791 = vld [vmem:[#allocation5 + $0x3b8] sm:$0xff]
        %v792 = vld [vmem:[#allocation5 + $0x3c0] sm:$0xff]
        %v793 = vld [vmem:[#allocation5 + $0x3c8] sm:$0xff]
        %v794 = vld [vmem:[#allocation5 + $0x3d0] sm:$0xff]
        %v795 = vld [vmem:[#allocation5 + $0x3d8] sm:$0xff]
        %v796 = vld [vmem:[#allocation5 + $0x3e0] sm:$0xff]
        %v797 = vld [vmem:[#allocation5 + $0x3e8] sm:$0xff]
        %v798 = vld [vmem:[#allocation5 + $0x3f0] sm:$0xff]
        %v799 = vld [vmem:[#allocation5 + $0x3f8] sm:$0xff]
        %v800 = vld [vmem:[#allocation5 + $0x400] sm:$0xff]
        %v801 = vld [vmem:[#allocation5 + $0x408] sm:$0xff]
        %v802 = vld [vmem:[#allocation5 + $0x410] sm:$0xff]
        %v803 = vld [vmem:[#allocation5 + $0x418] sm:$0xff]
        %v804 = vld [vmem:[#allocation5 + $0x420] sm:$0xff]
        %v805 = vld [vmem:[#allocation5 + $0x428] sm:$0xff]
        %v806 = vld [vmem:[#allocation5 + $0x430] sm:$0xff]
        %v807 = vld [vmem:[#allocation5 + $0x438] sm:$0xff]
        %v808 = vld [vmem:[#allocation5 + $0x440] sm:$0xff]
        %v809 = vld [vmem:[#allocation5 + $0x448] sm:$0xff]
        %v810 = vld [vmem:[#allocation5 + $0x450] sm:$0xff]
        %v811 = vld [vmem:[#allocation5 + $0x458] sm:$0xff]
        %v812 = vld [vmem:[#allocation5 + $0x460] sm:$0xff]
        %v813 = vld [vmem:[#allocation5 + $0x468] sm:$0xff]
        %v814 = vld [vmem:[#allocation5 + $0x470] sm:$0xff]
        %v815 = vld [vmem:[#allocation5 + $0x478] sm:$0xff]
        %v816 = vld [vmem:[#allocation5 + $0x480] sm:$0xff]
        %v817 = vld [vmem:[#allocation5 + $0x488] sm:$0xff]
        %v818 = vld [vmem:[#allocation5 + $0x490] sm:$0xff]
        %v819 = vld [vmem:[#allocation5 + $0x498] sm:$0xff]
        %v820 = vld [vmem:[#allocation5 + $0x4a0] sm:$0xff]
        %v821 = vld [vmem:[#allocation5 + $0x4a8] sm:$0xff]
        %v822 = vld [vmem:[#allocation5 + $0x4b0] sm:$0xff]
        %v823 = vld [vmem:[#allocation5 + $0x4b8] sm:$0xff]
        %v824 = vld [vmem:[#allocation5 + $0x4c0] sm:$0xff]
        %v825 = vld [vmem:[#allocation5 + $0x4c8] sm:$0xff]
        %v826 = vld [vmem:[#allocation5 + $0x4d0] sm:$0xff]
        %v827 = vld [vmem:[#allocation5 + $0x4d8] sm:$0xff]
        %v828 = vld [vmem:[#allocation5 + $0x4e0] sm:$0xff]
        %v829 = vld [vmem:[#allocation5 + $0x4e8] sm:$0xff]
        %v830 = vld [vmem:[#allocation5 + $0x4f0] sm:$0xff]
        %v831 = vld [vmem:[#allocation5 + $0x4f8] sm:$0xff]
        %v832 = vld [vmem:[#allocation5 + $0x500] sm:$0xff]
        %v833 = vld [vmem:[#allocation5 + $0x508] sm:$0xff]
        %v834 = vld [vmem:[#allocation5 + $0x510] sm:$0xff]
        %v835 = vld [vmem:[#allocation5 + $0x518] sm:$0xff]
        %v836 = vld [vmem:[#allocation5 + $0x520] sm:$0xff]
        %v837 = vld [vmem:[#allocation5 + $0x528] sm:$0xff]
        %v838 = vld [vmem:[#allocation5 + $0x530] sm:$0xff]
        %v839 = vld [vmem:[#allocation5 + $0x538] sm:$0xff]
        %v840 = vld [vmem:[#allocation5 + $0x540] sm:$0xff]
        %v841 = vld [vmem:[#allocation5 + $0x548] sm:$0xff]
        %v842 = vld [vmem:[#allocation5 + $0x550] sm:$0xff]
        %v843 = vld [vmem:[#allocation5 + $0x558] sm:$0xff]
        %v844 = vld [vmem:[#allocation5 + $0x560] sm:$0xff]
        %v845 = vld [vmem:[#allocation5 + $0x568] sm:$0xff]
        %v846 = vld [vmem:[#allocation5 + $0x570] sm:$0xff]
        %v847 = vld [vmem:[#allocation5 + $0x578] sm:$0xff]
        %v848 = vld [vmem:[#allocation5 + $0x580] sm:$0xff]
        %v849 = vld [vmem:[#allocation5 + $0x588] sm:$0xff]
        %v850 = vld [vmem:[#allocation5 + $0x590] sm:$0xff]
        %v851 = vld [vmem:[#allocation5 + $0x598] sm:$0xff]
        %v852 = vld [vmem:[#allocation5 + $0x5a0] sm:$0xff]
        %v853 = vld [vmem:[#allocation5 + $0x5a8] sm:$0xff]
        %v854 = vld [vmem:[#allocation5 + $0x5b0] sm:$0xff]
        %v855 = vld [vmem:[#allocation5 + $0x5b8] sm:$0xff]
        %v856 = vld [vmem:[#allocation5 + $0x5c0] sm:$0xff]
        %v857 = vld [vmem:[#allocation5 + $0x5c8] sm:$0xff]
        %v858 = vld [vmem:[#allocation5 + $0x5d0] sm:$0xff]
        %v859 = vld [vmem:[#allocation5 + $0x5d8] sm:$0xff]
        %v860 = vld [vmem:[#allocation5 + $0x5e0] sm:$0xff]
        %v861 = vld [vmem:[#allocation5 + $0x5e8] sm:$0xff]
        %v862 = vld [vmem:[#allocation5 + $0x5f0] sm:$0xff]
        %v863 = vld [vmem:[#allocation5 + $0x5f8] sm:$0xff]
        %v864 = vld [vmem:[#allocation5 + $0x600] sm:$0xff]
        %v865 = vld [vmem:[#allocation5 + $0x608] sm:$0xff]
        %v866 = vld [vmem:[#allocation5 + $0x610] sm:$0xff]
        %v867 = vld [vmem:[#allocation5 + $0x618] sm:$0xff]
        %v868 = vld [vmem:[#allocation5 + $0x620] sm:$0xff]
        %v869 = vld [vmem:[#allocation5 + $0x628] sm:$0xff]
        %v870 = vld [vmem:[#allocation5 + $0x630] sm:$0xff]
        %v871 = vld [vmem:[#allocation5 + $0x638] sm:$0xff]
        %v872 = vld [vmem:[#allocation5 + $0x640] sm:$0xff]
        %v873 = vld [vmem:[#allocation5 + $0x648] sm:$0xff]
        %v874 = vld [vmem:[#allocation5 + $0x650] sm:$0xff]
        %v875 = vld [vmem:[#allocation5 + $0x658] sm:$0xff]
        %v876 = vld [vmem:[#allocation5 + $0x660] sm:$0xff]
        %v877 = vld [vmem:[#allocation5 + $0x668] sm:$0xff]
        %v878 = vld [vmem:[#allocation5 + $0x670] sm:$0xff]
        %v879 = vld [vmem:[#allocation5 + $0x678] sm:$0xff]
        %v880 = vld [vmem:[#allocation5 + $0x680] sm:$0xff]
        %v881 = vld [vmem:[#allocation5 + $0x688] sm:$0xff]
        %v882 = vld [vmem:[#allocation5 + $0x690] sm:$0xff]
        %v883 = vld [vmem:[#allocation5 + $0x698] sm:$0xff]
        %v884 = vld [vmem:[#allocation5 + $0x6a0] sm:$0xff]
        %v885 = vld [vmem:[#allocation5 + $0x6a8] sm:$0xff]
        %v886 = vld [vmem:[#allocation5 + $0x6b0] sm:$0xff]
        %v887 = vld [vmem:[#allocation5 + $0x6b8] sm:$0xff]
        %v888 = vld [vmem:[#allocation5 + $0x6c0] sm:$0xff]
        %v889 = vld [vmem:[#allocation5 + $0x6c8] sm:$0xff]
        %v890 = vld [vmem:[#allocation5 + $0x6d0] sm:$0xff]
        %v891 = vld [vmem:[#allocation5 + $0x6d8] sm:$0xff]
        %v892 = vld [vmem:[#allocation5 + $0x6e0] sm:$0xff]
        %v893 = vld [vmem:[#allocation5 + $0x6e8] sm:$0xff]
        %v894 = vld [vmem:[#allocation5 + $0x6f0] sm:$0xff]
        %v895 = vld [vmem:[#allocation5 + $0x6f8] sm:$0xff]
        %v896 = vld [vmem:[#allocation5 + $0x700] sm:$0xff]
        %v897 = vld [vmem:[#allocation5 + $0x708] sm:$0xff]
        %v898 = vld [vmem:[#allocation5 + $0x710] sm:$0xff]
        %v899 = vld [vmem:[#allocation5 + $0x718] sm:$0xff]
        %v900 = vld [vmem:[#allocation5 + $0x720] sm:$0xff]
        %v901 = vld [vmem:[#allocation5 + $0x728] sm:$0xff]
        %v902 = vld [vmem:[#allocation5 + $0x730] sm:$0xff]
        %v903 = vld [vmem:[#allocation5 + $0x738] sm:$0xff]
        %v904 = vld [vmem:[#allocation5 + $0x740] sm:$0xff]
        %v905 = vld [vmem:[#allocation5 + $0x748] sm:$0xff]
        %v906 = vld [vmem:[#allocation5 + $0x750] sm:$0xff]
        %v907 = vld [vmem:[#allocation5 + $0x758] sm:$0xff]
        %v908 = vld [vmem:[#allocation5 + $0x760] sm:$0xff]
        %v909 = vld [vmem:[#allocation5 + $0x768] sm:$0xff]
        %v910 = vld [vmem:[#allocation5 + $0x770] sm:$0xff]
        %v911 = vld [vmem:[#allocation5 + $0x778] sm:$0xff]
        %v912 = vld [vmem:[#allocation5 + $0x780] sm:$0xff]
        %v913 = vld [vmem:[#allocation5 + $0x788] sm:$0xff]
        %v914 = vld [vmem:[#allocation5 + $0x790] sm:$0xff]
        %v915 = vld [vmem:[#allocation5 + $0x798] sm:$0xff]
        %v916 = vld [vmem:[#allocation5 + $0x7a0] sm:$0xff]
        %v917 = vld [vmem:[#allocation5 + $0x7a8] sm:$0xff]
        %v918 = vld [vmem:[#allocation5 + $0x7b0] sm:$0xff]
        %v919 = vld [vmem:[#allocation5 + $0x7b8] sm:$0xff]
        %v920 = vld [vmem:[#allocation5 + $0x7c0] sm:$0xff]
        %v921 = vld [vmem:[#allocation5 + $0x7c8] sm:$0xff]
        %v922 = vld [vmem:[#allocation5 + $0x7d0] sm:$0xff]
        %v923 = vld [vmem:[#allocation5 + $0x7d8] sm:$0xff]
        %v924 = vld [vmem:[#allocation5 + $0x7e0] sm:$0xff]
        %v925 = vld [vmem:[#allocation5 + $0x7e8] sm:$0xff]
        %v926 = vld [vmem:[#allocation5 + $0x7f0] sm:$0xff]
        %v927 = vld [vmem:[#allocation5 + $0x7f8] sm:$0xff]
        %v928 = vld [vmem:[#allocation5 + $0x800] sm:$0xff]
        %v929 = vld [vmem:[#allocation5 + $0x808] sm:$0xff]
        %v930 = vld [vmem:[#allocation5 + $0x810] sm:$0xff]
        %v931 = vld [vmem:[#allocation5 + $0x818] sm:$0xff]
        %v932 = vld [vmem:[#allocation5 + $0x820] sm:$0xff]
        %v933 = vld [vmem:[#allocation5 + $0x828] sm:$0xff]
        %v934 = vld [vmem:[#allocation5 + $0x830] sm:$0xff]
        %v935 = vld [vmem:[#allocation5 + $0x838] sm:$0xff]
        %v936 = vld [vmem:[#allocation5 + $0x840] sm:$0xff]
        %v937 = vld [vmem:[#allocation5 + $0x848] sm:$0xff]
        %v938 = vld [vmem:[#allocation5 + $0x850] sm:$0xff]
        %v939 = vld [vmem:[#allocation5 + $0x858] sm:$0xff]
        %v940 = vld [vmem:[#allocation5 + $0x860] sm:$0xff]
        %v941 = vld [vmem:[#allocation5 + $0x868] sm:$0xff]
        %v942 = vld [vmem:[#allocation5 + $0x870] sm:$0xff]
        %v943 = vld [vmem:[#allocation5 + $0x878] sm:$0xff]
        %v944 = vld [vmem:[#allocation5 + $0x880] sm:$0xff]
        %v945 = vld [vmem:[#allocation5 + $0x888] sm:$0xff]
        %v946 = vld [vmem:[#allocation5 + $0x890] sm:$0xff]
        %v947 = vld [vmem:[#allocation5 + $0x898] sm:$0xff]
        %v948 = vld [vmem:[#allocation5 + $0x8a0] sm:$0xff]
        %v949 = vld [vmem:[#allocation5 + $0x8a8] sm:$0xff]
        %v950 = vld [vmem:[#allocation5 + $0x8b0] sm:$0xff]
        %v951 = vld [vmem:[#allocation5 + $0x8b8] sm:$0xff]
        %v952 = vld [vmem:[#allocation5 + $0x8c0] sm:$0xff]
        %v953 = vld [vmem:[#allocation5 + $0x8c8] sm:$0xff]
        %v954 = vld [vmem:[#allocation5 + $0x8d0] sm:$0xff]
        %v955 = vld [vmem:[#allocation5 + $0x8d8] sm:$0xff]
        %v956 = vld [vmem:[#allocation5 + $0x8e0] sm:$0xff]
        %v957 = vld [vmem:[#allocation5 + $0x8e8] sm:$0xff]
        %v958 = vld [vmem:[#allocation5 + $0x8f0] sm:$0xff]
        %v959 = vld [vmem:[#allocation5 + $0x8f8] sm:$0xff]
        %v960 = vld [vmem:[#allocation5 + $0x900] sm:$0xff]
        %v961 = vld [vmem:[#allocation5 + $0x908] sm:$0xff]
        %v962 = vld [vmem:[#allocation5 + $0x910] sm:$0xff]
        %v963 = vld [vmem:[#allocation5 + $0x918] sm:$0xff]
        %v964 = vld [vmem:[#allocation5 + $0x920] sm:$0xff]
        %v965 = vld [vmem:[#allocation5 + $0x928] sm:$0xff]
        %v966 = vld [vmem:[#allocation5 + $0x930] sm:$0xff]
        %v967 = vld [vmem:[#allocation5 + $0x938] sm:$0xff]
        %v968 = vld [vmem:[#allocation5 + $0x940] sm:$0xff]
        %v969 = vld [vmem:[#allocation5 + $0x948] sm:$0xff]
        %v970 = vld [vmem:[#allocation5 + $0x950] sm:$0xff]
        %v971 = vld [vmem:[#allocation5 + $0x958] sm:$0xff]
        %v972 = vld [vmem:[#allocation5 + $0x960] sm:$0xff]
        %v973 = vld [vmem:[#allocation5 + $0x968] sm:$0xff]
        %v974 = vld [vmem:[#allocation5 + $0x970] sm:$0xff]
        %v975 = vld [vmem:[#allocation5 + $0x978] sm:$0xff]
        %v976 = vld [vmem:[#allocation5 + $0x980] sm:$0xff]
        %v977 = vld [vmem:[#allocation5 + $0x988] sm:$0xff]
        %v978 = vld [vmem:[#allocation5 + $0x990] sm:$0xff]
        %v979 = vld [vmem:[#allocation5 + $0x998] sm:$0xff]
        %v980 = vld [vmem:[#allocation5 + $0x9a0] sm:$0xff]
        %v981 = vld [vmem:[#allocation5 + $0x9a8] sm:$0xff]
        %v982 = vld [vmem:[#allocation5 + $0x9b0] sm:$0xff]
        %v983 = vld [vmem:[#allocation5 + $0x9b8] sm:$0xff]
        %v984 = vld [vmem:[#allocation5 + $0x9c0] sm:$0xff]
        %v985 = vld [vmem:[#allocation5 + $0x9c8] sm:$0xff]
        %v986 = vld [vmem:[#allocation5 + $0x9d0] sm:$0xff]
        %v987 = vld [vmem:[#allocation5 + $0x9d8] sm:$0xff]
        %v988 = vld [vmem:[#allocation5 + $0x9e0] sm:$0xff]
        %v989 = vld [vmem:[#allocation5 + $0x9e8] sm:$0xff]
        %v990 = vld [vmem:[#allocation5 + $0x9f0] sm:$0xff]
        %v991 = vld [vmem:[#allocation5 + $0x9f8] sm:$0xff]
        %v992 = vld [vmem:[#allocation5 + $0xa00] sm:$0xff]
        %v993 = vld [vmem:[#allocation5 + $0xa08] sm:$0xff]
        %v994 = vld [vmem:[#allocation5 + $0xa10] sm:$0xff]
        %v995 = vld [vmem:[#allocation5 + $0xa18] sm:$0xff]
        %v996 = vld [vmem:[#allocation5 + $0xa20] sm:$0xff]
        %v997 = vld [vmem:[#allocation5 + $0xa28] sm:$0xff]
        %v998 = vld [vmem:[#allocation5 + $0xa30] sm:$0xff]
        %v999 = vld [vmem:[#allocation5 + $0xa38] sm:$0xff]
        %v1000 = vld [vmem:[#allocation5 + $0xa40] sm:$0xff]
        %v1001 = vld [vmem:[#allocation5 + $0xa48] sm:$0xff]
        %v1002 = vld [vmem:[#allocation5 + $0xa50] sm:$0xff]
        %v1003 = vld [vmem:[#allocation5 + $0xa58] sm:$0xff]
        %v1004 = vld [vmem:[#allocation5 + $0xa60] sm:$0xff]
        %v1005 = vld [vmem:[#allocation5 + $0xa68] sm:$0xff]
        %v1006 = vld [vmem:[#allocation5 + $0xa70] sm:$0xff]
        %v1007 = vld [vmem:[#allocation5 + $0xa78] sm:$0xff]
        %v1008 = vld [vmem:[#allocation5 + $0xa80] sm:$0xff]
        %v1009 = vld [vmem:[#allocation5 + $0xa88] sm:$0xff]
        %v1010 = vld [vmem:[#allocation5 + $0xa90] sm:$0xff]
        %v1011 = vld [vmem:[#allocation5 + $0xa98] sm:$0xff]
        %v1012 = vld [vmem:[#allocation5 + $0xaa0] sm:$0xff]
        %v1013 = vld [vmem:[#allocation5 + $0xaa8] sm:$0xff]
        %v1014 = vld [vmem:[#allocation5 + $0xab0] sm:$0xff]
        %v1015 = vld [vmem:[#allocation5 + $0xab8] sm:$0xff]
        %v1016 = vld [vmem:[#allocation5 + $0xac0] sm:$0xff]
        %v1017 = vld [vmem:[#allocation5 + $0xac8] sm:$0xff]
        %v1018 = vld [vmem:[#allocation5 + $0xad0] sm:$0xff]
        %v1019 = vld [vmem:[#allocation5 + $0xad8] sm:$0xff]
        %v1020 = vld [vmem:[#allocation5 + $0xae0] sm:$0xff]
        %v1021 = vld [vmem:[#allocation5 + $0xae8] sm:$0xff]
        %v1022 = vld [vmem:[#allocation5 + $0xaf0] sm:$0xff]
        %v1023 = vld [vmem:[#allocation5 + $0xaf8] sm:$0xff]
        %v1024 = vld [vmem:[#allocation5 + $0xb00] sm:$0xff]
        %v1025 = vld [vmem:[#allocation5 + $0xb08] sm:$0xff]
        %v1026 = vld [vmem:[#allocation5 + $0xb10] sm:$0xff]
        %v1027 = vld [vmem:[#allocation5 + $0xb18] sm:$0xff]
        %v1028 = vld [vmem:[#allocation5 + $0xb20] sm:$0xff]
        %v1029 = vld [vmem:[#allocation5 + $0xb28] sm:$0xff]
        %v1030 = vld [vmem:[#allocation5 + $0xb30] sm:$0xff]
        %v1031 = vld [vmem:[#allocation5 + $0xb38] sm:$0xff]
        %v1032 = vld [vmem:[#allocation5 + $0xb40] sm:$0xff]
        %v1033 = vld [vmem:[#allocation5 + $0xb48] sm:$0xff]
        %v1034 = vld [vmem:[#allocation5 + $0xb50] sm:$0xff]
        %v1035 = vld [vmem:[#allocation5 + $0xb58] sm:$0xff]
        %v1036 = vld [vmem:[#allocation5 + $0xb60] sm:$0xff]
        %v1037 = vld [vmem:[#allocation5 + $0xb68] sm:$0xff]
        %v1038 = vld [vmem:[#allocation5 + $0xb70] sm:$0xff]
        %v1039 = vld [vmem:[#allocation5 + $0xb78] sm:$0xff]
        %v1040 = vld [vmem:[#allocation5 + $0xb80] sm:$0xff]
        %v1041 = vld [vmem:[#allocation5 + $0xb88] sm:$0xff]
        %v1042 = vld [vmem:[#allocation5 + $0xb90] sm:$0xff]
        %v1043 = vld [vmem:[#allocation5 + $0xb98] sm:$0xff]
        %v1044 = vld [vmem:[#allocation5 + $0xba0] sm:$0xff]
        %v1045 = vld [vmem:[#allocation5 + $0xba8] sm:$0xff]
        %v1046 = vld [vmem:[#allocation5 + $0xbb0] sm:$0xff]
        %v1047 = vld [vmem:[#allocation5 + $0xbb8] sm:$0xff]
        %v1048 = vld [vmem:[#allocation5 + $0xbc0] sm:$0xff]
        %v1049 = vld [vmem:[#allocation5 + $0xbc8] sm:$0xff]
        %v1050 = vld [vmem:[#allocation5 + $0xbd0] sm:$0xff]
        %v1051 = vld [vmem:[#allocation5 + $0xbd8] sm:$0xff]
        %v1052 = vld [vmem:[#allocation5 + $0xbe0] sm:$0xff]
        %v1053 = vld [vmem:[#allocation5 + $0xbe8] sm:$0xff]
        %v1054 = vld [vmem:[#allocation5 + $0xbf0] sm:$0xff]
        %v1055 = vld [vmem:[#allocation5 + $0xbf8] sm:$0xff]
        %v1056 = vld [vmem:[#allocation5 + $0xc00] sm:$0xff]
        %v1057 = vld [vmem:[#allocation5 + $0xc08] sm:$0xff]
        %v1058 = vld [vmem:[#allocation5 + $0xc10] sm:$0xff]
        %v1059 = vld [vmem:[#allocation5 + $0xc18] sm:$0xff]
        %v1060 = vld [vmem:[#allocation5 + $0xc20] sm:$0xff]
        %v1061 = vld [vmem:[#allocation5 + $0xc28] sm:$0xff]
        %v1062 = vld [vmem:[#allocation5 + $0xc30] sm:$0xff]
        %v1063 = vld [vmem:[#allocation5 + $0xc38] sm:$0xff]
        %v1064 = vld [vmem:[#allocation5 + $0xc40] sm:$0xff]
        %v1065 = vld [vmem:[#allocation5 + $0xc48] sm:$0xff]
        %v1066 = vld [vmem:[#allocation5 + $0xc50] sm:$0xff]
        %v1067 = vld [vmem:[#allocation5 + $0xc58] sm:$0xff]
        %v1068 = vld [vmem:[#allocation5 + $0xc60] sm:$0xff]
        %v1069 = vld [vmem:[#allocation5 + $0xc68] sm:$0xff]
        %v1070 = vld [vmem:[#allocation5 + $0xc70] sm:$0xff]
        %v1071 = vld [vmem:[#allocation5 + $0xc78] sm:$0xff]
        %v1072 = vld [vmem:[#allocation5 + $0xc80] sm:$0xff]
        %v1073 = vld [vmem:[#allocation5 + $0xc88] sm:$0xff]
        %v1074 = vld [vmem:[#allocation5 + $0xc90] sm:$0xff]
        %v1075 = vld [vmem:[#allocation5 + $0xc98] sm:$0xff]
        %v1076 = vld [vmem:[#allocation5 + $0xca0] sm:$0xff]
        %v1077 = vld [vmem:[#allocation5 + $0xca8] sm:$0xff]
        %v1078 = vld [vmem:[#allocation5 + $0xcb0] sm:$0xff]
        %v1079 = vld [vmem:[#allocation5 + $0xcb8] sm:$0xff]
        %v1080 = vld [vmem:[#allocation5 + $0xcc0] sm:$0xff]
        %v1081 = vld [vmem:[#allocation5 + $0xcc8] sm:$0xff]
        %v1082 = vld [vmem:[#allocation5 + $0xcd0] sm:$0xff]
        %v1083 = vld [vmem:[#allocation5 + $0xcd8] sm:$0xff]
        %v1084 = vld [vmem:[#allocation5 + $0xce0] sm:$0xff]
        %v1085 = vld [vmem:[#allocation5 + $0xce8] sm:$0xff]
        %v1086 = vld [vmem:[#allocation5 + $0xcf0] sm:$0xff]
        %v1087 = vld [vmem:[#allocation5 + $0xcf8] sm:$0xff]
        %v1088 = vld [vmem:[#allocation5 + $0xd00] sm:$0xff]
        %v1089 = vld [vmem:[#allocation5 + $0xd08] sm:$0xff]
        %v1090 = vld [vmem:[#allocation5 + $0xd10] sm:$0xff]
        %v1091 = vld [vmem:[#allocation5 + $0xd18] sm:$0xff]
        %v1092 = vld [vmem:[#allocation5 + $0xd20] sm:$0xff]
        %v1093 = vld [vmem:[#allocation5 + $0xd28] sm:$0xff]
        %v1094 = vld [vmem:[#allocation5 + $0xd30] sm:$0xff]
        %v1095 = vld [vmem:[#allocation5 + $0xd38] sm:$0xff]
        %v1096 = vld [vmem:[#allocation5 + $0xd40] sm:$0xff]
        %v1097 = vld [vmem:[#allocation5 + $0xd48] sm:$0xff]
        %v1098 = vld [vmem:[#allocation5 + $0xd50] sm:$0xff]
        %v1099 = vld [vmem:[#allocation5 + $0xd58] sm:$0xff]
        %v1100 = vld [vmem:[#allocation5 + $0xd60] sm:$0xff]
        %v1101 = vld [vmem:[#allocation5 + $0xd68] sm:$0xff]
        %v1102 = vld [vmem:[#allocation5 + $0xd70] sm:$0xff]
        %v1103 = vld [vmem:[#allocation5 + $0xd78] sm:$0xff]
        %v1104 = vld [vmem:[#allocation5 + $0xd80] sm:$0xff]
        %v1105 = vld [vmem:[#allocation5 + $0xd88] sm:$0xff]
        %v1106 = vld [vmem:[#allocation5 + $0xd90] sm:$0xff]
        %v1107 = vld [vmem:[#allocation5 + $0xd98] sm:$0xff]
        %v1108 = vld [vmem:[#allocation5 + $0xda0] sm:$0xff]
        %v1109 = vld [vmem:[#allocation5 + $0xda8] sm:$0xff]
        %v1110 = vld [vmem:[#allocation5 + $0xdb0] sm:$0xff]
        %v1111 = vld [vmem:[#allocation5 + $0xdb8] sm:$0xff]
        %v1112 = vld [vmem:[#allocation5 + $0xdc0] sm:$0xff]
        %v1113 = vld [vmem:[#allocation5 + $0xdc8] sm:$0xff]
        %v1114 = vld [vmem:[#allocation5 + $0xdd0] sm:$0xff]
        %v1115 = vld [vmem:[#allocation5 + $0xdd8] sm:$0xff]
        %v1116 = vld [vmem:[#allocation5 + $0xde0] sm:$0xff]
        %v1117 = vld [vmem:[#allocation5 + $0xde8] sm:$0xff]
        %v1118 = vld [vmem:[#allocation5 + $0xdf0] sm:$0xff]
        %v1119 = vld [vmem:[#allocation5 + $0xdf8] sm:$0xff]
        %v1120 = vld [vmem:[#allocation5 + $0xe00] sm:$0xff]
        %v1121 = vld [vmem:[#allocation5 + $0xe08] sm:$0xff]
        %v1122 = vld [vmem:[#allocation5 + $0xe10] sm:$0xff]
        %v1123 = vld [vmem:[#allocation5 + $0xe18] sm:$0xff]
        %v1124 = vld [vmem:[#allocation5 + $0xe20] sm:$0xff]
        %v1125 = vld [vmem:[#allocation5 + $0xe28] sm:$0xff]
        %v1126 = vld [vmem:[#allocation5 + $0xe30] sm:$0xff]
        %v1127 = vld [vmem:[#allocation5 + $0xe38] sm:$0xff]
        %v1128 = vld [vmem:[#allocation5 + $0xe40] sm:$0xff]
        %v1129 = vld [vmem:[#allocation5 + $0xe48] sm:$0xff]
        %v1130 = vld [vmem:[#allocation5 + $0xe50] sm:$0xff]
        %v1131 = vld [vmem:[#allocation5 + $0xe58] sm:$0xff]
        %v1132 = vld [vmem:[#allocation5 + $0xe60] sm:$0xff]
        %v1133 = vld [vmem:[#allocation5 + $0xe68] sm:$0xff]
        %v1134 = vld [vmem:[#allocation5 + $0xe70] sm:$0xff]
        %v1135 = vld [vmem:[#allocation5 + $0xe78] sm:$0xff]
        %v1136 = vld [vmem:[#allocation5 + $0xe80] sm:$0xff]
        %v1137 = vld [vmem:[#allocation5 + $0xe88] sm:$0xff]
        %v1138 = vld [vmem:[#allocation5 + $0xe90] sm:$0xff]
        %v1139 = vld [vmem:[#allocation5 + $0xe98] sm:$0xff]
        %v1140 = vld [vmem:[#allocation5 + $0xea0] sm:$0xff]
        %v1141 = vld [vmem:[#allocation5 + $0xea8] sm:$0xff]
        %v1142 = vld [vmem:[#allocation5 + $0xeb0] sm:$0xff]
        %v1143 = vld [vmem:[#allocation5 + $0xeb8] sm:$0xff]
        %v1144 = vld [vmem:[#allocation5 + $0xec0] sm:$0xff]
        %v1145 = vld [vmem:[#allocation5 + $0xec8] sm:$0xff]
        %v1146 = vld [vmem:[#allocation5 + $0xed0] sm:$0xff]
        %v1147 = vld [vmem:[#allocation5 + $0xed8] sm:$0xff]
        %v1148 = vld [vmem:[#allocation5 + $0xee0] sm:$0xff]
        %v1149 = vld [vmem:[#allocation5 + $0xee8] sm:$0xff]
        %v1150 = vld [vmem:[#allocation5 + $0xef0] sm:$0xff]
        %v1151 = vld [vmem:[#allocation5 + $0xef8] sm:$0xff]
        %v1152 = vld [vmem:[#allocation5 + $0xf00] sm:$0xff]
        %v1153 = vld [vmem:[#allocation5 + $0xf08] sm:$0xff]
        %v1154 = vld [vmem:[#allocation5 + $0xf10] sm:$0xff]
        %v1155 = vld [vmem:[#allocation5 + $0xf18] sm:$0xff]
        %v1156 = vld [vmem:[#allocation5 + $0xf20] sm:$0xff]
        %v1157 = vld [vmem:[#allocation5 + $0xf28] sm:$0xff]
        %v1158 = vld [vmem:[#allocation5 + $0xf30] sm:$0xff]
        %v1159 = vld [vmem:[#allocation5 + $0xf38] sm:$0xff]
        %v1160 = vld [vmem:[#allocation5 + $0xf40] sm:$0xff]
        %v1161 = vld [vmem:[#allocation5 + $0xf48] sm:$0xff]
        %v1162 = vld [vmem:[#allocation5 + $0xf50] sm:$0xff]
        %v1163 = vld [vmem:[#allocation5 + $0xf58] sm:$0xff]
        %v1164 = vld [vmem:[#allocation5 + $0xf60] sm:$0xff]
        %v1165 = vld [vmem:[#allocation5 + $0xf68] sm:$0xff]
        %v1166 = vld [vmem:[#allocation5 + $0xf70] sm:$0xff]
        %v1167 = vld [vmem:[#allocation5 + $0xf78] sm:$0xff]
        %v1168 = vld [vmem:[#allocation5 + $0xf80] sm:$0xff]
        %v1169 = vld [vmem:[#allocation5 + $0xf88] sm:$0xff]
        %v1170 = vld [vmem:[#allocation5 + $0xf90] sm:$0xff]
        %v1171 = vld [vmem:[#allocation5 + $0xf98] sm:$0xff]
        %v1172 = vld [vmem:[#allocation5 + $0xfa0] sm:$0xff]
        %v1173 = vld [vmem:[#allocation5 + $0xfa8] sm:$0xff]
        %v1174 = vld [vmem:[#allocation5 + $0xfb0] sm:$0xff]
        %v1175 = vld [vmem:[#allocation5 + $0xfb8] sm:$0xff]
        %v1176 = vld [vmem:[#allocation5 + $0xfc0] sm:$0xff]
        %v1177 = vld [vmem:[#allocation5 + $0xfc8] sm:$0xff]
        %v1178 = vld [vmem:[#allocation5 + $0xfd0] sm:$0xff]
        %v1179 = vld [vmem:[#allocation5 + $0xfd8] sm:$0xff]
        %v1180 = vld [vmem:[#allocation5 + $0xfe0] sm:$0xff]
        %v1181 = vld [vmem:[#allocation5 + $0xfe8] sm:$0xff]
        %v1182 = vld [vmem:[#allocation5 + $0xff0] sm:$0xff]
        %v1183 = vld [vmem:[#allocation5 + $0xff8] sm:$0xff]
        %v1184 = vld [vmem:[#allocation7] sm:$0xff]
        %v1186 = vperm.slane %v1184, 0
        %v1187 = vperm.slane %v1184, 1
        %v1188 = vperm.slane %v1184, 2
        %v1189 = vperm.slane %v1184, 3
        %v1190 = vperm.slane %v1184, 4
        %v1191 = vperm.slane %v1184, 5
        %v1192 = vperm.slane %v1184, 6
        %v1193 = vperm.slane %v1184, 7
        %v1714 = vunpack.c.l.b16 %v672
        %v1715 = vunpack.c.h.b16 %v672
        %v1716 = vunpack.c.l.b16 %v673
        %v1717 = vunpack.c.h.b16 %v673
        %v1718 = vunpack.c.l.b16 %v674
        %v1719 = vunpack.c.h.b16 %v674
        %v1720 = vunpack.c.l.b16 %v675
        %v1721 = vunpack.c.h.b16 %v675
        %v1722 = vunpack.c.l.b16 %v676
        %v1723 = vunpack.c.h.b16 %v676
        %v1724 = vunpack.c.l.b16 %v677
        %v1725 = vunpack.c.h.b16 %v677
        %v1726 = vunpack.c.l.b16 %v678
        %v1727 = vunpack.c.h.b16 %v678
        %v1728 = vunpack.c.l.b16 %v679
        %v1729 = vunpack.c.h.b16 %v679
        %v1730 = vunpack.c.l.b16 %v680
        %v1731 = vunpack.c.h.b16 %v680
        %v1732 = vunpack.c.l.b16 %v681
        %v1733 = vunpack.c.h.b16 %v681
        %v1734 = vunpack.c.l.b16 %v682
        %v1735 = vunpack.c.h.b16 %v682
        %v1736 = vunpack.c.l.b16 %v683
        %v1737 = vunpack.c.h.b16 %v683
        %v1738 = vunpack.c.l.b16 %v684
        %v1739 = vunpack.c.h.b16 %v684
        %v1740 = vunpack.c.l.b16 %v685
        %v1741 = vunpack.c.h.b16 %v685
        %v1742 = vunpack.c.l.b16 %v686
        %v1743 = vunpack.c.h.b16 %v686
        %v1744 = vunpack.c.l.b16 %v687
        %v1745 = vunpack.c.h.b16 %v687
        %v1746 = vunpack.c.l.b16 %v688
        %v1747 = vunpack.c.h.b16 %v688
        %v1748 = vunpack.c.l.b16 %v689
        %v1749 = vunpack.c.h.b16 %v689
        %v1750 = vunpack.c.l.b16 %v690
        %v1751 = vunpack.c.h.b16 %v690
        %v1752 = vunpack.c.l.b16 %v691
        %v1753 = vunpack.c.h.b16 %v691
        %v1754 = vunpack.c.l.b16 %v692
        %v1755 = vunpack.c.h.b16 %v692
        %v1756 = vunpack.c.l.b16 %v693
        %v1757 = vunpack.c.h.b16 %v693
        %v1758 = vunpack.c.l.b16 %v694
        %v1759 = vunpack.c.h.b16 %v694
        %v1760 = vunpack.c.l.b16 %v695
        %v1761 = vunpack.c.h.b16 %v695
        %v1762 = vunpack.c.l.b16 %v696
        %v1763 = vunpack.c.h.b16 %v696
        %v1764 = vunpack.c.l.b16 %v697
        %v1765 = vunpack.c.h.b16 %v697
        %v1766 = vunpack.c.l.b16 %v698
        %v1767 = vunpack.c.h.b16 %v698
        %v1768 = vunpack.c.l.b16 %v699
        %v1769 = vunpack.c.h.b16 %v699
        %v1770 = vunpack.c.l.b16 %v700
        %v1771 = vunpack.c.h.b16 %v700
        %v1772 = vunpack.c.l.b16 %v701
        %v1773 = vunpack.c.h.b16 %v701
        %v1774 = vunpack.c.l.b16 %v702
        %v1775 = vunpack.c.h.b16 %v702
        %v1776 = vunpack.c.l.b16 %v703
        %v1777 = vunpack.c.h.b16 %v703
        %v1778 = vunpack.c.l.b16 %v704
        %v1779 = vunpack.c.h.b16 %v704
        %v1780 = vunpack.c.l.b16 %v705
        %v1781 = vunpack.c.h.b16 %v705
        %v1782 = vunpack.c.l.b16 %v706
        %v1783 = vunpack.c.h.b16 %v706
        %v1784 = vunpack.c.l.b16 %v707
        %v1785 = vunpack.c.h.b16 %v707
        %v1786 = vunpack.c.l.b16 %v708
        %v1787 = vunpack.c.h.b16 %v708
        %v1788 = vunpack.c.l.b16 %v709
        %v1789 = vunpack.c.h.b16 %v709
        %v1790 = vunpack.c.l.b16 %v710
        %v1791 = vunpack.c.h.b16 %v710
        %v1792 = vunpack.c.l.b16 %v711
        %v1793 = vunpack.c.h.b16 %v711
        %v1794 = vunpack.c.l.b16 %v712
        %v1795 = vunpack.c.h.b16 %v712
        %v1796 = vunpack.c.l.b16 %v713
        %v1797 = vunpack.c.h.b16 %v713
        %v1798 = vunpack.c.l.b16 %v714
        %v1799 = vunpack.c.h.b16 %v714
        %v1800 = vunpack.c.l.b16 %v715
        %v1801 = vunpack.c.h.b16 %v715
        %v1802 = vunpack.c.l.b16 %v716
        %v1803 = vunpack.c.h.b16 %v716
        %v1804 = vunpack.c.l.b16 %v717
        %v1805 = vunpack.c.h.b16 %v717
        %v1806 = vunpack.c.l.b16 %v718
        %v1807 = vunpack.c.h.b16 %v718
        %v1808 = vunpack.c.l.b16 %v719
        %v1809 = vunpack.c.h.b16 %v719
        %v1810 = vunpack.c.l.b16 %v720
        %v1811 = vunpack.c.h.b16 %v720
        %v1812 = vunpack.c.l.b16 %v721
        %v1813 = vunpack.c.h.b16 %v721
        %v1814 = vunpack.c.l.b16 %v722
        %v1815 = vunpack.c.h.b16 %v722
        %v1816 = vunpack.c.l.b16 %v723
        %v1817 = vunpack.c.h.b16 %v723
        %v1818 = vunpack.c.l.b16 %v724
        %v1819 = vunpack.c.h.b16 %v724
        %v1820 = vunpack.c.l.b16 %v725
        %v1821 = vunpack.c.h.b16 %v725
        %v1822 = vunpack.c.l.b16 %v726
        %v1823 = vunpack.c.h.b16 %v726
        %v1824 = vunpack.c.l.b16 %v727
        %v1825 = vunpack.c.h.b16 %v727
        %v1826 = vunpack.c.l.b16 %v728
        %v1827 = vunpack.c.h.b16 %v728
        %v1828 = vunpack.c.l.b16 %v729
        %v1829 = vunpack.c.h.b16 %v729
        %v1830 = vunpack.c.l.b16 %v730
        %v1831 = vunpack.c.h.b16 %v730
        %v1832 = vunpack.c.l.b16 %v731
        %v1833 = vunpack.c.h.b16 %v731
        %v1834 = vunpack.c.l.b16 %v732
        %v1835 = vunpack.c.h.b16 %v732
        %v1836 = vunpack.c.l.b16 %v733
        %v1837 = vunpack.c.h.b16 %v733
        %v1838 = vunpack.c.l.b16 %v734
        %v1839 = vunpack.c.h.b16 %v734
        %v1840 = vunpack.c.l.b16 %v735
        %v1841 = vunpack.c.h.b16 %v735
        %v1842 = vunpack.c.l.b16 %v736
        %v1843 = vunpack.c.h.b16 %v736
        %v1844 = vunpack.c.l.b16 %v737
        %v1845 = vunpack.c.h.b16 %v737
        %v1846 = vunpack.c.l.b16 %v738
        %v1847 = vunpack.c.h.b16 %v738
        %v1848 = vunpack.c.l.b16 %v739
        %v1849 = vunpack.c.h.b16 %v739
        %v1850 = vunpack.c.l.b16 %v740
        %v1851 = vunpack.c.h.b16 %v740
        %v1852 = vunpack.c.l.b16 %v741
        %v1853 = vunpack.c.h.b16 %v741
        %v1854 = vunpack.c.l.b16 %v742
        %v1855 = vunpack.c.h.b16 %v742
        %v1856 = vunpack.c.l.b16 %v743
        %v1857 = vunpack.c.h.b16 %v743
        %v1858 = vunpack.c.l.b16 %v744
        %v1859 = vunpack.c.h.b16 %v744
        %v1860 = vunpack.c.l.b16 %v745
        %v1861 = vunpack.c.h.b16 %v745
        %v1862 = vunpack.c.l.b16 %v746
        %v1863 = vunpack.c.h.b16 %v746
        %v1864 = vunpack.c.l.b16 %v747
        %v1865 = vunpack.c.h.b16 %v747
        %v1866 = vunpack.c.l.b16 %v748
        %v1867 = vunpack.c.h.b16 %v748
        %v1868 = vunpack.c.l.b16 %v749
        %v1869 = vunpack.c.h.b16 %v749
        %v1870 = vunpack.c.l.b16 %v750
        %v1871 = vunpack.c.h.b16 %v750
        %v1872 = vunpack.c.l.b16 %v751
        %v1873 = vunpack.c.h.b16 %v751
        %v1874 = vunpack.c.l.b16 %v752
        %v1875 = vunpack.c.h.b16 %v752
        %v1876 = vunpack.c.l.b16 %v753
        %v1877 = vunpack.c.h.b16 %v753
        %v1878 = vunpack.c.l.b16 %v754
        %v1879 = vunpack.c.h.b16 %v754
        %v1880 = vunpack.c.l.b16 %v755
        %v1881 = vunpack.c.h.b16 %v755
        %v1882 = vunpack.c.l.b16 %v756
        %v1883 = vunpack.c.h.b16 %v756
        %v1884 = vunpack.c.l.b16 %v757
        %v1885 = vunpack.c.h.b16 %v757
        %v1886 = vunpack.c.l.b16 %v758
        %v1887 = vunpack.c.h.b16 %v758
        %v1888 = vunpack.c.l.b16 %v759
        %v1889 = vunpack.c.h.b16 %v759
        %v1890 = vunpack.c.l.b16 %v760
        %v1891 = vunpack.c.h.b16 %v760
        %v1892 = vunpack.c.l.b16 %v761
        %v1893 = vunpack.c.h.b16 %v761
        %v1894 = vunpack.c.l.b16 %v762
        %v1895 = vunpack.c.h.b16 %v762
        %v1896 = vunpack.c.l.b16 %v763
        %v1897 = vunpack.c.h.b16 %v763
        %v1898 = vunpack.c.l.b16 %v764
        %v1899 = vunpack.c.h.b16 %v764
        %v1900 = vunpack.c.l.b16 %v765
        %v1901 = vunpack.c.h.b16 %v765
        %v1902 = vunpack.c.l.b16 %v766
        %v1903 = vunpack.c.h.b16 %v766
        %v1904 = vunpack.c.l.b16 %v767
        %v1905 = vunpack.c.h.b16 %v767
        %v1906 = vunpack.c.l.b16 %v768
        %v1907 = vunpack.c.h.b16 %v768
        %v1908 = vunpack.c.l.b16 %v769
        %v1909 = vunpack.c.h.b16 %v769
        %v1910 = vunpack.c.l.b16 %v770
        %v1911 = vunpack.c.h.b16 %v770
        %v1912 = vunpack.c.l.b16 %v771
        %v1913 = vunpack.c.h.b16 %v771
        %v1914 = vunpack.c.l.b16 %v772
        %v1915 = vunpack.c.h.b16 %v772
        %v1916 = vunpack.c.l.b16 %v773
        %v1917 = vunpack.c.h.b16 %v773
        %v1918 = vunpack.c.l.b16 %v774
        %v1919 = vunpack.c.h.b16 %v774
        %v1920 = vunpack.c.l.b16 %v775
        %v1921 = vunpack.c.h.b16 %v775
        %v1922 = vunpack.c.l.b16 %v776
        %v1923 = vunpack.c.h.b16 %v776
        %v1924 = vunpack.c.l.b16 %v777
        %v1925 = vunpack.c.h.b16 %v777
        %v1926 = vunpack.c.l.b16 %v778
        %v1927 = vunpack.c.h.b16 %v778
        %v1928 = vunpack.c.l.b16 %v779
        %v1929 = vunpack.c.h.b16 %v779
        %v1930 = vunpack.c.l.b16 %v780
        %v1931 = vunpack.c.h.b16 %v780
        %v1932 = vunpack.c.l.b16 %v781
        %v1933 = vunpack.c.h.b16 %v781
        %v1934 = vunpack.c.l.b16 %v782
        %v1935 = vunpack.c.h.b16 %v782
        %v1936 = vunpack.c.l.b16 %v783
        %v1937 = vunpack.c.h.b16 %v783
        %v1938 = vunpack.c.l.b16 %v784
        %v1939 = vunpack.c.h.b16 %v784
        %v1940 = vunpack.c.l.b16 %v785
        %v1941 = vunpack.c.h.b16 %v785
        %v1942 = vunpack.c.l.b16 %v786
        %v1943 = vunpack.c.h.b16 %v786
        %v1944 = vunpack.c.l.b16 %v787
        %v1945 = vunpack.c.h.b16 %v787
        %v1946 = vunpack.c.l.b16 %v788
        %v1947 = vunpack.c.h.b16 %v788
        %v1948 = vunpack.c.l.b16 %v789
        %v1949 = vunpack.c.h.b16 %v789
        %v1950 = vunpack.c.l.b16 %v790
        %v1951 = vunpack.c.h.b16 %v790
        %v1952 = vunpack.c.l.b16 %v791
        %v1953 = vunpack.c.h.b16 %v791
        %v1954 = vunpack.c.l.b16 %v792
        %v1955 = vunpack.c.h.b16 %v792
        %v1956 = vunpack.c.l.b16 %v793
        %v1957 = vunpack.c.h.b16 %v793
        %v1958 = vunpack.c.l.b16 %v794
        %v1959 = vunpack.c.h.b16 %v794
        %v1960 = vunpack.c.l.b16 %v795
        %v1961 = vunpack.c.h.b16 %v795
        %v1962 = vunpack.c.l.b16 %v796
        %v1963 = vunpack.c.h.b16 %v796
        %v1964 = vunpack.c.l.b16 %v797
        %v1965 = vunpack.c.h.b16 %v797
        %v1966 = vunpack.c.l.b16 %v798
        %v1967 = vunpack.c.h.b16 %v798
        %v1968 = vunpack.c.l.b16 %v799
        %v1969 = vunpack.c.h.b16 %v799
        %v1970 = vunpack.c.l.b16 %v800
        %v1971 = vunpack.c.h.b16 %v800
        %v1972 = vunpack.c.l.b16 %v801
        %v1973 = vunpack.c.h.b16 %v801
        %v1974 = vunpack.c.l.b16 %v802
        %v1975 = vunpack.c.h.b16 %v802
        %v1976 = vunpack.c.l.b16 %v803
        %v1977 = vunpack.c.h.b16 %v803
        %v1978 = vunpack.c.l.b16 %v804
        %v1979 = vunpack.c.h.b16 %v804
        %v1980 = vunpack.c.l.b16 %v805
        %v1981 = vunpack.c.h.b16 %v805
        %v1982 = vunpack.c.l.b16 %v806
        %v1983 = vunpack.c.h.b16 %v806
        %v1984 = vunpack.c.l.b16 %v807
        %v1985 = vunpack.c.h.b16 %v807
        %v1986 = vunpack.c.l.b16 %v808
        %v1987 = vunpack.c.h.b16 %v808
        %v1988 = vunpack.c.l.b16 %v809
        %v1989 = vunpack.c.h.b16 %v809
        %v1990 = vunpack.c.l.b16 %v810
        %v1991 = vunpack.c.h.b16 %v810
        %v1992 = vunpack.c.l.b16 %v811
        %v1993 = vunpack.c.h.b16 %v811
        %v1994 = vunpack.c.l.b16 %v812
        %v1995 = vunpack.c.h.b16 %v812
        %v1996 = vunpack.c.l.b16 %v813
        %v1997 = vunpack.c.h.b16 %v813
        %v1998 = vunpack.c.l.b16 %v814
        %v1999 = vunpack.c.h.b16 %v814
        %v2000 = vunpack.c.l.b16 %v815
        %v2001 = vunpack.c.h.b16 %v815
        %v2002 = vunpack.c.l.b16 %v816
        %v2003 = vunpack.c.h.b16 %v816
        %v2004 = vunpack.c.l.b16 %v817
        %v2005 = vunpack.c.h.b16 %v817
        %v2006 = vunpack.c.l.b16 %v818
        %v2007 = vunpack.c.h.b16 %v818
        %v2008 = vunpack.c.l.b16 %v819
        %v2009 = vunpack.c.h.b16 %v819
        %v2010 = vunpack.c.l.b16 %v820
        %v2011 = vunpack.c.h.b16 %v820
        %v2012 = vunpack.c.l.b16 %v821
        %v2013 = vunpack.c.h.b16 %v821
        %v2014 = vunpack.c.l.b16 %v822
        %v2015 = vunpack.c.h.b16 %v822
        %v2016 = vunpack.c.l.b16 %v823
        %v2017 = vunpack.c.h.b16 %v823
        %v2018 = vunpack.c.l.b16 %v824
        %v2019 = vunpack.c.h.b16 %v824
        %v2020 = vunpack.c.l.b16 %v825
        %v2021 = vunpack.c.h.b16 %v825
        %v2022 = vunpack.c.l.b16 %v826
        %v2023 = vunpack.c.h.b16 %v826
        %v2024 = vunpack.c.l.b16 %v827
        %v2025 = vunpack.c.h.b16 %v827
        %v2026 = vunpack.c.l.b16 %v828
        %v2027 = vunpack.c.h.b16 %v828
        %v2028 = vunpack.c.l.b16 %v829
        %v2029 = vunpack.c.h.b16 %v829
        %v2030 = vunpack.c.l.b16 %v830
        %v2031 = vunpack.c.h.b16 %v830
        %v2032 = vunpack.c.l.b16 %v831
        %v2033 = vunpack.c.h.b16 %v831
        %v2034 = vunpack.c.l.b16 %v832
        %v2035 = vunpack.c.h.b16 %v832
        %v2036 = vunpack.c.l.b16 %v833
        %v2037 = vunpack.c.h.b16 %v833
        %v2038 = vunpack.c.l.b16 %v834
        %v2039 = vunpack.c.h.b16 %v834
        %v2040 = vunpack.c.l.b16 %v835
        %v2041 = vunpack.c.h.b16 %v835
        %v2042 = vunpack.c.l.b16 %v836
        %v2043 = vunpack.c.h.b16 %v836
        %v2044 = vunpack.c.l.b16 %v837
        %v2045 = vunpack.c.h.b16 %v837
        %v2046 = vunpack.c.l.b16 %v838
        %v2047 = vunpack.c.h.b16 %v838
        %v2048 = vunpack.c.l.b16 %v839
        %v2049 = vunpack.c.h.b16 %v839
        %v2050 = vunpack.c.l.b16 %v840
        %v2051 = vunpack.c.h.b16 %v840
        %v2052 = vunpack.c.l.b16 %v841
        %v2053 = vunpack.c.h.b16 %v841
        %v2054 = vunpack.c.l.b16 %v842
        %v2055 = vunpack.c.h.b16 %v842
        %v2056 = vunpack.c.l.b16 %v843
        %v2057 = vunpack.c.h.b16 %v843
        %v2058 = vunpack.c.l.b16 %v844
        %v2059 = vunpack.c.h.b16 %v844
        %v2060 = vunpack.c.l.b16 %v845
        %v2061 = vunpack.c.h.b16 %v845
        %v2062 = vunpack.c.l.b16 %v846
        %v2063 = vunpack.c.h.b16 %v846
        %v2064 = vunpack.c.l.b16 %v847
        %v2065 = vunpack.c.h.b16 %v847
        %v2066 = vunpack.c.l.b16 %v848
        %v2067 = vunpack.c.h.b16 %v848
        %v2068 = vunpack.c.l.b16 %v849
        %v2069 = vunpack.c.h.b16 %v849
        %v2070 = vunpack.c.l.b16 %v850
        %v2071 = vunpack.c.h.b16 %v850
        %v2072 = vunpack.c.l.b16 %v851
        %v2073 = vunpack.c.h.b16 %v851
        %v2074 = vunpack.c.l.b16 %v852
        %v2075 = vunpack.c.h.b16 %v852
        %v2076 = vunpack.c.l.b16 %v853
        %v2077 = vunpack.c.h.b16 %v853
        %v2078 = vunpack.c.l.b16 %v854
        %v2079 = vunpack.c.h.b16 %v854
        %v2080 = vunpack.c.l.b16 %v855
        %v2081 = vunpack.c.h.b16 %v855
        %v2082 = vunpack.c.l.b16 %v856
        %v2083 = vunpack.c.h.b16 %v856
        %v2084 = vunpack.c.l.b16 %v857
        %v2085 = vunpack.c.h.b16 %v857
        %v2086 = vunpack.c.l.b16 %v858
        %v2087 = vunpack.c.h.b16 %v858
        %v2088 = vunpack.c.l.b16 %v859
        %v2089 = vunpack.c.h.b16 %v859
        %v2090 = vunpack.c.l.b16 %v860
        %v2091 = vunpack.c.h.b16 %v860
        %v2092 = vunpack.c.l.b16 %v861
        %v2093 = vunpack.c.h.b16 %v861
        %v2094 = vunpack.c.l.b16 %v862
        %v2095 = vunpack.c.h.b16 %v862
        %v2096 = vunpack.c.l.b16 %v863
        %v2097 = vunpack.c.h.b16 %v863
        %v2098 = vunpack.c.l.b16 %v864
        %v2099 = vunpack.c.h.b16 %v864
        %v2100 = vunpack.c.l.b16 %v865
        %v2101 = vunpack.c.h.b16 %v865
        %v2102 = vunpack.c.l.b16 %v866
        %v2103 = vunpack.c.h.b16 %v866
        %v2104 = vunpack.c.l.b16 %v867
        %v2105 = vunpack.c.h.b16 %v867
        %v2106 = vunpack.c.l.b16 %v868
        %v2107 = vunpack.c.h.b16 %v868
        %v2108 = vunpack.c.l.b16 %v869
        %v2109 = vunpack.c.h.b16 %v869
        %v2110 = vunpack.c.l.b16 %v870
        %v2111 = vunpack.c.h.b16 %v870
        %v2112 = vunpack.c.l.b16 %v871
        %v2113 = vunpack.c.h.b16 %v871
        %v2114 = vunpack.c.l.b16 %v872
        %v2115 = vunpack.c.h.b16 %v872
        %v2116 = vunpack.c.l.b16 %v873
        %v2117 = vunpack.c.h.b16 %v873
        %v2118 = vunpack.c.l.b16 %v874
        %v2119 = vunpack.c.h.b16 %v874
        %v2120 = vunpack.c.l.b16 %v875
        %v2121 = vunpack.c.h.b16 %v875
        %v2122 = vunpack.c.l.b16 %v876
        %v2123 = vunpack.c.h.b16 %v876
        %v2124 = vunpack.c.l.b16 %v877
        %v2125 = vunpack.c.h.b16 %v877
        %v2126 = vunpack.c.l.b16 %v878
        %v2127 = vunpack.c.h.b16 %v878
        %v2128 = vunpack.c.l.b16 %v879
        %v2129 = vunpack.c.h.b16 %v879
        %v2130 = vunpack.c.l.b16 %v880
        %v2131 = vunpack.c.h.b16 %v880
        %v2132 = vunpack.c.l.b16 %v881
        %v2133 = vunpack.c.h.b16 %v881
        %v2134 = vunpack.c.l.b16 %v882
        %v2135 = vunpack.c.h.b16 %v882
        %v2136 = vunpack.c.l.b16 %v883
        %v2137 = vunpack.c.h.b16 %v883
        %v2138 = vunpack.c.l.b16 %v884
        %v2139 = vunpack.c.h.b16 %v884
        %v2140 = vunpack.c.l.b16 %v885
        %v2141 = vunpack.c.h.b16 %v885
        %v2142 = vunpack.c.l.b16 %v886
        %v2143 = vunpack.c.h.b16 %v886
        %v2144 = vunpack.c.l.b16 %v887
        %v2145 = vunpack.c.h.b16 %v887
        %v2146 = vunpack.c.l.b16 %v888
        %v2147 = vunpack.c.h.b16 %v888
        %v2148 = vunpack.c.l.b16 %v889
        %v2149 = vunpack.c.h.b16 %v889
        %v2150 = vunpack.c.l.b16 %v890
        %v2151 = vunpack.c.h.b16 %v890
        %v2152 = vunpack.c.l.b16 %v891
        %v2153 = vunpack.c.h.b16 %v891
        %v2154 = vunpack.c.l.b16 %v892
        %v2155 = vunpack.c.h.b16 %v892
        %v2156 = vunpack.c.l.b16 %v893
        %v2157 = vunpack.c.h.b16 %v893
        %v2158 = vunpack.c.l.b16 %v894
        %v2159 = vunpack.c.h.b16 %v894
        %v2160 = vunpack.c.l.b16 %v895
        %v2161 = vunpack.c.h.b16 %v895
        %v2162 = vunpack.c.l.b16 %v896
        %v2163 = vunpack.c.h.b16 %v896
        %v2164 = vunpack.c.l.b16 %v897
        %v2165 = vunpack.c.h.b16 %v897
        %v2166 = vunpack.c.l.b16 %v898
        %v2167 = vunpack.c.h.b16 %v898
        %v2168 = vunpack.c.l.b16 %v899
        %v2169 = vunpack.c.h.b16 %v899
        %v2170 = vunpack.c.l.b16 %v900
        %v2171 = vunpack.c.h.b16 %v900
        %v2172 = vunpack.c.l.b16 %v901
        %v2173 = vunpack.c.h.b16 %v901
        %v2174 = vunpack.c.l.b16 %v902
        %v2175 = vunpack.c.h.b16 %v902
        %v2176 = vunpack.c.l.b16 %v903
        %v2177 = vunpack.c.h.b16 %v903
        %v2178 = vunpack.c.l.b16 %v904
        %v2179 = vunpack.c.h.b16 %v904
        %v2180 = vunpack.c.l.b16 %v905
        %v2181 = vunpack.c.h.b16 %v905
        %v2182 = vunpack.c.l.b16 %v906
        %v2183 = vunpack.c.h.b16 %v906
        %v2184 = vunpack.c.l.b16 %v907
        %v2185 = vunpack.c.h.b16 %v907
        %v2186 = vunpack.c.l.b16 %v908
        %v2187 = vunpack.c.h.b16 %v908
        %v2188 = vunpack.c.l.b16 %v909
        %v2189 = vunpack.c.h.b16 %v909
        %v2190 = vunpack.c.l.b16 %v910
        %v2191 = vunpack.c.h.b16 %v910
        %v2192 = vunpack.c.l.b16 %v911
        %v2193 = vunpack.c.h.b16 %v911
        %v2194 = vunpack.c.l.b16 %v912
        %v2195 = vunpack.c.h.b16 %v912
        %v2196 = vunpack.c.l.b16 %v913
        %v2197 = vunpack.c.h.b16 %v913
        %v2198 = vunpack.c.l.b16 %v914
        %v2199 = vunpack.c.h.b16 %v914
        %v2200 = vunpack.c.l.b16 %v915
        %v2201 = vunpack.c.h.b16 %v915
        %v2202 = vunpack.c.l.b16 %v916
        %v2203 = vunpack.c.h.b16 %v916
        %v2204 = vunpack.c.l.b16 %v917
        %v2205 = vunpack.c.h.b16 %v917
        %v2206 = vunpack.c.l.b16 %v918
        %v2207 = vunpack.c.h.b16 %v918
        %v2208 = vunpack.c.l.b16 %v919
        %v2209 = vunpack.c.h.b16 %v919
        %v2210 = vunpack.c.l.b16 %v920
        %v2211 = vunpack.c.h.b16 %v920
        %v2212 = vunpack.c.l.b16 %v921
        %v2213 = vunpack.c.h.b16 %v921
        %v2214 = vunpack.c.l.b16 %v922
        %v2215 = vunpack.c.h.b16 %v922
        %v2216 = vunpack.c.l.b16 %v923
        %v2217 = vunpack.c.h.b16 %v923
        %v2218 = vunpack.c.l.b16 %v924
        %v2219 = vunpack.c.h.b16 %v924
        %v2220 = vunpack.c.l.b16 %v925
        %v2221 = vunpack.c.h.b16 %v925
        %v2222 = vunpack.c.l.b16 %v926
        %v2223 = vunpack.c.h.b16 %v926
        %v2224 = vunpack.c.l.b16 %v927
        %v2225 = vunpack.c.h.b16 %v927
        %v2226 = vunpack.c.l.b16 %v928
        %v2227 = vunpack.c.h.b16 %v928
        %v2228 = vunpack.c.l.b16 %v929
        %v2229 = vunpack.c.h.b16 %v929
        %v2230 = vunpack.c.l.b16 %v930
        %v2231 = vunpack.c.h.b16 %v930
        %v2232 = vunpack.c.l.b16 %v931
        %v2233 = vunpack.c.h.b16 %v931
        %v2234 = vunpack.c.l.b16 %v932
        %v2235 = vunpack.c.h.b16 %v932
        %v2236 = vunpack.c.l.b16 %v933
        %v2237 = vunpack.c.h.b16 %v933
        %v2238 = vunpack.c.l.b16 %v934
        %v2239 = vunpack.c.h.b16 %v934
        %v2240 = vunpack.c.l.b16 %v935
        %v2241 = vunpack.c.h.b16 %v935
        %v2242 = vunpack.c.l.b16 %v936
        %v2243 = vunpack.c.h.b16 %v936
        %v2244 = vunpack.c.l.b16 %v937
        %v2245 = vunpack.c.h.b16 %v937
        %v2246 = vunpack.c.l.b16 %v938
        %v2247 = vunpack.c.h.b16 %v938
        %v2248 = vunpack.c.l.b16 %v939
        %v2249 = vunpack.c.h.b16 %v939
        %v2250 = vunpack.c.l.b16 %v940
        %v2251 = vunpack.c.h.b16 %v940
        %v2252 = vunpack.c.l.b16 %v941
        %v2253 = vunpack.c.h.b16 %v941
        %v2254 = vunpack.c.l.b16 %v942
        %v2255 = vunpack.c.h.b16 %v942
        %v2256 = vunpack.c.l.b16 %v943
        %v2257 = vunpack.c.h.b16 %v943
        %v2258 = vunpack.c.l.b16 %v944
        %v2259 = vunpack.c.h.b16 %v944
        %v2260 = vunpack.c.l.b16 %v945
        %v2261 = vunpack.c.h.b16 %v945
        %v2262 = vunpack.c.l.b16 %v946
        %v2263 = vunpack.c.h.b16 %v946
        %v2264 = vunpack.c.l.b16 %v947
        %v2265 = vunpack.c.h.b16 %v947
        %v2266 = vunpack.c.l.b16 %v948
        %v2267 = vunpack.c.h.b16 %v948
        %v2268 = vunpack.c.l.b16 %v949
        %v2269 = vunpack.c.h.b16 %v949
        %v2270 = vunpack.c.l.b16 %v950
        %v2271 = vunpack.c.h.b16 %v950
        %v2272 = vunpack.c.l.b16 %v951
        %v2273 = vunpack.c.h.b16 %v951
        %v2274 = vunpack.c.l.b16 %v952
        %v2275 = vunpack.c.h.b16 %v952
        %v2276 = vunpack.c.l.b16 %v953
        %v2277 = vunpack.c.h.b16 %v953
        %v2278 = vunpack.c.l.b16 %v954
        %v2279 = vunpack.c.h.b16 %v954
        %v2280 = vunpack.c.l.b16 %v955
        %v2281 = vunpack.c.h.b16 %v955
        %v2282 = vunpack.c.l.b16 %v956
        %v2283 = vunpack.c.h.b16 %v956
        %v2284 = vunpack.c.l.b16 %v957
        %v2285 = vunpack.c.h.b16 %v957
        %v2286 = vunpack.c.l.b16 %v958
        %v2287 = vunpack.c.h.b16 %v958
        %v2288 = vunpack.c.l.b16 %v959
        %v2289 = vunpack.c.h.b16 %v959
        %v2290 = vunpack.c.l.b16 %v960
        %v2291 = vunpack.c.h.b16 %v960
        %v2292 = vunpack.c.l.b16 %v961
        %v2293 = vunpack.c.h.b16 %v961
        %v2294 = vunpack.c.l.b16 %v962
        %v2295 = vunpack.c.h.b16 %v962
        %v2296 = vunpack.c.l.b16 %v963
        %v2297 = vunpack.c.h.b16 %v963
        %v2298 = vunpack.c.l.b16 %v964
        %v2299 = vunpack.c.h.b16 %v964
        %v2300 = vunpack.c.l.b16 %v965
        %v2301 = vunpack.c.h.b16 %v965
        %v2302 = vunpack.c.l.b16 %v966
        %v2303 = vunpack.c.h.b16 %v966
        %v2304 = vunpack.c.l.b16 %v967
        %v2305 = vunpack.c.h.b16 %v967
        %v2306 = vunpack.c.l.b16 %v968
        %v2307 = vunpack.c.h.b16 %v968
        %v2308 = vunpack.c.l.b16 %v969
        %v2309 = vunpack.c.h.b16 %v969
        %v2310 = vunpack.c.l.b16 %v970
        %v2311 = vunpack.c.h.b16 %v970
        %v2312 = vunpack.c.l.b16 %v971
        %v2313 = vunpack.c.h.b16 %v971
        %v2314 = vunpack.c.l.b16 %v972
        %v2315 = vunpack.c.h.b16 %v972
        %v2316 = vunpack.c.l.b16 %v973
        %v2317 = vunpack.c.h.b16 %v973
        %v2318 = vunpack.c.l.b16 %v974
        %v2319 = vunpack.c.h.b16 %v974
        %v2320 = vunpack.c.l.b16 %v975
        %v2321 = vunpack.c.h.b16 %v975
        %v2322 = vunpack.c.l.b16 %v976
        %v2323 = vunpack.c.h.b16 %v976
        %v2324 = vunpack.c.l.b16 %v977
        %v2325 = vunpack.c.h.b16 %v977
        %v2326 = vunpack.c.l.b16 %v978
        %v2327 = vunpack.c.h.b16 %v978
        %v2328 = vunpack.c.l.b16 %v979
        %v2329 = vunpack.c.h.b16 %v979
        %v2330 = vunpack.c.l.b16 %v980
        %v2331 = vunpack.c.h.b16 %v980
        %v2332 = vunpack.c.l.b16 %v981
        %v2333 = vunpack.c.h.b16 %v981
        %v2334 = vunpack.c.l.b16 %v982
        %v2335 = vunpack.c.h.b16 %v982
        %v2336 = vunpack.c.l.b16 %v983
        %v2337 = vunpack.c.h.b16 %v983
        %v2338 = vunpack.c.l.b16 %v984
        %v2339 = vunpack.c.h.b16 %v984
        %v2340 = vunpack.c.l.b16 %v985
        %v2341 = vunpack.c.h.b16 %v985
        %v2342 = vunpack.c.l.b16 %v986
        %v2343 = vunpack.c.h.b16 %v986
        %v2344 = vunpack.c.l.b16 %v987
        %v2345 = vunpack.c.h.b16 %v987
        %v2346 = vunpack.c.l.b16 %v988
        %v2347 = vunpack.c.h.b16 %v988
        %v2348 = vunpack.c.l.b16 %v989
        %v2349 = vunpack.c.h.b16 %v989
        %v2350 = vunpack.c.l.b16 %v990
        %v2351 = vunpack.c.h.b16 %v990
        %v2352 = vunpack.c.l.b16 %v991
        %v2353 = vunpack.c.h.b16 %v991
        %v2354 = vunpack.c.l.b16 %v992
        %v2355 = vunpack.c.h.b16 %v992
        %v2356 = vunpack.c.l.b16 %v993
        %v2357 = vunpack.c.h.b16 %v993
        %v2358 = vunpack.c.l.b16 %v994
        %v2359 = vunpack.c.h.b16 %v994
        %v2360 = vunpack.c.l.b16 %v995
        %v2361 = vunpack.c.h.b16 %v995
        %v2362 = vunpack.c.l.b16 %v996
        %v2363 = vunpack.c.h.b16 %v996
        %v2364 = vunpack.c.l.b16 %v997
        %v2365 = vunpack.c.h.b16 %v997
        %v2366 = vunpack.c.l.b16 %v998
        %v2367 = vunpack.c.h.b16 %v998
        %v2368 = vunpack.c.l.b16 %v999
        %v2369 = vunpack.c.h.b16 %v999
        %v2370 = vunpack.c.l.b16 %v1000
        %v2371 = vunpack.c.h.b16 %v1000
        %v2372 = vunpack.c.l.b16 %v1001
        %v2373 = vunpack.c.h.b16 %v1001
        %v2374 = vunpack.c.l.b16 %v1002
        %v2375 = vunpack.c.h.b16 %v1002
        %v2376 = vunpack.c.l.b16 %v1003
        %v2377 = vunpack.c.h.b16 %v1003
        %v2378 = vunpack.c.l.b16 %v1004
        %v2379 = vunpack.c.h.b16 %v1004
        %v2380 = vunpack.c.l.b16 %v1005
        %v2381 = vunpack.c.h.b16 %v1005
        %v2382 = vunpack.c.l.b16 %v1006
        %v2383 = vunpack.c.h.b16 %v1006
        %v2384 = vunpack.c.l.b16 %v1007
        %v2385 = vunpack.c.h.b16 %v1007
        %v2386 = vunpack.c.l.b16 %v1008
        %v2387 = vunpack.c.h.b16 %v1008
        %v2388 = vunpack.c.l.b16 %v1009
        %v2389 = vunpack.c.h.b16 %v1009
        %v2390 = vunpack.c.l.b16 %v1010
        %v2391 = vunpack.c.h.b16 %v1010
        %v2392 = vunpack.c.l.b16 %v1011
        %v2393 = vunpack.c.h.b16 %v1011
        %v2394 = vunpack.c.l.b16 %v1012
        %v2395 = vunpack.c.h.b16 %v1012
        %v2396 = vunpack.c.l.b16 %v1013
        %v2397 = vunpack.c.h.b16 %v1013
        %v2398 = vunpack.c.l.b16 %v1014
        %v2399 = vunpack.c.h.b16 %v1014
        %v2400 = vunpack.c.l.b16 %v1015
        %v2401 = vunpack.c.h.b16 %v1015
        %v2402 = vunpack.c.l.b16 %v1016
        %v2403 = vunpack.c.h.b16 %v1016
        %v2404 = vunpack.c.l.b16 %v1017
        %v2405 = vunpack.c.h.b16 %v1017
        %v2406 = vunpack.c.l.b16 %v1018
        %v2407 = vunpack.c.h.b16 %v1018
        %v2408 = vunpack.c.l.b16 %v1019
        %v2409 = vunpack.c.h.b16 %v1019
        %v2410 = vunpack.c.l.b16 %v1020
        %v2411 = vunpack.c.h.b16 %v1020
        %v2412 = vunpack.c.l.b16 %v1021
        %v2413 = vunpack.c.h.b16 %v1021
        %v2414 = vunpack.c.l.b16 %v1022
        %v2415 = vunpack.c.h.b16 %v1022
        %v2416 = vunpack.c.l.b16 %v1023
        %v2417 = vunpack.c.h.b16 %v1023
        %v2418 = vunpack.c.l.b16 %v1024
        %v2419 = vunpack.c.h.b16 %v1024
        %v2420 = vunpack.c.l.b16 %v1025
        %v2421 = vunpack.c.h.b16 %v1025
        %v2422 = vunpack.c.l.b16 %v1026
        %v2423 = vunpack.c.h.b16 %v1026
        %v2424 = vunpack.c.l.b16 %v1027
        %v2425 = vunpack.c.h.b16 %v1027
        %v2426 = vunpack.c.l.b16 %v1028
        %v2427 = vunpack.c.h.b16 %v1028
        %v2428 = vunpack.c.l.b16 %v1029
        %v2429 = vunpack.c.h.b16 %v1029
        %v2430 = vunpack.c.l.b16 %v1030
        %v2431 = vunpack.c.h.b16 %v1030
        %v2432 = vunpack.c.l.b16 %v1031
        %v2433 = vunpack.c.h.b16 %v1031
        %v2434 = vunpack.c.l.b16 %v1032
        %v2435 = vunpack.c.h.b16 %v1032
        %v2436 = vunpack.c.l.b16 %v1033
        %v2437 = vunpack.c.h.b16 %v1033
        %v2438 = vunpack.c.l.b16 %v1034
        %v2439 = vunpack.c.h.b16 %v1034
        %v2440 = vunpack.c.l.b16 %v1035
        %v2441 = vunpack.c.h.b16 %v1035
        %v2442 = vunpack.c.l.b16 %v1036
        %v2443 = vunpack.c.h.b16 %v1036
        %v2444 = vunpack.c.l.b16 %v1037
        %v2445 = vunpack.c.h.b16 %v1037
        %v2446 = vunpack.c.l.b16 %v1038
        %v2447 = vunpack.c.h.b16 %v1038
        %v2448 = vunpack.c.l.b16 %v1039
        %v2449 = vunpack.c.h.b16 %v1039
        %v2450 = vunpack.c.l.b16 %v1040
        %v2451 = vunpack.c.h.b16 %v1040
        %v2452 = vunpack.c.l.b16 %v1041
        %v2453 = vunpack.c.h.b16 %v1041
        %v2454 = vunpack.c.l.b16 %v1042
        %v2455 = vunpack.c.h.b16 %v1042
        %v2456 = vunpack.c.l.b16 %v1043
        %v2457 = vunpack.c.h.b16 %v1043
        %v2458 = vunpack.c.l.b16 %v1044
        %v2459 = vunpack.c.h.b16 %v1044
        %v2460 = vunpack.c.l.b16 %v1045
        %v2461 = vunpack.c.h.b16 %v1045
        %v2462 = vunpack.c.l.b16 %v1046
        %v2463 = vunpack.c.h.b16 %v1046
        %v2464 = vunpack.c.l.b16 %v1047
        %v2465 = vunpack.c.h.b16 %v1047
        %v2466 = vunpack.c.l.b16 %v1048
        %v2467 = vunpack.c.h.b16 %v1048
        %v2468 = vunpack.c.l.b16 %v1049
        %v2469 = vunpack.c.h.b16 %v1049
        %v2470 = vunpack.c.l.b16 %v1050
        %v2471 = vunpack.c.h.b16 %v1050
        %v2472 = vunpack.c.l.b16 %v1051
        %v2473 = vunpack.c.h.b16 %v1051
        %v2474 = vunpack.c.l.b16 %v1052
        %v2475 = vunpack.c.h.b16 %v1052
        %v2476 = vunpack.c.l.b16 %v1053
        %v2477 = vunpack.c.h.b16 %v1053
        %v2478 = vunpack.c.l.b16 %v1054
        %v2479 = vunpack.c.h.b16 %v1054
        %v2480 = vunpack.c.l.b16 %v1055
        %v2481 = vunpack.c.h.b16 %v1055
        %v2482 = vunpack.c.l.b16 %v1056
        %v2483 = vunpack.c.h.b16 %v1056
        %v2484 = vunpack.c.l.b16 %v1057
        %v2485 = vunpack.c.h.b16 %v1057
        %v2486 = vunpack.c.l.b16 %v1058
        %v2487 = vunpack.c.h.b16 %v1058
        %v2488 = vunpack.c.l.b16 %v1059
        %v2489 = vunpack.c.h.b16 %v1059
        %v2490 = vunpack.c.l.b16 %v1060
        %v2491 = vunpack.c.h.b16 %v1060
        %v2492 = vunpack.c.l.b16 %v1061
        %v2493 = vunpack.c.h.b16 %v1061
        %v2494 = vunpack.c.l.b16 %v1062
        %v2495 = vunpack.c.h.b16 %v1062
        %v2496 = vunpack.c.l.b16 %v1063
        %v2497 = vunpack.c.h.b16 %v1063
        %v2498 = vunpack.c.l.b16 %v1064
        %v2499 = vunpack.c.h.b16 %v1064
        %v2500 = vunpack.c.l.b16 %v1065
        %v2501 = vunpack.c.h.b16 %v1065
        %v2502 = vunpack.c.l.b16 %v1066
        %v2503 = vunpack.c.h.b16 %v1066
        %v2504 = vunpack.c.l.b16 %v1067
        %v2505 = vunpack.c.h.b16 %v1067
        %v2506 = vunpack.c.l.b16 %v1068
        %v2507 = vunpack.c.h.b16 %v1068
        %v2508 = vunpack.c.l.b16 %v1069
        %v2509 = vunpack.c.h.b16 %v1069
        %v2510 = vunpack.c.l.b16 %v1070
        %v2511 = vunpack.c.h.b16 %v1070
        %v2512 = vunpack.c.l.b16 %v1071
        %v2513 = vunpack.c.h.b16 %v1071
        %v2514 = vunpack.c.l.b16 %v1072
        %v2515 = vunpack.c.h.b16 %v1072
        %v2516 = vunpack.c.l.b16 %v1073
        %v2517 = vunpack.c.h.b16 %v1073
        %v2518 = vunpack.c.l.b16 %v1074
        %v2519 = vunpack.c.h.b16 %v1074
        %v2520 = vunpack.c.l.b16 %v1075
        %v2521 = vunpack.c.h.b16 %v1075
        %v2522 = vunpack.c.l.b16 %v1076
        %v2523 = vunpack.c.h.b16 %v1076
        %v2524 = vunpack.c.l.b16 %v1077
        %v2525 = vunpack.c.h.b16 %v1077
        %v2526 = vunpack.c.l.b16 %v1078
        %v2527 = vunpack.c.h.b16 %v1078
        %v2528 = vunpack.c.l.b16 %v1079
        %v2529 = vunpack.c.h.b16 %v1079
        %v2530 = vunpack.c.l.b16 %v1080
        %v2531 = vunpack.c.h.b16 %v1080
        %v2532 = vunpack.c.l.b16 %v1081
        %v2533 = vunpack.c.h.b16 %v1081
        %v2534 = vunpack.c.l.b16 %v1082
        %v2535 = vunpack.c.h.b16 %v1082
        %v2536 = vunpack.c.l.b16 %v1083
        %v2537 = vunpack.c.h.b16 %v1083
        %v2538 = vunpack.c.l.b16 %v1084
        %v2539 = vunpack.c.h.b16 %v1084
        %v2540 = vunpack.c.l.b16 %v1085
        %v2541 = vunpack.c.h.b16 %v1085
        %v2542 = vunpack.c.l.b16 %v1086
        %v2543 = vunpack.c.h.b16 %v1086
        %v2544 = vunpack.c.l.b16 %v1087
        %v2545 = vunpack.c.h.b16 %v1087
        %v2546 = vunpack.c.l.b16 %v1088
        %v2547 = vunpack.c.h.b16 %v1088
        %v2548 = vunpack.c.l.b16 %v1089
        %v2549 = vunpack.c.h.b16 %v1089
        %v2550 = vunpack.c.l.b16 %v1090
        %v2551 = vunpack.c.h.b16 %v1090
        %v2552 = vunpack.c.l.b16 %v1091
        %v2553 = vunpack.c.h.b16 %v1091
        %v2554 = vunpack.c.l.b16 %v1092
        %v2555 = vunpack.c.h.b16 %v1092
        %v2556 = vunpack.c.l.b16 %v1093
        %v2557 = vunpack.c.h.b16 %v1093
        %v2558 = vunpack.c.l.b16 %v1094
        %v2559 = vunpack.c.h.b16 %v1094
        %v2560 = vunpack.c.l.b16 %v1095
        %v2561 = vunpack.c.h.b16 %v1095
        %v2562 = vunpack.c.l.b16 %v1096
        %v2563 = vunpack.c.h.b16 %v1096
        %v2564 = vunpack.c.l.b16 %v1097
        %v2565 = vunpack.c.h.b16 %v1097
        %v2566 = vunpack.c.l.b16 %v1098
        %v2567 = vunpack.c.h.b16 %v1098
        %v2568 = vunpack.c.l.b16 %v1099
        %v2569 = vunpack.c.h.b16 %v1099
        %v2570 = vunpack.c.l.b16 %v1100
        %v2571 = vunpack.c.h.b16 %v1100
        %v2572 = vunpack.c.l.b16 %v1101
        %v2573 = vunpack.c.h.b16 %v1101
        %v2574 = vunpack.c.l.b16 %v1102
        %v2575 = vunpack.c.h.b16 %v1102
        %v2576 = vunpack.c.l.b16 %v1103
        %v2577 = vunpack.c.h.b16 %v1103
        %v2578 = vunpack.c.l.b16 %v1104
        %v2579 = vunpack.c.h.b16 %v1104
        %v2580 = vunpack.c.l.b16 %v1105
        %v2581 = vunpack.c.h.b16 %v1105
        %v2582 = vunpack.c.l.b16 %v1106
        %v2583 = vunpack.c.h.b16 %v1106
        %v2584 = vunpack.c.l.b16 %v1107
        %v2585 = vunpack.c.h.b16 %v1107
        %v2586 = vunpack.c.l.b16 %v1108
        %v2587 = vunpack.c.h.b16 %v1108
        %v2588 = vunpack.c.l.b16 %v1109
        %v2589 = vunpack.c.h.b16 %v1109
        %v2590 = vunpack.c.l.b16 %v1110
        %v2591 = vunpack.c.h.b16 %v1110
        %v2592 = vunpack.c.l.b16 %v1111
        %v2593 = vunpack.c.h.b16 %v1111
        %v2594 = vunpack.c.l.b16 %v1112
        %v2595 = vunpack.c.h.b16 %v1112
        %v2596 = vunpack.c.l.b16 %v1113
        %v2597 = vunpack.c.h.b16 %v1113
        %v2598 = vunpack.c.l.b16 %v1114
        %v2599 = vunpack.c.h.b16 %v1114
        %v2600 = vunpack.c.l.b16 %v1115
        %v2601 = vunpack.c.h.b16 %v1115
        %v2602 = vunpack.c.l.b16 %v1116
        %v2603 = vunpack.c.h.b16 %v1116
        %v2604 = vunpack.c.l.b16 %v1117
        %v2605 = vunpack.c.h.b16 %v1117
        %v2606 = vunpack.c.l.b16 %v1118
        %v2607 = vunpack.c.h.b16 %v1118
        %v2608 = vunpack.c.l.b16 %v1119
        %v2609 = vunpack.c.h.b16 %v1119
        %v2610 = vunpack.c.l.b16 %v1120
        %v2611 = vunpack.c.h.b16 %v1120
        %v2612 = vunpack.c.l.b16 %v1121
        %v2613 = vunpack.c.h.b16 %v1121
        %v2614 = vunpack.c.l.b16 %v1122
        %v2615 = vunpack.c.h.b16 %v1122
        %v2616 = vunpack.c.l.b16 %v1123
        %v2617 = vunpack.c.h.b16 %v1123
        %v2618 = vunpack.c.l.b16 %v1124
        %v2619 = vunpack.c.h.b16 %v1124
        %v2620 = vunpack.c.l.b16 %v1125
        %v2621 = vunpack.c.h.b16 %v1125
        %v2622 = vunpack.c.l.b16 %v1126
        %v2623 = vunpack.c.h.b16 %v1126
        %v2624 = vunpack.c.l.b16 %v1127
        %v2625 = vunpack.c.h.b16 %v1127
        %v2626 = vunpack.c.l.b16 %v1128
        %v2627 = vunpack.c.h.b16 %v1128
        %v2628 = vunpack.c.l.b16 %v1129
        %v2629 = vunpack.c.h.b16 %v1129
        %v2630 = vunpack.c.l.b16 %v1130
        %v2631 = vunpack.c.h.b16 %v1130
        %v2632 = vunpack.c.l.b16 %v1131
        %v2633 = vunpack.c.h.b16 %v1131
        %v2634 = vunpack.c.l.b16 %v1132
        %v2635 = vunpack.c.h.b16 %v1132
        %v2636 = vunpack.c.l.b16 %v1133
        %v2637 = vunpack.c.h.b16 %v1133
        %v2638 = vunpack.c.l.b16 %v1134
        %v2639 = vunpack.c.h.b16 %v1134
        %v2640 = vunpack.c.l.b16 %v1135
        %v2641 = vunpack.c.h.b16 %v1135
        %v2642 = vunpack.c.l.b16 %v1136
        %v2643 = vunpack.c.h.b16 %v1136
        %v2644 = vunpack.c.l.b16 %v1137
        %v2645 = vunpack.c.h.b16 %v1137
        %v2646 = vunpack.c.l.b16 %v1138
        %v2647 = vunpack.c.h.b16 %v1138
        %v2648 = vunpack.c.l.b16 %v1139
        %v2649 = vunpack.c.h.b16 %v1139
        %v2650 = vunpack.c.l.b16 %v1140
        %v2651 = vunpack.c.h.b16 %v1140
        %v2652 = vunpack.c.l.b16 %v1141
        %v2653 = vunpack.c.h.b16 %v1141
        %v2654 = vunpack.c.l.b16 %v1142
        %v2655 = vunpack.c.h.b16 %v1142
        %v2656 = vunpack.c.l.b16 %v1143
        %v2657 = vunpack.c.h.b16 %v1143
        %v2658 = vunpack.c.l.b16 %v1144
        %v2659 = vunpack.c.h.b16 %v1144
        %v2660 = vunpack.c.l.b16 %v1145
        %v2661 = vunpack.c.h.b16 %v1145
        %v2662 = vunpack.c.l.b16 %v1146
        %v2663 = vunpack.c.h.b16 %v1146
        %v2664 = vunpack.c.l.b16 %v1147
        %v2665 = vunpack.c.h.b16 %v1147
        %v2666 = vunpack.c.l.b16 %v1148
        %v2667 = vunpack.c.h.b16 %v1148
        %v2668 = vunpack.c.l.b16 %v1149
        %v2669 = vunpack.c.h.b16 %v1149
        %v2670 = vunpack.c.l.b16 %v1150
        %v2671 = vunpack.c.h.b16 %v1150
        %v2672 = vunpack.c.l.b16 %v1151
        %v2673 = vunpack.c.h.b16 %v1151
        %v2674 = vunpack.c.l.b16 %v1152
        %v2675 = vunpack.c.h.b16 %v1152
        %v2676 = vunpack.c.l.b16 %v1153
        %v2677 = vunpack.c.h.b16 %v1153
        %v2678 = vunpack.c.l.b16 %v1154
        %v2679 = vunpack.c.h.b16 %v1154
        %v2680 = vunpack.c.l.b16 %v1155
        %v2681 = vunpack.c.h.b16 %v1155
        %v2682 = vunpack.c.l.b16 %v1156
        %v2683 = vunpack.c.h.b16 %v1156
        %v2684 = vunpack.c.l.b16 %v1157
        %v2685 = vunpack.c.h.b16 %v1157
        %v2686 = vunpack.c.l.b16 %v1158
        %v2687 = vunpack.c.h.b16 %v1158
        %v2688 = vunpack.c.l.b16 %v1159
        %v2689 = vunpack.c.h.b16 %v1159
        %v2690 = vunpack.c.l.b16 %v1160
        %v2691 = vunpack.c.h.b16 %v1160
        %v2692 = vunpack.c.l.b16 %v1161
        %v2693 = vunpack.c.h.b16 %v1161
        %v2694 = vunpack.c.l.b16 %v1162
        %v2695 = vunpack.c.h.b16 %v1162
        %v2696 = vunpack.c.l.b16 %v1163
        %v2697 = vunpack.c.h.b16 %v1163
        %v2698 = vunpack.c.l.b16 %v1164
        %v2699 = vunpack.c.h.b16 %v1164
        %v2700 = vunpack.c.l.b16 %v1165
        %v2701 = vunpack.c.h.b16 %v1165
        %v2702 = vunpack.c.l.b16 %v1166
        %v2703 = vunpack.c.h.b16 %v1166
        %v2704 = vunpack.c.l.b16 %v1167
        %v2705 = vunpack.c.h.b16 %v1167
        %v2706 = vunpack.c.l.b16 %v1168
        %v2707 = vunpack.c.h.b16 %v1168
        %v2708 = vunpack.c.l.b16 %v1169
        %v2709 = vunpack.c.h.b16 %v1169
        %v2710 = vunpack.c.l.b16 %v1170
        %v2711 = vunpack.c.h.b16 %v1170
        %v2712 = vunpack.c.l.b16 %v1171
        %v2713 = vunpack.c.h.b16 %v1171
        %v2714 = vunpack.c.l.b16 %v1172
        %v2715 = vunpack.c.h.b16 %v1172
        %v2716 = vunpack.c.l.b16 %v1173
        %v2717 = vunpack.c.h.b16 %v1173
        %v2718 = vunpack.c.l.b16 %v1174
        %v2719 = vunpack.c.h.b16 %v1174
        %v2720 = vunpack.c.l.b16 %v1175
        %v2721 = vunpack.c.h.b16 %v1175
        %v2722 = vunpack.c.l.b16 %v1176
        %v2723 = vunpack.c.h.b16 %v1176
        %v2724 = vunpack.c.l.b16 %v1177
        %v2725 = vunpack.c.h.b16 %v1177
        %v2726 = vunpack.c.l.b16 %v1178
        %v2727 = vunpack.c.h.b16 %v1178
        %v2728 = vunpack.c.l.b16 %v1179
        %v2729 = vunpack.c.h.b16 %v1179
        %v2730 = vunpack.c.l.b16 %v1180
        %v2731 = vunpack.c.h.b16 %v1180
        %v2732 = vunpack.c.l.b16 %v1181
        %v2733 = vunpack.c.h.b16 %v1181
        %v2734 = vunpack.c.l.b16 %v1182
        %v2735 = vunpack.c.h.b16 %v1182
        %v2736 = vunpack.c.l.b16 %v1183
        %v2737 = vunpack.c.h.b16 %v1183
        %v2738 = vpack.c.b16 %v1722, %v1714
        %v2739 = vpack.c.b16 %v1723, %v1715
        %v2740 = vpack.c.b16 %v1724, %v1716
        %v2741 = vpack.c.b16 %v1725, %v1717
        %v2742 = vpack.c.b16 %v1726, %v1718
        %v2743 = vpack.c.b16 %v1727, %v1719
        %v2744 = vpack.c.b16 %v1728, %v1720
        %v2745 = vpack.c.b16 %v1729, %v1721
        %v2746 = vpack.c.b16 %v1738, %v1730
        %v2747 = vpack.c.b16 %v1739, %v1731
        %v2748 = vpack.c.b16 %v1740, %v1732
        %v2749 = vpack.c.b16 %v1741, %v1733
        %v2750 = vpack.c.b16 %v1742, %v1734
        %v2751 = vpack.c.b16 %v1743, %v1735
        %v2752 = vpack.c.b16 %v1744, %v1736
        %v2753 = vpack.c.b16 %v1745, %v1737
        %v2754 = vpack.c.b16 %v1754, %v1746
        %v2755 = vpack.c.b16 %v1755, %v1747
        %v2756 = vpack.c.b16 %v1756, %v1748
        %v2757 = vpack.c.b16 %v1757, %v1749
        %v2758 = vpack.c.b16 %v1758, %v1750
        %v2759 = vpack.c.b16 %v1759, %v1751
        %v2760 = vpack.c.b16 %v1760, %v1752
        %v2761 = vpack.c.b16 %v1761, %v1753
        %v2762 = vpack.c.b16 %v1770, %v1762
        %v2763 = vpack.c.b16 %v1771, %v1763
        %v2764 = vpack.c.b16 %v1772, %v1764
        %v2765 = vpack.c.b16 %v1773, %v1765
        %v2766 = vpack.c.b16 %v1774, %v1766
        %v2767 = vpack.c.b16 %v1775, %v1767
        %v2768 = vpack.c.b16 %v1776, %v1768
        %v2769 = vpack.c.b16 %v1777, %v1769
        %v2770 = vpack.c.b16 %v1786, %v1778
        %v2771 = vpack.c.b16 %v1787, %v1779
        %v2772 = vpack.c.b16 %v1788, %v1780
        %v2773 = vpack.c.b16 %v1789, %v1781
        %v2774 = vpack.c.b16 %v1790, %v1782
        %v2775 = vpack.c.b16 %v1791, %v1783
        %v2776 = vpack.c.b16 %v1792, %v1784
        %v2777 = vpack.c.b16 %v1793, %v1785
        %v2778 = vpack.c.b16 %v1802, %v1794
        %v2779 = vpack.c.b16 %v1803, %v1795
        %v2780 = vpack.c.b16 %v1804, %v1796
        %v2781 = vpack.c.b16 %v1805, %v1797
        %v2782 = vpack.c.b16 %v1806, %v1798
        %v2783 = vpack.c.b16 %v1807, %v1799
        %v2784 = vpack.c.b16 %v1808, %v1800
        %v2785 = vpack.c.b16 %v1809, %v1801
        %v2786 = vpack.c.b16 %v1818, %v1810
        %v2787 = vpack.c.b16 %v1819, %v1811
        %v2788 = vpack.c.b16 %v1820, %v1812
        %v2789 = vpack.c.b16 %v1821, %v1813
        %v2790 = vpack.c.b16 %v1822, %v1814
        %v2791 = vpack.c.b16 %v1823, %v1815
        %v2792 = vpack.c.b16 %v1824, %v1816
        %v2793 = vpack.c.b16 %v1825, %v1817
        %v2794 = vpack.c.b16 %v1834, %v1826
        %v2795 = vpack.c.b16 %v1835, %v1827
        %v2796 = vpack.c.b16 %v1836, %v1828
        %v2797 = vpack.c.b16 %v1837, %v1829
        %v2798 = vpack.c.b16 %v1838, %v1830
        %v2799 = vpack.c.b16 %v1839, %v1831
        %v2800 = vpack.c.b16 %v1840, %v1832
        %v2801 = vpack.c.b16 %v1841, %v1833
        %v2802 = vpack.c.b16 %v1850, %v1842
        %v2803 = vpack.c.b16 %v1851, %v1843
        %v2804 = vpack.c.b16 %v1852, %v1844
        %v2805 = vpack.c.b16 %v1853, %v1845
        %v2806 = vpack.c.b16 %v1854, %v1846
        %v2807 = vpack.c.b16 %v1855, %v1847
        %v2808 = vpack.c.b16 %v1856, %v1848
        %v2809 = vpack.c.b16 %v1857, %v1849
        %v2810 = vpack.c.b16 %v1866, %v1858
        %v2811 = vpack.c.b16 %v1867, %v1859
        %v2812 = vpack.c.b16 %v1868, %v1860
        %v2813 = vpack.c.b16 %v1869, %v1861
        %v2814 = vpack.c.b16 %v1870, %v1862
        %v2815 = vpack.c.b16 %v1871, %v1863
        %v2816 = vpack.c.b16 %v1872, %v1864
        %v2817 = vpack.c.b16 %v1873, %v1865
        %v2818 = vpack.c.b16 %v1882, %v1874
        %v2819 = vpack.c.b16 %v1883, %v1875
        %v2820 = vpack.c.b16 %v1884, %v1876
        %v2821 = vpack.c.b16 %v1885, %v1877
        %v2822 = vpack.c.b16 %v1886, %v1878
        %v2823 = vpack.c.b16 %v1887, %v1879
        %v2824 = vpack.c.b16 %v1888, %v1880
        %v2825 = vpack.c.b16 %v1889, %v1881
        %v2826 = vpack.c.b16 %v1898, %v1890
        %v2827 = vpack.c.b16 %v1899, %v1891
        %v2828 = vpack.c.b16 %v1900, %v1892
        %v2829 = vpack.c.b16 %v1901, %v1893
        %v2830 = vpack.c.b16 %v1902, %v1894
        %v2831 = vpack.c.b16 %v1903, %v1895
        %v2832 = vpack.c.b16 %v1904, %v1896
        %v2833 = vpack.c.b16 %v1905, %v1897
        %v2834 = vpack.c.b16 %v1914, %v1906
        %v2835 = vpack.c.b16 %v1915, %v1907
        %v2836 = vpack.c.b16 %v1916, %v1908
        %v2837 = vpack.c.b16 %v1917, %v1909
        %v2838 = vpack.c.b16 %v1918, %v1910
        %v2839 = vpack.c.b16 %v1919, %v1911
        %v2840 = vpack.c.b16 %v1920, %v1912
        %v2841 = vpack.c.b16 %v1921, %v1913
        %v2842 = vpack.c.b16 %v1930, %v1922
        %v2843 = vpack.c.b16 %v1931, %v1923
        %v2844 = vpack.c.b16 %v1932, %v1924
        %v2845 = vpack.c.b16 %v1933, %v1925
        %v2846 = vpack.c.b16 %v1934, %v1926
        %v2847 = vpack.c.b16 %v1935, %v1927
        %v2848 = vpack.c.b16 %v1936, %v1928
        %v2849 = vpack.c.b16 %v1937, %v1929
        %v2850 = vpack.c.b16 %v1946, %v1938
        %v2851 = vpack.c.b16 %v1947, %v1939
        %v2852 = vpack.c.b16 %v1948, %v1940
        %v2853 = vpack.c.b16 %v1949, %v1941
        %v2854 = vpack.c.b16 %v1950, %v1942
        %v2855 = vpack.c.b16 %v1951, %v1943
        %v2856 = vpack.c.b16 %v1952, %v1944
        %v2857 = vpack.c.b16 %v1953, %v1945
        %v2858 = vpack.c.b16 %v1962, %v1954
        %v2859 = vpack.c.b16 %v1963, %v1955
        %v2860 = vpack.c.b16 %v1964, %v1956
        %v2861 = vpack.c.b16 %v1965, %v1957
        %v2862 = vpack.c.b16 %v1966, %v1958
        %v2863 = vpack.c.b16 %v1967, %v1959
        %v2864 = vpack.c.b16 %v1968, %v1960
        %v2865 = vpack.c.b16 %v1969, %v1961
        %v2866 = vpack.c.b16 %v1978, %v1970
        %v2867 = vpack.c.b16 %v1979, %v1971
        %v2868 = vpack.c.b16 %v1980, %v1972
        %v2869 = vpack.c.b16 %v1981, %v1973
        %v2870 = vpack.c.b16 %v1982, %v1974
        %v2871 = vpack.c.b16 %v1983, %v1975
        %v2872 = vpack.c.b16 %v1984, %v1976
        %v2873 = vpack.c.b16 %v1985, %v1977
        %v2874 = vpack.c.b16 %v1994, %v1986
        %v2875 = vpack.c.b16 %v1995, %v1987
        %v2876 = vpack.c.b16 %v1996, %v1988
        %v2877 = vpack.c.b16 %v1997, %v1989
        %v2878 = vpack.c.b16 %v1998, %v1990
        %v2879 = vpack.c.b16 %v1999, %v1991
        %v2880 = vpack.c.b16 %v2000, %v1992
        %v2881 = vpack.c.b16 %v2001, %v1993
        %v2882 = vpack.c.b16 %v2010, %v2002
        %v2883 = vpack.c.b16 %v2011, %v2003
        %v2884 = vpack.c.b16 %v2012, %v2004
        %v2885 = vpack.c.b16 %v2013, %v2005
        %v2886 = vpack.c.b16 %v2014, %v2006
        %v2887 = vpack.c.b16 %v2015, %v2007
        %v2888 = vpack.c.b16 %v2016, %v2008
        %v2889 = vpack.c.b16 %v2017, %v2009
        %v2890 = vpack.c.b16 %v2026, %v2018
        %v2891 = vpack.c.b16 %v2027, %v2019
        %v2892 = vpack.c.b16 %v2028, %v2020
        %v2893 = vpack.c.b16 %v2029, %v2021
        %v2894 = vpack.c.b16 %v2030, %v2022
        %v2895 = vpack.c.b16 %v2031, %v2023
        %v2896 = vpack.c.b16 %v2032, %v2024
        %v2897 = vpack.c.b16 %v2033, %v2025
        %v2898 = vpack.c.b16 %v2042, %v2034
        %v2899 = vpack.c.b16 %v2043, %v2035
        %v2900 = vpack.c.b16 %v2044, %v2036
        %v2901 = vpack.c.b16 %v2045, %v2037
        %v2902 = vpack.c.b16 %v2046, %v2038
        %v2903 = vpack.c.b16 %v2047, %v2039
        %v2904 = vpack.c.b16 %v2048, %v2040
        %v2905 = vpack.c.b16 %v2049, %v2041
        %v2906 = vpack.c.b16 %v2058, %v2050
        %v2907 = vpack.c.b16 %v2059, %v2051
        %v2908 = vpack.c.b16 %v2060, %v2052
        %v2909 = vpack.c.b16 %v2061, %v2053
        %v2910 = vpack.c.b16 %v2062, %v2054
        %v2911 = vpack.c.b16 %v2063, %v2055
        %v2912 = vpack.c.b16 %v2064, %v2056
        %v2913 = vpack.c.b16 %v2065, %v2057
        %v2914 = vpack.c.b16 %v2074, %v2066
        %v2915 = vpack.c.b16 %v2075, %v2067
        %v2916 = vpack.c.b16 %v2076, %v2068
        %v2917 = vpack.c.b16 %v2077, %v2069
        %v2918 = vpack.c.b16 %v2078, %v2070
        %v2919 = vpack.c.b16 %v2079, %v2071
        %v2920 = vpack.c.b16 %v2080, %v2072
        %v2921 = vpack.c.b16 %v2081, %v2073
        %v2922 = vpack.c.b16 %v2090, %v2082
        %v2923 = vpack.c.b16 %v2091, %v2083
        %v2924 = vpack.c.b16 %v2092, %v2084
        %v2925 = vpack.c.b16 %v2093, %v2085
        %v2926 = vpack.c.b16 %v2094, %v2086
        %v2927 = vpack.c.b16 %v2095, %v2087
        %v2928 = vpack.c.b16 %v2096, %v2088
        %v2929 = vpack.c.b16 %v2097, %v2089
        %v2930 = vpack.c.b16 %v2106, %v2098
        %v2931 = vpack.c.b16 %v2107, %v2099
        %v2932 = vpack.c.b16 %v2108, %v2100
        %v2933 = vpack.c.b16 %v2109, %v2101
        %v2934 = vpack.c.b16 %v2110, %v2102
        %v2935 = vpack.c.b16 %v2111, %v2103
        %v2936 = vpack.c.b16 %v2112, %v2104
        %v2937 = vpack.c.b16 %v2113, %v2105
        %v2938 = vpack.c.b16 %v2122, %v2114
        %v2939 = vpack.c.b16 %v2123, %v2115
        %v2940 = vpack.c.b16 %v2124, %v2116
        %v2941 = vpack.c.b16 %v2125, %v2117
        %v2942 = vpack.c.b16 %v2126, %v2118
        %v2943 = vpack.c.b16 %v2127, %v2119
        %v2944 = vpack.c.b16 %v2128, %v2120
        %v2945 = vpack.c.b16 %v2129, %v2121
        %v2946 = vpack.c.b16 %v2138, %v2130
        %v2947 = vpack.c.b16 %v2139, %v2131
        %v2948 = vpack.c.b16 %v2140, %v2132
        %v2949 = vpack.c.b16 %v2141, %v2133
        %v2950 = vpack.c.b16 %v2142, %v2134
        %v2951 = vpack.c.b16 %v2143, %v2135
        %v2952 = vpack.c.b16 %v2144, %v2136
        %v2953 = vpack.c.b16 %v2145, %v2137
        %v2954 = vpack.c.b16 %v2154, %v2146
        %v2955 = vpack.c.b16 %v2155, %v2147
        %v2956 = vpack.c.b16 %v2156, %v2148
        %v2957 = vpack.c.b16 %v2157, %v2149
        %v2958 = vpack.c.b16 %v2158, %v2150
        %v2959 = vpack.c.b16 %v2159, %v2151
        %v2960 = vpack.c.b16 %v2160, %v2152
        %v2961 = vpack.c.b16 %v2161, %v2153
        %v2962 = vpack.c.b16 %v2170, %v2162
        %v2963 = vpack.c.b16 %v2171, %v2163
        %v2964 = vpack.c.b16 %v2172, %v2164
        %v2965 = vpack.c.b16 %v2173, %v2165
        %v2966 = vpack.c.b16 %v2174, %v2166
        %v2967 = vpack.c.b16 %v2175, %v2167
        %v2968 = vpack.c.b16 %v2176, %v2168
        %v2969 = vpack.c.b16 %v2177, %v2169
        %v2970 = vpack.c.b16 %v2186, %v2178
        %v2971 = vpack.c.b16 %v2187, %v2179
        %v2972 = vpack.c.b16 %v2188, %v2180
        %v2973 = vpack.c.b16 %v2189, %v2181
        %v2974 = vpack.c.b16 %v2190, %v2182
        %v2975 = vpack.c.b16 %v2191, %v2183
        %v2976 = vpack.c.b16 %v2192, %v2184
        %v2977 = vpack.c.b16 %v2193, %v2185
        %v2978 = vpack.c.b16 %v2202, %v2194
        %v2979 = vpack.c.b16 %v2203, %v2195
        %v2980 = vpack.c.b16 %v2204, %v2196
        %v2981 = vpack.c.b16 %v2205, %v2197
        %v2982 = vpack.c.b16 %v2206, %v2198
        %v2983 = vpack.c.b16 %v2207, %v2199
        %v2984 = vpack.c.b16 %v2208, %v2200
        %v2985 = vpack.c.b16 %v2209, %v2201
        %v2986 = vpack.c.b16 %v2218, %v2210
        %v2987 = vpack.c.b16 %v2219, %v2211
        %v2988 = vpack.c.b16 %v2220, %v2212
        %v2989 = vpack.c.b16 %v2221, %v2213
        %v2990 = vpack.c.b16 %v2222, %v2214
        %v2991 = vpack.c.b16 %v2223, %v2215
        %v2992 = vpack.c.b16 %v2224, %v2216
        %v2993 = vpack.c.b16 %v2225, %v2217
        %v2994 = vpack.c.b16 %v2234, %v2226
        %v2995 = vpack.c.b16 %v2235, %v2227
        %v2996 = vpack.c.b16 %v2236, %v2228
        %v2997 = vpack.c.b16 %v2237, %v2229
        %v2998 = vpack.c.b16 %v2238, %v2230
        %v2999 = vpack.c.b16 %v2239, %v2231
        %v3000 = vpack.c.b16 %v2240, %v2232
        %v3001 = vpack.c.b16 %v2241, %v2233
        %v3002 = vpack.c.b16 %v2250, %v2242
        %v3003 = vpack.c.b16 %v2251, %v2243
        %v3004 = vpack.c.b16 %v2252, %v2244
        %v3005 = vpack.c.b16 %v2253, %v2245
        %v3006 = vpack.c.b16 %v2254, %v2246
        %v3007 = vpack.c.b16 %v2255, %v2247
        %v3008 = vpack.c.b16 %v2256, %v2248
        %v3009 = vpack.c.b16 %v2257, %v2249
        %v3010 = vpack.c.b16 %v2266, %v2258
        %v3011 = vpack.c.b16 %v2267, %v2259
        %v3012 = vpack.c.b16 %v2268, %v2260
        %v3013 = vpack.c.b16 %v2269, %v2261
        %v3014 = vpack.c.b16 %v2270, %v2262
        %v3015 = vpack.c.b16 %v2271, %v2263
        %v3016 = vpack.c.b16 %v2272, %v2264
        %v3017 = vpack.c.b16 %v2273, %v2265
        %v3018 = vpack.c.b16 %v2282, %v2274
        %v3019 = vpack.c.b16 %v2283, %v2275
        %v3020 = vpack.c.b16 %v2284, %v2276
        %v3021 = vpack.c.b16 %v2285, %v2277
        %v3022 = vpack.c.b16 %v2286, %v2278
        %v3023 = vpack.c.b16 %v2287, %v2279
        %v3024 = vpack.c.b16 %v2288, %v2280
        %v3025 = vpack.c.b16 %v2289, %v2281
        %v3026 = vpack.c.b16 %v2298, %v2290
        %v3027 = vpack.c.b16 %v2299, %v2291
        %v3028 = vpack.c.b16 %v2300, %v2292
        %v3029 = vpack.c.b16 %v2301, %v2293
        %v3030 = vpack.c.b16 %v2302, %v2294
        %v3031 = vpack.c.b16 %v2303, %v2295
        %v3032 = vpack.c.b16 %v2304, %v2296
        %v3033 = vpack.c.b16 %v2305, %v2297
        %v3034 = vpack.c.b16 %v2314, %v2306
        %v3035 = vpack.c.b16 %v2315, %v2307
        %v3036 = vpack.c.b16 %v2316, %v2308
        %v3037 = vpack.c.b16 %v2317, %v2309
        %v3038 = vpack.c.b16 %v2318, %v2310
        %v3039 = vpack.c.b16 %v2319, %v2311
        %v3040 = vpack.c.b16 %v2320, %v2312
        %v3041 = vpack.c.b16 %v2321, %v2313
        %v3042 = vpack.c.b16 %v2330, %v2322
        %v3043 = vpack.c.b16 %v2331, %v2323
        %v3044 = vpack.c.b16 %v2332, %v2324
        %v3045 = vpack.c.b16 %v2333, %v2325
        %v3046 = vpack.c.b16 %v2334, %v2326
        %v3047 = vpack.c.b16 %v2335, %v2327
        %v3048 = vpack.c.b16 %v2336, %v2328
        %v3049 = vpack.c.b16 %v2337, %v2329
        %v3050 = vpack.c.b16 %v2346, %v2338
        %v3051 = vpack.c.b16 %v2347, %v2339
        %v3052 = vpack.c.b16 %v2348, %v2340
        %v3053 = vpack.c.b16 %v2349, %v2341
        %v3054 = vpack.c.b16 %v2350, %v2342
        %v3055 = vpack.c.b16 %v2351, %v2343
        %v3056 = vpack.c.b16 %v2352, %v2344
        %v3057 = vpack.c.b16 %v2353, %v2345
        %v3058 = vpack.c.b16 %v2362, %v2354
        %v3059 = vpack.c.b16 %v2363, %v2355
        %v3060 = vpack.c.b16 %v2364, %v2356
        %v3061 = vpack.c.b16 %v2365, %v2357
        %v3062 = vpack.c.b16 %v2366, %v2358
        %v3063 = vpack.c.b16 %v2367, %v2359
        %v3064 = vpack.c.b16 %v2368, %v2360
        %v3065 = vpack.c.b16 %v2369, %v2361
        %v3066 = vpack.c.b16 %v2378, %v2370
        %v3067 = vpack.c.b16 %v2379, %v2371
        %v3068 = vpack.c.b16 %v2380, %v2372
        %v3069 = vpack.c.b16 %v2381, %v2373
        %v3070 = vpack.c.b16 %v2382, %v2374
        %v3071 = vpack.c.b16 %v2383, %v2375
        %v3072 = vpack.c.b16 %v2384, %v2376
        %v3073 = vpack.c.b16 %v2385, %v2377
        %v3074 = vpack.c.b16 %v2394, %v2386
        %v3075 = vpack.c.b16 %v2395, %v2387
        %v3076 = vpack.c.b16 %v2396, %v2388
        %v3077 = vpack.c.b16 %v2397, %v2389
        %v3078 = vpack.c.b16 %v2398, %v2390
        %v3079 = vpack.c.b16 %v2399, %v2391
        %v3080 = vpack.c.b16 %v2400, %v2392
        %v3081 = vpack.c.b16 %v2401, %v2393
        %v3082 = vpack.c.b16 %v2410, %v2402
        %v3083 = vpack.c.b16 %v2411, %v2403
        %v3084 = vpack.c.b16 %v2412, %v2404
        %v3085 = vpack.c.b16 %v2413, %v2405
        %v3086 = vpack.c.b16 %v2414, %v2406
        %v3087 = vpack.c.b16 %v2415, %v2407
        %v3088 = vpack.c.b16 %v2416, %v2408
        %v3089 = vpack.c.b16 %v2417, %v2409
        %v3090 = vpack.c.b16 %v2426, %v2418
        %v3091 = vpack.c.b16 %v2427, %v2419
        %v3092 = vpack.c.b16 %v2428, %v2420
        %v3093 = vpack.c.b16 %v2429, %v2421
        %v3094 = vpack.c.b16 %v2430, %v2422
        %v3095 = vpack.c.b16 %v2431, %v2423
        %v3096 = vpack.c.b16 %v2432, %v2424
        %v3097 = vpack.c.b16 %v2433, %v2425
        %v3098 = vpack.c.b16 %v2442, %v2434
        %v3099 = vpack.c.b16 %v2443, %v2435
        %v3100 = vpack.c.b16 %v2444, %v2436
        %v3101 = vpack.c.b16 %v2445, %v2437
        %v3102 = vpack.c.b16 %v2446, %v2438
        %v3103 = vpack.c.b16 %v2447, %v2439
        %v3104 = vpack.c.b16 %v2448, %v2440
        %v3105 = vpack.c.b16 %v2449, %v2441
        %v3106 = vpack.c.b16 %v2458, %v2450
        %v3107 = vpack.c.b16 %v2459, %v2451
        %v3108 = vpack.c.b16 %v2460, %v2452
        %v3109 = vpack.c.b16 %v2461, %v2453
        %v3110 = vpack.c.b16 %v2462, %v2454
        %v3111 = vpack.c.b16 %v2463, %v2455
        %v3112 = vpack.c.b16 %v2464, %v2456
        %v3113 = vpack.c.b16 %v2465, %v2457
        %v3114 = vpack.c.b16 %v2474, %v2466
        %v3115 = vpack.c.b16 %v2475, %v2467
        %v3116 = vpack.c.b16 %v2476, %v2468
        %v3117 = vpack.c.b16 %v2477, %v2469
        %v3118 = vpack.c.b16 %v2478, %v2470
        %v3119 = vpack.c.b16 %v2479, %v2471
        %v3120 = vpack.c.b16 %v2480, %v2472
        %v3121 = vpack.c.b16 %v2481, %v2473
        %v3122 = vpack.c.b16 %v2490, %v2482
        %v3123 = vpack.c.b16 %v2491, %v2483
        %v3124 = vpack.c.b16 %v2492, %v2484
        %v3125 = vpack.c.b16 %v2493, %v2485
        %v3126 = vpack.c.b16 %v2494, %v2486
        %v3127 = vpack.c.b16 %v2495, %v2487
        %v3128 = vpack.c.b16 %v2496, %v2488
        %v3129 = vpack.c.b16 %v2497, %v2489
        %v3130 = vpack.c.b16 %v2506, %v2498
        %v3131 = vpack.c.b16 %v2507, %v2499
        %v3132 = vpack.c.b16 %v2508, %v2500
        %v3133 = vpack.c.b16 %v2509, %v2501
        %v3134 = vpack.c.b16 %v2510, %v2502
        %v3135 = vpack.c.b16 %v2511, %v2503
        %v3136 = vpack.c.b16 %v2512, %v2504
        %v3137 = vpack.c.b16 %v2513, %v2505
        %v3138 = vpack.c.b16 %v2522, %v2514
        %v3139 = vpack.c.b16 %v2523, %v2515
        %v3140 = vpack.c.b16 %v2524, %v2516
        %v3141 = vpack.c.b16 %v2525, %v2517
        %v3142 = vpack.c.b16 %v2526, %v2518
        %v3143 = vpack.c.b16 %v2527, %v2519
        %v3144 = vpack.c.b16 %v2528, %v2520
        %v3145 = vpack.c.b16 %v2529, %v2521
        %v3146 = vpack.c.b16 %v2538, %v2530
        %v3147 = vpack.c.b16 %v2539, %v2531
        %v3148 = vpack.c.b16 %v2540, %v2532
        %v3149 = vpack.c.b16 %v2541, %v2533
        %v3150 = vpack.c.b16 %v2542, %v2534
        %v3151 = vpack.c.b16 %v2543, %v2535
        %v3152 = vpack.c.b16 %v2544, %v2536
        %v3153 = vpack.c.b16 %v2545, %v2537
        %v3154 = vpack.c.b16 %v2554, %v2546
        %v3155 = vpack.c.b16 %v2555, %v2547
        %v3156 = vpack.c.b16 %v2556, %v2548
        %v3157 = vpack.c.b16 %v2557, %v2549
        %v3158 = vpack.c.b16 %v2558, %v2550
        %v3159 = vpack.c.b16 %v2559, %v2551
        %v3160 = vpack.c.b16 %v2560, %v2552
        %v3161 = vpack.c.b16 %v2561, %v2553
        %v3162 = vpack.c.b16 %v2570, %v2562
        %v3163 = vpack.c.b16 %v2571, %v2563
        %v3164 = vpack.c.b16 %v2572, %v2564
        %v3165 = vpack.c.b16 %v2573, %v2565
        %v3166 = vpack.c.b16 %v2574, %v2566
        %v3167 = vpack.c.b16 %v2575, %v2567
        %v3168 = vpack.c.b16 %v2576, %v2568
        %v3169 = vpack.c.b16 %v2577, %v2569
        %v3170 = vpack.c.b16 %v2586, %v2578
        %v3171 = vpack.c.b16 %v2587, %v2579
        %v3172 = vpack.c.b16 %v2588, %v2580
        %v3173 = vpack.c.b16 %v2589, %v2581
        %v3174 = vpack.c.b16 %v2590, %v2582
        %v3175 = vpack.c.b16 %v2591, %v2583
        %v3176 = vpack.c.b16 %v2592, %v2584
        %v3177 = vpack.c.b16 %v2593, %v2585
        %v3178 = vpack.c.b16 %v2602, %v2594
        %v3179 = vpack.c.b16 %v2603, %v2595
        %v3180 = vpack.c.b16 %v2604, %v2596
        %v3181 = vpack.c.b16 %v2605, %v2597
        %v3182 = vpack.c.b16 %v2606, %v2598
        %v3183 = vpack.c.b16 %v2607, %v2599
        %v3184 = vpack.c.b16 %v2608, %v2600
        %v3185 = vpack.c.b16 %v2609, %v2601
        %v3186 = vpack.c.b16 %v2618, %v2610
        %v3187 = vpack.c.b16 %v2619, %v2611
        %v3188 = vpack.c.b16 %v2620, %v2612
        %v3189 = vpack.c.b16 %v2621, %v2613
        %v3190 = vpack.c.b16 %v2622, %v2614
        %v3191 = vpack.c.b16 %v2623, %v2615
        %v3192 = vpack.c.b16 %v2624, %v2616
        %v3193 = vpack.c.b16 %v2625, %v2617
        %v3194 = vpack.c.b16 %v2634, %v2626
        %v3195 = vpack.c.b16 %v2635, %v2627
        %v3196 = vpack.c.b16 %v2636, %v2628
        %v3197 = vpack.c.b16 %v2637, %v2629
        %v3198 = vpack.c.b16 %v2638, %v2630
        %v3199 = vpack.c.b16 %v2639, %v2631
        %v3200 = vpack.c.b16 %v2640, %v2632
        %v3201 = vpack.c.b16 %v2641, %v2633
        %v3202 = vpack.c.b16 %v2650, %v2642
        %v3203 = vpack.c.b16 %v2651, %v2643
        %v3204 = vpack.c.b16 %v2652, %v2644
        %v3205 = vpack.c.b16 %v2653, %v2645
        %v3206 = vpack.c.b16 %v2654, %v2646
        %v3207 = vpack.c.b16 %v2655, %v2647
        %v3208 = vpack.c.b16 %v2656, %v2648
        %v3209 = vpack.c.b16 %v2657, %v2649
        %v3210 = vpack.c.b16 %v2666, %v2658
        %v3211 = vpack.c.b16 %v2667, %v2659
        %v3212 = vpack.c.b16 %v2668, %v2660
        %v3213 = vpack.c.b16 %v2669, %v2661
        %v3214 = vpack.c.b16 %v2670, %v2662
        %v3215 = vpack.c.b16 %v2671, %v2663
        %v3216 = vpack.c.b16 %v2672, %v2664
        %v3217 = vpack.c.b16 %v2673, %v2665
        %v3218 = vpack.c.b16 %v2682, %v2674
        %v3219 = vpack.c.b16 %v2683, %v2675
        %v3220 = vpack.c.b16 %v2684, %v2676
        %v3221 = vpack.c.b16 %v2685, %v2677
        %v3222 = vpack.c.b16 %v2686, %v2678
        %v3223 = vpack.c.b16 %v2687, %v2679
        %v3224 = vpack.c.b16 %v2688, %v2680
        %v3225 = vpack.c.b16 %v2689, %v2681
        %v3226 = vpack.c.b16 %v2698, %v2690
        %v3227 = vpack.c.b16 %v2699, %v2691
        %v3228 = vpack.c.b16 %v2700, %v2692
        %v3229 = vpack.c.b16 %v2701, %v2693
        %v3230 = vpack.c.b16 %v2702, %v2694
        %v3231 = vpack.c.b16 %v2703, %v2695
        %v3232 = vpack.c.b16 %v2704, %v2696
        %v3233 = vpack.c.b16 %v2705, %v2697
        %v3234 = vpack.c.b16 %v2714, %v2706
        %v3235 = vpack.c.b16 %v2715, %v2707
        %v3236 = vpack.c.b16 %v2716, %v2708
        %v3237 = vpack.c.b16 %v2717, %v2709
        %v3238 = vpack.c.b16 %v2718, %v2710
        %v3239 = vpack.c.b16 %v2719, %v2711
        %v3240 = vpack.c.b16 %v2720, %v2712
        %v3241 = vpack.c.b16 %v2721, %v2713
        %v3242 = vpack.c.b16 %v2730, %v2722
        %v3243 = vpack.c.b16 %v2731, %v2723
        %v3244 = vpack.c.b16 %v2732, %v2724
        %v3245 = vpack.c.b16 %v2733, %v2725
        %v3246 = vpack.c.b16 %v2734, %v2726
        %v3247 = vpack.c.b16 %v2735, %v2727
        %v3248 = vpack.c.b16 %v2736, %v2728
        %v3249 = vpack.c.b16 %v2737, %v2729
        %3762 = vmatpush.bf16.msra.mxu0 %v2794
        %3763 = vmatpush.bf16.msra.mxu0 %v2786
        %3764 = vmatpush.bf16.msra.mxu0 %v2778
        %3765 = vmatpush.bf16.msra.mxu0 %v2770
        %3766 = vmatpush.bf16.msra.mxu0 %v2762
        %3767 = vmatpush.bf16.msra.mxu0 %v2754
        %3768 = vmatpush.bf16.msra.mxu0 %v2746
        %3769 = vmatpush.bf16.msra.mxu0 %v2738
        %3770 = vmatmul.bf16.gmra.mxu0 %v608
        %v3771 = vpop.f32.mrf.mxu0
        %v3772 = vadd.f32 %v1186, %v3771
        %v3773 = vpop.f32.mrf.mxu0
        %v3774 = vadd.f32 %v1186, %v3773
        %3775 = vmatmul.bf16.gmra.mxu0 %v616
        %v3776 = vpop.f32.mrf.mxu0
        %v3777 = vadd.f32 %v1186, %v3776
        %v3778 = vpop.f32.mrf.mxu0
        %v3779 = vadd.f32 %v1186, %v3778
        %3780 = vmatmul.bf16.gmra.mxu0 %v624
        %v3781 = vpop.f32.mrf.mxu0
        %v3782 = vadd.f32 %v1186, %v3781
        %v3783 = vpop.f32.mrf.mxu0
        %v3784 = vadd.f32 %v1186, %v3783
        %3785 = vmatmul.bf16.gmra.mxu0 %v632
        %v3786 = vpop.f32.mrf.mxu0
        %v3787 = vadd.f32 %v1186, %v3786
        %v3788 = vpop.f32.mrf.mxu0
        %v3789 = vadd.f32 %v1186, %v3788
        %3790 = vmatmul.bf16.gmra.mxu0 %v640
        %v3791 = vpop.f32.mrf.mxu0
        %v3792 = vadd.f32 %v1186, %v3791
        %v3793 = vpop.f32.mrf.mxu0
        %v3794 = vadd.f32 %v1186, %v3793
        %3795 = vmatmul.bf16.gmra.mxu0 %v648
        %v3796 = vpop.f32.mrf.mxu0
        %v3797 = vadd.f32 %v1186, %v3796
        %v3798 = vpop.f32.mrf.mxu0
        %v3799 = vadd.f32 %v1186, %v3798
        %3800 = vmatmul.bf16.gmra.mxu0 %v656
        %v3801 = vpop.f32.mrf.mxu0
        %v3802 = vadd.f32 %v1186, %v3801
        %v3803 = vpop.f32.mrf.mxu0
        %v3804 = vadd.f32 %v1186, %v3803
        %3805 = vmatmul.bf16.gmra.mxu0 %v664
        %v3806 = vpop.f32.mrf.mxu0
        %v3807 = vadd.f32 %v1186, %v3806
        %v3808 = vpop.f32.mrf.mxu0
        %v3809 = vadd.f32 %v1186, %v3808
        %3810 = vdwg.mxu0
        %3811 = vmatpush.bf16.msra.mxu0 %v2858
        %3812 = vmatpush.bf16.msra.mxu0 %v2850
        %3813 = vmatpush.bf16.msra.mxu0 %v2842
        %3814 = vmatpush.bf16.msra.mxu0 %v2834
        %3815 = vmatpush.bf16.msra.mxu0 %v2826
        %3816 = vmatpush.bf16.msra.mxu0 %v2818
        %3817 = vmatpush.bf16.msra.mxu0 %v2810
        %3818 = vmatpush.bf16.msra.mxu0 %v2802
        %3819 = vmatmul.bf16.gmra.mxu0 %v609
        %v3820 = vpop.f32.mrf.mxu0
        %v3821 = vadd.f32 %v3772, %v3820
        %v3822 = vpop.f32.mrf.mxu0
        %v3823 = vadd.f32 %v3774, %v3822
        %3824 = vmatmul.bf16.gmra.mxu0 %v617
        %v3825 = vpop.f32.mrf.mxu0
        %v3826 = vadd.f32 %v3777, %v3825
        %v3827 = vpop.f32.mrf.mxu0
        %v3828 = vadd.f32 %v3779, %v3827
        %3829 = vmatmul.bf16.gmra.mxu0 %v625
        %v3830 = vpop.f32.mrf.mxu0
        %v3831 = vadd.f32 %v3782, %v3830
        %v3832 = vpop.f32.mrf.mxu0
        %v3833 = vadd.f32 %v3784, %v3832
        %3834 = vmatmul.bf16.gmra.mxu0 %v633
        %v3835 = vpop.f32.mrf.mxu0
        %v3836 = vadd.f32 %v3787, %v3835
        %v3837 = vpop.f32.mrf.mxu0
        %v3838 = vadd.f32 %v3789, %v3837
        %3839 = vmatmul.bf16.gmra.mxu0 %v641
        %v3840 = vpop.f32.mrf.mxu0
        %v3841 = vadd.f32 %v3792, %v3840
        %v3842 = vpop.f32.mrf.mxu0
        %v3843 = vadd.f32 %v3794, %v3842
        %3844 = vmatmul.bf16.gmra.mxu0 %v649
        %v3845 = vpop.f32.mrf.mxu0
        %v3846 = vadd.f32 %v3797, %v3845
        %v3847 = vpop.f32.mrf.mxu0
        %v3848 = vadd.f32 %v3799, %v3847
        %3849 = vmatmul.bf16.gmra.mxu0 %v657
        %v3850 = vpop.f32.mrf.mxu0
        %v3851 = vadd.f32 %v3802, %v3850
        %v3852 = vpop.f32.mrf.mxu0
        %v3853 = vadd.f32 %v3804, %v3852
        %3854 = vmatmul.bf16.gmra.mxu0 %v665
        %v3855 = vpop.f32.mrf.mxu0
        %v3856 = vadd.f32 %v3807, %v3855
        %v3857 = vpop.f32.mrf.mxu0
        %v3858 = vadd.f32 %v3809, %v3857
        %3859 = vdwg.mxu0
        %3860 = vmatpush.bf16.msra.mxu0 %v2922
        %3861 = vmatpush.bf16.msra.mxu0 %v2914
        %3862 = vmatpush.bf16.msra.mxu0 %v2906
        %3863 = vmatpush.bf16.msra.mxu0 %v2898
        %3864 = vmatpush.bf16.msra.mxu0 %v2890
        %3865 = vmatpush.bf16.msra.mxu0 %v2882
        %3866 = vmatpush.bf16.msra.mxu0 %v2874
        %3867 = vmatpush.bf16.msra.mxu0 %v2866
        %3868 = vmatmul.bf16.gmra.mxu0 %v610
        %v3869 = vpop.f32.mrf.mxu0
        %v3870 = vadd.f32 %v3821, %v3869
        %v3871 = vpop.f32.mrf.mxu0
        %v3872 = vadd.f32 %v3823, %v3871
        %3873 = vmatmul.bf16.gmra.mxu0 %v618
        %v3874 = vpop.f32.mrf.mxu0
        %v3875 = vadd.f32 %v3826, %v3874
        %v3876 = vpop.f32.mrf.mxu0
        %v3877 = vadd.f32 %v3828, %v3876
        %3878 = vmatmul.bf16.gmra.mxu0 %v626
        %v3879 = vpop.f32.mrf.mxu0
        %v3880 = vadd.f32 %v3831, %v3879
        %v3881 = vpop.f32.mrf.mxu0
        %v3882 = vadd.f32 %v3833, %v3881
        %3883 = vmatmul.bf16.gmra.mxu0 %v634
        %v3884 = vpop.f32.mrf.mxu0
        %v3885 = vadd.f32 %v3836, %v3884
        %v3886 = vpop.f32.mrf.mxu0
        %v3887 = vadd.f32 %v3838, %v3886
        %3888 = vmatmul.bf16.gmra.mxu0 %v642
        %v3889 = vpop.f32.mrf.mxu0
        %v3890 = vadd.f32 %v3841, %v3889
        %v3891 = vpop.f32.mrf.mxu0
        %v3892 = vadd.f32 %v3843, %v3891
        %3893 = vmatmul.bf16.gmra.mxu0 %v650
        %v3894 = vpop.f32.mrf.mxu0
        %v3895 = vadd.f32 %v3846, %v3894
        %v3896 = vpop.f32.mrf.mxu0
        %v3897 = vadd.f32 %v3848, %v3896
        %3898 = vmatmul.bf16.gmra.mxu0 %v658
        %v3899 = vpop.f32.mrf.mxu0
        %v3900 = vadd.f32 %v3851, %v3899
        %v3901 = vpop.f32.mrf.mxu0
        %v3902 = vadd.f32 %v3853, %v3901
        %3903 = vmatmul.bf16.gmra.mxu0 %v666
        %v3904 = vpop.f32.mrf.mxu0
        %v3905 = vadd.f32 %v3856, %v3904
        %v3906 = vpop.f32.mrf.mxu0
        %v3907 = vadd.f32 %v3858, %v3906
        %3908 = vdwg.mxu0
        %3909 = vmatpush.bf16.msra.mxu0 %v2986
        %3910 = vmatpush.bf16.msra.mxu0 %v2978
        %3911 = vmatpush.bf16.msra.mxu0 %v2970
        %3912 = vmatpush.bf16.msra.mxu0 %v2962
        %3913 = vmatpush.bf16.msra.mxu0 %v2954
        %3914 = vmatpush.bf16.msra.mxu0 %v2946
        %3915 = vmatpush.bf16.msra.mxu0 %v2938
        %3916 = vmatpush.bf16.msra.mxu0 %v2930
        %3917 = vmatmul.bf16.gmra.mxu0 %v611
        %v3918 = vpop.f32.mrf.mxu0
        %v3919 = vadd.f32 %v3870, %v3918
        %v3920 = vpop.f32.mrf.mxu0
        %v3921 = vadd.f32 %v3872, %v3920
        %3922 = vmatmul.bf16.gmra.mxu0 %v619
        %v3923 = vpop.f32.mrf.mxu0
        %v3924 = vadd.f32 %v3875, %v3923
        %v3925 = vpop.f32.mrf.mxu0
        %v3926 = vadd.f32 %v3877, %v3925
        %3927 = vmatmul.bf16.gmra.mxu0 %v627
        %v3928 = vpop.f32.mrf.mxu0
        %v3929 = vadd.f32 %v3880, %v3928
        %v3930 = vpop.f32.mrf.mxu0
        %v3931 = vadd.f32 %v3882, %v3930
        %3932 = vmatmul.bf16.gmra.mxu0 %v635
        %v3933 = vpop.f32.mrf.mxu0
        %v3934 = vadd.f32 %v3885, %v3933
        %v3935 = vpop.f32.mrf.mxu0
        %v3936 = vadd.f32 %v3887, %v3935
        %3937 = vmatmul.bf16.gmra.mxu0 %v643
        %v3938 = vpop.f32.mrf.mxu0
        %v3939 = vadd.f32 %v3890, %v3938
        %v3940 = vpop.f32.mrf.mxu0
        %v3941 = vadd.f32 %v3892, %v3940
        %3942 = vmatmul.bf16.gmra.mxu0 %v651
        %v3943 = vpop.f32.mrf.mxu0
        %v3944 = vadd.f32 %v3895, %v3943
        %v3945 = vpop.f32.mrf.mxu0
        %v3946 = vadd.f32 %v3897, %v3945
        %3947 = vmatmul.bf16.gmra.mxu0 %v659
        %v3948 = vpop.f32.mrf.mxu0
        %v3949 = vadd.f32 %v3900, %v3948
        %v3950 = vpop.f32.mrf.mxu0
        %v3951 = vadd.f32 %v3902, %v3950
        %3952 = vmatmul.bf16.gmra.mxu0 %v667
        %v3953 = vpop.f32.mrf.mxu0
        %v3954 = vadd.f32 %v3905, %v3953
        %v3955 = vpop.f32.mrf.mxu0
        %v3956 = vadd.f32 %v3907, %v3955
        %3957 = vdwg.mxu0
        %3958 = vmatpush.bf16.msra.mxu0 %v3050
        %3959 = vmatpush.bf16.msra.mxu0 %v3042
        %3960 = vmatpush.bf16.msra.mxu0 %v3034
        %3961 = vmatpush.bf16.msra.mxu0 %v3026
        %3962 = vmatpush.bf16.msra.mxu0 %v3018
        %3963 = vmatpush.bf16.msra.mxu0 %v3010
        %3964 = vmatpush.bf16.msra.mxu0 %v3002
        %3965 = vmatpush.bf16.msra.mxu0 %v2994
        %3966 = vmatmul.bf16.gmra.mxu0 %v612
        %v3967 = vpop.f32.mrf.mxu0
        %v3968 = vadd.f32 %v3919, %v3967
        %v3969 = vpop.f32.mrf.mxu0
        %v3970 = vadd.f32 %v3921, %v3969
        %3971 = vmatmul.bf16.gmra.mxu0 %v620
        %v3972 = vpop.f32.mrf.mxu0
        %v3973 = vadd.f32 %v3924, %v3972
        %v3974 = vpop.f32.mrf.mxu0
        %v3975 = vadd.f32 %v3926, %v3974
        %3976 = vmatmul.bf16.gmra.mxu0 %v628
        %v3977 = vpop.f32.mrf.mxu0
        %v3978 = vadd.f32 %v3929, %v3977
        %v3979 = vpop.f32.mrf.mxu0
        %v3980 = vadd.f32 %v3931, %v3979
        %3981 = vmatmul.bf16.gmra.mxu0 %v636
        %v3982 = vpop.f32.mrf.mxu0
        %v3983 = vadd.f32 %v3934, %v3982
        %v3984 = vpop.f32.mrf.mxu0
        %v3985 = vadd.f32 %v3936, %v3984
        %3986 = vmatmul.bf16.gmra.mxu0 %v644
        %v3987 = vpop.f32.mrf.mxu0
        %v3988 = vadd.f32 %v3939, %v3987
        %v3989 = vpop.f32.mrf.mxu0
        %v3990 = vadd.f32 %v3941, %v3989
        %3991 = vmatmul.bf16.gmra.mxu0 %v652
        %v3992 = vpop.f32.mrf.mxu0
        %v3993 = vadd.f32 %v3944, %v3992
        %v3994 = vpop.f32.mrf.mxu0
        %v3995 = vadd.f32 %v3946, %v3994
        %3996 = vmatmul.bf16.gmra.mxu0 %v660
        %v3997 = vpop.f32.mrf.mxu0
        %v3998 = vadd.f32 %v3949, %v3997
        %v3999 = vpop.f32.mrf.mxu0
        %v4000 = vadd.f32 %v3951, %v3999
        %4001 = vmatmul.bf16.gmra.mxu0 %v668
        %v4002 = vpop.f32.mrf.mxu0
        %v4003 = vadd.f32 %v3954, %v4002
        %v4004 = vpop.f32.mrf.mxu0
        %v4005 = vadd.f32 %v3956, %v4004
        %4006 = vdwg.mxu0
        %4007 = vmatpush.bf16.msra.mxu0 %v3114
        %4008 = vmatpush.bf16.msra.mxu0 %v3106
        %4009 = vmatpush.bf16.msra.mxu0 %v3098
        %4010 = vmatpush.bf16.msra.mxu0 %v3090
        %4011 = vmatpush.bf16.msra.mxu0 %v3082
        %4012 = vmatpush.bf16.msra.mxu0 %v3074
        %4013 = vmatpush.bf16.msra.mxu0 %v3066
        %4014 = vmatpush.bf16.msra.mxu0 %v3058
        %4015 = vmatmul.bf16.gmra.mxu0 %v613
        %v4016 = vpop.f32.mrf.mxu0
        %v4017 = vadd.f32 %v3968, %v4016
        %v4018 = vpop.f32.mrf.mxu0
        %v4019 = vadd.f32 %v3970, %v4018
        %4020 = vmatmul.bf16.gmra.mxu0 %v621
        %v4021 = vpop.f32.mrf.mxu0
        %v4022 = vadd.f32 %v3973, %v4021
        %v4023 = vpop.f32.mrf.mxu0
        %v4024 = vadd.f32 %v3975, %v4023
        %4025 = vmatmul.bf16.gmra.mxu0 %v629
        %v4026 = vpop.f32.mrf.mxu0
        %v4027 = vadd.f32 %v3978, %v4026
        %v4028 = vpop.f32.mrf.mxu0
        %v4029 = vadd.f32 %v3980, %v4028
        %4030 = vmatmul.bf16.gmra.mxu0 %v637
        %v4031 = vpop.f32.mrf.mxu0
        %v4032 = vadd.f32 %v3983, %v4031
        %v4033 = vpop.f32.mrf.mxu0
        %v4034 = vadd.f32 %v3985, %v4033
        %4035 = vmatmul.bf16.gmra.mxu0 %v645
        %v4036 = vpop.f32.mrf.mxu0
        %v4037 = vadd.f32 %v3988, %v4036
        %v4038 = vpop.f32.mrf.mxu0
        %v4039 = vadd.f32 %v3990, %v4038
        %4040 = vmatmul.bf16.gmra.mxu0 %v653
        %v4041 = vpop.f32.mrf.mxu0
        %v4042 = vadd.f32 %v3993, %v4041
        %v4043 = vpop.f32.mrf.mxu0
        %v4044 = vadd.f32 %v3995, %v4043
        %4045 = vmatmul.bf16.gmra.mxu0 %v661
        %v4046 = vpop.f32.mrf.mxu0
        %v4047 = vadd.f32 %v3998, %v4046
        %v4048 = vpop.f32.mrf.mxu0
        %v4049 = vadd.f32 %v4000, %v4048
        %4050 = vmatmul.bf16.gmra.mxu0 %v669
        %v4051 = vpop.f32.mrf.mxu0
        %v4052 = vadd.f32 %v4003, %v4051
        %v4053 = vpop.f32.mrf.mxu0
        %v4054 = vadd.f32 %v4005, %v4053
        %4055 = vdwg.mxu0
        %4056 = vmatpush.bf16.msra.mxu0 %v3178
        %4057 = vmatpush.bf16.msra.mxu0 %v3170
        %4058 = vmatpush.bf16.msra.mxu0 %v3162
        %4059 = vmatpush.bf16.msra.mxu0 %v3154
        %4060 = vmatpush.bf16.msra.mxu0 %v3146
        %4061 = vmatpush.bf16.msra.mxu0 %v3138
        %4062 = vmatpush.bf16.msra.mxu0 %v3130
        %4063 = vmatpush.bf16.msra.mxu0 %v3122
        %4064 = vmatmul.bf16.gmra.mxu0 %v614
        %v4065 = vpop.f32.mrf.mxu0
        %v4066 = vadd.f32 %v4017, %v4065
        %v4067 = vpop.f32.mrf.mxu0
        %v4068 = vadd.f32 %v4019, %v4067
        %4069 = vmatmul.bf16.gmra.mxu0 %v622
        %v4070 = vpop.f32.mrf.mxu0
        %v4071 = vadd.f32 %v4022, %v4070
        %v4072 = vpop.f32.mrf.mxu0
        %v4073 = vadd.f32 %v4024, %v4072
        %4074 = vmatmul.bf16.gmra.mxu0 %v630
        %v4075 = vpop.f32.mrf.mxu0
        %v4076 = vadd.f32 %v4027, %v4075
        %v4077 = vpop.f32.mrf.mxu0
        %v4078 = vadd.f32 %v4029, %v4077
        %4079 = vmatmul.bf16.gmra.mxu0 %v638
        %v4080 = vpop.f32.mrf.mxu0
        %v4081 = vadd.f32 %v4032, %v4080
        %v4082 = vpop.f32.mrf.mxu0
        %v4083 = vadd.f32 %v4034, %v4082
        %4084 = vmatmul.bf16.gmra.mxu0 %v646
        %v4085 = vpop.f32.mrf.mxu0
        %v4086 = vadd.f32 %v4037, %v4085
        %v4087 = vpop.f32.mrf.mxu0
        %v4088 = vadd.f32 %v4039, %v4087
        %4089 = vmatmul.bf16.gmra.mxu0 %v654
        %v4090 = vpop.f32.mrf.mxu0
        %v4091 = vadd.f32 %v4042, %v4090
        %v4092 = vpop.f32.mrf.mxu0
        %v4093 = vadd.f32 %v4044, %v4092
        %4094 = vmatmul.bf16.gmra.mxu0 %v662
        %v4095 = vpop.f32.mrf.mxu0
        %v4096 = vadd.f32 %v4047, %v4095
        %v4097 = vpop.f32.mrf.mxu0
        %v4098 = vadd.f32 %v4049, %v4097
        %4099 = vmatmul.bf16.gmra.mxu0 %v670
        %v4100 = vpop.f32.mrf.mxu0
        %v4101 = vadd.f32 %v4052, %v4100
        %v4102 = vpop.f32.mrf.mxu0
        %v4103 = vadd.f32 %v4054, %v4102
        %4104 = vdwg.mxu0
        %4105 = vmatpush.bf16.msra.mxu0 %v3242
        %4106 = vmatpush.bf16.msra.mxu0 %v3234
        %4107 = vmatpush.bf16.msra.mxu0 %v3226
        %4108 = vmatpush.bf16.msra.mxu0 %v3218
        %4109 = vmatpush.bf16.msra.mxu0 %v3210
        %4110 = vmatpush.bf16.msra.mxu0 %v3202
        %4111 = vmatpush.bf16.msra.mxu0 %v3194
        %4112 = vmatpush.bf16.msra.mxu0 %v3186
        %4113 = vmatmul.bf16.gmra.mxu0 %v615
        %v4114 = vpop.f32.mrf.mxu0
        %v4115 = vadd.f32 %v4066, %v4114
        %v4116 = vpop.f32.mrf.mxu0
        %v4117 = vadd.f32 %v4068, %v4116
        %4118 = vmatmul.bf16.gmra.mxu0 %v623
        %v4119 = vpop.f32.mrf.mxu0
        %v4120 = vadd.f32 %v4071, %v4119
        %v4121 = vpop.f32.mrf.mxu0
        %v4122 = vadd.f32 %v4073, %v4121
        %4123 = vmatmul.bf16.gmra.mxu0 %v631
        %v4124 = vpop.f32.mrf.mxu0
        %v4125 = vadd.f32 %v4076, %v4124
        %v4126 = vpop.f32.mrf.mxu0
        %v4127 = vadd.f32 %v4078, %v4126
        %4128 = vmatmul.bf16.gmra.mxu0 %v639
        %v4129 = vpop.f32.mrf.mxu0
        %v4130 = vadd.f32 %v4081, %v4129
        %v4131 = vpop.f32.mrf.mxu0
        %v4132 = vadd.f32 %v4083, %v4131
        %4133 = vmatmul.bf16.gmra.mxu0 %v647
        %v4134 = vpop.f32.mrf.mxu0
        %v4135 = vadd.f32 %v4086, %v4134
        %v4136 = vpop.f32.mrf.mxu0
        %v4137 = vadd.f32 %v4088, %v4136
        %4138 = vmatmul.bf16.gmra.mxu0 %v655
        %v4139 = vpop.f32.mrf.mxu0
        %v4140 = vadd.f32 %v4091, %v4139
        %v4141 = vpop.f32.mrf.mxu0
        %v4142 = vadd.f32 %v4093, %v4141
        %4143 = vmatmul.bf16.gmra.mxu0 %v663
        %v4144 = vpop.f32.mrf.mxu0
        %v4145 = vadd.f32 %v4096, %v4144
        %v4146 = vpop.f32.mrf.mxu0
        %v4147 = vadd.f32 %v4098, %v4146
        %4148 = vmatmul.bf16.gmra.mxu0 %v671
        %v4149 = vpop.f32.mrf.mxu0
        %v4150 = vadd.f32 %v4101, %v4149
        %v4151 = vpop.f32.mrf.mxu0
        %v4152 = vadd.f32 %v4103, %v4151
        %4153 = vdwg.mxu0
        %4154 = vmatpush.bf16.msra.mxu0 %v2795
        %4155 = vmatpush.bf16.msra.mxu0 %v2787
        %4156 = vmatpush.bf16.msra.mxu0 %v2779
        %4157 = vmatpush.bf16.msra.mxu0 %v2771
        %4158 = vmatpush.bf16.msra.mxu0 %v2763
        %4159 = vmatpush.bf16.msra.mxu0 %v2755
        %4160 = vmatpush.bf16.msra.mxu0 %v2747
        %4161 = vmatpush.bf16.msra.mxu0 %v2739
        %4162 = vmatmul.bf16.gmra.mxu0 %v608
        %v4163 = vpop.f32.mrf.mxu0
        %v4164 = vadd.f32 %v1187, %v4163
        %v4165 = vpop.f32.mrf.mxu0
        %v4166 = vadd.f32 %v1187, %v4165
        %4167 = vmatmul.bf16.gmra.mxu0 %v616
        %v4168 = vpop.f32.mrf.mxu0
        %v4169 = vadd.f32 %v1187, %v4168
        %v4170 = vpop.f32.mrf.mxu0
        %v4171 = vadd.f32 %v1187, %v4170
        %4172 = vmatmul.bf16.gmra.mxu0 %v624
        %v4173 = vpop.f32.mrf.mxu0
        %v4174 = vadd.f32 %v1187, %v4173
        %v4175 = vpop.f32.mrf.mxu0
        %v4176 = vadd.f32 %v1187, %v4175
        %4177 = vmatmul.bf16.gmra.mxu0 %v632
        %v4178 = vpop.f32.mrf.mxu0
        %v4179 = vadd.f32 %v1187, %v4178
        %v4180 = vpop.f32.mrf.mxu0
        %v4181 = vadd.f32 %v1187, %v4180
        %4182 = vmatmul.bf16.gmra.mxu0 %v640
        %v4183 = vpop.f32.mrf.mxu0
        %v4184 = vadd.f32 %v1187, %v4183
        %v4185 = vpop.f32.mrf.mxu0
        %v4186 = vadd.f32 %v1187, %v4185
        %4187 = vmatmul.bf16.gmra.mxu0 %v648
        %v4188 = vpop.f32.mrf.mxu0
        %v4189 = vadd.f32 %v1187, %v4188
        %v4190 = vpop.f32.mrf.mxu0
        %v4191 = vadd.f32 %v1187, %v4190
        %4192 = vmatmul.bf16.gmra.mxu0 %v656
        %v4193 = vpop.f32.mrf.mxu0
        %v4194 = vadd.f32 %v1187, %v4193
        %v4195 = vpop.f32.mrf.mxu0
        %v4196 = vadd.f32 %v1187, %v4195
        %4197 = vmatmul.bf16.gmra.mxu0 %v664
        %v4198 = vpop.f32.mrf.mxu0
        %v4199 = vadd.f32 %v1187, %v4198
        %v4200 = vpop.f32.mrf.mxu0
        %v4201 = vadd.f32 %v1187, %v4200
        %4202 = vdwg.mxu0
        %4203 = vmatpush.bf16.msra.mxu0 %v2859
        %4204 = vmatpush.bf16.msra.mxu0 %v2851
        %4205 = vmatpush.bf16.msra.mxu0 %v2843
        %4206 = vmatpush.bf16.msra.mxu0 %v2835
        %4207 = vmatpush.bf16.msra.mxu0 %v2827
        %4208 = vmatpush.bf16.msra.mxu0 %v2819
        %4209 = vmatpush.bf16.msra.mxu0 %v2811
        %4210 = vmatpush.bf16.msra.mxu0 %v2803
        %4211 = vmatmul.bf16.gmra.mxu0 %v609
        %v4212 = vpop.f32.mrf.mxu0
        %v4213 = vadd.f32 %v4164, %v4212
        %v4214 = vpop.f32.mrf.mxu0
        %v4215 = vadd.f32 %v4166, %v4214
        %4216 = vmatmul.bf16.gmra.mxu0 %v617
        %v4217 = vpop.f32.mrf.mxu0
        %v4218 = vadd.f32 %v4169, %v4217
        %v4219 = vpop.f32.mrf.mxu0
        %v4220 = vadd.f32 %v4171, %v4219
        %4221 = vmatmul.bf16.gmra.mxu0 %v625
        %v4222 = vpop.f32.mrf.mxu0
        %v4223 = vadd.f32 %v4174, %v4222
        %v4224 = vpop.f32.mrf.mxu0
        %v4225 = vadd.f32 %v4176, %v4224
        %4226 = vmatmul.bf16.gmra.mxu0 %v633
        %v4227 = vpop.f32.mrf.mxu0
        %v4228 = vadd.f32 %v4179, %v4227
        %v4229 = vpop.f32.mrf.mxu0
        %v4230 = vadd.f32 %v4181, %v4229
        %4231 = vmatmul.bf16.gmra.mxu0 %v641
        %v4232 = vpop.f32.mrf.mxu0
        %v4233 = vadd.f32 %v4184, %v4232
        %v4234 = vpop.f32.mrf.mxu0
        %v4235 = vadd.f32 %v4186, %v4234
        %4236 = vmatmul.bf16.gmra.mxu0 %v649
        %v4237 = vpop.f32.mrf.mxu0
        %v4238 = vadd.f32 %v4189, %v4237
        %v4239 = vpop.f32.mrf.mxu0
        %v4240 = vadd.f32 %v4191, %v4239
        %4241 = vmatmul.bf16.gmra.mxu0 %v657
        %v4242 = vpop.f32.mrf.mxu0
        %v4243 = vadd.f32 %v4194, %v4242
        %v4244 = vpop.f32.mrf.mxu0
        %v4245 = vadd.f32 %v4196, %v4244
        %4246 = vmatmul.bf16.gmra.mxu0 %v665
        %v4247 = vpop.f32.mrf.mxu0
        %v4248 = vadd.f32 %v4199, %v4247
        %v4249 = vpop.f32.mrf.mxu0
        %v4250 = vadd.f32 %v4201, %v4249
        %4251 = vdwg.mxu0
        %4252 = vmatpush.bf16.msra.mxu0 %v2923
        %4253 = vmatpush.bf16.msra.mxu0 %v2915
        %4254 = vmatpush.bf16.msra.mxu0 %v2907
        %4255 = vmatpush.bf16.msra.mxu0 %v2899
        %4256 = vmatpush.bf16.msra.mxu0 %v2891
        %4257 = vmatpush.bf16.msra.mxu0 %v2883
        %4258 = vmatpush.bf16.msra.mxu0 %v2875
        %4259 = vmatpush.bf16.msra.mxu0 %v2867
        %4260 = vmatmul.bf16.gmra.mxu0 %v610
        %v4261 = vpop.f32.mrf.mxu0
        %v4262 = vadd.f32 %v4213, %v4261
        %v4263 = vpop.f32.mrf.mxu0
        %v4264 = vadd.f32 %v4215, %v4263
        %4265 = vmatmul.bf16.gmra.mxu0 %v618
        %v4266 = vpop.f32.mrf.mxu0
        %v4267 = vadd.f32 %v4218, %v4266
        %v4268 = vpop.f32.mrf.mxu0
        %v4269 = vadd.f32 %v4220, %v4268
        %4270 = vmatmul.bf16.gmra.mxu0 %v626
        %v4271 = vpop.f32.mrf.mxu0
        %v4272 = vadd.f32 %v4223, %v4271
        %v4273 = vpop.f32.mrf.mxu0
        %v4274 = vadd.f32 %v4225, %v4273
        %4275 = vmatmul.bf16.gmra.mxu0 %v634
        %v4276 = vpop.f32.mrf.mxu0
        %v4277 = vadd.f32 %v4228, %v4276
        %v4278 = vpop.f32.mrf.mxu0
        %v4279 = vadd.f32 %v4230, %v4278
        %4280 = vmatmul.bf16.gmra.mxu0 %v642
        %v4281 = vpop.f32.mrf.mxu0
        %v4282 = vadd.f32 %v4233, %v4281
        %v4283 = vpop.f32.mrf.mxu0
        %v4284 = vadd.f32 %v4235, %v4283
        %4285 = vmatmul.bf16.gmra.mxu0 %v650
        %v4286 = vpop.f32.mrf.mxu0
        %v4287 = vadd.f32 %v4238, %v4286
        %v4288 = vpop.f32.mrf.mxu0
        %v4289 = vadd.f32 %v4240, %v4288
        %4290 = vmatmul.bf16.gmra.mxu0 %v658
        %v4291 = vpop.f32.mrf.mxu0
        %v4292 = vadd.f32 %v4243, %v4291
        %v4293 = vpop.f32.mrf.mxu0
        %v4294 = vadd.f32 %v4245, %v4293
        %4295 = vmatmul.bf16.gmra.mxu0 %v666
        %v4296 = vpop.f32.mrf.mxu0
        %v4297 = vadd.f32 %v4248, %v4296
        %v4298 = vpop.f32.mrf.mxu0
        %v4299 = vadd.f32 %v4250, %v4298
        %4300 = vdwg.mxu0
        %4301 = vmatpush.bf16.msra.mxu0 %v2987
        %4302 = vmatpush.bf16.msra.mxu0 %v2979
        %4303 = vmatpush.bf16.msra.mxu0 %v2971
        %4304 = vmatpush.bf16.msra.mxu0 %v2963
        %4305 = vmatpush.bf16.msra.mxu0 %v2955
        %4306 = vmatpush.bf16.msra.mxu0 %v2947
        %4307 = vmatpush.bf16.msra.mxu0 %v2939
        %4308 = vmatpush.bf16.msra.mxu0 %v2931
        %4309 = vmatmul.bf16.gmra.mxu0 %v611
        %v4310 = vpop.f32.mrf.mxu0
        %v4311 = vadd.f32 %v4262, %v4310
        %v4312 = vpop.f32.mrf.mxu0
        %v4313 = vadd.f32 %v4264, %v4312
        %4314 = vmatmul.bf16.gmra.mxu0 %v619
        %v4315 = vpop.f32.mrf.mxu0
        %v4316 = vadd.f32 %v4267, %v4315
        %v4317 = vpop.f32.mrf.mxu0
        %v4318 = vadd.f32 %v4269, %v4317
        %4319 = vmatmul.bf16.gmra.mxu0 %v627
        %v4320 = vpop.f32.mrf.mxu0
        %v4321 = vadd.f32 %v4272, %v4320
        %v4322 = vpop.f32.mrf.mxu0
        %v4323 = vadd.f32 %v4274, %v4322
        %4324 = vmatmul.bf16.gmra.mxu0 %v635
        %v4325 = vpop.f32.mrf.mxu0
        %v4326 = vadd.f32 %v4277, %v4325
        %v4327 = vpop.f32.mrf.mxu0
        %v4328 = vadd.f32 %v4279, %v4327
        %4329 = vmatmul.bf16.gmra.mxu0 %v643
        %v4330 = vpop.f32.mrf.mxu0
        %v4331 = vadd.f32 %v4282, %v4330
        %v4332 = vpop.f32.mrf.mxu0
        %v4333 = vadd.f32 %v4284, %v4332
        %4334 = vmatmul.bf16.gmra.mxu0 %v651
        %v4335 = vpop.f32.mrf.mxu0
        %v4336 = vadd.f32 %v4287, %v4335
        %v4337 = vpop.f32.mrf.mxu0
        %v4338 = vadd.f32 %v4289, %v4337
        %4339 = vmatmul.bf16.gmra.mxu0 %v659
        %v4340 = vpop.f32.mrf.mxu0
        %v4341 = vadd.f32 %v4292, %v4340
        %v4342 = vpop.f32.mrf.mxu0
        %v4343 = vadd.f32 %v4294, %v4342
        %4344 = vmatmul.bf16.gmra.mxu0 %v667
        %v4345 = vpop.f32.mrf.mxu0
        %v4346 = vadd.f32 %v4297, %v4345
        %v4347 = vpop.f32.mrf.mxu0
        %v4348 = vadd.f32 %v4299, %v4347
        %4349 = vdwg.mxu0
        %4350 = vmatpush.bf16.msra.mxu0 %v3051
        %4351 = vmatpush.bf16.msra.mxu0 %v3043
        %4352 = vmatpush.bf16.msra.mxu0 %v3035
        %4353 = vmatpush.bf16.msra.mxu0 %v3027
        %4354 = vmatpush.bf16.msra.mxu0 %v3019
        %4355 = vmatpush.bf16.msra.mxu0 %v3011
        %4356 = vmatpush.bf16.msra.mxu0 %v3003
        %4357 = vmatpush.bf16.msra.mxu0 %v2995
        %4358 = vmatmul.bf16.gmra.mxu0 %v612
        %v4359 = vpop.f32.mrf.mxu0
        %v4360 = vadd.f32 %v4311, %v4359
        %v4361 = vpop.f32.mrf.mxu0
        %v4362 = vadd.f32 %v4313, %v4361
        %4363 = vmatmul.bf16.gmra.mxu0 %v620
        %v4364 = vpop.f32.mrf.mxu0
        %v4365 = vadd.f32 %v4316, %v4364
        %v4366 = vpop.f32.mrf.mxu0
        %v4367 = vadd.f32 %v4318, %v4366
        %4368 = vmatmul.bf16.gmra.mxu0 %v628
        %v4369 = vpop.f32.mrf.mxu0
        %v4370 = vadd.f32 %v4321, %v4369
        %v4371 = vpop.f32.mrf.mxu0
        %v4372 = vadd.f32 %v4323, %v4371
        %4373 = vmatmul.bf16.gmra.mxu0 %v636
        %v4374 = vpop.f32.mrf.mxu0
        %v4375 = vadd.f32 %v4326, %v4374
        %v4376 = vpop.f32.mrf.mxu0
        %v4377 = vadd.f32 %v4328, %v4376
        %4378 = vmatmul.bf16.gmra.mxu0 %v644
        %v4379 = vpop.f32.mrf.mxu0
        %v4380 = vadd.f32 %v4331, %v4379
        %v4381 = vpop.f32.mrf.mxu0
        %v4382 = vadd.f32 %v4333, %v4381
        %4383 = vmatmul.bf16.gmra.mxu0 %v652
        %v4384 = vpop.f32.mrf.mxu0
        %v4385 = vadd.f32 %v4336, %v4384
        %v4386 = vpop.f32.mrf.mxu0
        %v4387 = vadd.f32 %v4338, %v4386
        %4388 = vmatmul.bf16.gmra.mxu0 %v660
        %v4389 = vpop.f32.mrf.mxu0
        %v4390 = vadd.f32 %v4341, %v4389
        %v4391 = vpop.f32.mrf.mxu0
        %v4392 = vadd.f32 %v4343, %v4391
        %4393 = vmatmul.bf16.gmra.mxu0 %v668
        %v4394 = vpop.f32.mrf.mxu0
        %v4395 = vadd.f32 %v4346, %v4394
        %v4396 = vpop.f32.mrf.mxu0
        %v4397 = vadd.f32 %v4348, %v4396
        %4398 = vdwg.mxu0
        %4399 = vmatpush.bf16.msra.mxu0 %v3115
        %4400 = vmatpush.bf16.msra.mxu0 %v3107
        %4401 = vmatpush.bf16.msra.mxu0 %v3099
        %4402 = vmatpush.bf16.msra.mxu0 %v3091
        %4403 = vmatpush.bf16.msra.mxu0 %v3083
        %4404 = vmatpush.bf16.msra.mxu0 %v3075
        %4405 = vmatpush.bf16.msra.mxu0 %v3067
        %4406 = vmatpush.bf16.msra.mxu0 %v3059
        %4407 = vmatmul.bf16.gmra.mxu0 %v613
        %v4408 = vpop.f32.mrf.mxu0
        %v4409 = vadd.f32 %v4360, %v4408
        %v4410 = vpop.f32.mrf.mxu0
        %v4411 = vadd.f32 %v4362, %v4410
        %4412 = vmatmul.bf16.gmra.mxu0 %v621
        %v4413 = vpop.f32.mrf.mxu0
        %v4414 = vadd.f32 %v4365, %v4413
        %v4415 = vpop.f32.mrf.mxu0
        %v4416 = vadd.f32 %v4367, %v4415
        %4417 = vmatmul.bf16.gmra.mxu0 %v629
        %v4418 = vpop.f32.mrf.mxu0
        %v4419 = vadd.f32 %v4370, %v4418
        %v4420 = vpop.f32.mrf.mxu0
        %v4421 = vadd.f32 %v4372, %v4420
        %4422 = vmatmul.bf16.gmra.mxu0 %v637
        %v4423 = vpop.f32.mrf.mxu0
        %v4424 = vadd.f32 %v4375, %v4423
        %v4425 = vpop.f32.mrf.mxu0
        %v4426 = vadd.f32 %v4377, %v4425
        %4427 = vmatmul.bf16.gmra.mxu0 %v645
        %v4428 = vpop.f32.mrf.mxu0
        %v4429 = vadd.f32 %v4380, %v4428
        %v4430 = vpop.f32.mrf.mxu0
        %v4431 = vadd.f32 %v4382, %v4430
        %4432 = vmatmul.bf16.gmra.mxu0 %v653
        %v4433 = vpop.f32.mrf.mxu0
        %v4434 = vadd.f32 %v4385, %v4433
        %v4435 = vpop.f32.mrf.mxu0
        %v4436 = vadd.f32 %v4387, %v4435
        %4437 = vmatmul.bf16.gmra.mxu0 %v661
        %v4438 = vpop.f32.mrf.mxu0
        %v4439 = vadd.f32 %v4390, %v4438
        %v4440 = vpop.f32.mrf.mxu0
        %v4441 = vadd.f32 %v4392, %v4440
        %4442 = vmatmul.bf16.gmra.mxu0 %v669
        %v4443 = vpop.f32.mrf.mxu0
        %v4444 = vadd.f32 %v4395, %v4443
        %v4445 = vpop.f32.mrf.mxu0
        %v4446 = vadd.f32 %v4397, %v4445
        %4447 = vdwg.mxu0
        %4448 = vmatpush.bf16.msra.mxu0 %v3179
        %4449 = vmatpush.bf16.msra.mxu0 %v3171
        %4450 = vmatpush.bf16.msra.mxu0 %v3163
        %4451 = vmatpush.bf16.msra.mxu0 %v3155
        %4452 = vmatpush.bf16.msra.mxu0 %v3147
        %4453 = vmatpush.bf16.msra.mxu0 %v3139
        %4454 = vmatpush.bf16.msra.mxu0 %v3131
        %4455 = vmatpush.bf16.msra.mxu0 %v3123
        %4456 = vmatmul.bf16.gmra.mxu0 %v614
        %v4457 = vpop.f32.mrf.mxu0
        %v4458 = vadd.f32 %v4409, %v4457
        %v4459 = vpop.f32.mrf.mxu0
        %v4460 = vadd.f32 %v4411, %v4459
        %4461 = vmatmul.bf16.gmra.mxu0 %v622
        %v4462 = vpop.f32.mrf.mxu0
        %v4463 = vadd.f32 %v4414, %v4462
        %v4464 = vpop.f32.mrf.mxu0
        %v4465 = vadd.f32 %v4416, %v4464
        %4466 = vmatmul.bf16.gmra.mxu0 %v630
        %v4467 = vpop.f32.mrf.mxu0
        %v4468 = vadd.f32 %v4419, %v4467
        %v4469 = vpop.f32.mrf.mxu0
        %v4470 = vadd.f32 %v4421, %v4469
        %4471 = vmatmul.bf16.gmra.mxu0 %v638
        %v4472 = vpop.f32.mrf.mxu0
        %v4473 = vadd.f32 %v4424, %v4472
        %v4474 = vpop.f32.mrf.mxu0
        %v4475 = vadd.f32 %v4426, %v4474
        %4476 = vmatmul.bf16.gmra.mxu0 %v646
        %v4477 = vpop.f32.mrf.mxu0
        %v4478 = vadd.f32 %v4429, %v4477
        %v4479 = vpop.f32.mrf.mxu0
        %v4480 = vadd.f32 %v4431, %v4479
        %4481 = vmatmul.bf16.gmra.mxu0 %v654
        %v4482 = vpop.f32.mrf.mxu0
        %v4483 = vadd.f32 %v4434, %v4482
        %v4484 = vpop.f32.mrf.mxu0
        %v4485 = vadd.f32 %v4436, %v4484
        %4486 = vmatmul.bf16.gmra.mxu0 %v662
        %v4487 = vpop.f32.mrf.mxu0
        %v4488 = vadd.f32 %v4439, %v4487
        %v4489 = vpop.f32.mrf.mxu0
        %v4490 = vadd.f32 %v4441, %v4489
        %4491 = vmatmul.bf16.gmra.mxu0 %v670
        %v4492 = vpop.f32.mrf.mxu0
        %v4493 = vadd.f32 %v4444, %v4492
        %v4494 = vpop.f32.mrf.mxu0
        %v4495 = vadd.f32 %v4446, %v4494
        %4496 = vdwg.mxu0
        %4497 = vmatpush.bf16.msra.mxu0 %v3243
        %4498 = vmatpush.bf16.msra.mxu0 %v3235
        %4499 = vmatpush.bf16.msra.mxu0 %v3227
        %4500 = vmatpush.bf16.msra.mxu0 %v3219
        %4501 = vmatpush.bf16.msra.mxu0 %v3211
        %4502 = vmatpush.bf16.msra.mxu0 %v3203
        %4503 = vmatpush.bf16.msra.mxu0 %v3195
        %4504 = vmatpush.bf16.msra.mxu0 %v3187
        %4505 = vmatmul.bf16.gmra.mxu0 %v615
        %v4506 = vpop.f32.mrf.mxu0
        %v4507 = vadd.f32 %v4458, %v4506
        %v4508 = vpop.f32.mrf.mxu0
        %v4509 = vadd.f32 %v4460, %v4508
        %4510 = vmatmul.bf16.gmra.mxu0 %v623
        %v4511 = vpop.f32.mrf.mxu0
        %v4512 = vadd.f32 %v4463, %v4511
        %v4513 = vpop.f32.mrf.mxu0
        %v4514 = vadd.f32 %v4465, %v4513
        %4515 = vmatmul.bf16.gmra.mxu0 %v631
        %v4516 = vpop.f32.mrf.mxu0
        %v4517 = vadd.f32 %v4468, %v4516
        %v4518 = vpop.f32.mrf.mxu0
        %v4519 = vadd.f32 %v4470, %v4518
        %4520 = vmatmul.bf16.gmra.mxu0 %v639
        %v4521 = vpop.f32.mrf.mxu0
        %v4522 = vadd.f32 %v4473, %v4521
        %v4523 = vpop.f32.mrf.mxu0
        %v4524 = vadd.f32 %v4475, %v4523
        %4525 = vmatmul.bf16.gmra.mxu0 %v647
        %v4526 = vpop.f32.mrf.mxu0
        %v4527 = vadd.f32 %v4478, %v4526
        %v4528 = vpop.f32.mrf.mxu0
        %v4529 = vadd.f32 %v4480, %v4528
        %4530 = vmatmul.bf16.gmra.mxu0 %v655
        %v4531 = vpop.f32.mrf.mxu0
        %v4532 = vadd.f32 %v4483, %v4531
        %v4533 = vpop.f32.mrf.mxu0
        %v4534 = vadd.f32 %v4485, %v4533
        %4535 = vmatmul.bf16.gmra.mxu0 %v663
        %v4536 = vpop.f32.mrf.mxu0
        %v4537 = vadd.f32 %v4488, %v4536
        %v4538 = vpop.f32.mrf.mxu0
        %v4539 = vadd.f32 %v4490, %v4538
        %4540 = vmatmul.bf16.gmra.mxu0 %v671
        %v4541 = vpop.f32.mrf.mxu0
        %v4542 = vadd.f32 %v4493, %v4541
        %v4543 = vpop.f32.mrf.mxu0
        %v4544 = vadd.f32 %v4495, %v4543
        %4545 = vdwg.mxu0
        %4546 = vmatpush.bf16.msra.mxu0 %v2796
        %4547 = vmatpush.bf16.msra.mxu0 %v2788
        %4548 = vmatpush.bf16.msra.mxu0 %v2780
        %4549 = vmatpush.bf16.msra.mxu0 %v2772
        %4550 = vmatpush.bf16.msra.mxu0 %v2764
        %4551 = vmatpush.bf16.msra.mxu0 %v2756
        %4552 = vmatpush.bf16.msra.mxu0 %v2748
        %4553 = vmatpush.bf16.msra.mxu0 %v2740
        %4554 = vmatmul.bf16.gmra.mxu0 %v608
        %v4555 = vpop.f32.mrf.mxu0
        %v4556 = vadd.f32 %v1188, %v4555
        %v4557 = vpop.f32.mrf.mxu0
        %v4558 = vadd.f32 %v1188, %v4557
        %4559 = vmatmul.bf16.gmra.mxu0 %v616
        %v4560 = vpop.f32.mrf.mxu0
        %v4561 = vadd.f32 %v1188, %v4560
        %v4562 = vpop.f32.mrf.mxu0
        %v4563 = vadd.f32 %v1188, %v4562
        %4564 = vmatmul.bf16.gmra.mxu0 %v624
        %v4565 = vpop.f32.mrf.mxu0
        %v4566 = vadd.f32 %v1188, %v4565
        %v4567 = vpop.f32.mrf.mxu0
        %v4568 = vadd.f32 %v1188, %v4567
        %4569 = vmatmul.bf16.gmra.mxu0 %v632
        %v4570 = vpop.f32.mrf.mxu0
        %v4571 = vadd.f32 %v1188, %v4570
        %v4572 = vpop.f32.mrf.mxu0
        %v4573 = vadd.f32 %v1188, %v4572
        %4574 = vmatmul.bf16.gmra.mxu0 %v640
        %v4575 = vpop.f32.mrf.mxu0
        %v4576 = vadd.f32 %v1188, %v4575
        %v4577 = vpop.f32.mrf.mxu0
        %v4578 = vadd.f32 %v1188, %v4577
        %4579 = vmatmul.bf16.gmra.mxu0 %v648
        %v4580 = vpop.f32.mrf.mxu0
        %v4581 = vadd.f32 %v1188, %v4580
        %v4582 = vpop.f32.mrf.mxu0
        %v4583 = vadd.f32 %v1188, %v4582
        %4584 = vmatmul.bf16.gmra.mxu0 %v656
        %v4585 = vpop.f32.mrf.mxu0
        %v4586 = vadd.f32 %v1188, %v4585
        %v4587 = vpop.f32.mrf.mxu0
        %v4588 = vadd.f32 %v1188, %v4587
        %4589 = vmatmul.bf16.gmra.mxu0 %v664
        %v4590 = vpop.f32.mrf.mxu0
        %v4591 = vadd.f32 %v1188, %v4590
        %v4592 = vpop.f32.mrf.mxu0
        %v4593 = vadd.f32 %v1188, %v4592
        %4594 = vdwg.mxu0
        %4595 = vmatpush.bf16.msra.mxu0 %v2860
        %4596 = vmatpush.bf16.msra.mxu0 %v2852
        %4597 = vmatpush.bf16.msra.mxu0 %v2844
        %4598 = vmatpush.bf16.msra.mxu0 %v2836
        %4599 = vmatpush.bf16.msra.mxu0 %v2828
        %4600 = vmatpush.bf16.msra.mxu0 %v2820
        %4601 = vmatpush.bf16.msra.mxu0 %v2812
        %4602 = vmatpush.bf16.msra.mxu0 %v2804
        %4603 = vmatmul.bf16.gmra.mxu0 %v609
        %v4604 = vpop.f32.mrf.mxu0
        %v4605 = vadd.f32 %v4556, %v4604
        %v4606 = vpop.f32.mrf.mxu0
        %v4607 = vadd.f32 %v4558, %v4606
        %4608 = vmatmul.bf16.gmra.mxu0 %v617
        %v4609 = vpop.f32.mrf.mxu0
        %v4610 = vadd.f32 %v4561, %v4609
        %v4611 = vpop.f32.mrf.mxu0
        %v4612 = vadd.f32 %v4563, %v4611
        %4613 = vmatmul.bf16.gmra.mxu0 %v625
        %v4614 = vpop.f32.mrf.mxu0
        %v4615 = vadd.f32 %v4566, %v4614
        %v4616 = vpop.f32.mrf.mxu0
        %v4617 = vadd.f32 %v4568, %v4616
        %4618 = vmatmul.bf16.gmra.mxu0 %v633
        %v4619 = vpop.f32.mrf.mxu0
        %v4620 = vadd.f32 %v4571, %v4619
        %v4621 = vpop.f32.mrf.mxu0
        %v4622 = vadd.f32 %v4573, %v4621
        %4623 = vmatmul.bf16.gmra.mxu0 %v641
        %v4624 = vpop.f32.mrf.mxu0
        %v4625 = vadd.f32 %v4576, %v4624
        %v4626 = vpop.f32.mrf.mxu0
        %v4627 = vadd.f32 %v4578, %v4626
        %4628 = vmatmul.bf16.gmra.mxu0 %v649
        %v4629 = vpop.f32.mrf.mxu0
        %v4630 = vadd.f32 %v4581, %v4629
        %v4631 = vpop.f32.mrf.mxu0
        %v4632 = vadd.f32 %v4583, %v4631
        %4633 = vmatmul.bf16.gmra.mxu0 %v657
        %v4634 = vpop.f32.mrf.mxu0
        %v4635 = vadd.f32 %v4586, %v4634
        %v4636 = vpop.f32.mrf.mxu0
        %v4637 = vadd.f32 %v4588, %v4636
        %4638 = vmatmul.bf16.gmra.mxu0 %v665
        %v4639 = vpop.f32.mrf.mxu0
        %v4640 = vadd.f32 %v4591, %v4639
        %v4641 = vpop.f32.mrf.mxu0
        %v4642 = vadd.f32 %v4593, %v4641
        %4643 = vdwg.mxu0
        %4644 = vmatpush.bf16.msra.mxu0 %v2924
        %4645 = vmatpush.bf16.msra.mxu0 %v2916
        %4646 = vmatpush.bf16.msra.mxu0 %v2908
        %4647 = vmatpush.bf16.msra.mxu0 %v2900
        %4648 = vmatpush.bf16.msra.mxu0 %v2892
        %4649 = vmatpush.bf16.msra.mxu0 %v2884
        %4650 = vmatpush.bf16.msra.mxu0 %v2876
        %4651 = vmatpush.bf16.msra.mxu0 %v2868
        %4652 = vmatmul.bf16.gmra.mxu0 %v610
        %v4653 = vpop.f32.mrf.mxu0
        %v4654 = vadd.f32 %v4605, %v4653
        %v4655 = vpop.f32.mrf.mxu0
        %v4656 = vadd.f32 %v4607, %v4655
        %4657 = vmatmul.bf16.gmra.mxu0 %v618
        %v4658 = vpop.f32.mrf.mxu0
        %v4659 = vadd.f32 %v4610, %v4658
        %v4660 = vpop.f32.mrf.mxu0
        %v4661 = vadd.f32 %v4612, %v4660
        %4662 = vmatmul.bf16.gmra.mxu0 %v626
        %v4663 = vpop.f32.mrf.mxu0
        %v4664 = vadd.f32 %v4615, %v4663
        %v4665 = vpop.f32.mrf.mxu0
        %v4666 = vadd.f32 %v4617, %v4665
        %4667 = vmatmul.bf16.gmra.mxu0 %v634
        %v4668 = vpop.f32.mrf.mxu0
        %v4669 = vadd.f32 %v4620, %v4668
        %v4670 = vpop.f32.mrf.mxu0
        %v4671 = vadd.f32 %v4622, %v4670
        %4672 = vmatmul.bf16.gmra.mxu0 %v642
        %v4673 = vpop.f32.mrf.mxu0
        %v4674 = vadd.f32 %v4625, %v4673
        %v4675 = vpop.f32.mrf.mxu0
        %v4676 = vadd.f32 %v4627, %v4675
        %4677 = vmatmul.bf16.gmra.mxu0 %v650
        %v4678 = vpop.f32.mrf.mxu0
        %v4679 = vadd.f32 %v4630, %v4678
        %v4680 = vpop.f32.mrf.mxu0
        %v4681 = vadd.f32 %v4632, %v4680
        %4682 = vmatmul.bf16.gmra.mxu0 %v658
        %v4683 = vpop.f32.mrf.mxu0
        %v4684 = vadd.f32 %v4635, %v4683
        %v4685 = vpop.f32.mrf.mxu0
        %v4686 = vadd.f32 %v4637, %v4685
        %4687 = vmatmul.bf16.gmra.mxu0 %v666
        %v4688 = vpop.f32.mrf.mxu0
        %v4689 = vadd.f32 %v4640, %v4688
        %v4690 = vpop.f32.mrf.mxu0
        %v4691 = vadd.f32 %v4642, %v4690
        %4692 = vdwg.mxu0
        %4693 = vmatpush.bf16.msra.mxu0 %v2988
        %4694 = vmatpush.bf16.msra.mxu0 %v2980
        %4695 = vmatpush.bf16.msra.mxu0 %v2972
        %4696 = vmatpush.bf16.msra.mxu0 %v2964
        %4697 = vmatpush.bf16.msra.mxu0 %v2956
        %4698 = vmatpush.bf16.msra.mxu0 %v2948
        %4699 = vmatpush.bf16.msra.mxu0 %v2940
        %4700 = vmatpush.bf16.msra.mxu0 %v2932
        %4701 = vmatmul.bf16.gmra.mxu0 %v611
        %v4702 = vpop.f32.mrf.mxu0
        %v4703 = vadd.f32 %v4654, %v4702
        %v4704 = vpop.f32.mrf.mxu0
        %v4705 = vadd.f32 %v4656, %v4704
        %4706 = vmatmul.bf16.gmra.mxu0 %v619
        %v4707 = vpop.f32.mrf.mxu0
        %v4708 = vadd.f32 %v4659, %v4707
        %v4709 = vpop.f32.mrf.mxu0
        %v4710 = vadd.f32 %v4661, %v4709
        %4711 = vmatmul.bf16.gmra.mxu0 %v627
        %v4712 = vpop.f32.mrf.mxu0
        %v4713 = vadd.f32 %v4664, %v4712
        %v4714 = vpop.f32.mrf.mxu0
        %v4715 = vadd.f32 %v4666, %v4714
        %4716 = vmatmul.bf16.gmra.mxu0 %v635
        %v4717 = vpop.f32.mrf.mxu0
        %v4718 = vadd.f32 %v4669, %v4717
        %v4719 = vpop.f32.mrf.mxu0
        %v4720 = vadd.f32 %v4671, %v4719
        %4721 = vmatmul.bf16.gmra.mxu0 %v643
        %v4722 = vpop.f32.mrf.mxu0
        %v4723 = vadd.f32 %v4674, %v4722
        %v4724 = vpop.f32.mrf.mxu0
        %v4725 = vadd.f32 %v4676, %v4724
        %4726 = vmatmul.bf16.gmra.mxu0 %v651
        %v4727 = vpop.f32.mrf.mxu0
        %v4728 = vadd.f32 %v4679, %v4727
        %v4729 = vpop.f32.mrf.mxu0
        %v4730 = vadd.f32 %v4681, %v4729
        %4731 = vmatmul.bf16.gmra.mxu0 %v659
        %v4732 = vpop.f32.mrf.mxu0
        %v4733 = vadd.f32 %v4684, %v4732
        %v4734 = vpop.f32.mrf.mxu0
        %v4735 = vadd.f32 %v4686, %v4734
        %4736 = vmatmul.bf16.gmra.mxu0 %v667
        %v4737 = vpop.f32.mrf.mxu0
        %v4738 = vadd.f32 %v4689, %v4737
        %v4739 = vpop.f32.mrf.mxu0
        %v4740 = vadd.f32 %v4691, %v4739
        %4741 = vdwg.mxu0
        %4742 = vmatpush.bf16.msra.mxu0 %v3052
        %4743 = vmatpush.bf16.msra.mxu0 %v3044
        %4744 = vmatpush.bf16.msra.mxu0 %v3036
        %4745 = vmatpush.bf16.msra.mxu0 %v3028
        %4746 = vmatpush.bf16.msra.mxu0 %v3020
        %4747 = vmatpush.bf16.msra.mxu0 %v3012
        %4748 = vmatpush.bf16.msra.mxu0 %v3004
        %4749 = vmatpush.bf16.msra.mxu0 %v2996
        %4750 = vmatmul.bf16.gmra.mxu0 %v612
        %v4751 = vpop.f32.mrf.mxu0
        %v4752 = vadd.f32 %v4703, %v4751
        %v4753 = vpop.f32.mrf.mxu0
        %v4754 = vadd.f32 %v4705, %v4753
        %4755 = vmatmul.bf16.gmra.mxu0 %v620
        %v4756 = vpop.f32.mrf.mxu0
        %v4757 = vadd.f32 %v4708, %v4756
        %v4758 = vpop.f32.mrf.mxu0
        %v4759 = vadd.f32 %v4710, %v4758
        %4760 = vmatmul.bf16.gmra.mxu0 %v628
        %v4761 = vpop.f32.mrf.mxu0
        %v4762 = vadd.f32 %v4713, %v4761
        %v4763 = vpop.f32.mrf.mxu0
        %v4764 = vadd.f32 %v4715, %v4763
        %4765 = vmatmul.bf16.gmra.mxu0 %v636
        %v4766 = vpop.f32.mrf.mxu0
        %v4767 = vadd.f32 %v4718, %v4766
        %v4768 = vpop.f32.mrf.mxu0
        %v4769 = vadd.f32 %v4720, %v4768
        %4770 = vmatmul.bf16.gmra.mxu0 %v644
        %v4771 = vpop.f32.mrf.mxu0
        %v4772 = vadd.f32 %v4723, %v4771
        %v4773 = vpop.f32.mrf.mxu0
        %v4774 = vadd.f32 %v4725, %v4773
        %4775 = vmatmul.bf16.gmra.mxu0 %v652
        %v4776 = vpop.f32.mrf.mxu0
        %v4777 = vadd.f32 %v4728, %v4776
        %v4778 = vpop.f32.mrf.mxu0
        %v4779 = vadd.f32 %v4730, %v4778
        %4780 = vmatmul.bf16.gmra.mxu0 %v660
        %v4781 = vpop.f32.mrf.mxu0
        %v4782 = vadd.f32 %v4733, %v4781
        %v4783 = vpop.f32.mrf.mxu0
        %v4784 = vadd.f32 %v4735, %v4783
        %4785 = vmatmul.bf16.gmra.mxu0 %v668
        %v4786 = vpop.f32.mrf.mxu0
        %v4787 = vadd.f32 %v4738, %v4786
        %v4788 = vpop.f32.mrf.mxu0
        %v4789 = vadd.f32 %v4740, %v4788
        %4790 = vdwg.mxu0
        %4791 = vmatpush.bf16.msra.mxu0 %v3116
        %4792 = vmatpush.bf16.msra.mxu0 %v3108
        %4793 = vmatpush.bf16.msra.mxu0 %v3100
        %4794 = vmatpush.bf16.msra.mxu0 %v3092
        %4795 = vmatpush.bf16.msra.mxu0 %v3084
        %4796 = vmatpush.bf16.msra.mxu0 %v3076
        %4797 = vmatpush.bf16.msra.mxu0 %v3068
        %4798 = vmatpush.bf16.msra.mxu0 %v3060
        %4799 = vmatmul.bf16.gmra.mxu0 %v613
        %v4800 = vpop.f32.mrf.mxu0
        %v4801 = vadd.f32 %v4752, %v4800
        %v4802 = vpop.f32.mrf.mxu0
        %v4803 = vadd.f32 %v4754, %v4802
        %4804 = vmatmul.bf16.gmra.mxu0 %v621
        %v4805 = vpop.f32.mrf.mxu0
        %v4806 = vadd.f32 %v4757, %v4805
        %v4807 = vpop.f32.mrf.mxu0
        %v4808 = vadd.f32 %v4759, %v4807
        %4809 = vmatmul.bf16.gmra.mxu0 %v629
        %v4810 = vpop.f32.mrf.mxu0
        %v4811 = vadd.f32 %v4762, %v4810
        %v4812 = vpop.f32.mrf.mxu0
        %v4813 = vadd.f32 %v4764, %v4812
        %4814 = vmatmul.bf16.gmra.mxu0 %v637
        %v4815 = vpop.f32.mrf.mxu0
        %v4816 = vadd.f32 %v4767, %v4815
        %v4817 = vpop.f32.mrf.mxu0
        %v4818 = vadd.f32 %v4769, %v4817
        %4819 = vmatmul.bf16.gmra.mxu0 %v645
        %v4820 = vpop.f32.mrf.mxu0
        %v4821 = vadd.f32 %v4772, %v4820
        %v4822 = vpop.f32.mrf.mxu0
        %v4823 = vadd.f32 %v4774, %v4822
        %4824 = vmatmul.bf16.gmra.mxu0 %v653
        %v4825 = vpop.f32.mrf.mxu0
        %v4826 = vadd.f32 %v4777, %v4825
        %v4827 = vpop.f32.mrf.mxu0
        %v4828 = vadd.f32 %v4779, %v4827
        %4829 = vmatmul.bf16.gmra.mxu0 %v661
        %v4830 = vpop.f32.mrf.mxu0
        %v4831 = vadd.f32 %v4782, %v4830
        %v4832 = vpop.f32.mrf.mxu0
        %v4833 = vadd.f32 %v4784, %v4832
        %4834 = vmatmul.bf16.gmra.mxu0 %v669
        %v4835 = vpop.f32.mrf.mxu0
        %v4836 = vadd.f32 %v4787, %v4835
        %v4837 = vpop.f32.mrf.mxu0
        %v4838 = vadd.f32 %v4789, %v4837
        %4839 = vdwg.mxu0
        %4840 = vmatpush.bf16.msra.mxu0 %v3180
        %4841 = vmatpush.bf16.msra.mxu0 %v3172
        %4842 = vmatpush.bf16.msra.mxu0 %v3164
        %4843 = vmatpush.bf16.msra.mxu0 %v3156
        %4844 = vmatpush.bf16.msra.mxu0 %v3148
        %4845 = vmatpush.bf16.msra.mxu0 %v3140
        %4846 = vmatpush.bf16.msra.mxu0 %v3132
        %4847 = vmatpush.bf16.msra.mxu0 %v3124
        %4848 = vmatmul.bf16.gmra.mxu0 %v614
        %v4849 = vpop.f32.mrf.mxu0
        %v4850 = vadd.f32 %v4801, %v4849
        %v4851 = vpop.f32.mrf.mxu0
        %v4852 = vadd.f32 %v4803, %v4851
        %4853 = vmatmul.bf16.gmra.mxu0 %v622
        %v4854 = vpop.f32.mrf.mxu0
        %v4855 = vadd.f32 %v4806, %v4854
        %v4856 = vpop.f32.mrf.mxu0
        %v4857 = vadd.f32 %v4808, %v4856
        %4858 = vmatmul.bf16.gmra.mxu0 %v630
        %v4859 = vpop.f32.mrf.mxu0
        %v4860 = vadd.f32 %v4811, %v4859
        %v4861 = vpop.f32.mrf.mxu0
        %v4862 = vadd.f32 %v4813, %v4861
        %4863 = vmatmul.bf16.gmra.mxu0 %v638
        %v4864 = vpop.f32.mrf.mxu0
        %v4865 = vadd.f32 %v4816, %v4864
        %v4866 = vpop.f32.mrf.mxu0
        %v4867 = vadd.f32 %v4818, %v4866
        %4868 = vmatmul.bf16.gmra.mxu0 %v646
        %v4869 = vpop.f32.mrf.mxu0
        %v4870 = vadd.f32 %v4821, %v4869
        %v4871 = vpop.f32.mrf.mxu0
        %v4872 = vadd.f32 %v4823, %v4871
        %4873 = vmatmul.bf16.gmra.mxu0 %v654
        %v4874 = vpop.f32.mrf.mxu0
        %v4875 = vadd.f32 %v4826, %v4874
        %v4876 = vpop.f32.mrf.mxu0
        %v4877 = vadd.f32 %v4828, %v4876
        %4878 = vmatmul.bf16.gmra.mxu0 %v662
        %v4879 = vpop.f32.mrf.mxu0
        %v4880 = vadd.f32 %v4831, %v4879
        %v4881 = vpop.f32.mrf.mxu0
        %v4882 = vadd.f32 %v4833, %v4881
        %4883 = vmatmul.bf16.gmra.mxu0 %v670
        %v4884 = vpop.f32.mrf.mxu0
        %v4885 = vadd.f32 %v4836, %v4884
        %v4886 = vpop.f32.mrf.mxu0
        %v4887 = vadd.f32 %v4838, %v4886
        %4888 = vdwg.mxu0
        %4889 = vmatpush.bf16.msra.mxu0 %v3244
        %4890 = vmatpush.bf16.msra.mxu0 %v3236
        %4891 = vmatpush.bf16.msra.mxu0 %v3228
        %4892 = vmatpush.bf16.msra.mxu0 %v3220
        %4893 = vmatpush.bf16.msra.mxu0 %v3212
        %4894 = vmatpush.bf16.msra.mxu0 %v3204
        %4895 = vmatpush.bf16.msra.mxu0 %v3196
        %4896 = vmatpush.bf16.msra.mxu0 %v3188
        %4897 = vmatmul.bf16.gmra.mxu0 %v615
        %v4898 = vpop.f32.mrf.mxu0
        %v4899 = vadd.f32 %v4850, %v4898
        %v4900 = vpop.f32.mrf.mxu0
        %v4901 = vadd.f32 %v4852, %v4900
        %4902 = vmatmul.bf16.gmra.mxu0 %v623
        %v4903 = vpop.f32.mrf.mxu0
        %v4904 = vadd.f32 %v4855, %v4903
        %v4905 = vpop.f32.mrf.mxu0
        %v4906 = vadd.f32 %v4857, %v4905
        %4907 = vmatmul.bf16.gmra.mxu0 %v631
        %v4908 = vpop.f32.mrf.mxu0
        %v4909 = vadd.f32 %v4860, %v4908
        %v4910 = vpop.f32.mrf.mxu0
        %v4911 = vadd.f32 %v4862, %v4910
        %4912 = vmatmul.bf16.gmra.mxu0 %v639
        %v4913 = vpop.f32.mrf.mxu0
        %v4914 = vadd.f32 %v4865, %v4913
        %v4915 = vpop.f32.mrf.mxu0
        %v4916 = vadd.f32 %v4867, %v4915
        %4917 = vmatmul.bf16.gmra.mxu0 %v647
        %v4918 = vpop.f32.mrf.mxu0
        %v4919 = vadd.f32 %v4870, %v4918
        %v4920 = vpop.f32.mrf.mxu0
        %v4921 = vadd.f32 %v4872, %v4920
        %4922 = vmatmul.bf16.gmra.mxu0 %v655
        %v4923 = vpop.f32.mrf.mxu0
        %v4924 = vadd.f32 %v4875, %v4923
        %v4925 = vpop.f32.mrf.mxu0
        %v4926 = vadd.f32 %v4877, %v4925
        %4927 = vmatmul.bf16.gmra.mxu0 %v663
        %v4928 = vpop.f32.mrf.mxu0
        %v4929 = vadd.f32 %v4880, %v4928
        %v4930 = vpop.f32.mrf.mxu0
        %v4931 = vadd.f32 %v4882, %v4930
        %4932 = vmatmul.bf16.gmra.mxu0 %v671
        %v4933 = vpop.f32.mrf.mxu0
        %v4934 = vadd.f32 %v4885, %v4933
        %v4935 = vpop.f32.mrf.mxu0
        %v4936 = vadd.f32 %v4887, %v4935
        %4937 = vdwg.mxu0
        %4938 = vmatpush.bf16.msra.mxu0 %v2797
        %4939 = vmatpush.bf16.msra.mxu0 %v2789
        %4940 = vmatpush.bf16.msra.mxu0 %v2781
        %4941 = vmatpush.bf16.msra.mxu0 %v2773
        %4942 = vmatpush.bf16.msra.mxu0 %v2765
        %4943 = vmatpush.bf16.msra.mxu0 %v2757
        %4944 = vmatpush.bf16.msra.mxu0 %v2749
        %4945 = vmatpush.bf16.msra.mxu0 %v2741
        %4946 = vmatmul.bf16.gmra.mxu0 %v608
        %v4947 = vpop.f32.mrf.mxu0
        %v4948 = vadd.f32 %v1189, %v4947
        %v4949 = vpop.f32.mrf.mxu0
        %v4950 = vadd.f32 %v1189, %v4949
        %4951 = vmatmul.bf16.gmra.mxu0 %v616
        %v4952 = vpop.f32.mrf.mxu0
        %v4953 = vadd.f32 %v1189, %v4952
        %v4954 = vpop.f32.mrf.mxu0
        %v4955 = vadd.f32 %v1189, %v4954
        %4956 = vmatmul.bf16.gmra.mxu0 %v624
        %v4957 = vpop.f32.mrf.mxu0
        %v4958 = vadd.f32 %v1189, %v4957
        %v4959 = vpop.f32.mrf.mxu0
        %v4960 = vadd.f32 %v1189, %v4959
        %4961 = vmatmul.bf16.gmra.mxu0 %v632
        %v4962 = vpop.f32.mrf.mxu0
        %v4963 = vadd.f32 %v1189, %v4962
        %v4964 = vpop.f32.mrf.mxu0
        %v4965 = vadd.f32 %v1189, %v4964
        %4966 = vmatmul.bf16.gmra.mxu0 %v640
        %v4967 = vpop.f32.mrf.mxu0
        %v4968 = vadd.f32 %v1189, %v4967
        %v4969 = vpop.f32.mrf.mxu0
        %v4970 = vadd.f32 %v1189, %v4969
        %4971 = vmatmul.bf16.gmra.mxu0 %v648
        %v4972 = vpop.f32.mrf.mxu0
        %v4973 = vadd.f32 %v1189, %v4972
        %v4974 = vpop.f32.mrf.mxu0
        %v4975 = vadd.f32 %v1189, %v4974
        %4976 = vmatmul.bf16.gmra.mxu0 %v656
        %v4977 = vpop.f32.mrf.mxu0
        %v4978 = vadd.f32 %v1189, %v4977
        %v4979 = vpop.f32.mrf.mxu0
        %v4980 = vadd.f32 %v1189, %v4979
        %4981 = vmatmul.bf16.gmra.mxu0 %v664
        %v4982 = vpop.f32.mrf.mxu0
        %v4983 = vadd.f32 %v1189, %v4982
        %v4984 = vpop.f32.mrf.mxu0
        %v4985 = vadd.f32 %v1189, %v4984
        %4986 = vdwg.mxu0
        %4987 = vmatpush.bf16.msra.mxu0 %v2861
        %4988 = vmatpush.bf16.msra.mxu0 %v2853
        %4989 = vmatpush.bf16.msra.mxu0 %v2845
        %4990 = vmatpush.bf16.msra.mxu0 %v2837
        %4991 = vmatpush.bf16.msra.mxu0 %v2829
        %4992 = vmatpush.bf16.msra.mxu0 %v2821
        %4993 = vmatpush.bf16.msra.mxu0 %v2813
        %4994 = vmatpush.bf16.msra.mxu0 %v2805
        %4995 = vmatmul.bf16.gmra.mxu0 %v609
        %v4996 = vpop.f32.mrf.mxu0
        %v4997 = vadd.f32 %v4948, %v4996
        %v4998 = vpop.f32.mrf.mxu0
        %v4999 = vadd.f32 %v4950, %v4998
        %5000 = vmatmul.bf16.gmra.mxu0 %v617
        %v5001 = vpop.f32.mrf.mxu0
        %v5002 = vadd.f32 %v4953, %v5001
        %v5003 = vpop.f32.mrf.mxu0
        %v5004 = vadd.f32 %v4955, %v5003
        %5005 = vmatmul.bf16.gmra.mxu0 %v625
        %v5006 = vpop.f32.mrf.mxu0
        %v5007 = vadd.f32 %v4958, %v5006
        %v5008 = vpop.f32.mrf.mxu0
        %v5009 = vadd.f32 %v4960, %v5008
        %5010 = vmatmul.bf16.gmra.mxu0 %v633
        %v5011 = vpop.f32.mrf.mxu0
        %v5012 = vadd.f32 %v4963, %v5011
        %v5013 = vpop.f32.mrf.mxu0
        %v5014 = vadd.f32 %v4965, %v5013
        %5015 = vmatmul.bf16.gmra.mxu0 %v641
        %v5016 = vpop.f32.mrf.mxu0
        %v5017 = vadd.f32 %v4968, %v5016
        %v5018 = vpop.f32.mrf.mxu0
        %v5019 = vadd.f32 %v4970, %v5018
        %5020 = vmatmul.bf16.gmra.mxu0 %v649
        %v5021 = vpop.f32.mrf.mxu0
        %v5022 = vadd.f32 %v4973, %v5021
        %v5023 = vpop.f32.mrf.mxu0
        %v5024 = vadd.f32 %v4975, %v5023
        %5025 = vmatmul.bf16.gmra.mxu0 %v657
        %v5026 = vpop.f32.mrf.mxu0
        %v5027 = vadd.f32 %v4978, %v5026
        %v5028 = vpop.f32.mrf.mxu0
        %v5029 = vadd.f32 %v4980, %v5028
        %5030 = vmatmul.bf16.gmra.mxu0 %v665
        %v5031 = vpop.f32.mrf.mxu0
        %v5032 = vadd.f32 %v4983, %v5031
        %v5033 = vpop.f32.mrf.mxu0
        %v5034 = vadd.f32 %v4985, %v5033
        %5035 = vdwg.mxu0
        %5036 = vmatpush.bf16.msra.mxu0 %v2925
        %5037 = vmatpush.bf16.msra.mxu0 %v2917
        %5038 = vmatpush.bf16.msra.mxu0 %v2909
        %5039 = vmatpush.bf16.msra.mxu0 %v2901
        %5040 = vmatpush.bf16.msra.mxu0 %v2893
        %5041 = vmatpush.bf16.msra.mxu0 %v2885
        %5042 = vmatpush.bf16.msra.mxu0 %v2877
        %5043 = vmatpush.bf16.msra.mxu0 %v2869
        %5044 = vmatmul.bf16.gmra.mxu0 %v610
        %v5045 = vpop.f32.mrf.mxu0
        %v5046 = vadd.f32 %v4997, %v5045
        %v5047 = vpop.f32.mrf.mxu0
        %v5048 = vadd.f32 %v4999, %v5047
        %5049 = vmatmul.bf16.gmra.mxu0 %v618
        %v5050 = vpop.f32.mrf.mxu0
        %v5051 = vadd.f32 %v5002, %v5050
        %v5052 = vpop.f32.mrf.mxu0
        %v5053 = vadd.f32 %v5004, %v5052
        %5054 = vmatmul.bf16.gmra.mxu0 %v626
        %v5055 = vpop.f32.mrf.mxu0
        %v5056 = vadd.f32 %v5007, %v5055
        %v5057 = vpop.f32.mrf.mxu0
        %v5058 = vadd.f32 %v5009, %v5057
        %5059 = vmatmul.bf16.gmra.mxu0 %v634
        %v5060 = vpop.f32.mrf.mxu0
        %v5061 = vadd.f32 %v5012, %v5060
        %v5062 = vpop.f32.mrf.mxu0
        %v5063 = vadd.f32 %v5014, %v5062
        %5064 = vmatmul.bf16.gmra.mxu0 %v642
        %v5065 = vpop.f32.mrf.mxu0
        %v5066 = vadd.f32 %v5017, %v5065
        %v5067 = vpop.f32.mrf.mxu0
        %v5068 = vadd.f32 %v5019, %v5067
        %5069 = vmatmul.bf16.gmra.mxu0 %v650
        %v5070 = vpop.f32.mrf.mxu0
        %v5071 = vadd.f32 %v5022, %v5070
        %v5072 = vpop.f32.mrf.mxu0
        %v5073 = vadd.f32 %v5024, %v5072
        %5074 = vmatmul.bf16.gmra.mxu0 %v658
        %v5075 = vpop.f32.mrf.mxu0
        %v5076 = vadd.f32 %v5027, %v5075
        %v5077 = vpop.f32.mrf.mxu0
        %v5078 = vadd.f32 %v5029, %v5077
        %5079 = vmatmul.bf16.gmra.mxu0 %v666
        %v5080 = vpop.f32.mrf.mxu0
        %v5081 = vadd.f32 %v5032, %v5080
        %v5082 = vpop.f32.mrf.mxu0
        %v5083 = vadd.f32 %v5034, %v5082
        %5084 = vdwg.mxu0
        %5085 = vmatpush.bf16.msra.mxu0 %v2989
        %5086 = vmatpush.bf16.msra.mxu0 %v2981
        %5087 = vmatpush.bf16.msra.mxu0 %v2973
        %5088 = vmatpush.bf16.msra.mxu0 %v2965
        %5089 = vmatpush.bf16.msra.mxu0 %v2957
        %5090 = vmatpush.bf16.msra.mxu0 %v2949
        %5091 = vmatpush.bf16.msra.mxu0 %v2941
        %5092 = vmatpush.bf16.msra.mxu0 %v2933
        %5093 = vmatmul.bf16.gmra.mxu0 %v611
        %v5094 = vpop.f32.mrf.mxu0
        %v5095 = vadd.f32 %v5046, %v5094
        %v5096 = vpop.f32.mrf.mxu0
        %v5097 = vadd.f32 %v5048, %v5096
        %5098 = vmatmul.bf16.gmra.mxu0 %v619
        %v5099 = vpop.f32.mrf.mxu0
        %v5100 = vadd.f32 %v5051, %v5099
        %v5101 = vpop.f32.mrf.mxu0
        %v5102 = vadd.f32 %v5053, %v5101
        %5103 = vmatmul.bf16.gmra.mxu0 %v627
        %v5104 = vpop.f32.mrf.mxu0
        %v5105 = vadd.f32 %v5056, %v5104
        %v5106 = vpop.f32.mrf.mxu0
        %v5107 = vadd.f32 %v5058, %v5106
        %5108 = vmatmul.bf16.gmra.mxu0 %v635
        %v5109 = vpop.f32.mrf.mxu0
        %v5110 = vadd.f32 %v5061, %v5109
        %v5111 = vpop.f32.mrf.mxu0
        %v5112 = vadd.f32 %v5063, %v5111
        %5113 = vmatmul.bf16.gmra.mxu0 %v643
        %v5114 = vpop.f32.mrf.mxu0
        %v5115 = vadd.f32 %v5066, %v5114
        %v5116 = vpop.f32.mrf.mxu0
        %v5117 = vadd.f32 %v5068, %v5116
        %5118 = vmatmul.bf16.gmra.mxu0 %v651
        %v5119 = vpop.f32.mrf.mxu0
        %v5120 = vadd.f32 %v5071, %v5119
        %v5121 = vpop.f32.mrf.mxu0
        %v5122 = vadd.f32 %v5073, %v5121
        %5123 = vmatmul.bf16.gmra.mxu0 %v659
        %v5124 = vpop.f32.mrf.mxu0
        %v5125 = vadd.f32 %v5076, %v5124
        %v5126 = vpop.f32.mrf.mxu0
        %v5127 = vadd.f32 %v5078, %v5126
        %5128 = vmatmul.bf16.gmra.mxu0 %v667
        %v5129 = vpop.f32.mrf.mxu0
        %v5130 = vadd.f32 %v5081, %v5129
        %v5131 = vpop.f32.mrf.mxu0
        %v5132 = vadd.f32 %v5083, %v5131
        %5133 = vdwg.mxu0
        %5134 = vmatpush.bf16.msra.mxu0 %v3053
        %5135 = vmatpush.bf16.msra.mxu0 %v3045
        %5136 = vmatpush.bf16.msra.mxu0 %v3037
        %5137 = vmatpush.bf16.msra.mxu0 %v3029
        %5138 = vmatpush.bf16.msra.mxu0 %v3021
        %5139 = vmatpush.bf16.msra.mxu0 %v3013
        %5140 = vmatpush.bf16.msra.mxu0 %v3005
        %5141 = vmatpush.bf16.msra.mxu0 %v2997
        %5142 = vmatmul.bf16.gmra.mxu0 %v612
        %v5143 = vpop.f32.mrf.mxu0
        %v5144 = vadd.f32 %v5095, %v5143
        %v5145 = vpop.f32.mrf.mxu0
        %v5146 = vadd.f32 %v5097, %v5145
        %5147 = vmatmul.bf16.gmra.mxu0 %v620
        %v5148 = vpop.f32.mrf.mxu0
        %v5149 = vadd.f32 %v5100, %v5148
        %v5150 = vpop.f32.mrf.mxu0
        %v5151 = vadd.f32 %v5102, %v5150
        %5152 = vmatmul.bf16.gmra.mxu0 %v628
        %v5153 = vpop.f32.mrf.mxu0
        %v5154 = vadd.f32 %v5105, %v5153
        %v5155 = vpop.f32.mrf.mxu0
        %v5156 = vadd.f32 %v5107, %v5155
        %5157 = vmatmul.bf16.gmra.mxu0 %v636
        %v5158 = vpop.f32.mrf.mxu0
        %v5159 = vadd.f32 %v5110, %v5158
        %v5160 = vpop.f32.mrf.mxu0
        %v5161 = vadd.f32 %v5112, %v5160
        %5162 = vmatmul.bf16.gmra.mxu0 %v644
        %v5163 = vpop.f32.mrf.mxu0
        %v5164 = vadd.f32 %v5115, %v5163
        %v5165 = vpop.f32.mrf.mxu0
        %v5166 = vadd.f32 %v5117, %v5165
        %5167 = vmatmul.bf16.gmra.mxu0 %v652
        %v5168 = vpop.f32.mrf.mxu0
        %v5169 = vadd.f32 %v5120, %v5168
        %v5170 = vpop.f32.mrf.mxu0
        %v5171 = vadd.f32 %v5122, %v5170
        %5172 = vmatmul.bf16.gmra.mxu0 %v660
        %v5173 = vpop.f32.mrf.mxu0
        %v5174 = vadd.f32 %v5125, %v5173
        %v5175 = vpop.f32.mrf.mxu0
        %v5176 = vadd.f32 %v5127, %v5175
        %5177 = vmatmul.bf16.gmra.mxu0 %v668
        %v5178 = vpop.f32.mrf.mxu0
        %v5179 = vadd.f32 %v5130, %v5178
        %v5180 = vpop.f32.mrf.mxu0
        %v5181 = vadd.f32 %v5132, %v5180
        %5182 = vdwg.mxu0
        %5183 = vmatpush.bf16.msra.mxu0 %v3117
        %5184 = vmatpush.bf16.msra.mxu0 %v3109
        %5185 = vmatpush.bf16.msra.mxu0 %v3101
        %5186 = vmatpush.bf16.msra.mxu0 %v3093
        %5187 = vmatpush.bf16.msra.mxu0 %v3085
        %5188 = vmatpush.bf16.msra.mxu0 %v3077
        %5189 = vmatpush.bf16.msra.mxu0 %v3069
        %5190 = vmatpush.bf16.msra.mxu0 %v3061
        %5191 = vmatmul.bf16.gmra.mxu0 %v613
        %v5192 = vpop.f32.mrf.mxu0
        %v5193 = vadd.f32 %v5144, %v5192
        %v5194 = vpop.f32.mrf.mxu0
        %v5195 = vadd.f32 %v5146, %v5194
        %5196 = vmatmul.bf16.gmra.mxu0 %v621
        %v5197 = vpop.f32.mrf.mxu0
        %v5198 = vadd.f32 %v5149, %v5197
        %v5199 = vpop.f32.mrf.mxu0
        %v5200 = vadd.f32 %v5151, %v5199
        %5201 = vmatmul.bf16.gmra.mxu0 %v629
        %v5202 = vpop.f32.mrf.mxu0
        %v5203 = vadd.f32 %v5154, %v5202
        %v5204 = vpop.f32.mrf.mxu0
        %v5205 = vadd.f32 %v5156, %v5204
        %5206 = vmatmul.bf16.gmra.mxu0 %v637
        %v5207 = vpop.f32.mrf.mxu0
        %v5208 = vadd.f32 %v5159, %v5207
        %v5209 = vpop.f32.mrf.mxu0
        %v5210 = vadd.f32 %v5161, %v5209
        %5211 = vmatmul.bf16.gmra.mxu0 %v645
        %v5212 = vpop.f32.mrf.mxu0
        %v5213 = vadd.f32 %v5164, %v5212
        %v5214 = vpop.f32.mrf.mxu0
        %v5215 = vadd.f32 %v5166, %v5214
        %5216 = vmatmul.bf16.gmra.mxu0 %v653
        %v5217 = vpop.f32.mrf.mxu0
        %v5218 = vadd.f32 %v5169, %v5217
        %v5219 = vpop.f32.mrf.mxu0
        %v5220 = vadd.f32 %v5171, %v5219
        %5221 = vmatmul.bf16.gmra.mxu0 %v661
        %v5222 = vpop.f32.mrf.mxu0
        %v5223 = vadd.f32 %v5174, %v5222
        %v5224 = vpop.f32.mrf.mxu0
        %v5225 = vadd.f32 %v5176, %v5224
        %5226 = vmatmul.bf16.gmra.mxu0 %v669
        %v5227 = vpop.f32.mrf.mxu0
        %v5228 = vadd.f32 %v5179, %v5227
        %v5229 = vpop.f32.mrf.mxu0
        %v5230 = vadd.f32 %v5181, %v5229
        %5231 = vdwg.mxu0
        %5232 = vmatpush.bf16.msra.mxu0 %v3181
        %5233 = vmatpush.bf16.msra.mxu0 %v3173
        %5234 = vmatpush.bf16.msra.mxu0 %v3165
        %5235 = vmatpush.bf16.msra.mxu0 %v3157
        %5236 = vmatpush.bf16.msra.mxu0 %v3149
        %5237 = vmatpush.bf16.msra.mxu0 %v3141
        %5238 = vmatpush.bf16.msra.mxu0 %v3133
        %5239 = vmatpush.bf16.msra.mxu0 %v3125
        %5240 = vmatmul.bf16.gmra.mxu0 %v614
        %v5241 = vpop.f32.mrf.mxu0
        %v5242 = vadd.f32 %v5193, %v5241
        %v5243 = vpop.f32.mrf.mxu0
        %v5244 = vadd.f32 %v5195, %v5243
        %5245 = vmatmul.bf16.gmra.mxu0 %v622
        %v5246 = vpop.f32.mrf.mxu0
        %v5247 = vadd.f32 %v5198, %v5246
        %v5248 = vpop.f32.mrf.mxu0
        %v5249 = vadd.f32 %v5200, %v5248
        %5250 = vmatmul.bf16.gmra.mxu0 %v630
        %v5251 = vpop.f32.mrf.mxu0
        %v5252 = vadd.f32 %v5203, %v5251
        %v5253 = vpop.f32.mrf.mxu0
        %v5254 = vadd.f32 %v5205, %v5253
        %5255 = vmatmul.bf16.gmra.mxu0 %v638
        %v5256 = vpop.f32.mrf.mxu0
        %v5257 = vadd.f32 %v5208, %v5256
        %v5258 = vpop.f32.mrf.mxu0
        %v5259 = vadd.f32 %v5210, %v5258
        %5260 = vmatmul.bf16.gmra.mxu0 %v646
        %v5261 = vpop.f32.mrf.mxu0
        %v5262 = vadd.f32 %v5213, %v5261
        %v5263 = vpop.f32.mrf.mxu0
        %v5264 = vadd.f32 %v5215, %v5263
        %5265 = vmatmul.bf16.gmra.mxu0 %v654
        %v5266 = vpop.f32.mrf.mxu0
        %v5267 = vadd.f32 %v5218, %v5266
        %v5268 = vpop.f32.mrf.mxu0
        %v5269 = vadd.f32 %v5220, %v5268
        %5270 = vmatmul.bf16.gmra.mxu0 %v662
        %v5271 = vpop.f32.mrf.mxu0
        %v5272 = vadd.f32 %v5223, %v5271
        %v5273 = vpop.f32.mrf.mxu0
        %v5274 = vadd.f32 %v5225, %v5273
        %5275 = vmatmul.bf16.gmra.mxu0 %v670
        %v5276 = vpop.f32.mrf.mxu0
        %v5277 = vadd.f32 %v5228, %v5276
        %v5278 = vpop.f32.mrf.mxu0
        %v5279 = vadd.f32 %v5230, %v5278
        %5280 = vdwg.mxu0
        %5281 = vmatpush.bf16.msra.mxu0 %v3245
        %5282 = vmatpush.bf16.msra.mxu0 %v3237
        %5283 = vmatpush.bf16.msra.mxu0 %v3229
        %5284 = vmatpush.bf16.msra.mxu0 %v3221
        %5285 = vmatpush.bf16.msra.mxu0 %v3213
        %5286 = vmatpush.bf16.msra.mxu0 %v3205
        %5287 = vmatpush.bf16.msra.mxu0 %v3197
        %5288 = vmatpush.bf16.msra.mxu0 %v3189
        %5289 = vmatmul.bf16.gmra.mxu0 %v615
        %v5290 = vpop.f32.mrf.mxu0
        %v5291 = vadd.f32 %v5242, %v5290
        %v5292 = vpop.f32.mrf.mxu0
        %v5293 = vadd.f32 %v5244, %v5292
        %5294 = vmatmul.bf16.gmra.mxu0 %v623
        %v5295 = vpop.f32.mrf.mxu0
        %v5296 = vadd.f32 %v5247, %v5295
        %v5297 = vpop.f32.mrf.mxu0
        %v5298 = vadd.f32 %v5249, %v5297
        %5299 = vmatmul.bf16.gmra.mxu0 %v631
        %v5300 = vpop.f32.mrf.mxu0
        %v5301 = vadd.f32 %v5252, %v5300
        %v5302 = vpop.f32.mrf.mxu0
        %v5303 = vadd.f32 %v5254, %v5302
        %5304 = vmatmul.bf16.gmra.mxu0 %v639
        %v5305 = vpop.f32.mrf.mxu0
        %v5306 = vadd.f32 %v5257, %v5305
        %v5307 = vpop.f32.mrf.mxu0
        %v5308 = vadd.f32 %v5259, %v5307
        %5309 = vmatmul.bf16.gmra.mxu0 %v647
        %v5310 = vpop.f32.mrf.mxu0
        %v5311 = vadd.f32 %v5262, %v5310
        %v5312 = vpop.f32.mrf.mxu0
        %v5313 = vadd.f32 %v5264, %v5312
        %5314 = vmatmul.bf16.gmra.mxu0 %v655
        %v5315 = vpop.f32.mrf.mxu0
        %v5316 = vadd.f32 %v5267, %v5315
        %v5317 = vpop.f32.mrf.mxu0
        %v5318 = vadd.f32 %v5269, %v5317
        %5319 = vmatmul.bf16.gmra.mxu0 %v663
        %v5320 = vpop.f32.mrf.mxu0
        %v5321 = vadd.f32 %v5272, %v5320
        %v5322 = vpop.f32.mrf.mxu0
        %v5323 = vadd.f32 %v5274, %v5322
        %5324 = vmatmul.bf16.gmra.mxu0 %v671
        %v5325 = vpop.f32.mrf.mxu0
        %v5326 = vadd.f32 %v5277, %v5325
        %v5327 = vpop.f32.mrf.mxu0
        %v5328 = vadd.f32 %v5279, %v5327
        %5329 = vdwg.mxu0
        %5330 = vmatpush.bf16.msra.mxu0 %v2798
        %5331 = vmatpush.bf16.msra.mxu0 %v2790
        %5332 = vmatpush.bf16.msra.mxu0 %v2782
        %5333 = vmatpush.bf16.msra.mxu0 %v2774
        %5334 = vmatpush.bf16.msra.mxu0 %v2766
        %5335 = vmatpush.bf16.msra.mxu0 %v2758
        %5336 = vmatpush.bf16.msra.mxu0 %v2750
        %5337 = vmatpush.bf16.msra.mxu0 %v2742
        %5338 = vmatmul.bf16.gmra.mxu0 %v608
        %v5339 = vpop.f32.mrf.mxu0
        %v5340 = vadd.f32 %v1190, %v5339
        %v5341 = vpop.f32.mrf.mxu0
        %v5342 = vadd.f32 %v1190, %v5341
        %5343 = vmatmul.bf16.gmra.mxu0 %v616
        %v5344 = vpop.f32.mrf.mxu0
        %v5345 = vadd.f32 %v1190, %v5344
        %v5346 = vpop.f32.mrf.mxu0
        %v5347 = vadd.f32 %v1190, %v5346
        %5348 = vmatmul.bf16.gmra.mxu0 %v624
        %v5349 = vpop.f32.mrf.mxu0
        %v5350 = vadd.f32 %v1190, %v5349
        %v5351 = vpop.f32.mrf.mxu0
        %v5352 = vadd.f32 %v1190, %v5351
        %5353 = vmatmul.bf16.gmra.mxu0 %v632
        %v5354 = vpop.f32.mrf.mxu0
        %v5355 = vadd.f32 %v1190, %v5354
        %v5356 = vpop.f32.mrf.mxu0
        %v5357 = vadd.f32 %v1190, %v5356
        %5358 = vmatmul.bf16.gmra.mxu0 %v640
        %v5359 = vpop.f32.mrf.mxu0
        %v5360 = vadd.f32 %v1190, %v5359
        %v5361 = vpop.f32.mrf.mxu0
        %v5362 = vadd.f32 %v1190, %v5361
        %5363 = vmatmul.bf16.gmra.mxu0 %v648
        %v5364 = vpop.f32.mrf.mxu0
        %v5365 = vadd.f32 %v1190, %v5364
        %v5366 = vpop.f32.mrf.mxu0
        %v5367 = vadd.f32 %v1190, %v5366
        %5368 = vmatmul.bf16.gmra.mxu0 %v656
        %v5369 = vpop.f32.mrf.mxu0
        %v5370 = vadd.f32 %v1190, %v5369
        %v5371 = vpop.f32.mrf.mxu0
        %v5372 = vadd.f32 %v1190, %v5371
        %5373 = vmatmul.bf16.gmra.mxu0 %v664
        %v5374 = vpop.f32.mrf.mxu0
        %v5375 = vadd.f32 %v1190, %v5374
        %v5376 = vpop.f32.mrf.mxu0
        %v5377 = vadd.f32 %v1190, %v5376
        %5378 = vdwg.mxu0
        %5379 = vmatpush.bf16.msra.mxu0 %v2862
        %5380 = vmatpush.bf16.msra.mxu0 %v2854
        %5381 = vmatpush.bf16.msra.mxu0 %v2846
        %5382 = vmatpush.bf16.msra.mxu0 %v2838
        %5383 = vmatpush.bf16.msra.mxu0 %v2830
        %5384 = vmatpush.bf16.msra.mxu0 %v2822
        %5385 = vmatpush.bf16.msra.mxu0 %v2814
        %5386 = vmatpush.bf16.msra.mxu0 %v2806
        %5387 = vmatmul.bf16.gmra.mxu0 %v609
        %v5388 = vpop.f32.mrf.mxu0
        %v5389 = vadd.f32 %v5340, %v5388
        %v5390 = vpop.f32.mrf.mxu0
        %v5391 = vadd.f32 %v5342, %v5390
        %5392 = vmatmul.bf16.gmra.mxu0 %v617
        %v5393 = vpop.f32.mrf.mxu0
        %v5394 = vadd.f32 %v5345, %v5393
        %v5395 = vpop.f32.mrf.mxu0
        %v5396 = vadd.f32 %v5347, %v5395
        %5397 = vmatmul.bf16.gmra.mxu0 %v625
        %v5398 = vpop.f32.mrf.mxu0
        %v5399 = vadd.f32 %v5350, %v5398
        %v5400 = vpop.f32.mrf.mxu0
        %v5401 = vadd.f32 %v5352, %v5400
        %5402 = vmatmul.bf16.gmra.mxu0 %v633
        %v5403 = vpop.f32.mrf.mxu0
        %v5404 = vadd.f32 %v5355, %v5403
        %v5405 = vpop.f32.mrf.mxu0
        %v5406 = vadd.f32 %v5357, %v5405
        %5407 = vmatmul.bf16.gmra.mxu0 %v641
        %v5408 = vpop.f32.mrf.mxu0
        %v5409 = vadd.f32 %v5360, %v5408
        %v5410 = vpop.f32.mrf.mxu0
        %v5411 = vadd.f32 %v5362, %v5410
        %5412 = vmatmul.bf16.gmra.mxu0 %v649
        %v5413 = vpop.f32.mrf.mxu0
        %v5414 = vadd.f32 %v5365, %v5413
        %v5415 = vpop.f32.mrf.mxu0
        %v5416 = vadd.f32 %v5367, %v5415
        %5417 = vmatmul.bf16.gmra.mxu0 %v657
        %v5418 = vpop.f32.mrf.mxu0
        %v5419 = vadd.f32 %v5370, %v5418
        %v5420 = vpop.f32.mrf.mxu0
        %v5421 = vadd.f32 %v5372, %v5420
        %5422 = vmatmul.bf16.gmra.mxu0 %v665
        %v5423 = vpop.f32.mrf.mxu0
        %v5424 = vadd.f32 %v5375, %v5423
        %v5425 = vpop.f32.mrf.mxu0
        %v5426 = vadd.f32 %v5377, %v5425
        %5427 = vdwg.mxu0
        %5428 = vmatpush.bf16.msra.mxu0 %v2926
        %5429 = vmatpush.bf16.msra.mxu0 %v2918
        %5430 = vmatpush.bf16.msra.mxu0 %v2910
        %5431 = vmatpush.bf16.msra.mxu0 %v2902
        %5432 = vmatpush.bf16.msra.mxu0 %v2894
        %5433 = vmatpush.bf16.msra.mxu0 %v2886
        %5434 = vmatpush.bf16.msra.mxu0 %v2878
        %5435 = vmatpush.bf16.msra.mxu0 %v2870
        %5436 = vmatmul.bf16.gmra.mxu0 %v610
        %v5437 = vpop.f32.mrf.mxu0
        %v5438 = vadd.f32 %v5389, %v5437
        %v5439 = vpop.f32.mrf.mxu0
        %v5440 = vadd.f32 %v5391, %v5439
        %5441 = vmatmul.bf16.gmra.mxu0 %v618
        %v5442 = vpop.f32.mrf.mxu0
        %v5443 = vadd.f32 %v5394, %v5442
        %v5444 = vpop.f32.mrf.mxu0
        %v5445 = vadd.f32 %v5396, %v5444
        %5446 = vmatmul.bf16.gmra.mxu0 %v626
        %v5447 = vpop.f32.mrf.mxu0
        %v5448 = vadd.f32 %v5399, %v5447
        %v5449 = vpop.f32.mrf.mxu0
        %v5450 = vadd.f32 %v5401, %v5449
        %5451 = vmatmul.bf16.gmra.mxu0 %v634
        %v5452 = vpop.f32.mrf.mxu0
        %v5453 = vadd.f32 %v5404, %v5452
        %v5454 = vpop.f32.mrf.mxu0
        %v5455 = vadd.f32 %v5406, %v5454
        %5456 = vmatmul.bf16.gmra.mxu0 %v642
        %v5457 = vpop.f32.mrf.mxu0
        %v5458 = vadd.f32 %v5409, %v5457
        %v5459 = vpop.f32.mrf.mxu0
        %v5460 = vadd.f32 %v5411, %v5459
        %5461 = vmatmul.bf16.gmra.mxu0 %v650
        %v5462 = vpop.f32.mrf.mxu0
        %v5463 = vadd.f32 %v5414, %v5462
        %v5464 = vpop.f32.mrf.mxu0
        %v5465 = vadd.f32 %v5416, %v5464
        %5466 = vmatmul.bf16.gmra.mxu0 %v658
        %v5467 = vpop.f32.mrf.mxu0
        %v5468 = vadd.f32 %v5419, %v5467
        %v5469 = vpop.f32.mrf.mxu0
        %v5470 = vadd.f32 %v5421, %v5469
        %5471 = vmatmul.bf16.gmra.mxu0 %v666
        %v5472 = vpop.f32.mrf.mxu0
        %v5473 = vadd.f32 %v5424, %v5472
        %v5474 = vpop.f32.mrf.mxu0
        %v5475 = vadd.f32 %v5426, %v5474
        %5476 = vdwg.mxu0
        %5477 = vmatpush.bf16.msra.mxu0 %v2990
        %5478 = vmatpush.bf16.msra.mxu0 %v2982
        %5479 = vmatpush.bf16.msra.mxu0 %v2974
        %5480 = vmatpush.bf16.msra.mxu0 %v2966
        %5481 = vmatpush.bf16.msra.mxu0 %v2958
        %5482 = vmatpush.bf16.msra.mxu0 %v2950
        %5483 = vmatpush.bf16.msra.mxu0 %v2942
        %5484 = vmatpush.bf16.msra.mxu0 %v2934
        %5485 = vmatmul.bf16.gmra.mxu0 %v611
        %v5486 = vpop.f32.mrf.mxu0
        %v5487 = vadd.f32 %v5438, %v5486
        %v5488 = vpop.f32.mrf.mxu0
        %v5489 = vadd.f32 %v5440, %v5488
        %5490 = vmatmul.bf16.gmra.mxu0 %v619
        %v5491 = vpop.f32.mrf.mxu0
        %v5492 = vadd.f32 %v5443, %v5491
        %v5493 = vpop.f32.mrf.mxu0
        %v5494 = vadd.f32 %v5445, %v5493
        %5495 = vmatmul.bf16.gmra.mxu0 %v627
        %v5496 = vpop.f32.mrf.mxu0
        %v5497 = vadd.f32 %v5448, %v5496
        %v5498 = vpop.f32.mrf.mxu0
        %v5499 = vadd.f32 %v5450, %v5498
        %5500 = vmatmul.bf16.gmra.mxu0 %v635
        %v5501 = vpop.f32.mrf.mxu0
        %v5502 = vadd.f32 %v5453, %v5501
        %v5503 = vpop.f32.mrf.mxu0
        %v5504 = vadd.f32 %v5455, %v5503
        %5505 = vmatmul.bf16.gmra.mxu0 %v643
        %v5506 = vpop.f32.mrf.mxu0
        %v5507 = vadd.f32 %v5458, %v5506
        %v5508 = vpop.f32.mrf.mxu0
        %v5509 = vadd.f32 %v5460, %v5508
        %5510 = vmatmul.bf16.gmra.mxu0 %v651
        %v5511 = vpop.f32.mrf.mxu0
        %v5512 = vadd.f32 %v5463, %v5511
        %v5513 = vpop.f32.mrf.mxu0
        %v5514 = vadd.f32 %v5465, %v5513
        %5515 = vmatmul.bf16.gmra.mxu0 %v659
        %v5516 = vpop.f32.mrf.mxu0
        %v5517 = vadd.f32 %v5468, %v5516
        %v5518 = vpop.f32.mrf.mxu0
        %v5519 = vadd.f32 %v5470, %v5518
        %5520 = vmatmul.bf16.gmra.mxu0 %v667
        %v5521 = vpop.f32.mrf.mxu0
        %v5522 = vadd.f32 %v5473, %v5521
        %v5523 = vpop.f32.mrf.mxu0
        %v5524 = vadd.f32 %v5475, %v5523
        %5525 = vdwg.mxu0
        %5526 = vmatpush.bf16.msra.mxu0 %v3054
        %5527 = vmatpush.bf16.msra.mxu0 %v3046
        %5528 = vmatpush.bf16.msra.mxu0 %v3038
        %5529 = vmatpush.bf16.msra.mxu0 %v3030
        %5530 = vmatpush.bf16.msra.mxu0 %v3022
        %5531 = vmatpush.bf16.msra.mxu0 %v3014
        %5532 = vmatpush.bf16.msra.mxu0 %v3006
        %5533 = vmatpush.bf16.msra.mxu0 %v2998
        %5534 = vmatmul.bf16.gmra.mxu0 %v612
        %v5535 = vpop.f32.mrf.mxu0
        %v5536 = vadd.f32 %v5487, %v5535
        %v5537 = vpop.f32.mrf.mxu0
        %v5538 = vadd.f32 %v5489, %v5537
        %5539 = vmatmul.bf16.gmra.mxu0 %v620
        %v5540 = vpop.f32.mrf.mxu0
        %v5541 = vadd.f32 %v5492, %v5540
        %v5542 = vpop.f32.mrf.mxu0
        %v5543 = vadd.f32 %v5494, %v5542
        %5544 = vmatmul.bf16.gmra.mxu0 %v628
        %v5545 = vpop.f32.mrf.mxu0
        %v5546 = vadd.f32 %v5497, %v5545
        %v5547 = vpop.f32.mrf.mxu0
        %v5548 = vadd.f32 %v5499, %v5547
        %5549 = vmatmul.bf16.gmra.mxu0 %v636
        %v5550 = vpop.f32.mrf.mxu0
        %v5551 = vadd.f32 %v5502, %v5550
        %v5552 = vpop.f32.mrf.mxu0
        %v5553 = vadd.f32 %v5504, %v5552
        %5554 = vmatmul.bf16.gmra.mxu0 %v644
        %v5555 = vpop.f32.mrf.mxu0
        %v5556 = vadd.f32 %v5507, %v5555
        %v5557 = vpop.f32.mrf.mxu0
        %v5558 = vadd.f32 %v5509, %v5557
        %5559 = vmatmul.bf16.gmra.mxu0 %v652
        %v5560 = vpop.f32.mrf.mxu0
        %v5561 = vadd.f32 %v5512, %v5560
        %v5562 = vpop.f32.mrf.mxu0
        %v5563 = vadd.f32 %v5514, %v5562
        %5564 = vmatmul.bf16.gmra.mxu0 %v660
        %v5565 = vpop.f32.mrf.mxu0
        %v5566 = vadd.f32 %v5517, %v5565
        %v5567 = vpop.f32.mrf.mxu0
        %v5568 = vadd.f32 %v5519, %v5567
        %5569 = vmatmul.bf16.gmra.mxu0 %v668
        %v5570 = vpop.f32.mrf.mxu0
        %v5571 = vadd.f32 %v5522, %v5570
        %v5572 = vpop.f32.mrf.mxu0
        %v5573 = vadd.f32 %v5524, %v5572
        %5574 = vdwg.mxu0
        %5575 = vmatpush.bf16.msra.mxu0 %v3118
        %5576 = vmatpush.bf16.msra.mxu0 %v3110
        %5577 = vmatpush.bf16.msra.mxu0 %v3102
        %5578 = vmatpush.bf16.msra.mxu0 %v3094
        %5579 = vmatpush.bf16.msra.mxu0 %v3086
        %5580 = vmatpush.bf16.msra.mxu0 %v3078
        %5581 = vmatpush.bf16.msra.mxu0 %v3070
        %5582 = vmatpush.bf16.msra.mxu0 %v3062
        %5583 = vmatmul.bf16.gmra.mxu0 %v613
        %v5584 = vpop.f32.mrf.mxu0
        %v5585 = vadd.f32 %v5536, %v5584
        %v5586 = vpop.f32.mrf.mxu0
        %v5587 = vadd.f32 %v5538, %v5586
        %5588 = vmatmul.bf16.gmra.mxu0 %v621
        %v5589 = vpop.f32.mrf.mxu0
        %v5590 = vadd.f32 %v5541, %v5589
        %v5591 = vpop.f32.mrf.mxu0
        %v5592 = vadd.f32 %v5543, %v5591
        %5593 = vmatmul.bf16.gmra.mxu0 %v629
        %v5594 = vpop.f32.mrf.mxu0
        %v5595 = vadd.f32 %v5546, %v5594
        %v5596 = vpop.f32.mrf.mxu0
        %v5597 = vadd.f32 %v5548, %v5596
        %5598 = vmatmul.bf16.gmra.mxu0 %v637
        %v5599 = vpop.f32.mrf.mxu0
        %v5600 = vadd.f32 %v5551, %v5599
        %v5601 = vpop.f32.mrf.mxu0
        %v5602 = vadd.f32 %v5553, %v5601
        %5603 = vmatmul.bf16.gmra.mxu0 %v645
        %v5604 = vpop.f32.mrf.mxu0
        %v5605 = vadd.f32 %v5556, %v5604
        %v5606 = vpop.f32.mrf.mxu0
        %v5607 = vadd.f32 %v5558, %v5606
        %5608 = vmatmul.bf16.gmra.mxu0 %v653
        %v5609 = vpop.f32.mrf.mxu0
        %v5610 = vadd.f32 %v5561, %v5609
        %v5611 = vpop.f32.mrf.mxu0
        %v5612 = vadd.f32 %v5563, %v5611
        %5613 = vmatmul.bf16.gmra.mxu0 %v661
        %v5614 = vpop.f32.mrf.mxu0
        %v5615 = vadd.f32 %v5566, %v5614
        %v5616 = vpop.f32.mrf.mxu0
        %v5617 = vadd.f32 %v5568, %v5616
        %5618 = vmatmul.bf16.gmra.mxu0 %v669
        %v5619 = vpop.f32.mrf.mxu0
        %v5620 = vadd.f32 %v5571, %v5619
        %v5621 = vpop.f32.mrf.mxu0
        %v5622 = vadd.f32 %v5573, %v5621
        %5623 = vdwg.mxu0
        %5624 = vmatpush.bf16.msra.mxu0 %v3182
        %5625 = vmatpush.bf16.msra.mxu0 %v3174
        %5626 = vmatpush.bf16.msra.mxu0 %v3166
        %5627 = vmatpush.bf16.msra.mxu0 %v3158
        %5628 = vmatpush.bf16.msra.mxu0 %v3150
        %5629 = vmatpush.bf16.msra.mxu0 %v3142
        %5630 = vmatpush.bf16.msra.mxu0 %v3134
        %5631 = vmatpush.bf16.msra.mxu0 %v3126
        %5632 = vmatmul.bf16.gmra.mxu0 %v614
        %v5633 = vpop.f32.mrf.mxu0
        %v5634 = vadd.f32 %v5585, %v5633
        %v5635 = vpop.f32.mrf.mxu0
        %v5636 = vadd.f32 %v5587, %v5635
        %5637 = vmatmul.bf16.gmra.mxu0 %v622
        %v5638 = vpop.f32.mrf.mxu0
        %v5639 = vadd.f32 %v5590, %v5638
        %v5640 = vpop.f32.mrf.mxu0
        %v5641 = vadd.f32 %v5592, %v5640
        %5642 = vmatmul.bf16.gmra.mxu0 %v630
        %v5643 = vpop.f32.mrf.mxu0
        %v5644 = vadd.f32 %v5595, %v5643
        %v5645 = vpop.f32.mrf.mxu0
        %v5646 = vadd.f32 %v5597, %v5645
        %5647 = vmatmul.bf16.gmra.mxu0 %v638
        %v5648 = vpop.f32.mrf.mxu0
        %v5649 = vadd.f32 %v5600, %v5648
        %v5650 = vpop.f32.mrf.mxu0
        %v5651 = vadd.f32 %v5602, %v5650
        %5652 = vmatmul.bf16.gmra.mxu0 %v646
        %v5653 = vpop.f32.mrf.mxu0
        %v5654 = vadd.f32 %v5605, %v5653
        %v5655 = vpop.f32.mrf.mxu0
        %v5656 = vadd.f32 %v5607, %v5655
        %5657 = vmatmul.bf16.gmra.mxu0 %v654
        %v5658 = vpop.f32.mrf.mxu0
        %v5659 = vadd.f32 %v5610, %v5658
        %v5660 = vpop.f32.mrf.mxu0
        %v5661 = vadd.f32 %v5612, %v5660
        %5662 = vmatmul.bf16.gmra.mxu0 %v662
        %v5663 = vpop.f32.mrf.mxu0
        %v5664 = vadd.f32 %v5615, %v5663
        %v5665 = vpop.f32.mrf.mxu0
        %v5666 = vadd.f32 %v5617, %v5665
        %5667 = vmatmul.bf16.gmra.mxu0 %v670
        %v5668 = vpop.f32.mrf.mxu0
        %v5669 = vadd.f32 %v5620, %v5668
        %v5670 = vpop.f32.mrf.mxu0
        %v5671 = vadd.f32 %v5622, %v5670
        %5672 = vdwg.mxu0
        %5673 = vmatpush.bf16.msra.mxu0 %v3246
        %5674 = vmatpush.bf16.msra.mxu0 %v3238
        %5675 = vmatpush.bf16.msra.mxu0 %v3230
        %5676 = vmatpush.bf16.msra.mxu0 %v3222
        %5677 = vmatpush.bf16.msra.mxu0 %v3214
        %5678 = vmatpush.bf16.msra.mxu0 %v3206
        %5679 = vmatpush.bf16.msra.mxu0 %v3198
        %5680 = vmatpush.bf16.msra.mxu0 %v3190
        %5681 = vmatmul.bf16.gmra.mxu0 %v615
        %v5682 = vpop.f32.mrf.mxu0
        %v5683 = vadd.f32 %v5634, %v5682
        %v5684 = vpop.f32.mrf.mxu0
        %v5685 = vadd.f32 %v5636, %v5684
        %5686 = vmatmul.bf16.gmra.mxu0 %v623
        %v5687 = vpop.f32.mrf.mxu0
        %v5688 = vadd.f32 %v5639, %v5687
        %v5689 = vpop.f32.mrf.mxu0
        %v5690 = vadd.f32 %v5641, %v5689
        %5691 = vmatmul.bf16.gmra.mxu0 %v631
        %v5692 = vpop.f32.mrf.mxu0
        %v5693 = vadd.f32 %v5644, %v5692
        %v5694 = vpop.f32.mrf.mxu0
        %v5695 = vadd.f32 %v5646, %v5694
        %5696 = vmatmul.bf16.gmra.mxu0 %v639
        %v5697 = vpop.f32.mrf.mxu0
        %v5698 = vadd.f32 %v5649, %v5697
        %v5699 = vpop.f32.mrf.mxu0
        %v5700 = vadd.f32 %v5651, %v5699
        %5701 = vmatmul.bf16.gmra.mxu0 %v647
        %v5702 = vpop.f32.mrf.mxu0
        %v5703 = vadd.f32 %v5654, %v5702
        %v5704 = vpop.f32.mrf.mxu0
        %v5705 = vadd.f32 %v5656, %v5704
        %5706 = vmatmul.bf16.gmra.mxu0 %v655
        %v5707 = vpop.f32.mrf.mxu0
        %v5708 = vadd.f32 %v5659, %v5707
        %v5709 = vpop.f32.mrf.mxu0
        %v5710 = vadd.f32 %v5661, %v5709
        %5711 = vmatmul.bf16.gmra.mxu0 %v663
        %v5712 = vpop.f32.mrf.mxu0
        %v5713 = vadd.f32 %v5664, %v5712
        %v5714 = vpop.f32.mrf.mxu0
        %v5715 = vadd.f32 %v5666, %v5714
        %5716 = vmatmul.bf16.gmra.mxu0 %v671
        %v5717 = vpop.f32.mrf.mxu0
        %v5718 = vadd.f32 %v5669, %v5717
        %v5719 = vpop.f32.mrf.mxu0
        %v5720 = vadd.f32 %v5671, %v5719
        %5721 = vdwg.mxu0
        %5722 = vmatpush.bf16.msra.mxu0 %v2799
        %5723 = vmatpush.bf16.msra.mxu0 %v2791
        %5724 = vmatpush.bf16.msra.mxu0 %v2783
        %5725 = vmatpush.bf16.msra.mxu0 %v2775
        %5726 = vmatpush.bf16.msra.mxu0 %v2767
        %5727 = vmatpush.bf16.msra.mxu0 %v2759
        %5728 = vmatpush.bf16.msra.mxu0 %v2751
        %5729 = vmatpush.bf16.msra.mxu0 %v2743
        %5730 = vmatmul.bf16.gmra.mxu0 %v608
        %v5731 = vpop.f32.mrf.mxu0
        %v5732 = vadd.f32 %v1191, %v5731
        %v5733 = vpop.f32.mrf.mxu0
        %v5734 = vadd.f32 %v1191, %v5733
        %5735 = vmatmul.bf16.gmra.mxu0 %v616
        %v5736 = vpop.f32.mrf.mxu0
        %v5737 = vadd.f32 %v1191, %v5736
        %v5738 = vpop.f32.mrf.mxu0
        %v5739 = vadd.f32 %v1191, %v5738
        %5740 = vmatmul.bf16.gmra.mxu0 %v624
        %v5741 = vpop.f32.mrf.mxu0
        %v5742 = vadd.f32 %v1191, %v5741
        %v5743 = vpop.f32.mrf.mxu0
        %v5744 = vadd.f32 %v1191, %v5743
        %5745 = vmatmul.bf16.gmra.mxu0 %v632
        %v5746 = vpop.f32.mrf.mxu0
        %v5747 = vadd.f32 %v1191, %v5746
        %v5748 = vpop.f32.mrf.mxu0
        %v5749 = vadd.f32 %v1191, %v5748
        %5750 = vmatmul.bf16.gmra.mxu0 %v640
        %v5751 = vpop.f32.mrf.mxu0
        %v5752 = vadd.f32 %v1191, %v5751
        %v5753 = vpop.f32.mrf.mxu0
        %v5754 = vadd.f32 %v1191, %v5753
        %5755 = vmatmul.bf16.gmra.mxu0 %v648
        %v5756 = vpop.f32.mrf.mxu0
        %v5757 = vadd.f32 %v1191, %v5756
        %v5758 = vpop.f32.mrf.mxu0
        %v5759 = vadd.f32 %v1191, %v5758
        %5760 = vmatmul.bf16.gmra.mxu0 %v656
        %v5761 = vpop.f32.mrf.mxu0
        %v5762 = vadd.f32 %v1191, %v5761
        %v5763 = vpop.f32.mrf.mxu0
        %v5764 = vadd.f32 %v1191, %v5763
        %5765 = vmatmul.bf16.gmra.mxu0 %v664
        %v5766 = vpop.f32.mrf.mxu0
        %v5767 = vadd.f32 %v1191, %v5766
        %v5768 = vpop.f32.mrf.mxu0
        %v5769 = vadd.f32 %v1191, %v5768
        %5770 = vdwg.mxu0
        %5771 = vmatpush.bf16.msra.mxu0 %v2863
        %5772 = vmatpush.bf16.msra.mxu0 %v2855
        %5773 = vmatpush.bf16.msra.mxu0 %v2847
        %5774 = vmatpush.bf16.msra.mxu0 %v2839
        %5775 = vmatpush.bf16.msra.mxu0 %v2831
        %5776 = vmatpush.bf16.msra.mxu0 %v2823
        %5777 = vmatpush.bf16.msra.mxu0 %v2815
        %5778 = vmatpush.bf16.msra.mxu0 %v2807
        %5779 = vmatmul.bf16.gmra.mxu0 %v609
        %v5780 = vpop.f32.mrf.mxu0
        %v5781 = vadd.f32 %v5732, %v5780
        %v5782 = vpop.f32.mrf.mxu0
        %v5783 = vadd.f32 %v5734, %v5782
        %5784 = vmatmul.bf16.gmra.mxu0 %v617
        %v5785 = vpop.f32.mrf.mxu0
        %v5786 = vadd.f32 %v5737, %v5785
        %v5787 = vpop.f32.mrf.mxu0
        %v5788 = vadd.f32 %v5739, %v5787
        %5789 = vmatmul.bf16.gmra.mxu0 %v625
        %v5790 = vpop.f32.mrf.mxu0
        %v5791 = vadd.f32 %v5742, %v5790
        %v5792 = vpop.f32.mrf.mxu0
        %v5793 = vadd.f32 %v5744, %v5792
        %5794 = vmatmul.bf16.gmra.mxu0 %v633
        %v5795 = vpop.f32.mrf.mxu0
        %v5796 = vadd.f32 %v5747, %v5795
        %v5797 = vpop.f32.mrf.mxu0
        %v5798 = vadd.f32 %v5749, %v5797
        %5799 = vmatmul.bf16.gmra.mxu0 %v641
        %v5800 = vpop.f32.mrf.mxu0
        %v5801 = vadd.f32 %v5752, %v5800
        %v5802 = vpop.f32.mrf.mxu0
        %v5803 = vadd.f32 %v5754, %v5802
        %5804 = vmatmul.bf16.gmra.mxu0 %v649
        %v5805 = vpop.f32.mrf.mxu0
        %v5806 = vadd.f32 %v5757, %v5805
        %v5807 = vpop.f32.mrf.mxu0
        %v5808 = vadd.f32 %v5759, %v5807
        %5809 = vmatmul.bf16.gmra.mxu0 %v657
        %v5810 = vpop.f32.mrf.mxu0
        %v5811 = vadd.f32 %v5762, %v5810
        %v5812 = vpop.f32.mrf.mxu0
        %v5813 = vadd.f32 %v5764, %v5812
        %5814 = vmatmul.bf16.gmra.mxu0 %v665
        %v5815 = vpop.f32.mrf.mxu0
        %v5816 = vadd.f32 %v5767, %v5815
        %v5817 = vpop.f32.mrf.mxu0
        %v5818 = vadd.f32 %v5769, %v5817
        %5819 = vdwg.mxu0
        %5820 = vmatpush.bf16.msra.mxu0 %v2927
        %5821 = vmatpush.bf16.msra.mxu0 %v2919
        %5822 = vmatpush.bf16.msra.mxu0 %v2911
        %5823 = vmatpush.bf16.msra.mxu0 %v2903
        %5824 = vmatpush.bf16.msra.mxu0 %v2895
        %5825 = vmatpush.bf16.msra.mxu0 %v2887
        %5826 = vmatpush.bf16.msra.mxu0 %v2879
        %5827 = vmatpush.bf16.msra.mxu0 %v2871
        %5828 = vmatmul.bf16.gmra.mxu0 %v610
        %v5829 = vpop.f32.mrf.mxu0
        %v5830 = vadd.f32 %v5781, %v5829
        %v5831 = vpop.f32.mrf.mxu0
        %v5832 = vadd.f32 %v5783, %v5831
        %5833 = vmatmul.bf16.gmra.mxu0 %v618
        %v5834 = vpop.f32.mrf.mxu0
        %v5835 = vadd.f32 %v5786, %v5834
        %v5836 = vpop.f32.mrf.mxu0
        %v5837 = vadd.f32 %v5788, %v5836
        %5838 = vmatmul.bf16.gmra.mxu0 %v626
        %v5839 = vpop.f32.mrf.mxu0
        %v5840 = vadd.f32 %v5791, %v5839
        %v5841 = vpop.f32.mrf.mxu0
        %v5842 = vadd.f32 %v5793, %v5841
        %5843 = vmatmul.bf16.gmra.mxu0 %v634
        %v5844 = vpop.f32.mrf.mxu0
        %v5845 = vadd.f32 %v5796, %v5844
        %v5846 = vpop.f32.mrf.mxu0
        %v5847 = vadd.f32 %v5798, %v5846
        %5848 = vmatmul.bf16.gmra.mxu0 %v642
        %v5849 = vpop.f32.mrf.mxu0
        %v5850 = vadd.f32 %v5801, %v5849
        %v5851 = vpop.f32.mrf.mxu0
        %v5852 = vadd.f32 %v5803, %v5851
        %5853 = vmatmul.bf16.gmra.mxu0 %v650
        %v5854 = vpop.f32.mrf.mxu0
        %v5855 = vadd.f32 %v5806, %v5854
        %v5856 = vpop.f32.mrf.mxu0
        %v5857 = vadd.f32 %v5808, %v5856
        %5858 = vmatmul.bf16.gmra.mxu0 %v658
        %v5859 = vpop.f32.mrf.mxu0
        %v5860 = vadd.f32 %v5811, %v5859
        %v5861 = vpop.f32.mrf.mxu0
        %v5862 = vadd.f32 %v5813, %v5861
        %5863 = vmatmul.bf16.gmra.mxu0 %v666
        %v5864 = vpop.f32.mrf.mxu0
        %v5865 = vadd.f32 %v5816, %v5864
        %v5866 = vpop.f32.mrf.mxu0
        %v5867 = vadd.f32 %v5818, %v5866
        %5868 = vdwg.mxu0
        %5869 = vmatpush.bf16.msra.mxu0 %v2991
        %5870 = vmatpush.bf16.msra.mxu0 %v2983
        %5871 = vmatpush.bf16.msra.mxu0 %v2975
        %5872 = vmatpush.bf16.msra.mxu0 %v2967
        %5873 = vmatpush.bf16.msra.mxu0 %v2959
        %5874 = vmatpush.bf16.msra.mxu0 %v2951
        %5875 = vmatpush.bf16.msra.mxu0 %v2943
        %5876 = vmatpush.bf16.msra.mxu0 %v2935
        %5877 = vmatmul.bf16.gmra.mxu0 %v611
        %v5878 = vpop.f32.mrf.mxu0
        %v5879 = vadd.f32 %v5830, %v5878
        %v5880 = vpop.f32.mrf.mxu0
        %v5881 = vadd.f32 %v5832, %v5880
        %5882 = vmatmul.bf16.gmra.mxu0 %v619
        %v5883 = vpop.f32.mrf.mxu0
        %v5884 = vadd.f32 %v5835, %v5883
        %v5885 = vpop.f32.mrf.mxu0
        %v5886 = vadd.f32 %v5837, %v5885
        %5887 = vmatmul.bf16.gmra.mxu0 %v627
        %v5888 = vpop.f32.mrf.mxu0
        %v5889 = vadd.f32 %v5840, %v5888
        %v5890 = vpop.f32.mrf.mxu0
        %v5891 = vadd.f32 %v5842, %v5890
        %5892 = vmatmul.bf16.gmra.mxu0 %v635
        %v5893 = vpop.f32.mrf.mxu0
        %v5894 = vadd.f32 %v5845, %v5893
        %v5895 = vpop.f32.mrf.mxu0
        %v5896 = vadd.f32 %v5847, %v5895
        %5897 = vmatmul.bf16.gmra.mxu0 %v643
        %v5898 = vpop.f32.mrf.mxu0
        %v5899 = vadd.f32 %v5850, %v5898
        %v5900 = vpop.f32.mrf.mxu0
        %v5901 = vadd.f32 %v5852, %v5900
        %5902 = vmatmul.bf16.gmra.mxu0 %v651
        %v5903 = vpop.f32.mrf.mxu0
        %v5904 = vadd.f32 %v5855, %v5903
        %v5905 = vpop.f32.mrf.mxu0
        %v5906 = vadd.f32 %v5857, %v5905
        %5907 = vmatmul.bf16.gmra.mxu0 %v659
        %v5908 = vpop.f32.mrf.mxu0
        %v5909 = vadd.f32 %v5860, %v5908
        %v5910 = vpop.f32.mrf.mxu0
        %v5911 = vadd.f32 %v5862, %v5910
        %5912 = vmatmul.bf16.gmra.mxu0 %v667
        %v5913 = vpop.f32.mrf.mxu0
        %v5914 = vadd.f32 %v5865, %v5913
        %v5915 = vpop.f32.mrf.mxu0
        %v5916 = vadd.f32 %v5867, %v5915
        %5917 = vdwg.mxu0
        %5918 = vmatpush.bf16.msra.mxu0 %v3055
        %5919 = vmatpush.bf16.msra.mxu0 %v3047
        %5920 = vmatpush.bf16.msra.mxu0 %v3039
        %5921 = vmatpush.bf16.msra.mxu0 %v3031
        %5922 = vmatpush.bf16.msra.mxu0 %v3023
        %5923 = vmatpush.bf16.msra.mxu0 %v3015
        %5924 = vmatpush.bf16.msra.mxu0 %v3007
        %5925 = vmatpush.bf16.msra.mxu0 %v2999
        %5926 = vmatmul.bf16.gmra.mxu0 %v612
        %v5927 = vpop.f32.mrf.mxu0
        %v5928 = vadd.f32 %v5879, %v5927
        %v5929 = vpop.f32.mrf.mxu0
        %v5930 = vadd.f32 %v5881, %v5929
        %5931 = vmatmul.bf16.gmra.mxu0 %v620
        %v5932 = vpop.f32.mrf.mxu0
        %v5933 = vadd.f32 %v5884, %v5932
        %v5934 = vpop.f32.mrf.mxu0
        %v5935 = vadd.f32 %v5886, %v5934
        %5936 = vmatmul.bf16.gmra.mxu0 %v628
        %v5937 = vpop.f32.mrf.mxu0
        %v5938 = vadd.f32 %v5889, %v5937
        %v5939 = vpop.f32.mrf.mxu0
        %v5940 = vadd.f32 %v5891, %v5939
        %5941 = vmatmul.bf16.gmra.mxu0 %v636
        %v5942 = vpop.f32.mrf.mxu0
        %v5943 = vadd.f32 %v5894, %v5942
        %v5944 = vpop.f32.mrf.mxu0
        %v5945 = vadd.f32 %v5896, %v5944
        %5946 = vmatmul.bf16.gmra.mxu0 %v644
        %v5947 = vpop.f32.mrf.mxu0
        %v5948 = vadd.f32 %v5899, %v5947
        %v5949 = vpop.f32.mrf.mxu0
        %v5950 = vadd.f32 %v5901, %v5949
        %5951 = vmatmul.bf16.gmra.mxu0 %v652
        %v5952 = vpop.f32.mrf.mxu0
        %v5953 = vadd.f32 %v5904, %v5952
        %v5954 = vpop.f32.mrf.mxu0
        %v5955 = vadd.f32 %v5906, %v5954
        %5956 = vmatmul.bf16.gmra.mxu0 %v660
        %v5957 = vpop.f32.mrf.mxu0
        %v5958 = vadd.f32 %v5909, %v5957
        %v5959 = vpop.f32.mrf.mxu0
        %v5960 = vadd.f32 %v5911, %v5959
        %5961 = vmatmul.bf16.gmra.mxu0 %v668
        %v5962 = vpop.f32.mrf.mxu0
        %v5963 = vadd.f32 %v5914, %v5962
        %v5964 = vpop.f32.mrf.mxu0
        %v5965 = vadd.f32 %v5916, %v5964
        %5966 = vdwg.mxu0
        %5967 = vmatpush.bf16.msra.mxu0 %v3119
        %5968 = vmatpush.bf16.msra.mxu0 %v3111
        %5969 = vmatpush.bf16.msra.mxu0 %v3103
        %5970 = vmatpush.bf16.msra.mxu0 %v3095
        %5971 = vmatpush.bf16.msra.mxu0 %v3087
        %5972 = vmatpush.bf16.msra.mxu0 %v3079
        %5973 = vmatpush.bf16.msra.mxu0 %v3071
        %5974 = vmatpush.bf16.msra.mxu0 %v3063
        %5975 = vmatmul.bf16.gmra.mxu0 %v613
        %v5976 = vpop.f32.mrf.mxu0
        %v5977 = vadd.f32 %v5928, %v5976
        %v5978 = vpop.f32.mrf.mxu0
        %v5979 = vadd.f32 %v5930, %v5978
        %5980 = vmatmul.bf16.gmra.mxu0 %v621
        %v5981 = vpop.f32.mrf.mxu0
        %v5982 = vadd.f32 %v5933, %v5981
        %v5983 = vpop.f32.mrf.mxu0
        %v5984 = vadd.f32 %v5935, %v5983
        %5985 = vmatmul.bf16.gmra.mxu0 %v629
        %v5986 = vpop.f32.mrf.mxu0
        %v5987 = vadd.f32 %v5938, %v5986
        %v5988 = vpop.f32.mrf.mxu0
        %v5989 = vadd.f32 %v5940, %v5988
        %5990 = vmatmul.bf16.gmra.mxu0 %v637
        %v5991 = vpop.f32.mrf.mxu0
        %v5992 = vadd.f32 %v5943, %v5991
        %v5993 = vpop.f32.mrf.mxu0
        %v5994 = vadd.f32 %v5945, %v5993
        %5995 = vmatmul.bf16.gmra.mxu0 %v645
        %v5996 = vpop.f32.mrf.mxu0
        %v5997 = vadd.f32 %v5948, %v5996
        %v5998 = vpop.f32.mrf.mxu0
        %v5999 = vadd.f32 %v5950, %v5998
        %6000 = vmatmul.bf16.gmra.mxu0 %v653
        %v6001 = vpop.f32.mrf.mxu0
        %v6002 = vadd.f32 %v5953, %v6001
        %v6003 = vpop.f32.mrf.mxu0
        %v6004 = vadd.f32 %v5955, %v6003
        %6005 = vmatmul.bf16.gmra.mxu0 %v661
        %v6006 = vpop.f32.mrf.mxu0
        %v6007 = vadd.f32 %v5958, %v6006
        %v6008 = vpop.f32.mrf.mxu0
        %v6009 = vadd.f32 %v5960, %v6008
        %6010 = vmatmul.bf16.gmra.mxu0 %v669
        %v6011 = vpop.f32.mrf.mxu0
        %v6012 = vadd.f32 %v5963, %v6011
        %v6013 = vpop.f32.mrf.mxu0
        %v6014 = vadd.f32 %v5965, %v6013
        %6015 = vdwg.mxu0
        %6016 = vmatpush.bf16.msra.mxu0 %v3183
        %6017 = vmatpush.bf16.msra.mxu0 %v3175
        %6018 = vmatpush.bf16.msra.mxu0 %v3167
        %6019 = vmatpush.bf16.msra.mxu0 %v3159
        %6020 = vmatpush.bf16.msra.mxu0 %v3151
        %6021 = vmatpush.bf16.msra.mxu0 %v3143
        %6022 = vmatpush.bf16.msra.mxu0 %v3135
        %6023 = vmatpush.bf16.msra.mxu0 %v3127
        %6024 = vmatmul.bf16.gmra.mxu0 %v614
        %v6025 = vpop.f32.mrf.mxu0
        %v6026 = vadd.f32 %v5977, %v6025
        %v6027 = vpop.f32.mrf.mxu0
        %v6028 = vadd.f32 %v5979, %v6027
        %6029 = vmatmul.bf16.gmra.mxu0 %v622
        %v6030 = vpop.f32.mrf.mxu0
        %v6031 = vadd.f32 %v5982, %v6030
        %v6032 = vpop.f32.mrf.mxu0
        %v6033 = vadd.f32 %v5984, %v6032
        %6034 = vmatmul.bf16.gmra.mxu0 %v630
        %v6035 = vpop.f32.mrf.mxu0
        %v6036 = vadd.f32 %v5987, %v6035
        %v6037 = vpop.f32.mrf.mxu0
        %v6038 = vadd.f32 %v5989, %v6037
        %6039 = vmatmul.bf16.gmra.mxu0 %v638
        %v6040 = vpop.f32.mrf.mxu0
        %v6041 = vadd.f32 %v5992, %v6040
        %v6042 = vpop.f32.mrf.mxu0
        %v6043 = vadd.f32 %v5994, %v6042
        %6044 = vmatmul.bf16.gmra.mxu0 %v646
        %v6045 = vpop.f32.mrf.mxu0
        %v6046 = vadd.f32 %v5997, %v6045
        %v6047 = vpop.f32.mrf.mxu0
        %v6048 = vadd.f32 %v5999, %v6047
        %6049 = vmatmul.bf16.gmra.mxu0 %v654
        %v6050 = vpop.f32.mrf.mxu0
        %v6051 = vadd.f32 %v6002, %v6050
        %v6052 = vpop.f32.mrf.mxu0
        %v6053 = vadd.f32 %v6004, %v6052
        %6054 = vmatmul.bf16.gmra.mxu0 %v662
        %v6055 = vpop.f32.mrf.mxu0
        %v6056 = vadd.f32 %v6007, %v6055
        %v6057 = vpop.f32.mrf.mxu0
        %v6058 = vadd.f32 %v6009, %v6057
        %6059 = vmatmul.bf16.gmra.mxu0 %v670
        %v6060 = vpop.f32.mrf.mxu0
        %v6061 = vadd.f32 %v6012, %v6060
        %v6062 = vpop.f32.mrf.mxu0
        %v6063 = vadd.f32 %v6014, %v6062
        %6064 = vdwg.mxu0
        %6065 = vmatpush.bf16.msra.mxu0 %v3247
        %6066 = vmatpush.bf16.msra.mxu0 %v3239
        %6067 = vmatpush.bf16.msra.mxu0 %v3231
        %6068 = vmatpush.bf16.msra.mxu0 %v3223
        %6069 = vmatpush.bf16.msra.mxu0 %v3215
        %6070 = vmatpush.bf16.msra.mxu0 %v3207
        %6071 = vmatpush.bf16.msra.mxu0 %v3199
        %6072 = vmatpush.bf16.msra.mxu0 %v3191
        %6073 = vmatmul.bf16.gmra.mxu0 %v615
        %v6074 = vpop.f32.mrf.mxu0
        %v6075 = vadd.f32 %v6026, %v6074
        %v6076 = vpop.f32.mrf.mxu0
        %v6077 = vadd.f32 %v6028, %v6076
        %6078 = vmatmul.bf16.gmra.mxu0 %v623
        %v6079 = vpop.f32.mrf.mxu0
        %v6080 = vadd.f32 %v6031, %v6079
        %v6081 = vpop.f32.mrf.mxu0
        %v6082 = vadd.f32 %v6033, %v6081
        %6083 = vmatmul.bf16.gmra.mxu0 %v631
        %v6084 = vpop.f32.mrf.mxu0
        %v6085 = vadd.f32 %v6036, %v6084
        %v6086 = vpop.f32.mrf.mxu0
        %v6087 = vadd.f32 %v6038, %v6086
        %6088 = vmatmul.bf16.gmra.mxu0 %v639
        %v6089 = vpop.f32.mrf.mxu0
        %v6090 = vadd.f32 %v6041, %v6089
        %v6091 = vpop.f32.mrf.mxu0
        %v6092 = vadd.f32 %v6043, %v6091
        %6093 = vmatmul.bf16.gmra.mxu0 %v647
        %v6094 = vpop.f32.mrf.mxu0
        %v6095 = vadd.f32 %v6046, %v6094
        %v6096 = vpop.f32.mrf.mxu0
        %v6097 = vadd.f32 %v6048, %v6096
        %6098 = vmatmul.bf16.gmra.mxu0 %v655
        %v6099 = vpop.f32.mrf.mxu0
        %v6100 = vadd.f32 %v6051, %v6099
        %v6101 = vpop.f32.mrf.mxu0
        %v6102 = vadd.f32 %v6053, %v6101
        %6103 = vmatmul.bf16.gmra.mxu0 %v663
        %v6104 = vpop.f32.mrf.mxu0
        %v6105 = vadd.f32 %v6056, %v6104
        %v6106 = vpop.f32.mrf.mxu0
        %v6107 = vadd.f32 %v6058, %v6106
        %6108 = vmatmul.bf16.gmra.mxu0 %v671
        %v6109 = vpop.f32.mrf.mxu0
        %v6110 = vadd.f32 %v6061, %v6109
        %v6111 = vpop.f32.mrf.mxu0
        %v6112 = vadd.f32 %v6063, %v6111
        %6113 = vdwg.mxu0
        %6114 = vmatpush.bf16.msra.mxu0 %v2800
        %6115 = vmatpush.bf16.msra.mxu0 %v2792
        %6116 = vmatpush.bf16.msra.mxu0 %v2784
        %6117 = vmatpush.bf16.msra.mxu0 %v2776
        %6118 = vmatpush.bf16.msra.mxu0 %v2768
        %6119 = vmatpush.bf16.msra.mxu0 %v2760
        %6120 = vmatpush.bf16.msra.mxu0 %v2752
        %6121 = vmatpush.bf16.msra.mxu0 %v2744
        %6122 = vmatmul.bf16.gmra.mxu0 %v608
        %v6123 = vpop.f32.mrf.mxu0
        %v6124 = vadd.f32 %v1192, %v6123
        %v6125 = vpop.f32.mrf.mxu0
        %v6126 = vadd.f32 %v1192, %v6125
        %6127 = vmatmul.bf16.gmra.mxu0 %v616
        %v6128 = vpop.f32.mrf.mxu0
        %v6129 = vadd.f32 %v1192, %v6128
        %v6130 = vpop.f32.mrf.mxu0
        %v6131 = vadd.f32 %v1192, %v6130
        %6132 = vmatmul.bf16.gmra.mxu0 %v624
        %v6133 = vpop.f32.mrf.mxu0
        %v6134 = vadd.f32 %v1192, %v6133
        %v6135 = vpop.f32.mrf.mxu0
        %v6136 = vadd.f32 %v1192, %v6135
        %6137 = vmatmul.bf16.gmra.mxu0 %v632
        %v6138 = vpop.f32.mrf.mxu0
        %v6139 = vadd.f32 %v1192, %v6138
        %v6140 = vpop.f32.mrf.mxu0
        %v6141 = vadd.f32 %v1192, %v6140
        %6142 = vmatmul.bf16.gmra.mxu0 %v640
        %v6143 = vpop.f32.mrf.mxu0
        %v6144 = vadd.f32 %v1192, %v6143
        %v6145 = vpop.f32.mrf.mxu0
        %v6146 = vadd.f32 %v1192, %v6145
        %6147 = vmatmul.bf16.gmra.mxu0 %v648
        %v6148 = vpop.f32.mrf.mxu0
        %v6149 = vadd.f32 %v1192, %v6148
        %v6150 = vpop.f32.mrf.mxu0
        %v6151 = vadd.f32 %v1192, %v6150
        %6152 = vmatmul.bf16.gmra.mxu0 %v656
        %v6153 = vpop.f32.mrf.mxu0
        %v6154 = vadd.f32 %v1192, %v6153
        %v6155 = vpop.f32.mrf.mxu0
        %v6156 = vadd.f32 %v1192, %v6155
        %6157 = vmatmul.bf16.gmra.mxu0 %v664
        %v6158 = vpop.f32.mrf.mxu0
        %v6159 = vadd.f32 %v1192, %v6158
        %v6160 = vpop.f32.mrf.mxu0
        %v6161 = vadd.f32 %v1192, %v6160
        %6162 = vdwg.mxu0
        %6163 = vmatpush.bf16.msra.mxu0 %v2864
        %6164 = vmatpush.bf16.msra.mxu0 %v2856
        %6165 = vmatpush.bf16.msra.mxu0 %v2848
        %6166 = vmatpush.bf16.msra.mxu0 %v2840
        %6167 = vmatpush.bf16.msra.mxu0 %v2832
        %6168 = vmatpush.bf16.msra.mxu0 %v2824
        %6169 = vmatpush.bf16.msra.mxu0 %v2816
        %6170 = vmatpush.bf16.msra.mxu0 %v2808
        %6171 = vmatmul.bf16.gmra.mxu0 %v609
        %v6172 = vpop.f32.mrf.mxu0
        %v6173 = vadd.f32 %v6124, %v6172
        %v6174 = vpop.f32.mrf.mxu0
        %v6175 = vadd.f32 %v6126, %v6174
        %6176 = vmatmul.bf16.gmra.mxu0 %v617
        %v6177 = vpop.f32.mrf.mxu0
        %v6178 = vadd.f32 %v6129, %v6177
        %v6179 = vpop.f32.mrf.mxu0
        %v6180 = vadd.f32 %v6131, %v6179
        %6181 = vmatmul.bf16.gmra.mxu0 %v625
        %v6182 = vpop.f32.mrf.mxu0
        %v6183 = vadd.f32 %v6134, %v6182
        %v6184 = vpop.f32.mrf.mxu0
        %v6185 = vadd.f32 %v6136, %v6184
        %6186 = vmatmul.bf16.gmra.mxu0 %v633
        %v6187 = vpop.f32.mrf.mxu0
        %v6188 = vadd.f32 %v6139, %v6187
        %v6189 = vpop.f32.mrf.mxu0
        %v6190 = vadd.f32 %v6141, %v6189
        %6191 = vmatmul.bf16.gmra.mxu0 %v641
        %v6192 = vpop.f32.mrf.mxu0
        %v6193 = vadd.f32 %v6144, %v6192
        %v6194 = vpop.f32.mrf.mxu0
        %v6195 = vadd.f32 %v6146, %v6194
        %6196 = vmatmul.bf16.gmra.mxu0 %v649
        %v6197 = vpop.f32.mrf.mxu0
        %v6198 = vadd.f32 %v6149, %v6197
        %v6199 = vpop.f32.mrf.mxu0
        %v6200 = vadd.f32 %v6151, %v6199
        %6201 = vmatmul.bf16.gmra.mxu0 %v657
        %v6202 = vpop.f32.mrf.mxu0
        %v6203 = vadd.f32 %v6154, %v6202
        %v6204 = vpop.f32.mrf.mxu0
        %v6205 = vadd.f32 %v6156, %v6204
        %6206 = vmatmul.bf16.gmra.mxu0 %v665
        %v6207 = vpop.f32.mrf.mxu0
        %v6208 = vadd.f32 %v6159, %v6207
        %v6209 = vpop.f32.mrf.mxu0
        %v6210 = vadd.f32 %v6161, %v6209
        %6211 = vdwg.mxu0
        %6212 = vmatpush.bf16.msra.mxu0 %v2928
        %6213 = vmatpush.bf16.msra.mxu0 %v2920
        %6214 = vmatpush.bf16.msra.mxu0 %v2912
        %6215 = vmatpush.bf16.msra.mxu0 %v2904
        %6216 = vmatpush.bf16.msra.mxu0 %v2896
        %6217 = vmatpush.bf16.msra.mxu0 %v2888
        %6218 = vmatpush.bf16.msra.mxu0 %v2880
        %6219 = vmatpush.bf16.msra.mxu0 %v2872
        %6220 = vmatmul.bf16.gmra.mxu0 %v610
        %v6221 = vpop.f32.mrf.mxu0
        %v6222 = vadd.f32 %v6173, %v6221
        %v6223 = vpop.f32.mrf.mxu0
        %v6224 = vadd.f32 %v6175, %v6223
        %6225 = vmatmul.bf16.gmra.mxu0 %v618
        %v6226 = vpop.f32.mrf.mxu0
        %v6227 = vadd.f32 %v6178, %v6226
        %v6228 = vpop.f32.mrf.mxu0
        %v6229 = vadd.f32 %v6180, %v6228
        %6230 = vmatmul.bf16.gmra.mxu0 %v626
        %v6231 = vpop.f32.mrf.mxu0
        %v6232 = vadd.f32 %v6183, %v6231
        %v6233 = vpop.f32.mrf.mxu0
        %v6234 = vadd.f32 %v6185, %v6233
        %6235 = vmatmul.bf16.gmra.mxu0 %v634
        %v6236 = vpop.f32.mrf.mxu0
        %v6237 = vadd.f32 %v6188, %v6236
        %v6238 = vpop.f32.mrf.mxu0
        %v6239 = vadd.f32 %v6190, %v6238
        %6240 = vmatmul.bf16.gmra.mxu0 %v642
        %v6241 = vpop.f32.mrf.mxu0
        %v6242 = vadd.f32 %v6193, %v6241
        %v6243 = vpop.f32.mrf.mxu0
        %v6244 = vadd.f32 %v6195, %v6243
        %6245 = vmatmul.bf16.gmra.mxu0 %v650
        %v6246 = vpop.f32.mrf.mxu0
        %v6247 = vadd.f32 %v6198, %v6246
        %v6248 = vpop.f32.mrf.mxu0
        %v6249 = vadd.f32 %v6200, %v6248
        %6250 = vmatmul.bf16.gmra.mxu0 %v658
        %v6251 = vpop.f32.mrf.mxu0
        %v6252 = vadd.f32 %v6203, %v6251
        %v6253 = vpop.f32.mrf.mxu0
        %v6254 = vadd.f32 %v6205, %v6253
        %6255 = vmatmul.bf16.gmra.mxu0 %v666
        %v6256 = vpop.f32.mrf.mxu0
        %v6257 = vadd.f32 %v6208, %v6256
        %v6258 = vpop.f32.mrf.mxu0
        %v6259 = vadd.f32 %v6210, %v6258
        %6260 = vdwg.mxu0
        %6261 = vmatpush.bf16.msra.mxu0 %v2992
        %6262 = vmatpush.bf16.msra.mxu0 %v2984
        %6263 = vmatpush.bf16.msra.mxu0 %v2976
        %6264 = vmatpush.bf16.msra.mxu0 %v2968
        %6265 = vmatpush.bf16.msra.mxu0 %v2960
        %6266 = vmatpush.bf16.msra.mxu0 %v2952
        %6267 = vmatpush.bf16.msra.mxu0 %v2944
        %6268 = vmatpush.bf16.msra.mxu0 %v2936
        %6269 = vmatmul.bf16.gmra.mxu0 %v611
        %v6270 = vpop.f32.mrf.mxu0
        %v6271 = vadd.f32 %v6222, %v6270
        %v6272 = vpop.f32.mrf.mxu0
        %v6273 = vadd.f32 %v6224, %v6272
        %6274 = vmatmul.bf16.gmra.mxu0 %v619
        %v6275 = vpop.f32.mrf.mxu0
        %v6276 = vadd.f32 %v6227, %v6275
        %v6277 = vpop.f32.mrf.mxu0
        %v6278 = vadd.f32 %v6229, %v6277
        %6279 = vmatmul.bf16.gmra.mxu0 %v627
        %v6280 = vpop.f32.mrf.mxu0
        %v6281 = vadd.f32 %v6232, %v6280
        %v6282 = vpop.f32.mrf.mxu0
        %v6283 = vadd.f32 %v6234, %v6282
        %6284 = vmatmul.bf16.gmra.mxu0 %v635
        %v6285 = vpop.f32.mrf.mxu0
        %v6286 = vadd.f32 %v6237, %v6285
        %v6287 = vpop.f32.mrf.mxu0
        %v6288 = vadd.f32 %v6239, %v6287
        %6289 = vmatmul.bf16.gmra.mxu0 %v643
        %v6290 = vpop.f32.mrf.mxu0
        %v6291 = vadd.f32 %v6242, %v6290
        %v6292 = vpop.f32.mrf.mxu0
        %v6293 = vadd.f32 %v6244, %v6292
        %6294 = vmatmul.bf16.gmra.mxu0 %v651
        %v6295 = vpop.f32.mrf.mxu0
        %v6296 = vadd.f32 %v6247, %v6295
        %v6297 = vpop.f32.mrf.mxu0
        %v6298 = vadd.f32 %v6249, %v6297
        %6299 = vmatmul.bf16.gmra.mxu0 %v659
        %v6300 = vpop.f32.mrf.mxu0
        %v6301 = vadd.f32 %v6252, %v6300
        %v6302 = vpop.f32.mrf.mxu0
        %v6303 = vadd.f32 %v6254, %v6302
        %6304 = vmatmul.bf16.gmra.mxu0 %v667
        %v6305 = vpop.f32.mrf.mxu0
        %v6306 = vadd.f32 %v6257, %v6305
        %v6307 = vpop.f32.mrf.mxu0
        %v6308 = vadd.f32 %v6259, %v6307
        %6309 = vdwg.mxu0
        %6310 = vmatpush.bf16.msra.mxu0 %v3056
        %6311 = vmatpush.bf16.msra.mxu0 %v3048
        %6312 = vmatpush.bf16.msra.mxu0 %v3040
        %6313 = vmatpush.bf16.msra.mxu0 %v3032
        %6314 = vmatpush.bf16.msra.mxu0 %v3024
        %6315 = vmatpush.bf16.msra.mxu0 %v3016
        %6316 = vmatpush.bf16.msra.mxu0 %v3008
        %6317 = vmatpush.bf16.msra.mxu0 %v3000
        %6318 = vmatmul.bf16.gmra.mxu0 %v612
        %v6319 = vpop.f32.mrf.mxu0
        %v6320 = vadd.f32 %v6271, %v6319
        %v6321 = vpop.f32.mrf.mxu0
        %v6322 = vadd.f32 %v6273, %v6321
        %6323 = vmatmul.bf16.gmra.mxu0 %v620
        %v6324 = vpop.f32.mrf.mxu0
        %v6325 = vadd.f32 %v6276, %v6324
        %v6326 = vpop.f32.mrf.mxu0
        %v6327 = vadd.f32 %v6278, %v6326
        %6328 = vmatmul.bf16.gmra.mxu0 %v628
        %v6329 = vpop.f32.mrf.mxu0
        %v6330 = vadd.f32 %v6281, %v6329
        %v6331 = vpop.f32.mrf.mxu0
        %v6332 = vadd.f32 %v6283, %v6331
        %6333 = vmatmul.bf16.gmra.mxu0 %v636
        %v6334 = vpop.f32.mrf.mxu0
        %v6335 = vadd.f32 %v6286, %v6334
        %v6336 = vpop.f32.mrf.mxu0
        %v6337 = vadd.f32 %v6288, %v6336
        %6338 = vmatmul.bf16.gmra.mxu0 %v644
        %v6339 = vpop.f32.mrf.mxu0
        %v6340 = vadd.f32 %v6291, %v6339
        %v6341 = vpop.f32.mrf.mxu0
        %v6342 = vadd.f32 %v6293, %v6341
        %6343 = vmatmul.bf16.gmra.mxu0 %v652
        %v6344 = vpop.f32.mrf.mxu0
        %v6345 = vadd.f32 %v6296, %v6344
        %v6346 = vpop.f32.mrf.mxu0
        %v6347 = vadd.f32 %v6298, %v6346
        %6348 = vmatmul.bf16.gmra.mxu0 %v660
        %v6349 = vpop.f32.mrf.mxu0
        %v6350 = vadd.f32 %v6301, %v6349
        %v6351 = vpop.f32.mrf.mxu0
        %v6352 = vadd.f32 %v6303, %v6351
        %6353 = vmatmul.bf16.gmra.mxu0 %v668
        %v6354 = vpop.f32.mrf.mxu0
        %v6355 = vadd.f32 %v6306, %v6354
        %v6356 = vpop.f32.mrf.mxu0
        %v6357 = vadd.f32 %v6308, %v6356
        %6358 = vdwg.mxu0
        %6359 = vmatpush.bf16.msra.mxu0 %v3120
        %6360 = vmatpush.bf16.msra.mxu0 %v3112
        %6361 = vmatpush.bf16.msra.mxu0 %v3104
        %6362 = vmatpush.bf16.msra.mxu0 %v3096
        %6363 = vmatpush.bf16.msra.mxu0 %v3088
        %6364 = vmatpush.bf16.msra.mxu0 %v3080
        %6365 = vmatpush.bf16.msra.mxu0 %v3072
        %6366 = vmatpush.bf16.msra.mxu0 %v3064
        %6367 = vmatmul.bf16.gmra.mxu0 %v613
        %v6368 = vpop.f32.mrf.mxu0
        %v6369 = vadd.f32 %v6320, %v6368
        %v6370 = vpop.f32.mrf.mxu0
        %v6371 = vadd.f32 %v6322, %v6370
        %6372 = vmatmul.bf16.gmra.mxu0 %v621
        %v6373 = vpop.f32.mrf.mxu0
        %v6374 = vadd.f32 %v6325, %v6373
        %v6375 = vpop.f32.mrf.mxu0
        %v6376 = vadd.f32 %v6327, %v6375
        %6377 = vmatmul.bf16.gmra.mxu0 %v629
        %v6378 = vpop.f32.mrf.mxu0
        %v6379 = vadd.f32 %v6330, %v6378
        %v6380 = vpop.f32.mrf.mxu0
        %v6381 = vadd.f32 %v6332, %v6380
        %6382 = vmatmul.bf16.gmra.mxu0 %v637
        %v6383 = vpop.f32.mrf.mxu0
        %v6384 = vadd.f32 %v6335, %v6383
        %v6385 = vpop.f32.mrf.mxu0
        %v6386 = vadd.f32 %v6337, %v6385
        %6387 = vmatmul.bf16.gmra.mxu0 %v645
        %v6388 = vpop.f32.mrf.mxu0
        %v6389 = vadd.f32 %v6340, %v6388
        %v6390 = vpop.f32.mrf.mxu0
        %v6391 = vadd.f32 %v6342, %v6390
        %6392 = vmatmul.bf16.gmra.mxu0 %v653
        %v6393 = vpop.f32.mrf.mxu0
        %v6394 = vadd.f32 %v6345, %v6393
        %v6395 = vpop.f32.mrf.mxu0
        %v6396 = vadd.f32 %v6347, %v6395
        %6397 = vmatmul.bf16.gmra.mxu0 %v661
        %v6398 = vpop.f32.mrf.mxu0
        %v6399 = vadd.f32 %v6350, %v6398
        %v6400 = vpop.f32.mrf.mxu0
        %v6401 = vadd.f32 %v6352, %v6400
        %6402 = vmatmul.bf16.gmra.mxu0 %v669
        %v6403 = vpop.f32.mrf.mxu0
        %v6404 = vadd.f32 %v6355, %v6403
        %v6405 = vpop.f32.mrf.mxu0
        %v6406 = vadd.f32 %v6357, %v6405
        %6407 = vdwg.mxu0
        %6408 = vmatpush.bf16.msra.mxu0 %v3184
        %6409 = vmatpush.bf16.msra.mxu0 %v3176
        %6410 = vmatpush.bf16.msra.mxu0 %v3168
        %6411 = vmatpush.bf16.msra.mxu0 %v3160
        %6412 = vmatpush.bf16.msra.mxu0 %v3152
        %6413 = vmatpush.bf16.msra.mxu0 %v3144
        %6414 = vmatpush.bf16.msra.mxu0 %v3136
        %6415 = vmatpush.bf16.msra.mxu0 %v3128
        %6416 = vmatmul.bf16.gmra.mxu0 %v614
        %v6417 = vpop.f32.mrf.mxu0
        %v6418 = vadd.f32 %v6369, %v6417
        %v6419 = vpop.f32.mrf.mxu0
        %v6420 = vadd.f32 %v6371, %v6419
        %6421 = vmatmul.bf16.gmra.mxu0 %v622
        %v6422 = vpop.f32.mrf.mxu0
        %v6423 = vadd.f32 %v6374, %v6422
        %v6424 = vpop.f32.mrf.mxu0
        %v6425 = vadd.f32 %v6376, %v6424
        %6426 = vmatmul.bf16.gmra.mxu0 %v630
        %v6427 = vpop.f32.mrf.mxu0
        %v6428 = vadd.f32 %v6379, %v6427
        %v6429 = vpop.f32.mrf.mxu0
        %v6430 = vadd.f32 %v6381, %v6429
        %6431 = vmatmul.bf16.gmra.mxu0 %v638
        %v6432 = vpop.f32.mrf.mxu0
        %v6433 = vadd.f32 %v6384, %v6432
        %v6434 = vpop.f32.mrf.mxu0
        %v6435 = vadd.f32 %v6386, %v6434
        %6436 = vmatmul.bf16.gmra.mxu0 %v646
        %v6437 = vpop.f32.mrf.mxu0
        %v6438 = vadd.f32 %v6389, %v6437
        %v6439 = vpop.f32.mrf.mxu0
        %v6440 = vadd.f32 %v6391, %v6439
        %6441 = vmatmul.bf16.gmra.mxu0 %v654
        %v6442 = vpop.f32.mrf.mxu0
        %v6443 = vadd.f32 %v6394, %v6442
        %v6444 = vpop.f32.mrf.mxu0
        %v6445 = vadd.f32 %v6396, %v6444
        %6446 = vmatmul.bf16.gmra.mxu0 %v662
        %v6447 = vpop.f32.mrf.mxu0
        %v6448 = vadd.f32 %v6399, %v6447
        %v6449 = vpop.f32.mrf.mxu0
        %v6450 = vadd.f32 %v6401, %v6449
        %6451 = vmatmul.bf16.gmra.mxu0 %v670
        %v6452 = vpop.f32.mrf.mxu0
        %v6453 = vadd.f32 %v6404, %v6452
        %v6454 = vpop.f32.mrf.mxu0
        %v6455 = vadd.f32 %v6406, %v6454
        %6456 = vdwg.mxu0
        %6457 = vmatpush.bf16.msra.mxu0 %v3248
        %6458 = vmatpush.bf16.msra.mxu0 %v3240
        %6459 = vmatpush.bf16.msra.mxu0 %v3232
        %6460 = vmatpush.bf16.msra.mxu0 %v3224
        %6461 = vmatpush.bf16.msra.mxu0 %v3216
        %6462 = vmatpush.bf16.msra.mxu0 %v3208
        %6463 = vmatpush.bf16.msra.mxu0 %v3200
        %6464 = vmatpush.bf16.msra.mxu0 %v3192
        %6465 = vmatmul.bf16.gmra.mxu0 %v615
        %v6466 = vpop.f32.mrf.mxu0
        %v6467 = vadd.f32 %v6418, %v6466
        %v6468 = vpop.f32.mrf.mxu0
        %v6469 = vadd.f32 %v6420, %v6468
        %6470 = vmatmul.bf16.gmra.mxu0 %v623
        %v6471 = vpop.f32.mrf.mxu0
        %v6472 = vadd.f32 %v6423, %v6471
        %v6473 = vpop.f32.mrf.mxu0
        %v6474 = vadd.f32 %v6425, %v6473
        %6475 = vmatmul.bf16.gmra.mxu0 %v631
        %v6476 = vpop.f32.mrf.mxu0
        %v6477 = vadd.f32 %v6428, %v6476
        %v6478 = vpop.f32.mrf.mxu0
        %v6479 = vadd.f32 %v6430, %v6478
        %6480 = vmatmul.bf16.gmra.mxu0 %v639
        %v6481 = vpop.f32.mrf.mxu0
        %v6482 = vadd.f32 %v6433, %v6481
        %v6483 = vpop.f32.mrf.mxu0
        %v6484 = vadd.f32 %v6435, %v6483
        %6485 = vmatmul.bf16.gmra.mxu0 %v647
        %v6486 = vpop.f32.mrf.mxu0
        %v6487 = vadd.f32 %v6438, %v6486
        %v6488 = vpop.f32.mrf.mxu0
        %v6489 = vadd.f32 %v6440, %v6488
        %6490 = vmatmul.bf16.gmra.mxu0 %v655
        %v6491 = vpop.f32.mrf.mxu0
        %v6492 = vadd.f32 %v6443, %v6491
        %v6493 = vpop.f32.mrf.mxu0
        %v6494 = vadd.f32 %v6445, %v6493
        %6495 = vmatmul.bf16.gmra.mxu0 %v663
        %v6496 = vpop.f32.mrf.mxu0
        %v6497 = vadd.f32 %v6448, %v6496
        %v6498 = vpop.f32.mrf.mxu0
        %v6499 = vadd.f32 %v6450, %v6498
        %6500 = vmatmul.bf16.gmra.mxu0 %v671
        %v6501 = vpop.f32.mrf.mxu0
        %v6502 = vadd.f32 %v6453, %v6501
        %v6503 = vpop.f32.mrf.mxu0
        %v6504 = vadd.f32 %v6455, %v6503
        %6505 = vdwg.mxu0
        %6506 = vmatpush.bf16.msra.mxu0 %v2801
        %6507 = vmatpush.bf16.msra.mxu0 %v2793
        %6508 = vmatpush.bf16.msra.mxu0 %v2785
        %6509 = vmatpush.bf16.msra.mxu0 %v2777
        %6510 = vmatpush.bf16.msra.mxu0 %v2769
        %6511 = vmatpush.bf16.msra.mxu0 %v2761
        %6512 = vmatpush.bf16.msra.mxu0 %v2753
        %6513 = vmatpush.bf16.msra.mxu0 %v2745
        %6514 = vmatmul.bf16.gmra.mxu0 %v608
        %v6515 = vpop.f32.mrf.mxu0
        %v6516 = vadd.f32 %v1193, %v6515
        %v6517 = vpop.f32.mrf.mxu0
        %v6518 = vadd.f32 %v1193, %v6517
        %6519 = vmatmul.bf16.gmra.mxu0 %v616
        %v6520 = vpop.f32.mrf.mxu0
        %v6521 = vadd.f32 %v1193, %v6520
        %v6522 = vpop.f32.mrf.mxu0
        %v6523 = vadd.f32 %v1193, %v6522
        %6524 = vmatmul.bf16.gmra.mxu0 %v624
        %v6525 = vpop.f32.mrf.mxu0
        %v6526 = vadd.f32 %v1193, %v6525
        %v6527 = vpop.f32.mrf.mxu0
        %v6528 = vadd.f32 %v1193, %v6527
        %6529 = vmatmul.bf16.gmra.mxu0 %v632
        %v6530 = vpop.f32.mrf.mxu0
        %v6531 = vadd.f32 %v1193, %v6530
        %v6532 = vpop.f32.mrf.mxu0
        %v6533 = vadd.f32 %v1193, %v6532
        %6534 = vmatmul.bf16.gmra.mxu0 %v640
        %v6535 = vpop.f32.mrf.mxu0
        %v6536 = vadd.f32 %v1193, %v6535
        %v6537 = vpop.f32.mrf.mxu0
        %v6538 = vadd.f32 %v1193, %v6537
        %6539 = vmatmul.bf16.gmra.mxu0 %v648
        %v6540 = vpop.f32.mrf.mxu0
        %v6541 = vadd.f32 %v1193, %v6540
        %v6542 = vpop.f32.mrf.mxu0
        %v6543 = vadd.f32 %v1193, %v6542
        %6544 = vmatmul.bf16.gmra.mxu0 %v656
        %v6545 = vpop.f32.mrf.mxu0
        %v6546 = vadd.f32 %v1193, %v6545
        %v6547 = vpop.f32.mrf.mxu0
        %v6548 = vadd.f32 %v1193, %v6547
        %6549 = vmatmul.bf16.gmra.mxu0 %v664
        %v6550 = vpop.f32.mrf.mxu0
        %v6551 = vadd.f32 %v1193, %v6550
        %v6552 = vpop.f32.mrf.mxu0
        %v6553 = vadd.f32 %v1193, %v6552
        %6554 = vdwg.mxu0
        %6555 = vmatpush.bf16.msra.mxu0 %v2865
        %6556 = vmatpush.bf16.msra.mxu0 %v2857
        %6557 = vmatpush.bf16.msra.mxu0 %v2849
        %6558 = vmatpush.bf16.msra.mxu0 %v2841
        %6559 = vmatpush.bf16.msra.mxu0 %v2833
        %6560 = vmatpush.bf16.msra.mxu0 %v2825
        %6561 = vmatpush.bf16.msra.mxu0 %v2817
        %6562 = vmatpush.bf16.msra.mxu0 %v2809
        %6563 = vmatmul.bf16.gmra.mxu0 %v609
        %v6564 = vpop.f32.mrf.mxu0
        %v6565 = vadd.f32 %v6516, %v6564
        %v6566 = vpop.f32.mrf.mxu0
        %v6567 = vadd.f32 %v6518, %v6566
        %6568 = vmatmul.bf16.gmra.mxu0 %v617
        %v6569 = vpop.f32.mrf.mxu0
        %v6570 = vadd.f32 %v6521, %v6569
        %v6571 = vpop.f32.mrf.mxu0
        %v6572 = vadd.f32 %v6523, %v6571
        %6573 = vmatmul.bf16.gmra.mxu0 %v625
        %v6574 = vpop.f32.mrf.mxu0
        %v6575 = vadd.f32 %v6526, %v6574
        %v6576 = vpop.f32.mrf.mxu0
        %v6577 = vadd.f32 %v6528, %v6576
        %6578 = vmatmul.bf16.gmra.mxu0 %v633
        %v6579 = vpop.f32.mrf.mxu0
        %v6580 = vadd.f32 %v6531, %v6579
        %v6581 = vpop.f32.mrf.mxu0
        %v6582 = vadd.f32 %v6533, %v6581
        %6583 = vmatmul.bf16.gmra.mxu0 %v641
        %v6584 = vpop.f32.mrf.mxu0
        %v6585 = vadd.f32 %v6536, %v6584
        %v6586 = vpop.f32.mrf.mxu0
        %v6587 = vadd.f32 %v6538, %v6586
        %6588 = vmatmul.bf16.gmra.mxu0 %v649
        %v6589 = vpop.f32.mrf.mxu0
        %v6590 = vadd.f32 %v6541, %v6589
        %v6591 = vpop.f32.mrf.mxu0
        %v6592 = vadd.f32 %v6543, %v6591
        %6593 = vmatmul.bf16.gmra.mxu0 %v657
        %v6594 = vpop.f32.mrf.mxu0
        %v6595 = vadd.f32 %v6546, %v6594
        %v6596 = vpop.f32.mrf.mxu0
        %v6597 = vadd.f32 %v6548, %v6596
        %6598 = vmatmul.bf16.gmra.mxu0 %v665
        %v6599 = vpop.f32.mrf.mxu0
        %v6600 = vadd.f32 %v6551, %v6599
        %v6601 = vpop.f32.mrf.mxu0
        %v6602 = vadd.f32 %v6553, %v6601
        %6603 = vdwg.mxu0
        %6604 = vmatpush.bf16.msra.mxu0 %v2929
        %6605 = vmatpush.bf16.msra.mxu0 %v2921
        %6606 = vmatpush.bf16.msra.mxu0 %v2913
        %6607 = vmatpush.bf16.msra.mxu0 %v2905
        %6608 = vmatpush.bf16.msra.mxu0 %v2897
        %6609 = vmatpush.bf16.msra.mxu0 %v2889
        %6610 = vmatpush.bf16.msra.mxu0 %v2881
        %6611 = vmatpush.bf16.msra.mxu0 %v2873
        %6612 = vmatmul.bf16.gmra.mxu0 %v610
        %v6613 = vpop.f32.mrf.mxu0
        %v6614 = vadd.f32 %v6565, %v6613
        %v6615 = vpop.f32.mrf.mxu0
        %v6616 = vadd.f32 %v6567, %v6615
        %6617 = vmatmul.bf16.gmra.mxu0 %v618
        %v6618 = vpop.f32.mrf.mxu0
        %v6619 = vadd.f32 %v6570, %v6618
        %v6620 = vpop.f32.mrf.mxu0
        %v6621 = vadd.f32 %v6572, %v6620
        %6622 = vmatmul.bf16.gmra.mxu0 %v626
        %v6623 = vpop.f32.mrf.mxu0
        %v6624 = vadd.f32 %v6575, %v6623
        %v6625 = vpop.f32.mrf.mxu0
        %v6626 = vadd.f32 %v6577, %v6625
        %6627 = vmatmul.bf16.gmra.mxu0 %v634
        %v6628 = vpop.f32.mrf.mxu0
        %v6629 = vadd.f32 %v6580, %v6628
        %v6630 = vpop.f32.mrf.mxu0
        %v6631 = vadd.f32 %v6582, %v6630
        %6632 = vmatmul.bf16.gmra.mxu0 %v642
        %v6633 = vpop.f32.mrf.mxu0
        %v6634 = vadd.f32 %v6585, %v6633
        %v6635 = vpop.f32.mrf.mxu0
        %v6636 = vadd.f32 %v6587, %v6635
        %6637 = vmatmul.bf16.gmra.mxu0 %v650
        %v6638 = vpop.f32.mrf.mxu0
        %v6639 = vadd.f32 %v6590, %v6638
        %v6640 = vpop.f32.mrf.mxu0
        %v6641 = vadd.f32 %v6592, %v6640
        %6642 = vmatmul.bf16.gmra.mxu0 %v658
        %v6643 = vpop.f32.mrf.mxu0
        %v6644 = vadd.f32 %v6595, %v6643
        %v6645 = vpop.f32.mrf.mxu0
        %v6646 = vadd.f32 %v6597, %v6645
        %6647 = vmatmul.bf16.gmra.mxu0 %v666
        %v6648 = vpop.f32.mrf.mxu0
        %v6649 = vadd.f32 %v6600, %v6648
        %v6650 = vpop.f32.mrf.mxu0
        %v6651 = vadd.f32 %v6602, %v6650
        %6652 = vdwg.mxu0
        %6653 = vmatpush.bf16.msra.mxu0 %v2993
        %6654 = vmatpush.bf16.msra.mxu0 %v2985
        %6655 = vmatpush.bf16.msra.mxu0 %v2977
        %6656 = vmatpush.bf16.msra.mxu0 %v2969
        %6657 = vmatpush.bf16.msra.mxu0 %v2961
        %6658 = vmatpush.bf16.msra.mxu0 %v2953
        %6659 = vmatpush.bf16.msra.mxu0 %v2945
        %6660 = vmatpush.bf16.msra.mxu0 %v2937
        %6661 = vmatmul.bf16.gmra.mxu0 %v611
        %v6662 = vpop.f32.mrf.mxu0
        %v6663 = vadd.f32 %v6614, %v6662
        %v6664 = vpop.f32.mrf.mxu0
        %v6665 = vadd.f32 %v6616, %v6664
        %6666 = vmatmul.bf16.gmra.mxu0 %v619
        %v6667 = vpop.f32.mrf.mxu0
        %v6668 = vadd.f32 %v6619, %v6667
        %v6669 = vpop.f32.mrf.mxu0
        %v6670 = vadd.f32 %v6621, %v6669
        %6671 = vmatmul.bf16.gmra.mxu0 %v627
        %v6672 = vpop.f32.mrf.mxu0
        %v6673 = vadd.f32 %v6624, %v6672
        %v6674 = vpop.f32.mrf.mxu0
        %v6675 = vadd.f32 %v6626, %v6674
        %6676 = vmatmul.bf16.gmra.mxu0 %v635
        %v6677 = vpop.f32.mrf.mxu0
        %v6678 = vadd.f32 %v6629, %v6677
        %v6679 = vpop.f32.mrf.mxu0
        %v6680 = vadd.f32 %v6631, %v6679
        %6681 = vmatmul.bf16.gmra.mxu0 %v643
        %v6682 = vpop.f32.mrf.mxu0
        %v6683 = vadd.f32 %v6634, %v6682
        %v6684 = vpop.f32.mrf.mxu0
        %v6685 = vadd.f32 %v6636, %v6684
        %6686 = vmatmul.bf16.gmra.mxu0 %v651
        %v6687 = vpop.f32.mrf.mxu0
        %v6688 = vadd.f32 %v6639, %v6687
        %v6689 = vpop.f32.mrf.mxu0
        %v6690 = vadd.f32 %v6641, %v6689
        %6691 = vmatmul.bf16.gmra.mxu0 %v659
        %v6692 = vpop.f32.mrf.mxu0
        %v6693 = vadd.f32 %v6644, %v6692
        %v6694 = vpop.f32.mrf.mxu0
        %v6695 = vadd.f32 %v6646, %v6694
        %6696 = vmatmul.bf16.gmra.mxu0 %v667
        %v6697 = vpop.f32.mrf.mxu0
        %v6698 = vadd.f32 %v6649, %v6697
        %v6699 = vpop.f32.mrf.mxu0
        %v6700 = vadd.f32 %v6651, %v6699
        %6701 = vdwg.mxu0
        %6702 = vmatpush.bf16.msra.mxu0 %v3057
        %6703 = vmatpush.bf16.msra.mxu0 %v3049
        %6704 = vmatpush.bf16.msra.mxu0 %v3041
        %6705 = vmatpush.bf16.msra.mxu0 %v3033
        %6706 = vmatpush.bf16.msra.mxu0 %v3025
        %6707 = vmatpush.bf16.msra.mxu0 %v3017
        %6708 = vmatpush.bf16.msra.mxu0 %v3009
        %6709 = vmatpush.bf16.msra.mxu0 %v3001
        %6710 = vmatmul.bf16.gmra.mxu0 %v612
        %v6711 = vpop.f32.mrf.mxu0
        %v6712 = vadd.f32 %v6663, %v6711
        %v6713 = vpop.f32.mrf.mxu0
        %v6714 = vadd.f32 %v6665, %v6713
        %6715 = vmatmul.bf16.gmra.mxu0 %v620
        %v6716 = vpop.f32.mrf.mxu0
        %v6717 = vadd.f32 %v6668, %v6716
        %v6718 = vpop.f32.mrf.mxu0
        %v6719 = vadd.f32 %v6670, %v6718
        %6720 = vmatmul.bf16.gmra.mxu0 %v628
        %v6721 = vpop.f32.mrf.mxu0
        %v6722 = vadd.f32 %v6673, %v6721
        %v6723 = vpop.f32.mrf.mxu0
        %v6724 = vadd.f32 %v6675, %v6723
        %6725 = vmatmul.bf16.gmra.mxu0 %v636
        %v6726 = vpop.f32.mrf.mxu0
        %v6727 = vadd.f32 %v6678, %v6726
        %v6728 = vpop.f32.mrf.mxu0
        %v6729 = vadd.f32 %v6680, %v6728
        %6730 = vmatmul.bf16.gmra.mxu0 %v644
        %v6731 = vpop.f32.mrf.mxu0
        %v6732 = vadd.f32 %v6683, %v6731
        %v6733 = vpop.f32.mrf.mxu0
        %v6734 = vadd.f32 %v6685, %v6733
        %6735 = vmatmul.bf16.gmra.mxu0 %v652
        %v6736 = vpop.f32.mrf.mxu0
        %v6737 = vadd.f32 %v6688, %v6736
        %v6738 = vpop.f32.mrf.mxu0
        %v6739 = vadd.f32 %v6690, %v6738
        %6740 = vmatmul.bf16.gmra.mxu0 %v660
        %v6741 = vpop.f32.mrf.mxu0
        %v6742 = vadd.f32 %v6693, %v6741
        %v6743 = vpop.f32.mrf.mxu0
        %v6744 = vadd.f32 %v6695, %v6743
        %6745 = vmatmul.bf16.gmra.mxu0 %v668
        %v6746 = vpop.f32.mrf.mxu0
        %v6747 = vadd.f32 %v6698, %v6746
        %v6748 = vpop.f32.mrf.mxu0
        %v6749 = vadd.f32 %v6700, %v6748
        %6750 = vdwg.mxu0
        %6751 = vmatpush.bf16.msra.mxu0 %v3121
        %6752 = vmatpush.bf16.msra.mxu0 %v3113
        %6753 = vmatpush.bf16.msra.mxu0 %v3105
        %6754 = vmatpush.bf16.msra.mxu0 %v3097
        %6755 = vmatpush.bf16.msra.mxu0 %v3089
        %6756 = vmatpush.bf16.msra.mxu0 %v3081
        %6757 = vmatpush.bf16.msra.mxu0 %v3073
        %6758 = vmatpush.bf16.msra.mxu0 %v3065
        %6759 = vmatmul.bf16.gmra.mxu0 %v613
        %v6760 = vpop.f32.mrf.mxu0
        %v6761 = vadd.f32 %v6712, %v6760
        %v6762 = vpop.f32.mrf.mxu0
        %v6763 = vadd.f32 %v6714, %v6762
        %6764 = vmatmul.bf16.gmra.mxu0 %v621
        %v6765 = vpop.f32.mrf.mxu0
        %v6766 = vadd.f32 %v6717, %v6765
        %v6767 = vpop.f32.mrf.mxu0
        %v6768 = vadd.f32 %v6719, %v6767
        %6769 = vmatmul.bf16.gmra.mxu0 %v629
        %v6770 = vpop.f32.mrf.mxu0
        %v6771 = vadd.f32 %v6722, %v6770
        %v6772 = vpop.f32.mrf.mxu0
        %v6773 = vadd.f32 %v6724, %v6772
        %6774 = vmatmul.bf16.gmra.mxu0 %v637
        %v6775 = vpop.f32.mrf.mxu0
        %v6776 = vadd.f32 %v6727, %v6775
        %v6777 = vpop.f32.mrf.mxu0
        %v6778 = vadd.f32 %v6729, %v6777
        %6779 = vmatmul.bf16.gmra.mxu0 %v645
        %v6780 = vpop.f32.mrf.mxu0
        %v6781 = vadd.f32 %v6732, %v6780
        %v6782 = vpop.f32.mrf.mxu0
        %v6783 = vadd.f32 %v6734, %v6782
        %6784 = vmatmul.bf16.gmra.mxu0 %v653
        %v6785 = vpop.f32.mrf.mxu0
        %v6786 = vadd.f32 %v6737, %v6785
        %v6787 = vpop.f32.mrf.mxu0
        %v6788 = vadd.f32 %v6739, %v6787
        %6789 = vmatmul.bf16.gmra.mxu0 %v661
        %v6790 = vpop.f32.mrf.mxu0
        %v6791 = vadd.f32 %v6742, %v6790
        %v6792 = vpop.f32.mrf.mxu0
        %v6793 = vadd.f32 %v6744, %v6792
        %6794 = vmatmul.bf16.gmra.mxu0 %v669
        %v6795 = vpop.f32.mrf.mxu0
        %v6796 = vadd.f32 %v6747, %v6795
        %v6797 = vpop.f32.mrf.mxu0
        %v6798 = vadd.f32 %v6749, %v6797
        %6799 = vdwg.mxu0
        %6800 = vmatpush.bf16.msra.mxu0 %v3185
        %6801 = vmatpush.bf16.msra.mxu0 %v3177
        %6802 = vmatpush.bf16.msra.mxu0 %v3169
        %6803 = vmatpush.bf16.msra.mxu0 %v3161
        %6804 = vmatpush.bf16.msra.mxu0 %v3153
        %6805 = vmatpush.bf16.msra.mxu0 %v3145
        %6806 = vmatpush.bf16.msra.mxu0 %v3137
        %6807 = vmatpush.bf16.msra.mxu0 %v3129
        %6808 = vmatmul.bf16.gmra.mxu0 %v614
        %v6809 = vpop.f32.mrf.mxu0
        %v6810 = vadd.f32 %v6761, %v6809
        %v6811 = vpop.f32.mrf.mxu0
        %v6812 = vadd.f32 %v6763, %v6811
        %6813 = vmatmul.bf16.gmra.mxu0 %v622
        %v6814 = vpop.f32.mrf.mxu0
        %v6815 = vadd.f32 %v6766, %v6814
        %v6816 = vpop.f32.mrf.mxu0
        %v6817 = vadd.f32 %v6768, %v6816
        %6818 = vmatmul.bf16.gmra.mxu0 %v630
        %v6819 = vpop.f32.mrf.mxu0
        %v6820 = vadd.f32 %v6771, %v6819
        %v6821 = vpop.f32.mrf.mxu0
        %v6822 = vadd.f32 %v6773, %v6821
        %6823 = vmatmul.bf16.gmra.mxu0 %v638
        %v6824 = vpop.f32.mrf.mxu0
        %v6825 = vadd.f32 %v6776, %v6824
        %v6826 = vpop.f32.mrf.mxu0
        %v6827 = vadd.f32 %v6778, %v6826
        %6828 = vmatmul.bf16.gmra.mxu0 %v646
        %v6829 = vpop.f32.mrf.mxu0
        %v6830 = vadd.f32 %v6781, %v6829
        %v6831 = vpop.f32.mrf.mxu0
        %v6832 = vadd.f32 %v6783, %v6831
        %6833 = vmatmul.bf16.gmra.mxu0 %v654
        %v6834 = vpop.f32.mrf.mxu0
        %v6835 = vadd.f32 %v6786, %v6834
        %v6836 = vpop.f32.mrf.mxu0
        %v6837 = vadd.f32 %v6788, %v6836
        %6838 = vmatmul.bf16.gmra.mxu0 %v662
        %v6839 = vpop.f32.mrf.mxu0
        %v6840 = vadd.f32 %v6791, %v6839
        %v6841 = vpop.f32.mrf.mxu0
        %v6842 = vadd.f32 %v6793, %v6841
        %6843 = vmatmul.bf16.gmra.mxu0 %v670
        %v6844 = vpop.f32.mrf.mxu0
        %v6845 = vadd.f32 %v6796, %v6844
        %v6846 = vpop.f32.mrf.mxu0
        %v6847 = vadd.f32 %v6798, %v6846
        %6848 = vdwg.mxu0
        %6849 = vmatpush.bf16.msra.mxu0 %v3249
        %6850 = vmatpush.bf16.msra.mxu0 %v3241
        %6851 = vmatpush.bf16.msra.mxu0 %v3233
        %6852 = vmatpush.bf16.msra.mxu0 %v3225
        %6853 = vmatpush.bf16.msra.mxu0 %v3217
        %6854 = vmatpush.bf16.msra.mxu0 %v3209
        %6855 = vmatpush.bf16.msra.mxu0 %v3201
        %6856 = vmatpush.bf16.msra.mxu0 %v3193
        %6857 = vmatmul.bf16.gmra.mxu0 %v615
        %v6858 = vpop.f32.mrf.mxu0
        %v6859 = vadd.f32 %v6810, %v6858
        %v6860 = vpop.f32.mrf.mxu0
        %v6861 = vadd.f32 %v6812, %v6860
        %6862 = vmatmul.bf16.gmra.mxu0 %v623
        %v6863 = vpop.f32.mrf.mxu0
        %v6864 = vadd.f32 %v6815, %v6863
        %v6865 = vpop.f32.mrf.mxu0
        %v6866 = vadd.f32 %v6817, %v6865
        %6867 = vmatmul.bf16.gmra.mxu0 %v631
        %v6868 = vpop.f32.mrf.mxu0
        %v6869 = vadd.f32 %v6820, %v6868
        %v6870 = vpop.f32.mrf.mxu0
        %v6871 = vadd.f32 %v6822, %v6870
        %6872 = vmatmul.bf16.gmra.mxu0 %v639
        %v6873 = vpop.f32.mrf.mxu0
        %v6874 = vadd.f32 %v6825, %v6873
        %v6875 = vpop.f32.mrf.mxu0
        %v6876 = vadd.f32 %v6827, %v6875
        %6877 = vmatmul.bf16.gmra.mxu0 %v647
        %v6878 = vpop.f32.mrf.mxu0
        %v6879 = vadd.f32 %v6830, %v6878
        %v6880 = vpop.f32.mrf.mxu0
        %v6881 = vadd.f32 %v6832, %v6880
        %6882 = vmatmul.bf16.gmra.mxu0 %v655
        %v6883 = vpop.f32.mrf.mxu0
        %v6884 = vadd.f32 %v6835, %v6883
        %v6885 = vpop.f32.mrf.mxu0
        %v6886 = vadd.f32 %v6837, %v6885
        %6887 = vmatmul.bf16.gmra.mxu0 %v663
        %v6888 = vpop.f32.mrf.mxu0
        %v6889 = vadd.f32 %v6840, %v6888
        %v6890 = vpop.f32.mrf.mxu0
        %v6891 = vadd.f32 %v6842, %v6890
        %6892 = vmatmul.bf16.gmra.mxu0 %v671
        %v6893 = vpop.f32.mrf.mxu0
        %v6894 = vadd.f32 %v6845, %v6893
        %v6895 = vpop.f32.mrf.mxu0
        %v6896 = vadd.f32 %v6847, %v6895
        %6897 = vdwg.mxu0
        %v6898 = vmax.f32 %v4115, 0.0
        %v6899 = vmax.f32 %v4507, 0.0
        %v6900 = vmax.f32 %v4899, 0.0
        %v6901 = vmax.f32 %v5291, 0.0
        %v6902 = vmax.f32 %v5683, 0.0
        %v6903 = vmax.f32 %v6075, 0.0
        %v6904 = vmax.f32 %v6467, 0.0
        %v6905 = vmax.f32 %v6859, 0.0
        %v6906 = vmax.f32 %v4117, 0.0
        %v6907 = vmax.f32 %v4509, 0.0
        %v6908 = vmax.f32 %v4901, 0.0
        %v6909 = vmax.f32 %v5293, 0.0
        %v6910 = vmax.f32 %v5685, 0.0
        %v6911 = vmax.f32 %v6077, 0.0
        %v6912 = vmax.f32 %v6469, 0.0
        %v6913 = vmax.f32 %v6861, 0.0
        %v6914 = vmax.f32 %v4120, 0.0
        %v6915 = vmax.f32 %v4512, 0.0
        %v6916 = vmax.f32 %v4904, 0.0
        %v6917 = vmax.f32 %v5296, 0.0
        %v6918 = vmax.f32 %v5688, 0.0
        %v6919 = vmax.f32 %v6080, 0.0
        %v6920 = vmax.f32 %v6472, 0.0
        %v6921 = vmax.f32 %v6864, 0.0
        %v6922 = vmax.f32 %v4122, 0.0
        %v6923 = vmax.f32 %v4514, 0.0
        %v6924 = vmax.f32 %v4906, 0.0
        %v6925 = vmax.f32 %v5298, 0.0
        %v6926 = vmax.f32 %v5690, 0.0
        %v6927 = vmax.f32 %v6082, 0.0
        %v6928 = vmax.f32 %v6474, 0.0
        %v6929 = vmax.f32 %v6866, 0.0
        %v6930 = vmax.f32 %v4125, 0.0
        %v6931 = vmax.f32 %v4517, 0.0
        %v6932 = vmax.f32 %v4909, 0.0
        %v6933 = vmax.f32 %v5301, 0.0
        %v6934 = vmax.f32 %v5693, 0.0
        %v6935 = vmax.f32 %v6085, 0.0
        %v6936 = vmax.f32 %v6477, 0.0
        %v6937 = vmax.f32 %v6869, 0.0
        %v6938 = vmax.f32 %v4127, 0.0
        %v6939 = vmax.f32 %v4519, 0.0
        %v6940 = vmax.f32 %v4911, 0.0
        %v6941 = vmax.f32 %v5303, 0.0
        %v6942 = vmax.f32 %v5695, 0.0
        %v6943 = vmax.f32 %v6087, 0.0
        %v6944 = vmax.f32 %v6479, 0.0
        %v6945 = vmax.f32 %v6871, 0.0
        %v6946 = vmax.f32 %v4130, 0.0
        %v6947 = vmax.f32 %v4522, 0.0
        %v6948 = vmax.f32 %v4914, 0.0
        %v6949 = vmax.f32 %v5306, 0.0
        %v6950 = vmax.f32 %v5698, 0.0
        %v6951 = vmax.f32 %v6090, 0.0
        %v6952 = vmax.f32 %v6482, 0.0
        %v6953 = vmax.f32 %v6874, 0.0
        %v6954 = vmax.f32 %v4132, 0.0
        %v6955 = vmax.f32 %v4524, 0.0
        %v6956 = vmax.f32 %v4916, 0.0
        %v6957 = vmax.f32 %v5308, 0.0
        %v6958 = vmax.f32 %v5700, 0.0
        %v6959 = vmax.f32 %v6092, 0.0
        %v6960 = vmax.f32 %v6484, 0.0
        %v6961 = vmax.f32 %v6876, 0.0
        %v6962 = vmax.f32 %v4135, 0.0
        %v6963 = vmax.f32 %v4527, 0.0
        %v6964 = vmax.f32 %v4919, 0.0
        %v6965 = vmax.f32 %v5311, 0.0
        %v6966 = vmax.f32 %v5703, 0.0
        %v6967 = vmax.f32 %v6095, 0.0
        %v6968 = vmax.f32 %v6487, 0.0
        %v6969 = vmax.f32 %v6879, 0.0
        %v6970 = vmax.f32 %v4137, 0.0
        %v6971 = vmax.f32 %v4529, 0.0
        %v6972 = vmax.f32 %v4921, 0.0
        %v6973 = vmax.f32 %v5313, 0.0
        %v6974 = vmax.f32 %v5705, 0.0
        %v6975 = vmax.f32 %v6097, 0.0
        %v6976 = vmax.f32 %v6489, 0.0
        %v6977 = vmax.f32 %v6881, 0.0
        %v6978 = vmax.f32 %v4140, 0.0
        %v6979 = vmax.f32 %v4532, 0.0
        %v6980 = vmax.f32 %v4924, 0.0
        %v6981 = vmax.f32 %v5316, 0.0
        %v6982 = vmax.f32 %v5708, 0.0
        %v6983 = vmax.f32 %v6100, 0.0
        %v6984 = vmax.f32 %v6492, 0.0
        %v6985 = vmax.f32 %v6884, 0.0
        %v6986 = vmax.f32 %v4142, 0.0
        %v6987 = vmax.f32 %v4534, 0.0
        %v6988 = vmax.f32 %v4926, 0.0
        %v6989 = vmax.f32 %v5318, 0.0
        %v6990 = vmax.f32 %v5710, 0.0
        %v6991 = vmax.f32 %v6102, 0.0
        %v6992 = vmax.f32 %v6494, 0.0
        %v6993 = vmax.f32 %v6886, 0.0
        %v6994 = vmax.f32 %v4145, 0.0
        %v6995 = vmax.f32 %v4537, 0.0
        %v6996 = vmax.f32 %v4929, 0.0
        %v6997 = vmax.f32 %v5321, 0.0
        %v6998 = vmax.f32 %v5713, 0.0
        %v6999 = vmax.f32 %v6105, 0.0
        %v7000 = vmax.f32 %v6497, 0.0
        %v7001 = vmax.f32 %v6889, 0.0
        %v7002 = vmax.f32 %v4147, 0.0
        %v7003 = vmax.f32 %v4539, 0.0
        %v7004 = vmax.f32 %v4931, 0.0
        %v7005 = vmax.f32 %v5323, 0.0
        %v7006 = vmax.f32 %v5715, 0.0
        %v7007 = vmax.f32 %v6107, 0.0
        %v7008 = vmax.f32 %v6499, 0.0
        %v7009 = vmax.f32 %v6891, 0.0
        %v7010 = vmax.f32 %v4150, 0.0
        %v7011 = vmax.f32 %v4542, 0.0
        %v7012 = vmax.f32 %v4934, 0.0
        %v7013 = vmax.f32 %v5326, 0.0
        %v7014 = vmax.f32 %v5718, 0.0
        %v7015 = vmax.f32 %v6110, 0.0
        %v7016 = vmax.f32 %v6502, 0.0
        %v7017 = vmax.f32 %v6894, 0.0
        %v7018 = vmax.f32 %v4152, 0.0
        %v7019 = vmax.f32 %v4544, 0.0
        %v7020 = vmax.f32 %v4936, 0.0
        %v7021 = vmax.f32 %v5328, 0.0
        %v7022 = vmax.f32 %v5720, 0.0
        %v7023 = vmax.f32 %v6112, 0.0
        %v7024 = vmax.f32 %v6504, 0.0
        %v7025 = vmax.f32 %v6896, 0.0
        %v7026 = vpack.c.bf16 %v6906, %v6898
        %v7027 = vpack.c.bf16 %v6907, %v6899
        %v7028 = vpack.c.bf16 %v6908, %v6900
        %v7029 = vpack.c.bf16 %v6909, %v6901
        %v7030 = vpack.c.bf16 %v6910, %v6902
        %v7031 = vpack.c.bf16 %v6911, %v6903
        %v7032 = vpack.c.bf16 %v6912, %v6904
        %v7033 = vpack.c.bf16 %v6913, %v6905
        %v7034 = vpack.c.bf16 %v6922, %v6914
        %v7035 = vpack.c.bf16 %v6923, %v6915
        %v7036 = vpack.c.bf16 %v6924, %v6916
        %v7037 = vpack.c.bf16 %v6925, %v6917
        %v7038 = vpack.c.bf16 %v6926, %v6918
        %v7039 = vpack.c.bf16 %v6927, %v6919
        %v7040 = vpack.c.bf16 %v6928, %v6920
        %v7041 = vpack.c.bf16 %v6929, %v6921
        %v7042 = vpack.c.bf16 %v6938, %v6930
        %v7043 = vpack.c.bf16 %v6939, %v6931
        %v7044 = vpack.c.bf16 %v6940, %v6932
        %v7045 = vpack.c.bf16 %v6941, %v6933
        %v7046 = vpack.c.bf16 %v6942, %v6934
        %v7047 = vpack.c.bf16 %v6943, %v6935
        %v7048 = vpack.c.bf16 %v6944, %v6936
        %v7049 = vpack.c.bf16 %v6945, %v6937
        %v7050 = vpack.c.bf16 %v6954, %v6946
        %v7051 = vpack.c.bf16 %v6955, %v6947
        %v7052 = vpack.c.bf16 %v6956, %v6948
        %v7053 = vpack.c.bf16 %v6957, %v6949
        %v7054 = vpack.c.bf16 %v6958, %v6950
        %v7055 = vpack.c.bf16 %v6959, %v6951
        %v7056 = vpack.c.bf16 %v6960, %v6952
        %v7057 = vpack.c.bf16 %v6961, %v6953
        %v7058 = vpack.c.bf16 %v6970, %v6962
        %v7059 = vpack.c.bf16 %v6971, %v6963
        %v7060 = vpack.c.bf16 %v6972, %v6964
        %v7061 = vpack.c.bf16 %v6973, %v6965
        %v7062 = vpack.c.bf16 %v6974, %v6966
        %v7063 = vpack.c.bf16 %v6975, %v6967
        %v7064 = vpack.c.bf16 %v6976, %v6968
        %v7065 = vpack.c.bf16 %v6977, %v6969
        %v7066 = vpack.c.bf16 %v6986, %v6978
        %v7067 = vpack.c.bf16 %v6987, %v6979
        %v7068 = vpack.c.bf16 %v6988, %v6980
        %v7069 = vpack.c.bf16 %v6989, %v6981
        %v7070 = vpack.c.bf16 %v6990, %v6982
        %v7071 = vpack.c.bf16 %v6991, %v6983
        %v7072 = vpack.c.bf16 %v6992, %v6984
        %v7073 = vpack.c.bf16 %v6993, %v6985
        %v7074 = vpack.c.bf16 %v7002, %v6994
        %v7075 = vpack.c.bf16 %v7003, %v6995
        %v7076 = vpack.c.bf16 %v7004, %v6996
        %v7077 = vpack.c.bf16 %v7005, %v6997
        %v7078 = vpack.c.bf16 %v7006, %v6998
        %v7079 = vpack.c.bf16 %v7007, %v6999
        %v7080 = vpack.c.bf16 %v7008, %v7000
        %v7081 = vpack.c.bf16 %v7009, %v7001
        %v7082 = vpack.c.bf16 %v7018, %v7010
        %v7083 = vpack.c.bf16 %v7019, %v7011
        %v7084 = vpack.c.bf16 %v7020, %v7012
        %v7085 = vpack.c.bf16 %v7021, %v7013
        %v7086 = vpack.c.bf16 %v7022, %v7014
        %v7087 = vpack.c.bf16 %v7023, %v7015
        %v7088 = vpack.c.bf16 %v7024, %v7016
        %v7089 = vpack.c.bf16 %v7025, %v7017
        %v7090 = vld [vmem:[#allocation8] sm:$0xff]
        %v7091 = vld [vmem:[#allocation8 + $0x8] sm:$0xff]
        %v7092 = vld [vmem:[#allocation8 + $0x10] sm:$0xff]
        %v7093 = vld [vmem:[#allocation8 + $0x18] sm:$0xff]
        %v7094 = vld [vmem:[#allocation8 + $0x20] sm:$0xff]
        %v7095 = vld [vmem:[#allocation8 + $0x28] sm:$0xff]
        %v7096 = vld [vmem:[#allocation8 + $0x30] sm:$0xff]
        %v7097 = vld [vmem:[#allocation8 + $0x38] sm:$0xff]
        %v7098 = vld [vmem:[#allocation8 + $0x40] sm:$0xff]
        %v7099 = vld [vmem:[#allocation8 + $0x48] sm:$0xff]
        %v7100 = vld [vmem:[#allocation8 + $0x50] sm:$0xff]
        %v7101 = vld [vmem:[#allocation8 + $0x58] sm:$0xff]
        %v7102 = vld [vmem:[#allocation8 + $0x60] sm:$0xff]
        %v7103 = vld [vmem:[#allocation8 + $0x68] sm:$0xff]
        %v7104 = vld [vmem:[#allocation8 + $0x70] sm:$0xff]
        %v7105 = vld [vmem:[#allocation8 + $0x78] sm:$0xff]
        %v7106 = vld [vmem:[#allocation8 + $0x80] sm:$0xff]
        %v7107 = vld [vmem:[#allocation8 + $0x88] sm:$0xff]
        %v7108 = vld [vmem:[#allocation8 + $0x90] sm:$0xff]
        %v7109 = vld [vmem:[#allocation8 + $0x98] sm:$0xff]
        %v7110 = vld [vmem:[#allocation8 + $0xa0] sm:$0xff]
        %v7111 = vld [vmem:[#allocation8 + $0xa8] sm:$0xff]
        %v7112 = vld [vmem:[#allocation8 + $0xb0] sm:$0xff]
        %v7113 = vld [vmem:[#allocation8 + $0xb8] sm:$0xff]
        %v7114 = vld [vmem:[#allocation8 + $0xc0] sm:$0xff]
        %v7115 = vld [vmem:[#allocation8 + $0xc8] sm:$0xff]
        %v7116 = vld [vmem:[#allocation8 + $0xd0] sm:$0xff]
        %v7117 = vld [vmem:[#allocation8 + $0xd8] sm:$0xff]
        %v7118 = vld [vmem:[#allocation8 + $0xe0] sm:$0xff]
        %v7119 = vld [vmem:[#allocation8 + $0xe8] sm:$0xff]
        %v7120 = vld [vmem:[#allocation8 + $0xf0] sm:$0xff]
        %v7121 = vld [vmem:[#allocation8 + $0xf8] sm:$0xff]
        %v7122 = vld [vmem:[#allocation8 + $0x100] sm:$0xff]
        %v7123 = vld [vmem:[#allocation8 + $0x108] sm:$0xff]
        %v7124 = vld [vmem:[#allocation8 + $0x110] sm:$0xff]
        %v7125 = vld [vmem:[#allocation8 + $0x118] sm:$0xff]
        %v7126 = vld [vmem:[#allocation8 + $0x120] sm:$0xff]
        %v7127 = vld [vmem:[#allocation8 + $0x128] sm:$0xff]
        %v7128 = vld [vmem:[#allocation8 + $0x130] sm:$0xff]
        %v7129 = vld [vmem:[#allocation8 + $0x138] sm:$0xff]
        %v7130 = vld [vmem:[#allocation8 + $0x140] sm:$0xff]
        %v7131 = vld [vmem:[#allocation8 + $0x148] sm:$0xff]
        %v7132 = vld [vmem:[#allocation8 + $0x150] sm:$0xff]
        %v7133 = vld [vmem:[#allocation8 + $0x158] sm:$0xff]
        %v7134 = vld [vmem:[#allocation8 + $0x160] sm:$0xff]
        %v7135 = vld [vmem:[#allocation8 + $0x168] sm:$0xff]
        %v7136 = vld [vmem:[#allocation8 + $0x170] sm:$0xff]
        %v7137 = vld [vmem:[#allocation8 + $0x178] sm:$0xff]
        %v7138 = vld [vmem:[#allocation8 + $0x180] sm:$0xff]
        %v7139 = vld [vmem:[#allocation8 + $0x188] sm:$0xff]
        %v7140 = vld [vmem:[#allocation8 + $0x190] sm:$0xff]
        %v7141 = vld [vmem:[#allocation8 + $0x198] sm:$0xff]
        %v7142 = vld [vmem:[#allocation8 + $0x1a0] sm:$0xff]
        %v7143 = vld [vmem:[#allocation8 + $0x1a8] sm:$0xff]
        %v7144 = vld [vmem:[#allocation8 + $0x1b0] sm:$0xff]
        %v7145 = vld [vmem:[#allocation8 + $0x1b8] sm:$0xff]
        %v7146 = vld [vmem:[#allocation8 + $0x1c0] sm:$0xff]
        %v7147 = vld [vmem:[#allocation8 + $0x1c8] sm:$0xff]
        %v7148 = vld [vmem:[#allocation8 + $0x1d0] sm:$0xff]
        %v7149 = vld [vmem:[#allocation8 + $0x1d8] sm:$0xff]
        %v7150 = vld [vmem:[#allocation8 + $0x1e0] sm:$0xff]
        %v7151 = vld [vmem:[#allocation8 + $0x1e8] sm:$0xff]
        %v7152 = vld [vmem:[#allocation8 + $0x1f0] sm:$0xff]
        %v7153 = vld [vmem:[#allocation8 + $0x1f8] sm:$0xff]
        %v7154 = vld [vmem:[#allocation8 + $0x200] sm:$0xff]
        %v7155 = vld [vmem:[#allocation8 + $0x208] sm:$0xff]
        %v7156 = vld [vmem:[#allocation8 + $0x210] sm:$0xff]
        %v7157 = vld [vmem:[#allocation8 + $0x218] sm:$0xff]
        %v7158 = vld [vmem:[#allocation8 + $0x220] sm:$0xff]
        %v7159 = vld [vmem:[#allocation8 + $0x228] sm:$0xff]
        %v7160 = vld [vmem:[#allocation8 + $0x230] sm:$0xff]
        %v7161 = vld [vmem:[#allocation8 + $0x238] sm:$0xff]
        %v7162 = vld [vmem:[#allocation8 + $0x240] sm:$0xff]
        %v7163 = vld [vmem:[#allocation8 + $0x248] sm:$0xff]
        %v7164 = vld [vmem:[#allocation8 + $0x250] sm:$0xff]
        %v7165 = vld [vmem:[#allocation8 + $0x258] sm:$0xff]
        %v7166 = vld [vmem:[#allocation8 + $0x260] sm:$0xff]
        %v7167 = vld [vmem:[#allocation8 + $0x268] sm:$0xff]
        %v7168 = vld [vmem:[#allocation8 + $0x270] sm:$0xff]
        %v7169 = vld [vmem:[#allocation8 + $0x278] sm:$0xff]
        %v7170 = vld [vmem:[#allocation8 + $0x280] sm:$0xff]
        %v7171 = vld [vmem:[#allocation8 + $0x288] sm:$0xff]
        %v7172 = vld [vmem:[#allocation8 + $0x290] sm:$0xff]
        %v7173 = vld [vmem:[#allocation8 + $0x298] sm:$0xff]
        %v7174 = vld [vmem:[#allocation8 + $0x2a0] sm:$0xff]
        %v7175 = vld [vmem:[#allocation8 + $0x2a8] sm:$0xff]
        %v7176 = vld [vmem:[#allocation8 + $0x2b0] sm:$0xff]
        %v7177 = vld [vmem:[#allocation8 + $0x2b8] sm:$0xff]
        %v7178 = vld [vmem:[#allocation8 + $0x2c0] sm:$0xff]
        %v7179 = vld [vmem:[#allocation8 + $0x2c8] sm:$0xff]
        %v7180 = vld [vmem:[#allocation8 + $0x2d0] sm:$0xff]
        %v7181 = vld [vmem:[#allocation8 + $0x2d8] sm:$0xff]
        %v7182 = vld [vmem:[#allocation8 + $0x2e0] sm:$0xff]
        %v7183 = vld [vmem:[#allocation8 + $0x2e8] sm:$0xff]
        %v7184 = vld [vmem:[#allocation8 + $0x2f0] sm:$0xff]
        %v7185 = vld [vmem:[#allocation8 + $0x2f8] sm:$0xff]
        %v7186 = vld [vmem:[#allocation8 + $0x300] sm:$0xff]
        %v7187 = vld [vmem:[#allocation8 + $0x308] sm:$0xff]
        %v7188 = vld [vmem:[#allocation8 + $0x310] sm:$0xff]
        %v7189 = vld [vmem:[#allocation8 + $0x318] sm:$0xff]
        %v7190 = vld [vmem:[#allocation8 + $0x320] sm:$0xff]
        %v7191 = vld [vmem:[#allocation8 + $0x328] sm:$0xff]
        %v7192 = vld [vmem:[#allocation8 + $0x330] sm:$0xff]
        %v7193 = vld [vmem:[#allocation8 + $0x338] sm:$0xff]
        %v7194 = vld [vmem:[#allocation8 + $0x340] sm:$0xff]
        %v7195 = vld [vmem:[#allocation8 + $0x348] sm:$0xff]
        %v7196 = vld [vmem:[#allocation8 + $0x350] sm:$0xff]
        %v7197 = vld [vmem:[#allocation8 + $0x358] sm:$0xff]
        %v7198 = vld [vmem:[#allocation8 + $0x360] sm:$0xff]
        %v7199 = vld [vmem:[#allocation8 + $0x368] sm:$0xff]
        %v7200 = vld [vmem:[#allocation8 + $0x370] sm:$0xff]
        %v7201 = vld [vmem:[#allocation8 + $0x378] sm:$0xff]
        %v7202 = vld [vmem:[#allocation8 + $0x380] sm:$0xff]
        %v7203 = vld [vmem:[#allocation8 + $0x388] sm:$0xff]
        %v7204 = vld [vmem:[#allocation8 + $0x390] sm:$0xff]
        %v7205 = vld [vmem:[#allocation8 + $0x398] sm:$0xff]
        %v7206 = vld [vmem:[#allocation8 + $0x3a0] sm:$0xff]
        %v7207 = vld [vmem:[#allocation8 + $0x3a8] sm:$0xff]
        %v7208 = vld [vmem:[#allocation8 + $0x3b0] sm:$0xff]
        %v7209 = vld [vmem:[#allocation8 + $0x3b8] sm:$0xff]
        %v7210 = vld [vmem:[#allocation8 + $0x3c0] sm:$0xff]
        %v7211 = vld [vmem:[#allocation8 + $0x3c8] sm:$0xff]
        %v7212 = vld [vmem:[#allocation8 + $0x3d0] sm:$0xff]
        %v7213 = vld [vmem:[#allocation8 + $0x3d8] sm:$0xff]
        %v7214 = vld [vmem:[#allocation8 + $0x3e0] sm:$0xff]
        %v7215 = vld [vmem:[#allocation8 + $0x3e8] sm:$0xff]
        %v7216 = vld [vmem:[#allocation8 + $0x3f0] sm:$0xff]
        %v7217 = vld [vmem:[#allocation8 + $0x3f8] sm:$0xff]
        %v7218 = vld [vmem:[#allocation8 + $0x400] sm:$0xff]
        %v7219 = vld [vmem:[#allocation8 + $0x408] sm:$0xff]
        %v7220 = vld [vmem:[#allocation8 + $0x410] sm:$0xff]
        %v7221 = vld [vmem:[#allocation8 + $0x418] sm:$0xff]
        %v7222 = vld [vmem:[#allocation8 + $0x420] sm:$0xff]
        %v7223 = vld [vmem:[#allocation8 + $0x428] sm:$0xff]
        %v7224 = vld [vmem:[#allocation8 + $0x430] sm:$0xff]
        %v7225 = vld [vmem:[#allocation8 + $0x438] sm:$0xff]
        %v7226 = vld [vmem:[#allocation8 + $0x440] sm:$0xff]
        %v7227 = vld [vmem:[#allocation8 + $0x448] sm:$0xff]
        %v7228 = vld [vmem:[#allocation8 + $0x450] sm:$0xff]
        %v7229 = vld [vmem:[#allocation8 + $0x458] sm:$0xff]
        %v7230 = vld [vmem:[#allocation8 + $0x460] sm:$0xff]
        %v7231 = vld [vmem:[#allocation8 + $0x468] sm:$0xff]
        %v7232 = vld [vmem:[#allocation8 + $0x470] sm:$0xff]
        %v7233 = vld [vmem:[#allocation8 + $0x478] sm:$0xff]
        %v7234 = vld [vmem:[#allocation8 + $0x480] sm:$0xff]
        %v7235 = vld [vmem:[#allocation8 + $0x488] sm:$0xff]
        %v7236 = vld [vmem:[#allocation8 + $0x490] sm:$0xff]
        %v7237 = vld [vmem:[#allocation8 + $0x498] sm:$0xff]
        %v7238 = vld [vmem:[#allocation8 + $0x4a0] sm:$0xff]
        %v7239 = vld [vmem:[#allocation8 + $0x4a8] sm:$0xff]
        %v7240 = vld [vmem:[#allocation8 + $0x4b0] sm:$0xff]
        %v7241 = vld [vmem:[#allocation8 + $0x4b8] sm:$0xff]
        %v7242 = vld [vmem:[#allocation8 + $0x4c0] sm:$0xff]
        %v7243 = vld [vmem:[#allocation8 + $0x4c8] sm:$0xff]
        %v7244 = vld [vmem:[#allocation8 + $0x4d0] sm:$0xff]
        %v7245 = vld [vmem:[#allocation8 + $0x4d8] sm:$0xff]
        %v7246 = vld [vmem:[#allocation8 + $0x4e0] sm:$0xff]
        %v7247 = vld [vmem:[#allocation8 + $0x4e8] sm:$0xff]
        %v7248 = vld [vmem:[#allocation8 + $0x4f0] sm:$0xff]
        %v7249 = vld [vmem:[#allocation8 + $0x4f8] sm:$0xff]
        %v7250 = vld [vmem:[#allocation8 + $0x500] sm:$0xff]
        %v7251 = vld [vmem:[#allocation8 + $0x508] sm:$0xff]
        %v7252 = vld [vmem:[#allocation8 + $0x510] sm:$0xff]
        %v7253 = vld [vmem:[#allocation8 + $0x518] sm:$0xff]
        %v7254 = vld [vmem:[#allocation8 + $0x520] sm:$0xff]
        %v7255 = vld [vmem:[#allocation8 + $0x528] sm:$0xff]
        %v7256 = vld [vmem:[#allocation8 + $0x530] sm:$0xff]
        %v7257 = vld [vmem:[#allocation8 + $0x538] sm:$0xff]
        %v7258 = vld [vmem:[#allocation8 + $0x540] sm:$0xff]
        %v7259 = vld [vmem:[#allocation8 + $0x548] sm:$0xff]
        %v7260 = vld [vmem:[#allocation8 + $0x550] sm:$0xff]
        %v7261 = vld [vmem:[#allocation8 + $0x558] sm:$0xff]
        %v7262 = vld [vmem:[#allocation8 + $0x560] sm:$0xff]
        %v7263 = vld [vmem:[#allocation8 + $0x568] sm:$0xff]
        %v7264 = vld [vmem:[#allocation8 + $0x570] sm:$0xff]
        %v7265 = vld [vmem:[#allocation8 + $0x578] sm:$0xff]
        %v7266 = vld [vmem:[#allocation8 + $0x580] sm:$0xff]
        %v7267 = vld [vmem:[#allocation8 + $0x588] sm:$0xff]
        %v7268 = vld [vmem:[#allocation8 + $0x590] sm:$0xff]
        %v7269 = vld [vmem:[#allocation8 + $0x598] sm:$0xff]
        %v7270 = vld [vmem:[#allocation8 + $0x5a0] sm:$0xff]
        %v7271 = vld [vmem:[#allocation8 + $0x5a8] sm:$0xff]
        %v7272 = vld [vmem:[#allocation8 + $0x5b0] sm:$0xff]
        %v7273 = vld [vmem:[#allocation8 + $0x5b8] sm:$0xff]
        %v7274 = vld [vmem:[#allocation8 + $0x5c0] sm:$0xff]
        %v7275 = vld [vmem:[#allocation8 + $0x5c8] sm:$0xff]
        %v7276 = vld [vmem:[#allocation8 + $0x5d0] sm:$0xff]
        %v7277 = vld [vmem:[#allocation8 + $0x5d8] sm:$0xff]
        %v7278 = vld [vmem:[#allocation8 + $0x5e0] sm:$0xff]
        %v7279 = vld [vmem:[#allocation8 + $0x5e8] sm:$0xff]
        %v7280 = vld [vmem:[#allocation8 + $0x5f0] sm:$0xff]
        %v7281 = vld [vmem:[#allocation8 + $0x5f8] sm:$0xff]
        %v7282 = vld [vmem:[#allocation8 + $0x600] sm:$0xff]
        %v7283 = vld [vmem:[#allocation8 + $0x608] sm:$0xff]
        %v7284 = vld [vmem:[#allocation8 + $0x610] sm:$0xff]
        %v7285 = vld [vmem:[#allocation8 + $0x618] sm:$0xff]
        %v7286 = vld [vmem:[#allocation8 + $0x620] sm:$0xff]
        %v7287 = vld [vmem:[#allocation8 + $0x628] sm:$0xff]
        %v7288 = vld [vmem:[#allocation8 + $0x630] sm:$0xff]
        %v7289 = vld [vmem:[#allocation8 + $0x638] sm:$0xff]
        %v7290 = vld [vmem:[#allocation8 + $0x640] sm:$0xff]
        %v7291 = vld [vmem:[#allocation8 + $0x648] sm:$0xff]
        %v7292 = vld [vmem:[#allocation8 + $0x650] sm:$0xff]
        %v7293 = vld [vmem:[#allocation8 + $0x658] sm:$0xff]
        %v7294 = vld [vmem:[#allocation8 + $0x660] sm:$0xff]
        %v7295 = vld [vmem:[#allocation8 + $0x668] sm:$0xff]
        %v7296 = vld [vmem:[#allocation8 + $0x670] sm:$0xff]
        %v7297 = vld [vmem:[#allocation8 + $0x678] sm:$0xff]
        %v7298 = vld [vmem:[#allocation8 + $0x680] sm:$0xff]
        %v7299 = vld [vmem:[#allocation8 + $0x688] sm:$0xff]
        %v7300 = vld [vmem:[#allocation8 + $0x690] sm:$0xff]
        %v7301 = vld [vmem:[#allocation8 + $0x698] sm:$0xff]
        %v7302 = vld [vmem:[#allocation8 + $0x6a0] sm:$0xff]
        %v7303 = vld [vmem:[#allocation8 + $0x6a8] sm:$0xff]
        %v7304 = vld [vmem:[#allocation8 + $0x6b0] sm:$0xff]
        %v7305 = vld [vmem:[#allocation8 + $0x6b8] sm:$0xff]
        %v7306 = vld [vmem:[#allocation8 + $0x6c0] sm:$0xff]
        %v7307 = vld [vmem:[#allocation8 + $0x6c8] sm:$0xff]
        %v7308 = vld [vmem:[#allocation8 + $0x6d0] sm:$0xff]
        %v7309 = vld [vmem:[#allocation8 + $0x6d8] sm:$0xff]
        %v7310 = vld [vmem:[#allocation8 + $0x6e0] sm:$0xff]
        %v7311 = vld [vmem:[#allocation8 + $0x6e8] sm:$0xff]
        %v7312 = vld [vmem:[#allocation8 + $0x6f0] sm:$0xff]
        %v7313 = vld [vmem:[#allocation8 + $0x6f8] sm:$0xff]
        %v7314 = vld [vmem:[#allocation8 + $0x700] sm:$0xff]
        %v7315 = vld [vmem:[#allocation8 + $0x708] sm:$0xff]
        %v7316 = vld [vmem:[#allocation8 + $0x710] sm:$0xff]
        %v7317 = vld [vmem:[#allocation8 + $0x718] sm:$0xff]
        %v7318 = vld [vmem:[#allocation8 + $0x720] sm:$0xff]
        %v7319 = vld [vmem:[#allocation8 + $0x728] sm:$0xff]
        %v7320 = vld [vmem:[#allocation8 + $0x730] sm:$0xff]
        %v7321 = vld [vmem:[#allocation8 + $0x738] sm:$0xff]
        %v7322 = vld [vmem:[#allocation8 + $0x740] sm:$0xff]
        %v7323 = vld [vmem:[#allocation8 + $0x748] sm:$0xff]
        %v7324 = vld [vmem:[#allocation8 + $0x750] sm:$0xff]
        %v7325 = vld [vmem:[#allocation8 + $0x758] sm:$0xff]
        %v7326 = vld [vmem:[#allocation8 + $0x760] sm:$0xff]
        %v7327 = vld [vmem:[#allocation8 + $0x768] sm:$0xff]
        %v7328 = vld [vmem:[#allocation8 + $0x770] sm:$0xff]
        %v7329 = vld [vmem:[#allocation8 + $0x778] sm:$0xff]
        %v7330 = vld [vmem:[#allocation8 + $0x780] sm:$0xff]
        %v7331 = vld [vmem:[#allocation8 + $0x788] sm:$0xff]
        %v7332 = vld [vmem:[#allocation8 + $0x790] sm:$0xff]
        %v7333 = vld [vmem:[#allocation8 + $0x798] sm:$0xff]
        %v7334 = vld [vmem:[#allocation8 + $0x7a0] sm:$0xff]
        %v7335 = vld [vmem:[#allocation8 + $0x7a8] sm:$0xff]
        %v7336 = vld [vmem:[#allocation8 + $0x7b0] sm:$0xff]
        %v7337 = vld [vmem:[#allocation8 + $0x7b8] sm:$0xff]
        %v7338 = vld [vmem:[#allocation8 + $0x7c0] sm:$0xff]
        %v7339 = vld [vmem:[#allocation8 + $0x7c8] sm:$0xff]
        %v7340 = vld [vmem:[#allocation8 + $0x7d0] sm:$0xff]
        %v7341 = vld [vmem:[#allocation8 + $0x7d8] sm:$0xff]
        %v7342 = vld [vmem:[#allocation8 + $0x7e0] sm:$0xff]
        %v7343 = vld [vmem:[#allocation8 + $0x7e8] sm:$0xff]
        %v7344 = vld [vmem:[#allocation8 + $0x7f0] sm:$0xff]
        %v7345 = vld [vmem:[#allocation8 + $0x7f8] sm:$0xff]
        %v7346 = vld [vmem:[#allocation10] sm:$0xf]
        %v7348 = vperm.slane %v7346, 0
        %v7349 = vperm.slane %v7346, 1
        %v7350 = vperm.slane %v7346, 2
        %v7351 = vperm.slane %v7346, 3
        %v7612 = vunpack.c.l.b16 %v7090
        %v7613 = vunpack.c.h.b16 %v7090
        %v7614 = vunpack.c.l.b16 %v7091
        %v7615 = vunpack.c.h.b16 %v7091
        %v7616 = vunpack.c.l.b16 %v7092
        %v7617 = vunpack.c.h.b16 %v7092
        %v7618 = vunpack.c.l.b16 %v7093
        %v7619 = vunpack.c.h.b16 %v7093
        %v7620 = vunpack.c.l.b16 %v7094
        %v7621 = vunpack.c.h.b16 %v7094
        %v7622 = vunpack.c.l.b16 %v7095
        %v7623 = vunpack.c.h.b16 %v7095
        %v7624 = vunpack.c.l.b16 %v7096
        %v7625 = vunpack.c.h.b16 %v7096
        %v7626 = vunpack.c.l.b16 %v7097
        %v7627 = vunpack.c.h.b16 %v7097
        %v7628 = vunpack.c.l.b16 %v7098
        %v7629 = vunpack.c.h.b16 %v7098
        %v7630 = vunpack.c.l.b16 %v7099
        %v7631 = vunpack.c.h.b16 %v7099
        %v7632 = vunpack.c.l.b16 %v7100
        %v7633 = vunpack.c.h.b16 %v7100
        %v7634 = vunpack.c.l.b16 %v7101
        %v7635 = vunpack.c.h.b16 %v7101
        %v7636 = vunpack.c.l.b16 %v7102
        %v7637 = vunpack.c.h.b16 %v7102
        %v7638 = vunpack.c.l.b16 %v7103
        %v7639 = vunpack.c.h.b16 %v7103
        %v7640 = vunpack.c.l.b16 %v7104
        %v7641 = vunpack.c.h.b16 %v7104
        %v7642 = vunpack.c.l.b16 %v7105
        %v7643 = vunpack.c.h.b16 %v7105
        %v7644 = vunpack.c.l.b16 %v7106
        %v7645 = vunpack.c.h.b16 %v7106
        %v7646 = vunpack.c.l.b16 %v7107
        %v7647 = vunpack.c.h.b16 %v7107
        %v7648 = vunpack.c.l.b16 %v7108
        %v7649 = vunpack.c.h.b16 %v7108
        %v7650 = vunpack.c.l.b16 %v7109
        %v7651 = vunpack.c.h.b16 %v7109
        %v7652 = vunpack.c.l.b16 %v7110
        %v7653 = vunpack.c.h.b16 %v7110
        %v7654 = vunpack.c.l.b16 %v7111
        %v7655 = vunpack.c.h.b16 %v7111
        %v7656 = vunpack.c.l.b16 %v7112
        %v7657 = vunpack.c.h.b16 %v7112
        %v7658 = vunpack.c.l.b16 %v7113
        %v7659 = vunpack.c.h.b16 %v7113
        %v7660 = vunpack.c.l.b16 %v7114
        %v7661 = vunpack.c.h.b16 %v7114
        %v7662 = vunpack.c.l.b16 %v7115
        %v7663 = vunpack.c.h.b16 %v7115
        %v7664 = vunpack.c.l.b16 %v7116
        %v7665 = vunpack.c.h.b16 %v7116
        %v7666 = vunpack.c.l.b16 %v7117
        %v7667 = vunpack.c.h.b16 %v7117
        %v7668 = vunpack.c.l.b16 %v7118
        %v7669 = vunpack.c.h.b16 %v7118
        %v7670 = vunpack.c.l.b16 %v7119
        %v7671 = vunpack.c.h.b16 %v7119
        %v7672 = vunpack.c.l.b16 %v7120
        %v7673 = vunpack.c.h.b16 %v7120
        %v7674 = vunpack.c.l.b16 %v7121
        %v7675 = vunpack.c.h.b16 %v7121
        %v7676 = vunpack.c.l.b16 %v7122
        %v7677 = vunpack.c.h.b16 %v7122
        %v7678 = vunpack.c.l.b16 %v7123
        %v7679 = vunpack.c.h.b16 %v7123
        %v7680 = vunpack.c.l.b16 %v7124
        %v7681 = vunpack.c.h.b16 %v7124
        %v7682 = vunpack.c.l.b16 %v7125
        %v7683 = vunpack.c.h.b16 %v7125
        %v7684 = vunpack.c.l.b16 %v7126
        %v7685 = vunpack.c.h.b16 %v7126
        %v7686 = vunpack.c.l.b16 %v7127
        %v7687 = vunpack.c.h.b16 %v7127
        %v7688 = vunpack.c.l.b16 %v7128
        %v7689 = vunpack.c.h.b16 %v7128
        %v7690 = vunpack.c.l.b16 %v7129
        %v7691 = vunpack.c.h.b16 %v7129
        %v7692 = vunpack.c.l.b16 %v7130
        %v7693 = vunpack.c.h.b16 %v7130
        %v7694 = vunpack.c.l.b16 %v7131
        %v7695 = vunpack.c.h.b16 %v7131
        %v7696 = vunpack.c.l.b16 %v7132
        %v7697 = vunpack.c.h.b16 %v7132
        %v7698 = vunpack.c.l.b16 %v7133
        %v7699 = vunpack.c.h.b16 %v7133
        %v7700 = vunpack.c.l.b16 %v7134
        %v7701 = vunpack.c.h.b16 %v7134
        %v7702 = vunpack.c.l.b16 %v7135
        %v7703 = vunpack.c.h.b16 %v7135
        %v7704 = vunpack.c.l.b16 %v7136
        %v7705 = vunpack.c.h.b16 %v7136
        %v7706 = vunpack.c.l.b16 %v7137
        %v7707 = vunpack.c.h.b16 %v7137
        %v7708 = vunpack.c.l.b16 %v7138
        %v7709 = vunpack.c.h.b16 %v7138
        %v7710 = vunpack.c.l.b16 %v7139
        %v7711 = vunpack.c.h.b16 %v7139
        %v7712 = vunpack.c.l.b16 %v7140
        %v7713 = vunpack.c.h.b16 %v7140
        %v7714 = vunpack.c.l.b16 %v7141
        %v7715 = vunpack.c.h.b16 %v7141
        %v7716 = vunpack.c.l.b16 %v7142
        %v7717 = vunpack.c.h.b16 %v7142
        %v7718 = vunpack.c.l.b16 %v7143
        %v7719 = vunpack.c.h.b16 %v7143
        %v7720 = vunpack.c.l.b16 %v7144
        %v7721 = vunpack.c.h.b16 %v7144
        %v7722 = vunpack.c.l.b16 %v7145
        %v7723 = vunpack.c.h.b16 %v7145
        %v7724 = vunpack.c.l.b16 %v7146
        %v7725 = vunpack.c.h.b16 %v7146
        %v7726 = vunpack.c.l.b16 %v7147
        %v7727 = vunpack.c.h.b16 %v7147
        %v7728 = vunpack.c.l.b16 %v7148
        %v7729 = vunpack.c.h.b16 %v7148
        %v7730 = vunpack.c.l.b16 %v7149
        %v7731 = vunpack.c.h.b16 %v7149
        %v7732 = vunpack.c.l.b16 %v7150
        %v7733 = vunpack.c.h.b16 %v7150
        %v7734 = vunpack.c.l.b16 %v7151
        %v7735 = vunpack.c.h.b16 %v7151
        %v7736 = vunpack.c.l.b16 %v7152
        %v7737 = vunpack.c.h.b16 %v7152
        %v7738 = vunpack.c.l.b16 %v7153
        %v7739 = vunpack.c.h.b16 %v7153
        %v7740 = vunpack.c.l.b16 %v7154
        %v7741 = vunpack.c.h.b16 %v7154
        %v7742 = vunpack.c.l.b16 %v7155
        %v7743 = vunpack.c.h.b16 %v7155
        %v7744 = vunpack.c.l.b16 %v7156
        %v7745 = vunpack.c.h.b16 %v7156
        %v7746 = vunpack.c.l.b16 %v7157
        %v7747 = vunpack.c.h.b16 %v7157
        %v7748 = vunpack.c.l.b16 %v7158
        %v7749 = vunpack.c.h.b16 %v7158
        %v7750 = vunpack.c.l.b16 %v7159
        %v7751 = vunpack.c.h.b16 %v7159
        %v7752 = vunpack.c.l.b16 %v7160
        %v7753 = vunpack.c.h.b16 %v7160
        %v7754 = vunpack.c.l.b16 %v7161
        %v7755 = vunpack.c.h.b16 %v7161
        %v7756 = vunpack.c.l.b16 %v7162
        %v7757 = vunpack.c.h.b16 %v7162
        %v7758 = vunpack.c.l.b16 %v7163
        %v7759 = vunpack.c.h.b16 %v7163
        %v7760 = vunpack.c.l.b16 %v7164
        %v7761 = vunpack.c.h.b16 %v7164
        %v7762 = vunpack.c.l.b16 %v7165
        %v7763 = vunpack.c.h.b16 %v7165
        %v7764 = vunpack.c.l.b16 %v7166
        %v7765 = vunpack.c.h.b16 %v7166
        %v7766 = vunpack.c.l.b16 %v7167
        %v7767 = vunpack.c.h.b16 %v7167
        %v7768 = vunpack.c.l.b16 %v7168
        %v7769 = vunpack.c.h.b16 %v7168
        %v7770 = vunpack.c.l.b16 %v7169
        %v7771 = vunpack.c.h.b16 %v7169
        %v7772 = vunpack.c.l.b16 %v7170
        %v7773 = vunpack.c.h.b16 %v7170
        %v7774 = vunpack.c.l.b16 %v7171
        %v7775 = vunpack.c.h.b16 %v7171
        %v7776 = vunpack.c.l.b16 %v7172
        %v7777 = vunpack.c.h.b16 %v7172
        %v7778 = vunpack.c.l.b16 %v7173
        %v7779 = vunpack.c.h.b16 %v7173
        %v7780 = vunpack.c.l.b16 %v7174
        %v7781 = vunpack.c.h.b16 %v7174
        %v7782 = vunpack.c.l.b16 %v7175
        %v7783 = vunpack.c.h.b16 %v7175
        %v7784 = vunpack.c.l.b16 %v7176
        %v7785 = vunpack.c.h.b16 %v7176
        %v7786 = vunpack.c.l.b16 %v7177
        %v7787 = vunpack.c.h.b16 %v7177
        %v7788 = vunpack.c.l.b16 %v7178
        %v7789 = vunpack.c.h.b16 %v7178
        %v7790 = vunpack.c.l.b16 %v7179
        %v7791 = vunpack.c.h.b16 %v7179
        %v7792 = vunpack.c.l.b16 %v7180
        %v7793 = vunpack.c.h.b16 %v7180
        %v7794 = vunpack.c.l.b16 %v7181
        %v7795 = vunpack.c.h.b16 %v7181
        %v7796 = vunpack.c.l.b16 %v7182
        %v7797 = vunpack.c.h.b16 %v7182
        %v7798 = vunpack.c.l.b16 %v7183
        %v7799 = vunpack.c.h.b16 %v7183
        %v7800 = vunpack.c.l.b16 %v7184
        %v7801 = vunpack.c.h.b16 %v7184
        %v7802 = vunpack.c.l.b16 %v7185
        %v7803 = vunpack.c.h.b16 %v7185
        %v7804 = vunpack.c.l.b16 %v7186
        %v7805 = vunpack.c.h.b16 %v7186
        %v7806 = vunpack.c.l.b16 %v7187
        %v7807 = vunpack.c.h.b16 %v7187
        %v7808 = vunpack.c.l.b16 %v7188
        %v7809 = vunpack.c.h.b16 %v7188
        %v7810 = vunpack.c.l.b16 %v7189
        %v7811 = vunpack.c.h.b16 %v7189
        %v7812 = vunpack.c.l.b16 %v7190
        %v7813 = vunpack.c.h.b16 %v7190
        %v7814 = vunpack.c.l.b16 %v7191
        %v7815 = vunpack.c.h.b16 %v7191
        %v7816 = vunpack.c.l.b16 %v7192
        %v7817 = vunpack.c.h.b16 %v7192
        %v7818 = vunpack.c.l.b16 %v7193
        %v7819 = vunpack.c.h.b16 %v7193
        %v7820 = vunpack.c.l.b16 %v7194
        %v7821 = vunpack.c.h.b16 %v7194
        %v7822 = vunpack.c.l.b16 %v7195
        %v7823 = vunpack.c.h.b16 %v7195
        %v7824 = vunpack.c.l.b16 %v7196
        %v7825 = vunpack.c.h.b16 %v7196
        %v7826 = vunpack.c.l.b16 %v7197
        %v7827 = vunpack.c.h.b16 %v7197
        %v7828 = vunpack.c.l.b16 %v7198
        %v7829 = vunpack.c.h.b16 %v7198
        %v7830 = vunpack.c.l.b16 %v7199
        %v7831 = vunpack.c.h.b16 %v7199
        %v7832 = vunpack.c.l.b16 %v7200
        %v7833 = vunpack.c.h.b16 %v7200
        %v7834 = vunpack.c.l.b16 %v7201
        %v7835 = vunpack.c.h.b16 %v7201
        %v7836 = vunpack.c.l.b16 %v7202
        %v7837 = vunpack.c.h.b16 %v7202
        %v7838 = vunpack.c.l.b16 %v7203
        %v7839 = vunpack.c.h.b16 %v7203
        %v7840 = vunpack.c.l.b16 %v7204
        %v7841 = vunpack.c.h.b16 %v7204
        %v7842 = vunpack.c.l.b16 %v7205
        %v7843 = vunpack.c.h.b16 %v7205
        %v7844 = vunpack.c.l.b16 %v7206
        %v7845 = vunpack.c.h.b16 %v7206
        %v7846 = vunpack.c.l.b16 %v7207
        %v7847 = vunpack.c.h.b16 %v7207
        %v7848 = vunpack.c.l.b16 %v7208
        %v7849 = vunpack.c.h.b16 %v7208
        %v7850 = vunpack.c.l.b16 %v7209
        %v7851 = vunpack.c.h.b16 %v7209
        %v7852 = vunpack.c.l.b16 %v7210
        %v7853 = vunpack.c.h.b16 %v7210
        %v7854 = vunpack.c.l.b16 %v7211
        %v7855 = vunpack.c.h.b16 %v7211
        %v7856 = vunpack.c.l.b16 %v7212
        %v7857 = vunpack.c.h.b16 %v7212
        %v7858 = vunpack.c.l.b16 %v7213
        %v7859 = vunpack.c.h.b16 %v7213
        %v7860 = vunpack.c.l.b16 %v7214
        %v7861 = vunpack.c.h.b16 %v7214
        %v7862 = vunpack.c.l.b16 %v7215
        %v7863 = vunpack.c.h.b16 %v7215
        %v7864 = vunpack.c.l.b16 %v7216
        %v7865 = vunpack.c.h.b16 %v7216
        %v7866 = vunpack.c.l.b16 %v7217
        %v7867 = vunpack.c.h.b16 %v7217
        %v7868 = vunpack.c.l.b16 %v7218
        %v7869 = vunpack.c.h.b16 %v7218
        %v7870 = vunpack.c.l.b16 %v7219
        %v7871 = vunpack.c.h.b16 %v7219
        %v7872 = vunpack.c.l.b16 %v7220
        %v7873 = vunpack.c.h.b16 %v7220
        %v7874 = vunpack.c.l.b16 %v7221
        %v7875 = vunpack.c.h.b16 %v7221
        %v7876 = vunpack.c.l.b16 %v7222
        %v7877 = vunpack.c.h.b16 %v7222
        %v7878 = vunpack.c.l.b16 %v7223
        %v7879 = vunpack.c.h.b16 %v7223
        %v7880 = vunpack.c.l.b16 %v7224
        %v7881 = vunpack.c.h.b16 %v7224
        %v7882 = vunpack.c.l.b16 %v7225
        %v7883 = vunpack.c.h.b16 %v7225
        %v7884 = vunpack.c.l.b16 %v7226
        %v7885 = vunpack.c.h.b16 %v7226
        %v7886 = vunpack.c.l.b16 %v7227
        %v7887 = vunpack.c.h.b16 %v7227
        %v7888 = vunpack.c.l.b16 %v7228
        %v7889 = vunpack.c.h.b16 %v7228
        %v7890 = vunpack.c.l.b16 %v7229
        %v7891 = vunpack.c.h.b16 %v7229
        %v7892 = vunpack.c.l.b16 %v7230
        %v7893 = vunpack.c.h.b16 %v7230
        %v7894 = vunpack.c.l.b16 %v7231
        %v7895 = vunpack.c.h.b16 %v7231
        %v7896 = vunpack.c.l.b16 %v7232
        %v7897 = vunpack.c.h.b16 %v7232
        %v7898 = vunpack.c.l.b16 %v7233
        %v7899 = vunpack.c.h.b16 %v7233
        %v7900 = vunpack.c.l.b16 %v7234
        %v7901 = vunpack.c.h.b16 %v7234
        %v7902 = vunpack.c.l.b16 %v7235
        %v7903 = vunpack.c.h.b16 %v7235
        %v7904 = vunpack.c.l.b16 %v7236
        %v7905 = vunpack.c.h.b16 %v7236
        %v7906 = vunpack.c.l.b16 %v7237
        %v7907 = vunpack.c.h.b16 %v7237
        %v7908 = vunpack.c.l.b16 %v7238
        %v7909 = vunpack.c.h.b16 %v7238
        %v7910 = vunpack.c.l.b16 %v7239
        %v7911 = vunpack.c.h.b16 %v7239
        %v7912 = vunpack.c.l.b16 %v7240
        %v7913 = vunpack.c.h.b16 %v7240
        %v7914 = vunpack.c.l.b16 %v7241
        %v7915 = vunpack.c.h.b16 %v7241
        %v7916 = vunpack.c.l.b16 %v7242
        %v7917 = vunpack.c.h.b16 %v7242
        %v7918 = vunpack.c.l.b16 %v7243
        %v7919 = vunpack.c.h.b16 %v7243
        %v7920 = vunpack.c.l.b16 %v7244
        %v7921 = vunpack.c.h.b16 %v7244
        %v7922 = vunpack.c.l.b16 %v7245
        %v7923 = vunpack.c.h.b16 %v7245
        %v7924 = vunpack.c.l.b16 %v7246
        %v7925 = vunpack.c.h.b16 %v7246
        %v7926 = vunpack.c.l.b16 %v7247
        %v7927 = vunpack.c.h.b16 %v7247
        %v7928 = vunpack.c.l.b16 %v7248
        %v7929 = vunpack.c.h.b16 %v7248
        %v7930 = vunpack.c.l.b16 %v7249
        %v7931 = vunpack.c.h.b16 %v7249
        %v7932 = vunpack.c.l.b16 %v7250
        %v7933 = vunpack.c.h.b16 %v7250
        %v7934 = vunpack.c.l.b16 %v7251
        %v7935 = vunpack.c.h.b16 %v7251
        %v7936 = vunpack.c.l.b16 %v7252
        %v7937 = vunpack.c.h.b16 %v7252
        %v7938 = vunpack.c.l.b16 %v7253
        %v7939 = vunpack.c.h.b16 %v7253
        %v7940 = vunpack.c.l.b16 %v7254
        %v7941 = vunpack.c.h.b16 %v7254
        %v7942 = vunpack.c.l.b16 %v7255
        %v7943 = vunpack.c.h.b16 %v7255
        %v7944 = vunpack.c.l.b16 %v7256
        %v7945 = vunpack.c.h.b16 %v7256
        %v7946 = vunpack.c.l.b16 %v7257
        %v7947 = vunpack.c.h.b16 %v7257
        %v7948 = vunpack.c.l.b16 %v7258
        %v7949 = vunpack.c.h.b16 %v7258
        %v7950 = vunpack.c.l.b16 %v7259
        %v7951 = vunpack.c.h.b16 %v7259
        %v7952 = vunpack.c.l.b16 %v7260
        %v7953 = vunpack.c.h.b16 %v7260
        %v7954 = vunpack.c.l.b16 %v7261
        %v7955 = vunpack.c.h.b16 %v7261
        %v7956 = vunpack.c.l.b16 %v7262
        %v7957 = vunpack.c.h.b16 %v7262
        %v7958 = vunpack.c.l.b16 %v7263
        %v7959 = vunpack.c.h.b16 %v7263
        %v7960 = vunpack.c.l.b16 %v7264
        %v7961 = vunpack.c.h.b16 %v7264
        %v7962 = vunpack.c.l.b16 %v7265
        %v7963 = vunpack.c.h.b16 %v7265
        %v7964 = vunpack.c.l.b16 %v7266
        %v7965 = vunpack.c.h.b16 %v7266
        %v7966 = vunpack.c.l.b16 %v7267
        %v7967 = vunpack.c.h.b16 %v7267
        %v7968 = vunpack.c.l.b16 %v7268
        %v7969 = vunpack.c.h.b16 %v7268
        %v7970 = vunpack.c.l.b16 %v7269
        %v7971 = vunpack.c.h.b16 %v7269
        %v7972 = vunpack.c.l.b16 %v7270
        %v7973 = vunpack.c.h.b16 %v7270
        %v7974 = vunpack.c.l.b16 %v7271
        %v7975 = vunpack.c.h.b16 %v7271
        %v7976 = vunpack.c.l.b16 %v7272
        %v7977 = vunpack.c.h.b16 %v7272
        %v7978 = vunpack.c.l.b16 %v7273
        %v7979 = vunpack.c.h.b16 %v7273
        %v7980 = vunpack.c.l.b16 %v7274
        %v7981 = vunpack.c.h.b16 %v7274
        %v7982 = vunpack.c.l.b16 %v7275
        %v7983 = vunpack.c.h.b16 %v7275
        %v7984 = vunpack.c.l.b16 %v7276
        %v7985 = vunpack.c.h.b16 %v7276
        %v7986 = vunpack.c.l.b16 %v7277
        %v7987 = vunpack.c.h.b16 %v7277
        %v7988 = vunpack.c.l.b16 %v7278
        %v7989 = vunpack.c.h.b16 %v7278
        %v7990 = vunpack.c.l.b16 %v7279
        %v7991 = vunpack.c.h.b16 %v7279
        %v7992 = vunpack.c.l.b16 %v7280
        %v7993 = vunpack.c.h.b16 %v7280
        %v7994 = vunpack.c.l.b16 %v7281
        %v7995 = vunpack.c.h.b16 %v7281
        %v7996 = vunpack.c.l.b16 %v7282
        %v7997 = vunpack.c.h.b16 %v7282
        %v7998 = vunpack.c.l.b16 %v7283
        %v7999 = vunpack.c.h.b16 %v7283
        %v8000 = vunpack.c.l.b16 %v7284
        %v8001 = vunpack.c.h.b16 %v7284
        %v8002 = vunpack.c.l.b16 %v7285
        %v8003 = vunpack.c.h.b16 %v7285
        %v8004 = vunpack.c.l.b16 %v7286
        %v8005 = vunpack.c.h.b16 %v7286
        %v8006 = vunpack.c.l.b16 %v7287
        %v8007 = vunpack.c.h.b16 %v7287
        %v8008 = vunpack.c.l.b16 %v7288
        %v8009 = vunpack.c.h.b16 %v7288
        %v8010 = vunpack.c.l.b16 %v7289
        %v8011 = vunpack.c.h.b16 %v7289
        %v8012 = vunpack.c.l.b16 %v7290
        %v8013 = vunpack.c.h.b16 %v7290
        %v8014 = vunpack.c.l.b16 %v7291
        %v8015 = vunpack.c.h.b16 %v7291
        %v8016 = vunpack.c.l.b16 %v7292
        %v8017 = vunpack.c.h.b16 %v7292
        %v8018 = vunpack.c.l.b16 %v7293
        %v8019 = vunpack.c.h.b16 %v7293
        %v8020 = vunpack.c.l.b16 %v7294
        %v8021 = vunpack.c.h.b16 %v7294
        %v8022 = vunpack.c.l.b16 %v7295
        %v8023 = vunpack.c.h.b16 %v7295
        %v8024 = vunpack.c.l.b16 %v7296
        %v8025 = vunpack.c.h.b16 %v7296
        %v8026 = vunpack.c.l.b16 %v7297
        %v8027 = vunpack.c.h.b16 %v7297
        %v8028 = vunpack.c.l.b16 %v7298
        %v8029 = vunpack.c.h.b16 %v7298
        %v8030 = vunpack.c.l.b16 %v7299
        %v8031 = vunpack.c.h.b16 %v7299
        %v8032 = vunpack.c.l.b16 %v7300
        %v8033 = vunpack.c.h.b16 %v7300
        %v8034 = vunpack.c.l.b16 %v7301
        %v8035 = vunpack.c.h.b16 %v7301
        %v8036 = vunpack.c.l.b16 %v7302
        %v8037 = vunpack.c.h.b16 %v7302
        %v8038 = vunpack.c.l.b16 %v7303
        %v8039 = vunpack.c.h.b16 %v7303
        %v8040 = vunpack.c.l.b16 %v7304
        %v8041 = vunpack.c.h.b16 %v7304
        %v8042 = vunpack.c.l.b16 %v7305
        %v8043 = vunpack.c.h.b16 %v7305
        %v8044 = vunpack.c.l.b16 %v7306
        %v8045 = vunpack.c.h.b16 %v7306
        %v8046 = vunpack.c.l.b16 %v7307
        %v8047 = vunpack.c.h.b16 %v7307
        %v8048 = vunpack.c.l.b16 %v7308
        %v8049 = vunpack.c.h.b16 %v7308
        %v8050 = vunpack.c.l.b16 %v7309
        %v8051 = vunpack.c.h.b16 %v7309
        %v8052 = vunpack.c.l.b16 %v7310
        %v8053 = vunpack.c.h.b16 %v7310
        %v8054 = vunpack.c.l.b16 %v7311
        %v8055 = vunpack.c.h.b16 %v7311
        %v8056 = vunpack.c.l.b16 %v7312
        %v8057 = vunpack.c.h.b16 %v7312
        %v8058 = vunpack.c.l.b16 %v7313
        %v8059 = vunpack.c.h.b16 %v7313
        %v8060 = vunpack.c.l.b16 %v7314
        %v8061 = vunpack.c.h.b16 %v7314
        %v8062 = vunpack.c.l.b16 %v7315
        %v8063 = vunpack.c.h.b16 %v7315
        %v8064 = vunpack.c.l.b16 %v7316
        %v8065 = vunpack.c.h.b16 %v7316
        %v8066 = vunpack.c.l.b16 %v7317
        %v8067 = vunpack.c.h.b16 %v7317
        %v8068 = vunpack.c.l.b16 %v7318
        %v8069 = vunpack.c.h.b16 %v7318
        %v8070 = vunpack.c.l.b16 %v7319
        %v8071 = vunpack.c.h.b16 %v7319
        %v8072 = vunpack.c.l.b16 %v7320
        %v8073 = vunpack.c.h.b16 %v7320
        %v8074 = vunpack.c.l.b16 %v7321
        %v8075 = vunpack.c.h.b16 %v7321
        %v8076 = vunpack.c.l.b16 %v7322
        %v8077 = vunpack.c.h.b16 %v7322
        %v8078 = vunpack.c.l.b16 %v7323
        %v8079 = vunpack.c.h.b16 %v7323
        %v8080 = vunpack.c.l.b16 %v7324
        %v8081 = vunpack.c.h.b16 %v7324
        %v8082 = vunpack.c.l.b16 %v7325
        %v8083 = vunpack.c.h.b16 %v7325
        %v8084 = vunpack.c.l.b16 %v7326
        %v8085 = vunpack.c.h.b16 %v7326
        %v8086 = vunpack.c.l.b16 %v7327
        %v8087 = vunpack.c.h.b16 %v7327
        %v8088 = vunpack.c.l.b16 %v7328
        %v8089 = vunpack.c.h.b16 %v7328
        %v8090 = vunpack.c.l.b16 %v7329
        %v8091 = vunpack.c.h.b16 %v7329
        %v8092 = vunpack.c.l.b16 %v7330
        %v8093 = vunpack.c.h.b16 %v7330
        %v8094 = vunpack.c.l.b16 %v7331
        %v8095 = vunpack.c.h.b16 %v7331
        %v8096 = vunpack.c.l.b16 %v7332
        %v8097 = vunpack.c.h.b16 %v7332
        %v8098 = vunpack.c.l.b16 %v7333
        %v8099 = vunpack.c.h.b16 %v7333
        %v8100 = vunpack.c.l.b16 %v7334
        %v8101 = vunpack.c.h.b16 %v7334
        %v8102 = vunpack.c.l.b16 %v7335
        %v8103 = vunpack.c.h.b16 %v7335
        %v8104 = vunpack.c.l.b16 %v7336
        %v8105 = vunpack.c.h.b16 %v7336
        %v8106 = vunpack.c.l.b16 %v7337
        %v8107 = vunpack.c.h.b16 %v7337
        %v8108 = vunpack.c.l.b16 %v7338
        %v8109 = vunpack.c.h.b16 %v7338
        %v8110 = vunpack.c.l.b16 %v7339
        %v8111 = vunpack.c.h.b16 %v7339
        %v8112 = vunpack.c.l.b16 %v7340
        %v8113 = vunpack.c.h.b16 %v7340
        %v8114 = vunpack.c.l.b16 %v7341
        %v8115 = vunpack.c.h.b16 %v7341
        %v8116 = vunpack.c.l.b16 %v7342
        %v8117 = vunpack.c.h.b16 %v7342
        %v8118 = vunpack.c.l.b16 %v7343
        %v8119 = vunpack.c.h.b16 %v7343
        %v8120 = vunpack.c.l.b16 %v7344
        %v8121 = vunpack.c.h.b16 %v7344
        %v8122 = vunpack.c.l.b16 %v7345
        %v8123 = vunpack.c.h.b16 %v7345
        %v8124 = vpack.c.b16 %v7616, %v7612
        %v8125 = vpack.c.b16 %v7617, %v7613
        %v8126 = vpack.c.b16 %v7618, %v7614
        %v8127 = vpack.c.b16 %v7619, %v7615
        %v8128 = vpack.c.b16 %v7624, %v7620
        %v8129 = vpack.c.b16 %v7625, %v7621
        %v8130 = vpack.c.b16 %v7626, %v7622
        %v8131 = vpack.c.b16 %v7627, %v7623
        %v8132 = vpack.c.b16 %v7632, %v7628
        %v8133 = vpack.c.b16 %v7633, %v7629
        %v8134 = vpack.c.b16 %v7634, %v7630
        %v8135 = vpack.c.b16 %v7635, %v7631
        %v8136 = vpack.c.b16 %v7640, %v7636
        %v8137 = vpack.c.b16 %v7641, %v7637
        %v8138 = vpack.c.b16 %v7642, %v7638
        %v8139 = vpack.c.b16 %v7643, %v7639
        %v8140 = vpack.c.b16 %v7648, %v7644
        %v8141 = vpack.c.b16 %v7649, %v7645
        %v8142 = vpack.c.b16 %v7650, %v7646
        %v8143 = vpack.c.b16 %v7651, %v7647
        %v8144 = vpack.c.b16 %v7656, %v7652
        %v8145 = vpack.c.b16 %v7657, %v7653
        %v8146 = vpack.c.b16 %v7658, %v7654
        %v8147 = vpack.c.b16 %v7659, %v7655
        %v8148 = vpack.c.b16 %v7664, %v7660
        %v8149 = vpack.c.b16 %v7665, %v7661
        %v8150 = vpack.c.b16 %v7666, %v7662
        %v8151 = vpack.c.b16 %v7667, %v7663
        %v8152 = vpack.c.b16 %v7672, %v7668
        %v8153 = vpack.c.b16 %v7673, %v7669
        %v8154 = vpack.c.b16 %v7674, %v7670
        %v8155 = vpack.c.b16 %v7675, %v7671
        %v8156 = vpack.c.b16 %v7680, %v7676
        %v8157 = vpack.c.b16 %v7681, %v7677
        %v8158 = vpack.c.b16 %v7682, %v7678
        %v8159 = vpack.c.b16 %v7683, %v7679
        %v8160 = vpack.c.b16 %v7688, %v7684
        %v8161 = vpack.c.b16 %v7689, %v7685
        %v8162 = vpack.c.b16 %v7690, %v7686
        %v8163 = vpack.c.b16 %v7691, %v7687
        %v8164 = vpack.c.b16 %v7696, %v7692
        %v8165 = vpack.c.b16 %v7697, %v7693
        %v8166 = vpack.c.b16 %v7698, %v7694
        %v8167 = vpack.c.b16 %v7699, %v7695
        %v8168 = vpack.c.b16 %v7704, %v7700
        %v8169 = vpack.c.b16 %v7705, %v7701
        %v8170 = vpack.c.b16 %v7706, %v7702
        %v8171 = vpack.c.b16 %v7707, %v7703
        %v8172 = vpack.c.b16 %v7712, %v7708
        %v8173 = vpack.c.b16 %v7713, %v7709
        %v8174 = vpack.c.b16 %v7714, %v7710
        %v8175 = vpack.c.b16 %v7715, %v7711
        %v8176 = vpack.c.b16 %v7720, %v7716
        %v8177 = vpack.c.b16 %v7721, %v7717
        %v8178 = vpack.c.b16 %v7722, %v7718
        %v8179 = vpack.c.b16 %v7723, %v7719
        %v8180 = vpack.c.b16 %v7728, %v7724
        %v8181 = vpack.c.b16 %v7729, %v7725
        %v8182 = vpack.c.b16 %v7730, %v7726
        %v8183 = vpack.c.b16 %v7731, %v7727
        %v8184 = vpack.c.b16 %v7736, %v7732
        %v8185 = vpack.c.b16 %v7737, %v7733
        %v8186 = vpack.c.b16 %v7738, %v7734
        %v8187 = vpack.c.b16 %v7739, %v7735
        %v8188 = vpack.c.b16 %v7744, %v7740
        %v8189 = vpack.c.b16 %v7745, %v7741
        %v8190 = vpack.c.b16 %v7746, %v7742
        %v8191 = vpack.c.b16 %v7747, %v7743
        %v8192 = vpack.c.b16 %v7752, %v7748
        %v8193 = vpack.c.b16 %v7753, %v7749
        %v8194 = vpack.c.b16 %v7754, %v7750
        %v8195 = vpack.c.b16 %v7755, %v7751
        %v8196 = vpack.c.b16 %v7760, %v7756
        %v8197 = vpack.c.b16 %v7761, %v7757
        %v8198 = vpack.c.b16 %v7762, %v7758
        %v8199 = vpack.c.b16 %v7763, %v7759
        %v8200 = vpack.c.b16 %v7768, %v7764
        %v8201 = vpack.c.b16 %v7769, %v7765
        %v8202 = vpack.c.b16 %v7770, %v7766
        %v8203 = vpack.c.b16 %v7771, %v7767
        %v8204 = vpack.c.b16 %v7776, %v7772
        %v8205 = vpack.c.b16 %v7777, %v7773
        %v8206 = vpack.c.b16 %v7778, %v7774
        %v8207 = vpack.c.b16 %v7779, %v7775
        %v8208 = vpack.c.b16 %v7784, %v7780
        %v8209 = vpack.c.b16 %v7785, %v7781
        %v8210 = vpack.c.b16 %v7786, %v7782
        %v8211 = vpack.c.b16 %v7787, %v7783
        %v8212 = vpack.c.b16 %v7792, %v7788
        %v8213 = vpack.c.b16 %v7793, %v7789
        %v8214 = vpack.c.b16 %v7794, %v7790
        %v8215 = vpack.c.b16 %v7795, %v7791
        %v8216 = vpack.c.b16 %v7800, %v7796
        %v8217 = vpack.c.b16 %v7801, %v7797
        %v8218 = vpack.c.b16 %v7802, %v7798
        %v8219 = vpack.c.b16 %v7803, %v7799
        %v8220 = vpack.c.b16 %v7808, %v7804
        %v8221 = vpack.c.b16 %v7809, %v7805
        %v8222 = vpack.c.b16 %v7810, %v7806
        %v8223 = vpack.c.b16 %v7811, %v7807
        %v8224 = vpack.c.b16 %v7816, %v7812
        %v8225 = vpack.c.b16 %v7817, %v7813
        %v8226 = vpack.c.b16 %v7818, %v7814
        %v8227 = vpack.c.b16 %v7819, %v7815
        %v8228 = vpack.c.b16 %v7824, %v7820
        %v8229 = vpack.c.b16 %v7825, %v7821
        %v8230 = vpack.c.b16 %v7826, %v7822
        %v8231 = vpack.c.b16 %v7827, %v7823
        %v8232 = vpack.c.b16 %v7832, %v7828
        %v8233 = vpack.c.b16 %v7833, %v7829
        %v8234 = vpack.c.b16 %v7834, %v7830
        %v8235 = vpack.c.b16 %v7835, %v7831
        %v8236 = vpack.c.b16 %v7840, %v7836
        %v8237 = vpack.c.b16 %v7841, %v7837
        %v8238 = vpack.c.b16 %v7842, %v7838
        %v8239 = vpack.c.b16 %v7843, %v7839
        %v8240 = vpack.c.b16 %v7848, %v7844
        %v8241 = vpack.c.b16 %v7849, %v7845
        %v8242 = vpack.c.b16 %v7850, %v7846
        %v8243 = vpack.c.b16 %v7851, %v7847
        %v8244 = vpack.c.b16 %v7856, %v7852
        %v8245 = vpack.c.b16 %v7857, %v7853
        %v8246 = vpack.c.b16 %v7858, %v7854
        %v8247 = vpack.c.b16 %v7859, %v7855
        %v8248 = vpack.c.b16 %v7864, %v7860
        %v8249 = vpack.c.b16 %v7865, %v7861
        %v8250 = vpack.c.b16 %v7866, %v7862
        %v8251 = vpack.c.b16 %v7867, %v7863
        %v8252 = vpack.c.b16 %v7872, %v7868
        %v8253 = vpack.c.b16 %v7873, %v7869
        %v8254 = vpack.c.b16 %v7874, %v7870
        %v8255 = vpack.c.b16 %v7875, %v7871
        %v8256 = vpack.c.b16 %v7880, %v7876
        %v8257 = vpack.c.b16 %v7881, %v7877
        %v8258 = vpack.c.b16 %v7882, %v7878
        %v8259 = vpack.c.b16 %v7883, %v7879
        %v8260 = vpack.c.b16 %v7888, %v7884
        %v8261 = vpack.c.b16 %v7889, %v7885
        %v8262 = vpack.c.b16 %v7890, %v7886
        %v8263 = vpack.c.b16 %v7891, %v7887
        %v8264 = vpack.c.b16 %v7896, %v7892
        %v8265 = vpack.c.b16 %v7897, %v7893
        %v8266 = vpack.c.b16 %v7898, %v7894
        %v8267 = vpack.c.b16 %v7899, %v7895
        %v8268 = vpack.c.b16 %v7904, %v7900
        %v8269 = vpack.c.b16 %v7905, %v7901
        %v8270 = vpack.c.b16 %v7906, %v7902
        %v8271 = vpack.c.b16 %v7907, %v7903
        %v8272 = vpack.c.b16 %v7912, %v7908
        %v8273 = vpack.c.b16 %v7913, %v7909
        %v8274 = vpack.c.b16 %v7914, %v7910
        %v8275 = vpack.c.b16 %v7915, %v7911
        %v8276 = vpack.c.b16 %v7920, %v7916
        %v8277 = vpack.c.b16 %v7921, %v7917
        %v8278 = vpack.c.b16 %v7922, %v7918
        %v8279 = vpack.c.b16 %v7923, %v7919
        %v8280 = vpack.c.b16 %v7928, %v7924
        %v8281 = vpack.c.b16 %v7929, %v7925
        %v8282 = vpack.c.b16 %v7930, %v7926
        %v8283 = vpack.c.b16 %v7931, %v7927
        %v8284 = vpack.c.b16 %v7936, %v7932
        %v8285 = vpack.c.b16 %v7937, %v7933
        %v8286 = vpack.c.b16 %v7938, %v7934
        %v8287 = vpack.c.b16 %v7939, %v7935
        %v8288 = vpack.c.b16 %v7944, %v7940
        %v8289 = vpack.c.b16 %v7945, %v7941
        %v8290 = vpack.c.b16 %v7946, %v7942
        %v8291 = vpack.c.b16 %v7947, %v7943
        %v8292 = vpack.c.b16 %v7952, %v7948
        %v8293 = vpack.c.b16 %v7953, %v7949
        %v8294 = vpack.c.b16 %v7954, %v7950
        %v8295 = vpack.c.b16 %v7955, %v7951
        %v8296 = vpack.c.b16 %v7960, %v7956
        %v8297 = vpack.c.b16 %v7961, %v7957
        %v8298 = vpack.c.b16 %v7962, %v7958
        %v8299 = vpack.c.b16 %v7963, %v7959
        %v8300 = vpack.c.b16 %v7968, %v7964
        %v8301 = vpack.c.b16 %v7969, %v7965
        %v8302 = vpack.c.b16 %v7970, %v7966
        %v8303 = vpack.c.b16 %v7971, %v7967
        %v8304 = vpack.c.b16 %v7976, %v7972
        %v8305 = vpack.c.b16 %v7977, %v7973
        %v8306 = vpack.c.b16 %v7978, %v7974
        %v8307 = vpack.c.b16 %v7979, %v7975
        %v8308 = vpack.c.b16 %v7984, %v7980
        %v8309 = vpack.c.b16 %v7985, %v7981
        %v8310 = vpack.c.b16 %v7986, %v7982
        %v8311 = vpack.c.b16 %v7987, %v7983
        %v8312 = vpack.c.b16 %v7992, %v7988
        %v8313 = vpack.c.b16 %v7993, %v7989
        %v8314 = vpack.c.b16 %v7994, %v7990
        %v8315 = vpack.c.b16 %v7995, %v7991
        %v8316 = vpack.c.b16 %v8000, %v7996
        %v8317 = vpack.c.b16 %v8001, %v7997
        %v8318 = vpack.c.b16 %v8002, %v7998
        %v8319 = vpack.c.b16 %v8003, %v7999
        %v8320 = vpack.c.b16 %v8008, %v8004
        %v8321 = vpack.c.b16 %v8009, %v8005
        %v8322 = vpack.c.b16 %v8010, %v8006
        %v8323 = vpack.c.b16 %v8011, %v8007
        %v8324 = vpack.c.b16 %v8016, %v8012
        %v8325 = vpack.c.b16 %v8017, %v8013
        %v8326 = vpack.c.b16 %v8018, %v8014
        %v8327 = vpack.c.b16 %v8019, %v8015
        %v8328 = vpack.c.b16 %v8024, %v8020
        %v8329 = vpack.c.b16 %v8025, %v8021
        %v8330 = vpack.c.b16 %v8026, %v8022
        %v8331 = vpack.c.b16 %v8027, %v8023
        %v8332 = vpack.c.b16 %v8032, %v8028
        %v8333 = vpack.c.b16 %v8033, %v8029
        %v8334 = vpack.c.b16 %v8034, %v8030
        %v8335 = vpack.c.b16 %v8035, %v8031
        %v8336 = vpack.c.b16 %v8040, %v8036
        %v8337 = vpack.c.b16 %v8041, %v8037
        %v8338 = vpack.c.b16 %v8042, %v8038
        %v8339 = vpack.c.b16 %v8043, %v8039
        %v8340 = vpack.c.b16 %v8048, %v8044
        %v8341 = vpack.c.b16 %v8049, %v8045
        %v8342 = vpack.c.b16 %v8050, %v8046
        %v8343 = vpack.c.b16 %v8051, %v8047
        %v8344 = vpack.c.b16 %v8056, %v8052
        %v8345 = vpack.c.b16 %v8057, %v8053
        %v8346 = vpack.c.b16 %v8058, %v8054
        %v8347 = vpack.c.b16 %v8059, %v8055
        %v8348 = vpack.c.b16 %v8064, %v8060
        %v8349 = vpack.c.b16 %v8065, %v8061
        %v8350 = vpack.c.b16 %v8066, %v8062
        %v8351 = vpack.c.b16 %v8067, %v8063
        %v8352 = vpack.c.b16 %v8072, %v8068
        %v8353 = vpack.c.b16 %v8073, %v8069
        %v8354 = vpack.c.b16 %v8074, %v8070
        %v8355 = vpack.c.b16 %v8075, %v8071
        %v8356 = vpack.c.b16 %v8080, %v8076
        %v8357 = vpack.c.b16 %v8081, %v8077
        %v8358 = vpack.c.b16 %v8082, %v8078
        %v8359 = vpack.c.b16 %v8083, %v8079
        %v8360 = vpack.c.b16 %v8088, %v8084
        %v8361 = vpack.c.b16 %v8089, %v8085
        %v8362 = vpack.c.b16 %v8090, %v8086
        %v8363 = vpack.c.b16 %v8091, %v8087
        %v8364 = vpack.c.b16 %v8096, %v8092
        %v8365 = vpack.c.b16 %v8097, %v8093
        %v8366 = vpack.c.b16 %v8098, %v8094
        %v8367 = vpack.c.b16 %v8099, %v8095
        %v8368 = vpack.c.b16 %v8104, %v8100
        %v8369 = vpack.c.b16 %v8105, %v8101
        %v8370 = vpack.c.b16 %v8106, %v8102
        %v8371 = vpack.c.b16 %v8107, %v8103
        %v8372 = vpack.c.b16 %v8112, %v8108
        %v8373 = vpack.c.b16 %v8113, %v8109
        %v8374 = vpack.c.b16 %v8114, %v8110
        %v8375 = vpack.c.b16 %v8115, %v8111
        %v8376 = vpack.c.b16 %v8120, %v8116
        %v8377 = vpack.c.b16 %v8121, %v8117
        %v8378 = vpack.c.b16 %v8122, %v8118
        %v8379 = vpack.c.b16 %v8123, %v8119
        %8636 = vmatpush.bf16.msra.mxu0 %v8152
        %8637 = vmatpush.bf16.msra.mxu0 %v8148
        %8638 = vmatpush.bf16.msra.mxu0 %v8144
        %8639 = vmatpush.bf16.msra.mxu0 %v8140
        %8640 = vmatpush.bf16.msra.mxu0 %v8136
        %8641 = vmatpush.bf16.msra.mxu0 %v8132
        %8642 = vmatpush.bf16.msra.mxu0 %v8128
        %8643 = vmatpush.bf16.msra.mxu0 %v8124
        %8644 = vmatmul.bf16.gmra.mxu0 %v7026
        %v8645 = vpop.f32.mrf.mxu0
        %v8646 = vadd.f32 %v7348, %v8645
        %v8647 = vpop.f32.mrf.mxu0
        %v8648 = vadd.f32 %v7348, %v8647
        %8649 = vmatmul.bf16.gmra.mxu0 %v7034
        %v8650 = vpop.f32.mrf.mxu0
        %v8651 = vadd.f32 %v7348, %v8650
        %v8652 = vpop.f32.mrf.mxu0
        %v8653 = vadd.f32 %v7348, %v8652
        %8654 = vmatmul.bf16.gmra.mxu0 %v7042
        %v8655 = vpop.f32.mrf.mxu0
        %v8656 = vadd.f32 %v7348, %v8655
        %v8657 = vpop.f32.mrf.mxu0
        %v8658 = vadd.f32 %v7348, %v8657
        %8659 = vmatmul.bf16.gmra.mxu0 %v7050
        %v8660 = vpop.f32.mrf.mxu0
        %v8661 = vadd.f32 %v7348, %v8660
        %v8662 = vpop.f32.mrf.mxu0
        %v8663 = vadd.f32 %v7348, %v8662
        %8664 = vmatmul.bf16.gmra.mxu0 %v7058
        %v8665 = vpop.f32.mrf.mxu0
        %v8666 = vadd.f32 %v7348, %v8665
        %v8667 = vpop.f32.mrf.mxu0
        %v8668 = vadd.f32 %v7348, %v8667
        %8669 = vmatmul.bf16.gmra.mxu0 %v7066
        %v8670 = vpop.f32.mrf.mxu0
        %v8671 = vadd.f32 %v7348, %v8670
        %v8672 = vpop.f32.mrf.mxu0
        %v8673 = vadd.f32 %v7348, %v8672
        %8674 = vmatmul.bf16.gmra.mxu0 %v7074
        %v8675 = vpop.f32.mrf.mxu0
        %v8676 = vadd.f32 %v7348, %v8675
        %v8677 = vpop.f32.mrf.mxu0
        %v8678 = vadd.f32 %v7348, %v8677
        %8679 = vmatmul.bf16.gmra.mxu0 %v7082
        %v8680 = vpop.f32.mrf.mxu0
        %v8681 = vadd.f32 %v7348, %v8680
        %v8682 = vpop.f32.mrf.mxu0
        %v8683 = vadd.f32 %v7348, %v8682
        %8684 = vdwg.mxu0
        %8685 = vmatpush.bf16.msra.mxu0 %v8184
        %8686 = vmatpush.bf16.msra.mxu0 %v8180
        %8687 = vmatpush.bf16.msra.mxu0 %v8176
        %8688 = vmatpush.bf16.msra.mxu0 %v8172
        %8689 = vmatpush.bf16.msra.mxu0 %v8168
        %8690 = vmatpush.bf16.msra.mxu0 %v8164
        %8691 = vmatpush.bf16.msra.mxu0 %v8160
        %8692 = vmatpush.bf16.msra.mxu0 %v8156
        %8693 = vmatmul.bf16.gmra.mxu0 %v7027
        %v8694 = vpop.f32.mrf.mxu0
        %v8695 = vadd.f32 %v8646, %v8694
        %v8696 = vpop.f32.mrf.mxu0
        %v8697 = vadd.f32 %v8648, %v8696
        %8698 = vmatmul.bf16.gmra.mxu0 %v7035
        %v8699 = vpop.f32.mrf.mxu0
        %v8700 = vadd.f32 %v8651, %v8699
        %v8701 = vpop.f32.mrf.mxu0
        %v8702 = vadd.f32 %v8653, %v8701
        %8703 = vmatmul.bf16.gmra.mxu0 %v7043
        %v8704 = vpop.f32.mrf.mxu0
        %v8705 = vadd.f32 %v8656, %v8704
        %v8706 = vpop.f32.mrf.mxu0
        %v8707 = vadd.f32 %v8658, %v8706
        %8708 = vmatmul.bf16.gmra.mxu0 %v7051
        %v8709 = vpop.f32.mrf.mxu0
        %v8710 = vadd.f32 %v8661, %v8709
        %v8711 = vpop.f32.mrf.mxu0
        %v8712 = vadd.f32 %v8663, %v8711
        %8713 = vmatmul.bf16.gmra.mxu0 %v7059
        %v8714 = vpop.f32.mrf.mxu0
        %v8715 = vadd.f32 %v8666, %v8714
        %v8716 = vpop.f32.mrf.mxu0
        %v8717 = vadd.f32 %v8668, %v8716
        %8718 = vmatmul.bf16.gmra.mxu0 %v7067
        %v8719 = vpop.f32.mrf.mxu0
        %v8720 = vadd.f32 %v8671, %v8719
        %v8721 = vpop.f32.mrf.mxu0
        %v8722 = vadd.f32 %v8673, %v8721
        %8723 = vmatmul.bf16.gmra.mxu0 %v7075
        %v8724 = vpop.f32.mrf.mxu0
        %v8725 = vadd.f32 %v8676, %v8724
        %v8726 = vpop.f32.mrf.mxu0
        %v8727 = vadd.f32 %v8678, %v8726
        %8728 = vmatmul.bf16.gmra.mxu0 %v7083
        %v8729 = vpop.f32.mrf.mxu0
        %v8730 = vadd.f32 %v8681, %v8729
        %v8731 = vpop.f32.mrf.mxu0
        %v8732 = vadd.f32 %v8683, %v8731
        %8733 = vdwg.mxu0
        %8734 = vmatpush.bf16.msra.mxu0 %v8216
        %8735 = vmatpush.bf16.msra.mxu0 %v8212
        %8736 = vmatpush.bf16.msra.mxu0 %v8208
        %8737 = vmatpush.bf16.msra.mxu0 %v8204
        %8738 = vmatpush.bf16.msra.mxu0 %v8200
        %8739 = vmatpush.bf16.msra.mxu0 %v8196
        %8740 = vmatpush.bf16.msra.mxu0 %v8192
        %8741 = vmatpush.bf16.msra.mxu0 %v8188
        %8742 = vmatmul.bf16.gmra.mxu0 %v7028
        %v8743 = vpop.f32.mrf.mxu0
        %v8744 = vadd.f32 %v8695, %v8743
        %v8745 = vpop.f32.mrf.mxu0
        %v8746 = vadd.f32 %v8697, %v8745
        %8747 = vmatmul.bf16.gmra.mxu0 %v7036
        %v8748 = vpop.f32.mrf.mxu0
        %v8749 = vadd.f32 %v8700, %v8748
        %v8750 = vpop.f32.mrf.mxu0
        %v8751 = vadd.f32 %v8702, %v8750
        %8752 = vmatmul.bf16.gmra.mxu0 %v7044
        %v8753 = vpop.f32.mrf.mxu0
        %v8754 = vadd.f32 %v8705, %v8753
        %v8755 = vpop.f32.mrf.mxu0
        %v8756 = vadd.f32 %v8707, %v8755
        %8757 = vmatmul.bf16.gmra.mxu0 %v7052
        %v8758 = vpop.f32.mrf.mxu0
        %v8759 = vadd.f32 %v8710, %v8758
        %v8760 = vpop.f32.mrf.mxu0
        %v8761 = vadd.f32 %v8712, %v8760
        %8762 = vmatmul.bf16.gmra.mxu0 %v7060
        %v8763 = vpop.f32.mrf.mxu0
        %v8764 = vadd.f32 %v8715, %v8763
        %v8765 = vpop.f32.mrf.mxu0
        %v8766 = vadd.f32 %v8717, %v8765
        %8767 = vmatmul.bf16.gmra.mxu0 %v7068
        %v8768 = vpop.f32.mrf.mxu0
        %v8769 = vadd.f32 %v8720, %v8768
        %v8770 = vpop.f32.mrf.mxu0
        %v8771 = vadd.f32 %v8722, %v8770
        %8772 = vmatmul.bf16.gmra.mxu0 %v7076
        %v8773 = vpop.f32.mrf.mxu0
        %v8774 = vadd.f32 %v8725, %v8773
        %v8775 = vpop.f32.mrf.mxu0
        %v8776 = vadd.f32 %v8727, %v8775
        %8777 = vmatmul.bf16.gmra.mxu0 %v7084
        %v8778 = vpop.f32.mrf.mxu0
        %v8779 = vadd.f32 %v8730, %v8778
        %v8780 = vpop.f32.mrf.mxu0
        %v8781 = vadd.f32 %v8732, %v8780
        %8782 = vdwg.mxu0
        %8783 = vmatpush.bf16.msra.mxu0 %v8248
        %8784 = vmatpush.bf16.msra.mxu0 %v8244
        %8785 = vmatpush.bf16.msra.mxu0 %v8240
        %8786 = vmatpush.bf16.msra.mxu0 %v8236
        %8787 = vmatpush.bf16.msra.mxu0 %v8232
        %8788 = vmatpush.bf16.msra.mxu0 %v8228
        %8789 = vmatpush.bf16.msra.mxu0 %v8224
        %8790 = vmatpush.bf16.msra.mxu0 %v8220
        %8791 = vmatmul.bf16.gmra.mxu0 %v7029
        %v8792 = vpop.f32.mrf.mxu0
        %v8793 = vadd.f32 %v8744, %v8792
        %v8794 = vpop.f32.mrf.mxu0
        %v8795 = vadd.f32 %v8746, %v8794
        %8796 = vmatmul.bf16.gmra.mxu0 %v7037
        %v8797 = vpop.f32.mrf.mxu0
        %v8798 = vadd.f32 %v8749, %v8797
        %v8799 = vpop.f32.mrf.mxu0
        %v8800 = vadd.f32 %v8751, %v8799
        %8801 = vmatmul.bf16.gmra.mxu0 %v7045
        %v8802 = vpop.f32.mrf.mxu0
        %v8803 = vadd.f32 %v8754, %v8802
        %v8804 = vpop.f32.mrf.mxu0
        %v8805 = vadd.f32 %v8756, %v8804
        %8806 = vmatmul.bf16.gmra.mxu0 %v7053
        %v8807 = vpop.f32.mrf.mxu0
        %v8808 = vadd.f32 %v8759, %v8807
        %v8809 = vpop.f32.mrf.mxu0
        %v8810 = vadd.f32 %v8761, %v8809
        %8811 = vmatmul.bf16.gmra.mxu0 %v7061
        %v8812 = vpop.f32.mrf.mxu0
        %v8813 = vadd.f32 %v8764, %v8812
        %v8814 = vpop.f32.mrf.mxu0
        %v8815 = vadd.f32 %v8766, %v8814
        %8816 = vmatmul.bf16.gmra.mxu0 %v7069
        %v8817 = vpop.f32.mrf.mxu0
        %v8818 = vadd.f32 %v8769, %v8817
        %v8819 = vpop.f32.mrf.mxu0
        %v8820 = vadd.f32 %v8771, %v8819
        %8821 = vmatmul.bf16.gmra.mxu0 %v7077
        %v8822 = vpop.f32.mrf.mxu0
        %v8823 = vadd.f32 %v8774, %v8822
        %v8824 = vpop.f32.mrf.mxu0
        %v8825 = vadd.f32 %v8776, %v8824
        %8826 = vmatmul.bf16.gmra.mxu0 %v7085
        %v8827 = vpop.f32.mrf.mxu0
        %v8828 = vadd.f32 %v8779, %v8827
        %v8829 = vpop.f32.mrf.mxu0
        %v8830 = vadd.f32 %v8781, %v8829
        %8831 = vdwg.mxu0
        %8832 = vmatpush.bf16.msra.mxu0 %v8280
        %8833 = vmatpush.bf16.msra.mxu0 %v8276
        %8834 = vmatpush.bf16.msra.mxu0 %v8272
        %8835 = vmatpush.bf16.msra.mxu0 %v8268
        %8836 = vmatpush.bf16.msra.mxu0 %v8264
        %8837 = vmatpush.bf16.msra.mxu0 %v8260
        %8838 = vmatpush.bf16.msra.mxu0 %v8256
        %8839 = vmatpush.bf16.msra.mxu0 %v8252
        %8840 = vmatmul.bf16.gmra.mxu0 %v7030
        %v8841 = vpop.f32.mrf.mxu0
        %v8842 = vadd.f32 %v8793, %v8841
        %v8843 = vpop.f32.mrf.mxu0
        %v8844 = vadd.f32 %v8795, %v8843
        %8845 = vmatmul.bf16.gmra.mxu0 %v7038
        %v8846 = vpop.f32.mrf.mxu0
        %v8847 = vadd.f32 %v8798, %v8846
        %v8848 = vpop.f32.mrf.mxu0
        %v8849 = vadd.f32 %v8800, %v8848
        %8850 = vmatmul.bf16.gmra.mxu0 %v7046
        %v8851 = vpop.f32.mrf.mxu0
        %v8852 = vadd.f32 %v8803, %v8851
        %v8853 = vpop.f32.mrf.mxu0
        %v8854 = vadd.f32 %v8805, %v8853
        %8855 = vmatmul.bf16.gmra.mxu0 %v7054
        %v8856 = vpop.f32.mrf.mxu0
        %v8857 = vadd.f32 %v8808, %v8856
        %v8858 = vpop.f32.mrf.mxu0
        %v8859 = vadd.f32 %v8810, %v8858
        %8860 = vmatmul.bf16.gmra.mxu0 %v7062
        %v8861 = vpop.f32.mrf.mxu0
        %v8862 = vadd.f32 %v8813, %v8861
        %v8863 = vpop.f32.mrf.mxu0
        %v8864 = vadd.f32 %v8815, %v8863
        %8865 = vmatmul.bf16.gmra.mxu0 %v7070
        %v8866 = vpop.f32.mrf.mxu0
        %v8867 = vadd.f32 %v8818, %v8866
        %v8868 = vpop.f32.mrf.mxu0
        %v8869 = vadd.f32 %v8820, %v8868
        %8870 = vmatmul.bf16.gmra.mxu0 %v7078
        %v8871 = vpop.f32.mrf.mxu0
        %v8872 = vadd.f32 %v8823, %v8871
        %v8873 = vpop.f32.mrf.mxu0
        %v8874 = vadd.f32 %v8825, %v8873
        %8875 = vmatmul.bf16.gmra.mxu0 %v7086
        %v8876 = vpop.f32.mrf.mxu0
        %v8877 = vadd.f32 %v8828, %v8876
        %v8878 = vpop.f32.mrf.mxu0
        %v8879 = vadd.f32 %v8830, %v8878
        %8880 = vdwg.mxu0
        %8881 = vmatpush.bf16.msra.mxu0 %v8312
        %8882 = vmatpush.bf16.msra.mxu0 %v8308
        %8883 = vmatpush.bf16.msra.mxu0 %v8304
        %8884 = vmatpush.bf16.msra.mxu0 %v8300
        %8885 = vmatpush.bf16.msra.mxu0 %v8296
        %8886 = vmatpush.bf16.msra.mxu0 %v8292
        %8887 = vmatpush.bf16.msra.mxu0 %v8288
        %8888 = vmatpush.bf16.msra.mxu0 %v8284
        %8889 = vmatmul.bf16.gmra.mxu0 %v7031
        %v8890 = vpop.f32.mrf.mxu0
        %v8891 = vadd.f32 %v8842, %v8890
        %v8892 = vpop.f32.mrf.mxu0
        %v8893 = vadd.f32 %v8844, %v8892
        %8894 = vmatmul.bf16.gmra.mxu0 %v7039
        %v8895 = vpop.f32.mrf.mxu0
        %v8896 = vadd.f32 %v8847, %v8895
        %v8897 = vpop.f32.mrf.mxu0
        %v8898 = vadd.f32 %v8849, %v8897
        %8899 = vmatmul.bf16.gmra.mxu0 %v7047
        %v8900 = vpop.f32.mrf.mxu0
        %v8901 = vadd.f32 %v8852, %v8900
        %v8902 = vpop.f32.mrf.mxu0
        %v8903 = vadd.f32 %v8854, %v8902
        %8904 = vmatmul.bf16.gmra.mxu0 %v7055
        %v8905 = vpop.f32.mrf.mxu0
        %v8906 = vadd.f32 %v8857, %v8905
        %v8907 = vpop.f32.mrf.mxu0
        %v8908 = vadd.f32 %v8859, %v8907
        %8909 = vmatmul.bf16.gmra.mxu0 %v7063
        %v8910 = vpop.f32.mrf.mxu0
        %v8911 = vadd.f32 %v8862, %v8910
        %v8912 = vpop.f32.mrf.mxu0
        %v8913 = vadd.f32 %v8864, %v8912
        %8914 = vmatmul.bf16.gmra.mxu0 %v7071
        %v8915 = vpop.f32.mrf.mxu0
        %v8916 = vadd.f32 %v8867, %v8915
        %v8917 = vpop.f32.mrf.mxu0
        %v8918 = vadd.f32 %v8869, %v8917
        %8919 = vmatmul.bf16.gmra.mxu0 %v7079
        %v8920 = vpop.f32.mrf.mxu0
        %v8921 = vadd.f32 %v8872, %v8920
        %v8922 = vpop.f32.mrf.mxu0
        %v8923 = vadd.f32 %v8874, %v8922
        %8924 = vmatmul.bf16.gmra.mxu0 %v7087
        %v8925 = vpop.f32.mrf.mxu0
        %v8926 = vadd.f32 %v8877, %v8925
        %v8927 = vpop.f32.mrf.mxu0
        %v8928 = vadd.f32 %v8879, %v8927
        %8929 = vdwg.mxu0
        %8930 = vmatpush.bf16.msra.mxu0 %v8344
        %8931 = vmatpush.bf16.msra.mxu0 %v8340
        %8932 = vmatpush.bf16.msra.mxu0 %v8336
        %8933 = vmatpush.bf16.msra.mxu0 %v8332
        %8934 = vmatpush.bf16.msra.mxu0 %v8328
        %8935 = vmatpush.bf16.msra.mxu0 %v8324
        %8936 = vmatpush.bf16.msra.mxu0 %v8320
        %8937 = vmatpush.bf16.msra.mxu0 %v8316
        %8938 = vmatmul.bf16.gmra.mxu0 %v7032
        %v8939 = vpop.f32.mrf.mxu0
        %v8940 = vadd.f32 %v8891, %v8939
        %v8941 = vpop.f32.mrf.mxu0
        %v8942 = vadd.f32 %v8893, %v8941
        %8943 = vmatmul.bf16.gmra.mxu0 %v7040
        %v8944 = vpop.f32.mrf.mxu0
        %v8945 = vadd.f32 %v8896, %v8944
        %v8946 = vpop.f32.mrf.mxu0
        %v8947 = vadd.f32 %v8898, %v8946
        %8948 = vmatmul.bf16.gmra.mxu0 %v7048
        %v8949 = vpop.f32.mrf.mxu0
        %v8950 = vadd.f32 %v8901, %v8949
        %v8951 = vpop.f32.mrf.mxu0
        %v8952 = vadd.f32 %v8903, %v8951
        %8953 = vmatmul.bf16.gmra.mxu0 %v7056
        %v8954 = vpop.f32.mrf.mxu0
        %v8955 = vadd.f32 %v8906, %v8954
        %v8956 = vpop.f32.mrf.mxu0
        %v8957 = vadd.f32 %v8908, %v8956
        %8958 = vmatmul.bf16.gmra.mxu0 %v7064
        %v8959 = vpop.f32.mrf.mxu0
        %v8960 = vadd.f32 %v8911, %v8959
        %v8961 = vpop.f32.mrf.mxu0
        %v8962 = vadd.f32 %v8913, %v8961
        %8963 = vmatmul.bf16.gmra.mxu0 %v7072
        %v8964 = vpop.f32.mrf.mxu0
        %v8965 = vadd.f32 %v8916, %v8964
        %v8966 = vpop.f32.mrf.mxu0
        %v8967 = vadd.f32 %v8918, %v8966
        %8968 = vmatmul.bf16.gmra.mxu0 %v7080
        %v8969 = vpop.f32.mrf.mxu0
        %v8970 = vadd.f32 %v8921, %v8969
        %v8971 = vpop.f32.mrf.mxu0
        %v8972 = vadd.f32 %v8923, %v8971
        %8973 = vmatmul.bf16.gmra.mxu0 %v7088
        %v8974 = vpop.f32.mrf.mxu0
        %v8975 = vadd.f32 %v8926, %v8974
        %v8976 = vpop.f32.mrf.mxu0
        %v8977 = vadd.f32 %v8928, %v8976
        %8978 = vdwg.mxu0
        %8979 = vmatpush.bf16.msra.mxu0 %v8376
        %8980 = vmatpush.bf16.msra.mxu0 %v8372
        %8981 = vmatpush.bf16.msra.mxu0 %v8368
        %8982 = vmatpush.bf16.msra.mxu0 %v8364
        %8983 = vmatpush.bf16.msra.mxu0 %v8360
        %8984 = vmatpush.bf16.msra.mxu0 %v8356
        %8985 = vmatpush.bf16.msra.mxu0 %v8352
        %8986 = vmatpush.bf16.msra.mxu0 %v8348
        %8987 = vmatmul.bf16.gmra.mxu0 %v7033
        %v8988 = vpop.f32.mrf.mxu0
        %v8989 = vadd.f32 %v8940, %v8988
        %v8990 = vpop.f32.mrf.mxu0
        %v8991 = vadd.f32 %v8942, %v8990
        %8992 = vmatmul.bf16.gmra.mxu0 %v7041
        %v8993 = vpop.f32.mrf.mxu0
        %v8994 = vadd.f32 %v8945, %v8993
        %v8995 = vpop.f32.mrf.mxu0
        %v8996 = vadd.f32 %v8947, %v8995
        %8997 = vmatmul.bf16.gmra.mxu0 %v7049
        %v8998 = vpop.f32.mrf.mxu0
        %v8999 = vadd.f32 %v8950, %v8998
        %v9000 = vpop.f32.mrf.mxu0
        %v9001 = vadd.f32 %v8952, %v9000
        %9002 = vmatmul.bf16.gmra.mxu0 %v7057
        %v9003 = vpop.f32.mrf.mxu0
        %v9004 = vadd.f32 %v8955, %v9003
        %v9005 = vpop.f32.mrf.mxu0
        %v9006 = vadd.f32 %v8957, %v9005
        %9007 = vmatmul.bf16.gmra.mxu0 %v7065
        %v9008 = vpop.f32.mrf.mxu0
        %v9009 = vadd.f32 %v8960, %v9008
        %v9010 = vpop.f32.mrf.mxu0
        %v9011 = vadd.f32 %v8962, %v9010
        %9012 = vmatmul.bf16.gmra.mxu0 %v7073
        %v9013 = vpop.f32.mrf.mxu0
        %v9014 = vadd.f32 %v8965, %v9013
        %v9015 = vpop.f32.mrf.mxu0
        %v9016 = vadd.f32 %v8967, %v9015
        %9017 = vmatmul.bf16.gmra.mxu0 %v7081
        %v9018 = vpop.f32.mrf.mxu0
        %v9019 = vadd.f32 %v8970, %v9018
        %v9020 = vpop.f32.mrf.mxu0
        %v9021 = vadd.f32 %v8972, %v9020
        %9022 = vmatmul.bf16.gmra.mxu0 %v7089
        %v9023 = vpop.f32.mrf.mxu0
        %v9024 = vadd.f32 %v8975, %v9023
        %v9025 = vpop.f32.mrf.mxu0
        %v9026 = vadd.f32 %v8977, %v9025
        %9027 = vdwg.mxu0
        %9028 = vmatpush.bf16.msra.mxu0 %v8153
        %9029 = vmatpush.bf16.msra.mxu0 %v8149
        %9030 = vmatpush.bf16.msra.mxu0 %v8145
        %9031 = vmatpush.bf16.msra.mxu0 %v8141
        %9032 = vmatpush.bf16.msra.mxu0 %v8137
        %9033 = vmatpush.bf16.msra.mxu0 %v8133
        %9034 = vmatpush.bf16.msra.mxu0 %v8129
        %9035 = vmatpush.bf16.msra.mxu0 %v8125
        %9036 = vmatmul.bf16.gmra.mxu0 %v7026
        %v9037 = vpop.f32.mrf.mxu0
        %v9038 = vadd.f32 %v7349, %v9037
        %v9039 = vpop.f32.mrf.mxu0
        %v9040 = vadd.f32 %v7349, %v9039
        %9041 = vmatmul.bf16.gmra.mxu0 %v7034
        %v9042 = vpop.f32.mrf.mxu0
        %v9043 = vadd.f32 %v7349, %v9042
        %v9044 = vpop.f32.mrf.mxu0
        %v9045 = vadd.f32 %v7349, %v9044
        %9046 = vmatmul.bf16.gmra.mxu0 %v7042
        %v9047 = vpop.f32.mrf.mxu0
        %v9048 = vadd.f32 %v7349, %v9047
        %v9049 = vpop.f32.mrf.mxu0
        %v9050 = vadd.f32 %v7349, %v9049
        %9051 = vmatmul.bf16.gmra.mxu0 %v7050
        %v9052 = vpop.f32.mrf.mxu0
        %v9053 = vadd.f32 %v7349, %v9052
        %v9054 = vpop.f32.mrf.mxu0
        %v9055 = vadd.f32 %v7349, %v9054
        %9056 = vmatmul.bf16.gmra.mxu0 %v7058
        %v9057 = vpop.f32.mrf.mxu0
        %v9058 = vadd.f32 %v7349, %v9057
        %v9059 = vpop.f32.mrf.mxu0
        %v9060 = vadd.f32 %v7349, %v9059
        %9061 = vmatmul.bf16.gmra.mxu0 %v7066
        %v9062 = vpop.f32.mrf.mxu0
        %v9063 = vadd.f32 %v7349, %v9062
        %v9064 = vpop.f32.mrf.mxu0
        %v9065 = vadd.f32 %v7349, %v9064
        %9066 = vmatmul.bf16.gmra.mxu0 %v7074
        %v9067 = vpop.f32.mrf.mxu0
        %v9068 = vadd.f32 %v7349, %v9067
        %v9069 = vpop.f32.mrf.mxu0
        %v9070 = vadd.f32 %v7349, %v9069
        %9071 = vmatmul.bf16.gmra.mxu0 %v7082
        %v9072 = vpop.f32.mrf.mxu0
        %v9073 = vadd.f32 %v7349, %v9072
        %v9074 = vpop.f32.mrf.mxu0
        %v9075 = vadd.f32 %v7349, %v9074
        %9076 = vdwg.mxu0
        %9077 = vmatpush.bf16.msra.mxu0 %v8185
        %9078 = vmatpush.bf16.msra.mxu0 %v8181
        %9079 = vmatpush.bf16.msra.mxu0 %v8177
        %9080 = vmatpush.bf16.msra.mxu0 %v8173
        %9081 = vmatpush.bf16.msra.mxu0 %v8169
        %9082 = vmatpush.bf16.msra.mxu0 %v8165
        %9083 = vmatpush.bf16.msra.mxu0 %v8161
        %9084 = vmatpush.bf16.msra.mxu0 %v8157
        %9085 = vmatmul.bf16.gmra.mxu0 %v7027
        %v9086 = vpop.f32.mrf.mxu0
        %v9087 = vadd.f32 %v9038, %v9086
        %v9088 = vpop.f32.mrf.mxu0
        %v9089 = vadd.f32 %v9040, %v9088
        %9090 = vmatmul.bf16.gmra.mxu0 %v7035
        %v9091 = vpop.f32.mrf.mxu0
        %v9092 = vadd.f32 %v9043, %v9091
        %v9093 = vpop.f32.mrf.mxu0
        %v9094 = vadd.f32 %v9045, %v9093
        %9095 = vmatmul.bf16.gmra.mxu0 %v7043
        %v9096 = vpop.f32.mrf.mxu0
        %v9097 = vadd.f32 %v9048, %v9096
        %v9098 = vpop.f32.mrf.mxu0
        %v9099 = vadd.f32 %v9050, %v9098
        %9100 = vmatmul.bf16.gmra.mxu0 %v7051
        %v9101 = vpop.f32.mrf.mxu0
        %v9102 = vadd.f32 %v9053, %v9101
        %v9103 = vpop.f32.mrf.mxu0
        %v9104 = vadd.f32 %v9055, %v9103
        %9105 = vmatmul.bf16.gmra.mxu0 %v7059
        %v9106 = vpop.f32.mrf.mxu0
        %v9107 = vadd.f32 %v9058, %v9106
        %v9108 = vpop.f32.mrf.mxu0
        %v9109 = vadd.f32 %v9060, %v9108
        %9110 = vmatmul.bf16.gmra.mxu0 %v7067
        %v9111 = vpop.f32.mrf.mxu0
        %v9112 = vadd.f32 %v9063, %v9111
        %v9113 = vpop.f32.mrf.mxu0
        %v9114 = vadd.f32 %v9065, %v9113
        %9115 = vmatmul.bf16.gmra.mxu0 %v7075
        %v9116 = vpop.f32.mrf.mxu0
        %v9117 = vadd.f32 %v9068, %v9116
        %v9118 = vpop.f32.mrf.mxu0
        %v9119 = vadd.f32 %v9070, %v9118
        %9120 = vmatmul.bf16.gmra.mxu0 %v7083
        %v9121 = vpop.f32.mrf.mxu0
        %v9122 = vadd.f32 %v9073, %v9121
        %v9123 = vpop.f32.mrf.mxu0
        %v9124 = vadd.f32 %v9075, %v9123
        %9125 = vdwg.mxu0
        %9126 = vmatpush.bf16.msra.mxu0 %v8217
        %9127 = vmatpush.bf16.msra.mxu0 %v8213
        %9128 = vmatpush.bf16.msra.mxu0 %v8209
        %9129 = vmatpush.bf16.msra.mxu0 %v8205
        %9130 = vmatpush.bf16.msra.mxu0 %v8201
        %9131 = vmatpush.bf16.msra.mxu0 %v8197
        %9132 = vmatpush.bf16.msra.mxu0 %v8193
        %9133 = vmatpush.bf16.msra.mxu0 %v8189
        %9134 = vmatmul.bf16.gmra.mxu0 %v7028
        %v9135 = vpop.f32.mrf.mxu0
        %v9136 = vadd.f32 %v9087, %v9135
        %v9137 = vpop.f32.mrf.mxu0
        %v9138 = vadd.f32 %v9089, %v9137
        %9139 = vmatmul.bf16.gmra.mxu0 %v7036
        %v9140 = vpop.f32.mrf.mxu0
        %v9141 = vadd.f32 %v9092, %v9140
        %v9142 = vpop.f32.mrf.mxu0
        %v9143 = vadd.f32 %v9094, %v9142
        %9144 = vmatmul.bf16.gmra.mxu0 %v7044
        %v9145 = vpop.f32.mrf.mxu0
        %v9146 = vadd.f32 %v9097, %v9145
        %v9147 = vpop.f32.mrf.mxu0
        %v9148 = vadd.f32 %v9099, %v9147
        %9149 = vmatmul.bf16.gmra.mxu0 %v7052
        %v9150 = vpop.f32.mrf.mxu0
        %v9151 = vadd.f32 %v9102, %v9150
        %v9152 = vpop.f32.mrf.mxu0
        %v9153 = vadd.f32 %v9104, %v9152
        %9154 = vmatmul.bf16.gmra.mxu0 %v7060
        %v9155 = vpop.f32.mrf.mxu0
        %v9156 = vadd.f32 %v9107, %v9155
        %v9157 = vpop.f32.mrf.mxu0
        %v9158 = vadd.f32 %v9109, %v9157
        %9159 = vmatmul.bf16.gmra.mxu0 %v7068
        %v9160 = vpop.f32.mrf.mxu0
        %v9161 = vadd.f32 %v9112, %v9160
        %v9162 = vpop.f32.mrf.mxu0
        %v9163 = vadd.f32 %v9114, %v9162
        %9164 = vmatmul.bf16.gmra.mxu0 %v7076
        %v9165 = vpop.f32.mrf.mxu0
        %v9166 = vadd.f32 %v9117, %v9165
        %v9167 = vpop.f32.mrf.mxu0
        %v9168 = vadd.f32 %v9119, %v9167
        %9169 = vmatmul.bf16.gmra.mxu0 %v7084
        %v9170 = vpop.f32.mrf.mxu0
        %v9171 = vadd.f32 %v9122, %v9170
        %v9172 = vpop.f32.mrf.mxu0
        %v9173 = vadd.f32 %v9124, %v9172
        %9174 = vdwg.mxu0
        %9175 = vmatpush.bf16.msra.mxu0 %v8249
        %9176 = vmatpush.bf16.msra.mxu0 %v8245
        %9177 = vmatpush.bf16.msra.mxu0 %v8241
        %9178 = vmatpush.bf16.msra.mxu0 %v8237
        %9179 = vmatpush.bf16.msra.mxu0 %v8233
        %9180 = vmatpush.bf16.msra.mxu0 %v8229
        %9181 = vmatpush.bf16.msra.mxu0 %v8225
        %9182 = vmatpush.bf16.msra.mxu0 %v8221
        %9183 = vmatmul.bf16.gmra.mxu0 %v7029
        %v9184 = vpop.f32.mrf.mxu0
        %v9185 = vadd.f32 %v9136, %v9184
        %v9186 = vpop.f32.mrf.mxu0
        %v9187 = vadd.f32 %v9138, %v9186
        %9188 = vmatmul.bf16.gmra.mxu0 %v7037
        %v9189 = vpop.f32.mrf.mxu0
        %v9190 = vadd.f32 %v9141, %v9189
        %v9191 = vpop.f32.mrf.mxu0
        %v9192 = vadd.f32 %v9143, %v9191
        %9193 = vmatmul.bf16.gmra.mxu0 %v7045
        %v9194 = vpop.f32.mrf.mxu0
        %v9195 = vadd.f32 %v9146, %v9194
        %v9196 = vpop.f32.mrf.mxu0
        %v9197 = vadd.f32 %v9148, %v9196
        %9198 = vmatmul.bf16.gmra.mxu0 %v7053
        %v9199 = vpop.f32.mrf.mxu0
        %v9200 = vadd.f32 %v9151, %v9199
        %v9201 = vpop.f32.mrf.mxu0
        %v9202 = vadd.f32 %v9153, %v9201
        %9203 = vmatmul.bf16.gmra.mxu0 %v7061
        %v9204 = vpop.f32.mrf.mxu0
        %v9205 = vadd.f32 %v9156, %v9204
        %v9206 = vpop.f32.mrf.mxu0
        %v9207 = vadd.f32 %v9158, %v9206
        %9208 = vmatmul.bf16.gmra.mxu0 %v7069
        %v9209 = vpop.f32.mrf.mxu0
        %v9210 = vadd.f32 %v9161, %v9209
        %v9211 = vpop.f32.mrf.mxu0
        %v9212 = vadd.f32 %v9163, %v9211
        %9213 = vmatmul.bf16.gmra.mxu0 %v7077
        %v9214 = vpop.f32.mrf.mxu0
        %v9215 = vadd.f32 %v9166, %v9214
        %v9216 = vpop.f32.mrf.mxu0
        %v9217 = vadd.f32 %v9168, %v9216
        %9218 = vmatmul.bf16.gmra.mxu0 %v7085
        %v9219 = vpop.f32.mrf.mxu0
        %v9220 = vadd.f32 %v9171, %v9219
        %v9221 = vpop.f32.mrf.mxu0
        %v9222 = vadd.f32 %v9173, %v9221
        %9223 = vdwg.mxu0
        %9224 = vmatpush.bf16.msra.mxu0 %v8281
        %9225 = vmatpush.bf16.msra.mxu0 %v8277
        %9226 = vmatpush.bf16.msra.mxu0 %v8273
        %9227 = vmatpush.bf16.msra.mxu0 %v8269
        %9228 = vmatpush.bf16.msra.mxu0 %v8265
        %9229 = vmatpush.bf16.msra.mxu0 %v8261
        %9230 = vmatpush.bf16.msra.mxu0 %v8257
        %9231 = vmatpush.bf16.msra.mxu0 %v8253
        %9232 = vmatmul.bf16.gmra.mxu0 %v7030
        %v9233 = vpop.f32.mrf.mxu0
        %v9234 = vadd.f32 %v9185, %v9233
        %v9235 = vpop.f32.mrf.mxu0
        %v9236 = vadd.f32 %v9187, %v9235
        %9237 = vmatmul.bf16.gmra.mxu0 %v7038
        %v9238 = vpop.f32.mrf.mxu0
        %v9239 = vadd.f32 %v9190, %v9238
        %v9240 = vpop.f32.mrf.mxu0
        %v9241 = vadd.f32 %v9192, %v9240
        %9242 = vmatmul.bf16.gmra.mxu0 %v7046
        %v9243 = vpop.f32.mrf.mxu0
        %v9244 = vadd.f32 %v9195, %v9243
        %v9245 = vpop.f32.mrf.mxu0
        %v9246 = vadd.f32 %v9197, %v9245
        %9247 = vmatmul.bf16.gmra.mxu0 %v7054
        %v9248 = vpop.f32.mrf.mxu0
        %v9249 = vadd.f32 %v9200, %v9248
        %v9250 = vpop.f32.mrf.mxu0
        %v9251 = vadd.f32 %v9202, %v9250
        %9252 = vmatmul.bf16.gmra.mxu0 %v7062
        %v9253 = vpop.f32.mrf.mxu0
        %v9254 = vadd.f32 %v9205, %v9253
        %v9255 = vpop.f32.mrf.mxu0
        %v9256 = vadd.f32 %v9207, %v9255
        %9257 = vmatmul.bf16.gmra.mxu0 %v7070
        %v9258 = vpop.f32.mrf.mxu0
        %v9259 = vadd.f32 %v9210, %v9258
        %v9260 = vpop.f32.mrf.mxu0
        %v9261 = vadd.f32 %v9212, %v9260
        %9262 = vmatmul.bf16.gmra.mxu0 %v7078
        %v9263 = vpop.f32.mrf.mxu0
        %v9264 = vadd.f32 %v9215, %v9263
        %v9265 = vpop.f32.mrf.mxu0
        %v9266 = vadd.f32 %v9217, %v9265
        %9267 = vmatmul.bf16.gmra.mxu0 %v7086
        %v9268 = vpop.f32.mrf.mxu0
        %v9269 = vadd.f32 %v9220, %v9268
        %v9270 = vpop.f32.mrf.mxu0
        %v9271 = vadd.f32 %v9222, %v9270
        %9272 = vdwg.mxu0
        %9273 = vmatpush.bf16.msra.mxu0 %v8313
        %9274 = vmatpush.bf16.msra.mxu0 %v8309
        %9275 = vmatpush.bf16.msra.mxu0 %v8305
        %9276 = vmatpush.bf16.msra.mxu0 %v8301
        %9277 = vmatpush.bf16.msra.mxu0 %v8297
        %9278 = vmatpush.bf16.msra.mxu0 %v8293
        %9279 = vmatpush.bf16.msra.mxu0 %v8289
        %9280 = vmatpush.bf16.msra.mxu0 %v8285
        %9281 = vmatmul.bf16.gmra.mxu0 %v7031
        %v9282 = vpop.f32.mrf.mxu0
        %v9283 = vadd.f32 %v9234, %v9282
        %v9284 = vpop.f32.mrf.mxu0
        %v9285 = vadd.f32 %v9236, %v9284
        %9286 = vmatmul.bf16.gmra.mxu0 %v7039
        %v9287 = vpop.f32.mrf.mxu0
        %v9288 = vadd.f32 %v9239, %v9287
        %v9289 = vpop.f32.mrf.mxu0
        %v9290 = vadd.f32 %v9241, %v9289
        %9291 = vmatmul.bf16.gmra.mxu0 %v7047
        %v9292 = vpop.f32.mrf.mxu0
        %v9293 = vadd.f32 %v9244, %v9292
        %v9294 = vpop.f32.mrf.mxu0
        %v9295 = vadd.f32 %v9246, %v9294
        %9296 = vmatmul.bf16.gmra.mxu0 %v7055
        %v9297 = vpop.f32.mrf.mxu0
        %v9298 = vadd.f32 %v9249, %v9297
        %v9299 = vpop.f32.mrf.mxu0
        %v9300 = vadd.f32 %v9251, %v9299
        %9301 = vmatmul.bf16.gmra.mxu0 %v7063
        %v9302 = vpop.f32.mrf.mxu0
        %v9303 = vadd.f32 %v9254, %v9302
        %v9304 = vpop.f32.mrf.mxu0
        %v9305 = vadd.f32 %v9256, %v9304
        %9306 = vmatmul.bf16.gmra.mxu0 %v7071
        %v9307 = vpop.f32.mrf.mxu0
        %v9308 = vadd.f32 %v9259, %v9307
        %v9309 = vpop.f32.mrf.mxu0
        %v9310 = vadd.f32 %v9261, %v9309
        %9311 = vmatmul.bf16.gmra.mxu0 %v7079
        %v9312 = vpop.f32.mrf.mxu0
        %v9313 = vadd.f32 %v9264, %v9312
        %v9314 = vpop.f32.mrf.mxu0
        %v9315 = vadd.f32 %v9266, %v9314
        %9316 = vmatmul.bf16.gmra.mxu0 %v7087
        %v9317 = vpop.f32.mrf.mxu0
        %v9318 = vadd.f32 %v9269, %v9317
        %v9319 = vpop.f32.mrf.mxu0
        %v9320 = vadd.f32 %v9271, %v9319
        %9321 = vdwg.mxu0
        %9322 = vmatpush.bf16.msra.mxu0 %v8345
        %9323 = vmatpush.bf16.msra.mxu0 %v8341
        %9324 = vmatpush.bf16.msra.mxu0 %v8337
        %9325 = vmatpush.bf16.msra.mxu0 %v8333
        %9326 = vmatpush.bf16.msra.mxu0 %v8329
        %9327 = vmatpush.bf16.msra.mxu0 %v8325
        %9328 = vmatpush.bf16.msra.mxu0 %v8321
        %9329 = vmatpush.bf16.msra.mxu0 %v8317
        %9330 = vmatmul.bf16.gmra.mxu0 %v7032
        %v9331 = vpop.f32.mrf.mxu0
        %v9332 = vadd.f32 %v9283, %v9331
        %v9333 = vpop.f32.mrf.mxu0
        %v9334 = vadd.f32 %v9285, %v9333
        %9335 = vmatmul.bf16.gmra.mxu0 %v7040
        %v9336 = vpop.f32.mrf.mxu0
        %v9337 = vadd.f32 %v9288, %v9336
        %v9338 = vpop.f32.mrf.mxu0
        %v9339 = vadd.f32 %v9290, %v9338
        %9340 = vmatmul.bf16.gmra.mxu0 %v7048
        %v9341 = vpop.f32.mrf.mxu0
        %v9342 = vadd.f32 %v9293, %v9341
        %v9343 = vpop.f32.mrf.mxu0
        %v9344 = vadd.f32 %v9295, %v9343
        %9345 = vmatmul.bf16.gmra.mxu0 %v7056
        %v9346 = vpop.f32.mrf.mxu0
        %v9347 = vadd.f32 %v9298, %v9346
        %v9348 = vpop.f32.mrf.mxu0
        %v9349 = vadd.f32 %v9300, %v9348
        %9350 = vmatmul.bf16.gmra.mxu0 %v7064
        %v9351 = vpop.f32.mrf.mxu0
        %v9352 = vadd.f32 %v9303, %v9351
        %v9353 = vpop.f32.mrf.mxu0
        %v9354 = vadd.f32 %v9305, %v9353
        %9355 = vmatmul.bf16.gmra.mxu0 %v7072
        %v9356 = vpop.f32.mrf.mxu0
        %v9357 = vadd.f32 %v9308, %v9356
        %v9358 = vpop.f32.mrf.mxu0
        %v9359 = vadd.f32 %v9310, %v9358
        %9360 = vmatmul.bf16.gmra.mxu0 %v7080
        %v9361 = vpop.f32.mrf.mxu0
        %v9362 = vadd.f32 %v9313, %v9361
        %v9363 = vpop.f32.mrf.mxu0
        %v9364 = vadd.f32 %v9315, %v9363
        %9365 = vmatmul.bf16.gmra.mxu0 %v7088
        %v9366 = vpop.f32.mrf.mxu0
        %v9367 = vadd.f32 %v9318, %v9366
        %v9368 = vpop.f32.mrf.mxu0
        %v9369 = vadd.f32 %v9320, %v9368
        %9370 = vdwg.mxu0
        %9371 = vmatpush.bf16.msra.mxu0 %v8377
        %9372 = vmatpush.bf16.msra.mxu0 %v8373
        %9373 = vmatpush.bf16.msra.mxu0 %v8369
        %9374 = vmatpush.bf16.msra.mxu0 %v8365
        %9375 = vmatpush.bf16.msra.mxu0 %v8361
        %9376 = vmatpush.bf16.msra.mxu0 %v8357
        %9377 = vmatpush.bf16.msra.mxu0 %v8353
        %9378 = vmatpush.bf16.msra.mxu0 %v8349
        %9379 = vmatmul.bf16.gmra.mxu0 %v7033
        %v9380 = vpop.f32.mrf.mxu0
        %v9381 = vadd.f32 %v9332, %v9380
        %v9382 = vpop.f32.mrf.mxu0
        %v9383 = vadd.f32 %v9334, %v9382
        %9384 = vmatmul.bf16.gmra.mxu0 %v7041
        %v9385 = vpop.f32.mrf.mxu0
        %v9386 = vadd.f32 %v9337, %v9385
        %v9387 = vpop.f32.mrf.mxu0
        %v9388 = vadd.f32 %v9339, %v9387
        %9389 = vmatmul.bf16.gmra.mxu0 %v7049
        %v9390 = vpop.f32.mrf.mxu0
        %v9391 = vadd.f32 %v9342, %v9390
        %v9392 = vpop.f32.mrf.mxu0
        %v9393 = vadd.f32 %v9344, %v9392
        %9394 = vmatmul.bf16.gmra.mxu0 %v7057
        %v9395 = vpop.f32.mrf.mxu0
        %v9396 = vadd.f32 %v9347, %v9395
        %v9397 = vpop.f32.mrf.mxu0
        %v9398 = vadd.f32 %v9349, %v9397
        %9399 = vmatmul.bf16.gmra.mxu0 %v7065
        %v9400 = vpop.f32.mrf.mxu0
        %v9401 = vadd.f32 %v9352, %v9400
        %v9402 = vpop.f32.mrf.mxu0
        %v9403 = vadd.f32 %v9354, %v9402
        %9404 = vmatmul.bf16.gmra.mxu0 %v7073
        %v9405 = vpop.f32.mrf.mxu0
        %v9406 = vadd.f32 %v9357, %v9405
        %v9407 = vpop.f32.mrf.mxu0
        %v9408 = vadd.f32 %v9359, %v9407
        %9409 = vmatmul.bf16.gmra.mxu0 %v7081
        %v9410 = vpop.f32.mrf.mxu0
        %v9411 = vadd.f32 %v9362, %v9410
        %v9412 = vpop.f32.mrf.mxu0
        %v9413 = vadd.f32 %v9364, %v9412
        %9414 = vmatmul.bf16.gmra.mxu0 %v7089
        %v9415 = vpop.f32.mrf.mxu0
        %v9416 = vadd.f32 %v9367, %v9415
        %v9417 = vpop.f32.mrf.mxu0
        %v9418 = vadd.f32 %v9369, %v9417
        %9419 = vdwg.mxu0
        %9420 = vmatpush.bf16.msra.mxu0 %v8154
        %9421 = vmatpush.bf16.msra.mxu0 %v8150
        %9422 = vmatpush.bf16.msra.mxu0 %v8146
        %9423 = vmatpush.bf16.msra.mxu0 %v8142
        %9424 = vmatpush.bf16.msra.mxu0 %v8138
        %9425 = vmatpush.bf16.msra.mxu0 %v8134
        %9426 = vmatpush.bf16.msra.mxu0 %v8130
        %9427 = vmatpush.bf16.msra.mxu0 %v8126
        %9428 = vmatmul.bf16.gmra.mxu0 %v7026
        %v9429 = vpop.f32.mrf.mxu0
        %v9430 = vadd.f32 %v7350, %v9429
        %v9431 = vpop.f32.mrf.mxu0
        %v9432 = vadd.f32 %v7350, %v9431
        %9433 = vmatmul.bf16.gmra.mxu0 %v7034
        %v9434 = vpop.f32.mrf.mxu0
        %v9435 = vadd.f32 %v7350, %v9434
        %v9436 = vpop.f32.mrf.mxu0
        %v9437 = vadd.f32 %v7350, %v9436
        %9438 = vmatmul.bf16.gmra.mxu0 %v7042
        %v9439 = vpop.f32.mrf.mxu0
        %v9440 = vadd.f32 %v7350, %v9439
        %v9441 = vpop.f32.mrf.mxu0
        %v9442 = vadd.f32 %v7350, %v9441
        %9443 = vmatmul.bf16.gmra.mxu0 %v7050
        %v9444 = vpop.f32.mrf.mxu0
        %v9445 = vadd.f32 %v7350, %v9444
        %v9446 = vpop.f32.mrf.mxu0
        %v9447 = vadd.f32 %v7350, %v9446
        %9448 = vmatmul.bf16.gmra.mxu0 %v7058
        %v9449 = vpop.f32.mrf.mxu0
        %v9450 = vadd.f32 %v7350, %v9449
        %v9451 = vpop.f32.mrf.mxu0
        %v9452 = vadd.f32 %v7350, %v9451
        %9453 = vmatmul.bf16.gmra.mxu0 %v7066
        %v9454 = vpop.f32.mrf.mxu0
        %v9455 = vadd.f32 %v7350, %v9454
        %v9456 = vpop.f32.mrf.mxu0
        %v9457 = vadd.f32 %v7350, %v9456
        %9458 = vmatmul.bf16.gmra.mxu0 %v7074
        %v9459 = vpop.f32.mrf.mxu0
        %v9460 = vadd.f32 %v7350, %v9459
        %v9461 = vpop.f32.mrf.mxu0
        %v9462 = vadd.f32 %v7350, %v9461
        %9463 = vmatmul.bf16.gmra.mxu0 %v7082
        %v9464 = vpop.f32.mrf.mxu0
        %v9465 = vadd.f32 %v7350, %v9464
        %v9466 = vpop.f32.mrf.mxu0
        %v9467 = vadd.f32 %v7350, %v9466
        %9468 = vdwg.mxu0
        %9469 = vmatpush.bf16.msra.mxu0 %v8186
        %9470 = vmatpush.bf16.msra.mxu0 %v8182
        %9471 = vmatpush.bf16.msra.mxu0 %v8178
        %9472 = vmatpush.bf16.msra.mxu0 %v8174
        %9473 = vmatpush.bf16.msra.mxu0 %v8170
        %9474 = vmatpush.bf16.msra.mxu0 %v8166
        %9475 = vmatpush.bf16.msra.mxu0 %v8162
        %9476 = vmatpush.bf16.msra.mxu0 %v8158
        %9477 = vmatmul.bf16.gmra.mxu0 %v7027
        %v9478 = vpop.f32.mrf.mxu0
        %v9479 = vadd.f32 %v9430, %v9478
        %v9480 = vpop.f32.mrf.mxu0
        %v9481 = vadd.f32 %v9432, %v9480
        %9482 = vmatmul.bf16.gmra.mxu0 %v7035
        %v9483 = vpop.f32.mrf.mxu0
        %v9484 = vadd.f32 %v9435, %v9483
        %v9485 = vpop.f32.mrf.mxu0
        %v9486 = vadd.f32 %v9437, %v9485
        %9487 = vmatmul.bf16.gmra.mxu0 %v7043
        %v9488 = vpop.f32.mrf.mxu0
        %v9489 = vadd.f32 %v9440, %v9488
        %v9490 = vpop.f32.mrf.mxu0
        %v9491 = vadd.f32 %v9442, %v9490
        %9492 = vmatmul.bf16.gmra.mxu0 %v7051
        %v9493 = vpop.f32.mrf.mxu0
        %v9494 = vadd.f32 %v9445, %v9493
        %v9495 = vpop.f32.mrf.mxu0
        %v9496 = vadd.f32 %v9447, %v9495
        %9497 = vmatmul.bf16.gmra.mxu0 %v7059
        %v9498 = vpop.f32.mrf.mxu0
        %v9499 = vadd.f32 %v9450, %v9498
        %v9500 = vpop.f32.mrf.mxu0
        %v9501 = vadd.f32 %v9452, %v9500
        %9502 = vmatmul.bf16.gmra.mxu0 %v7067
        %v9503 = vpop.f32.mrf.mxu0
        %v9504 = vadd.f32 %v9455, %v9503
        %v9505 = vpop.f32.mrf.mxu0
        %v9506 = vadd.f32 %v9457, %v9505
        %9507 = vmatmul.bf16.gmra.mxu0 %v7075
        %v9508 = vpop.f32.mrf.mxu0
        %v9509 = vadd.f32 %v9460, %v9508
        %v9510 = vpop.f32.mrf.mxu0
        %v9511 = vadd.f32 %v9462, %v9510
        %9512 = vmatmul.bf16.gmra.mxu0 %v7083
        %v9513 = vpop.f32.mrf.mxu0
        %v9514 = vadd.f32 %v9465, %v9513
        %v9515 = vpop.f32.mrf.mxu0
        %v9516 = vadd.f32 %v9467, %v9515
        %9517 = vdwg.mxu0
        %9518 = vmatpush.bf16.msra.mxu0 %v8218
        %9519 = vmatpush.bf16.msra.mxu0 %v8214
        %9520 = vmatpush.bf16.msra.mxu0 %v8210
        %9521 = vmatpush.bf16.msra.mxu0 %v8206
        %9522 = vmatpush.bf16.msra.mxu0 %v8202
        %9523 = vmatpush.bf16.msra.mxu0 %v8198
        %9524 = vmatpush.bf16.msra.mxu0 %v8194
        %9525 = vmatpush.bf16.msra.mxu0 %v8190
        %9526 = vmatmul.bf16.gmra.mxu0 %v7028
        %v9527 = vpop.f32.mrf.mxu0
        %v9528 = vadd.f32 %v9479, %v9527
        %v9529 = vpop.f32.mrf.mxu0
        %v9530 = vadd.f32 %v9481, %v9529
        %9531 = vmatmul.bf16.gmra.mxu0 %v7036
        %v9532 = vpop.f32.mrf.mxu0
        %v9533 = vadd.f32 %v9484, %v9532
        %v9534 = vpop.f32.mrf.mxu0
        %v9535 = vadd.f32 %v9486, %v9534
        %9536 = vmatmul.bf16.gmra.mxu0 %v7044
        %v9537 = vpop.f32.mrf.mxu0
        %v9538 = vadd.f32 %v9489, %v9537
        %v9539 = vpop.f32.mrf.mxu0
        %v9540 = vadd.f32 %v9491, %v9539
        %9541 = vmatmul.bf16.gmra.mxu0 %v7052
        %v9542 = vpop.f32.mrf.mxu0
        %v9543 = vadd.f32 %v9494, %v9542
        %v9544 = vpop.f32.mrf.mxu0
        %v9545 = vadd.f32 %v9496, %v9544
        %9546 = vmatmul.bf16.gmra.mxu0 %v7060
        %v9547 = vpop.f32.mrf.mxu0
        %v9548 = vadd.f32 %v9499, %v9547
        %v9549 = vpop.f32.mrf.mxu0
        %v9550 = vadd.f32 %v9501, %v9549
        %9551 = vmatmul.bf16.gmra.mxu0 %v7068
        %v9552 = vpop.f32.mrf.mxu0
        %v9553 = vadd.f32 %v9504, %v9552
        %v9554 = vpop.f32.mrf.mxu0
        %v9555 = vadd.f32 %v9506, %v9554
        %9556 = vmatmul.bf16.gmra.mxu0 %v7076
        %v9557 = vpop.f32.mrf.mxu0
        %v9558 = vadd.f32 %v9509, %v9557
        %v9559 = vpop.f32.mrf.mxu0
        %v9560 = vadd.f32 %v9511, %v9559
        %9561 = vmatmul.bf16.gmra.mxu0 %v7084
        %v9562 = vpop.f32.mrf.mxu0
        %v9563 = vadd.f32 %v9514, %v9562
        %v9564 = vpop.f32.mrf.mxu0
        %v9565 = vadd.f32 %v9516, %v9564
        %9566 = vdwg.mxu0
        %9567 = vmatpush.bf16.msra.mxu0 %v8250
        %9568 = vmatpush.bf16.msra.mxu0 %v8246
        %9569 = vmatpush.bf16.msra.mxu0 %v8242
        %9570 = vmatpush.bf16.msra.mxu0 %v8238
        %9571 = vmatpush.bf16.msra.mxu0 %v8234
        %9572 = vmatpush.bf16.msra.mxu0 %v8230
        %9573 = vmatpush.bf16.msra.mxu0 %v8226
        %9574 = vmatpush.bf16.msra.mxu0 %v8222
        %9575 = vmatmul.bf16.gmra.mxu0 %v7029
        %v9576 = vpop.f32.mrf.mxu0
        %v9577 = vadd.f32 %v9528, %v9576
        %v9578 = vpop.f32.mrf.mxu0
        %v9579 = vadd.f32 %v9530, %v9578
        %9580 = vmatmul.bf16.gmra.mxu0 %v7037
        %v9581 = vpop.f32.mrf.mxu0
        %v9582 = vadd.f32 %v9533, %v9581
        %v9583 = vpop.f32.mrf.mxu0
        %v9584 = vadd.f32 %v9535, %v9583
        %9585 = vmatmul.bf16.gmra.mxu0 %v7045
        %v9586 = vpop.f32.mrf.mxu0
        %v9587 = vadd.f32 %v9538, %v9586
        %v9588 = vpop.f32.mrf.mxu0
        %v9589 = vadd.f32 %v9540, %v9588
        %9590 = vmatmul.bf16.gmra.mxu0 %v7053
        %v9591 = vpop.f32.mrf.mxu0
        %v9592 = vadd.f32 %v9543, %v9591
        %v9593 = vpop.f32.mrf.mxu0
        %v9594 = vadd.f32 %v9545, %v9593
        %9595 = vmatmul.bf16.gmra.mxu0 %v7061
        %v9596 = vpop.f32.mrf.mxu0
        %v9597 = vadd.f32 %v9548, %v9596
        %v9598 = vpop.f32.mrf.mxu0
        %v9599 = vadd.f32 %v9550, %v9598
        %9600 = vmatmul.bf16.gmra.mxu0 %v7069
        %v9601 = vpop.f32.mrf.mxu0
        %v9602 = vadd.f32 %v9553, %v9601
        %v9603 = vpop.f32.mrf.mxu0
        %v9604 = vadd.f32 %v9555, %v9603
        %9605 = vmatmul.bf16.gmra.mxu0 %v7077
        %v9606 = vpop.f32.mrf.mxu0
        %v9607 = vadd.f32 %v9558, %v9606
        %v9608 = vpop.f32.mrf.mxu0
        %v9609 = vadd.f32 %v9560, %v9608
        %9610 = vmatmul.bf16.gmra.mxu0 %v7085
        %v9611 = vpop.f32.mrf.mxu0
        %v9612 = vadd.f32 %v9563, %v9611
        %v9613 = vpop.f32.mrf.mxu0
        %v9614 = vadd.f32 %v9565, %v9613
        %9615 = vdwg.mxu0
        %9616 = vmatpush.bf16.msra.mxu0 %v8282
        %9617 = vmatpush.bf16.msra.mxu0 %v8278
        %9618 = vmatpush.bf16.msra.mxu0 %v8274
        %9619 = vmatpush.bf16.msra.mxu0 %v8270
        %9620 = vmatpush.bf16.msra.mxu0 %v8266
        %9621 = vmatpush.bf16.msra.mxu0 %v8262
        %9622 = vmatpush.bf16.msra.mxu0 %v8258
        %9623 = vmatpush.bf16.msra.mxu0 %v8254
        %9624 = vmatmul.bf16.gmra.mxu0 %v7030
        %v9625 = vpop.f32.mrf.mxu0
        %v9626 = vadd.f32 %v9577, %v9625
        %v9627 = vpop.f32.mrf.mxu0
        %v9628 = vadd.f32 %v9579, %v9627
        %9629 = vmatmul.bf16.gmra.mxu0 %v7038
        %v9630 = vpop.f32.mrf.mxu0
        %v9631 = vadd.f32 %v9582, %v9630
        %v9632 = vpop.f32.mrf.mxu0
        %v9633 = vadd.f32 %v9584, %v9632
        %9634 = vmatmul.bf16.gmra.mxu0 %v7046
        %v9635 = vpop.f32.mrf.mxu0
        %v9636 = vadd.f32 %v9587, %v9635
        %v9637 = vpop.f32.mrf.mxu0
        %v9638 = vadd.f32 %v9589, %v9637
        %9639 = vmatmul.bf16.gmra.mxu0 %v7054
        %v9640 = vpop.f32.mrf.mxu0
        %v9641 = vadd.f32 %v9592, %v9640
        %v9642 = vpop.f32.mrf.mxu0
        %v9643 = vadd.f32 %v9594, %v9642
        %9644 = vmatmul.bf16.gmra.mxu0 %v7062
        %v9645 = vpop.f32.mrf.mxu0
        %v9646 = vadd.f32 %v9597, %v9645
        %v9647 = vpop.f32.mrf.mxu0
        %v9648 = vadd.f32 %v9599, %v9647
        %9649 = vmatmul.bf16.gmra.mxu0 %v7070
        %v9650 = vpop.f32.mrf.mxu0
        %v9651 = vadd.f32 %v9602, %v9650
        %v9652 = vpop.f32.mrf.mxu0
        %v9653 = vadd.f32 %v9604, %v9652
        %9654 = vmatmul.bf16.gmra.mxu0 %v7078
        %v9655 = vpop.f32.mrf.mxu0
        %v9656 = vadd.f32 %v9607, %v9655
        %v9657 = vpop.f32.mrf.mxu0
        %v9658 = vadd.f32 %v9609, %v9657
        %9659 = vmatmul.bf16.gmra.mxu0 %v7086
        %v9660 = vpop.f32.mrf.mxu0
        %v9661 = vadd.f32 %v9612, %v9660
        %v9662 = vpop.f32.mrf.mxu0
        %v9663 = vadd.f32 %v9614, %v9662
        %9664 = vdwg.mxu0
        %9665 = vmatpush.bf16.msra.mxu0 %v8314
        %9666 = vmatpush.bf16.msra.mxu0 %v8310
        %9667 = vmatpush.bf16.msra.mxu0 %v8306
        %9668 = vmatpush.bf16.msra.mxu0 %v8302
        %9669 = vmatpush.bf16.msra.mxu0 %v8298
        %9670 = vmatpush.bf16.msra.mxu0 %v8294
        %9671 = vmatpush.bf16.msra.mxu0 %v8290
        %9672 = vmatpush.bf16.msra.mxu0 %v8286
        %9673 = vmatmul.bf16.gmra.mxu0 %v7031
        %v9674 = vpop.f32.mrf.mxu0
        %v9675 = vadd.f32 %v9626, %v9674
        %v9676 = vpop.f32.mrf.mxu0
        %v9677 = vadd.f32 %v9628, %v9676
        %9678 = vmatmul.bf16.gmra.mxu0 %v7039
        %v9679 = vpop.f32.mrf.mxu0
        %v9680 = vadd.f32 %v9631, %v9679
        %v9681 = vpop.f32.mrf.mxu0
        %v9682 = vadd.f32 %v9633, %v9681
        %9683 = vmatmul.bf16.gmra.mxu0 %v7047
        %v9684 = vpop.f32.mrf.mxu0
        %v9685 = vadd.f32 %v9636, %v9684
        %v9686 = vpop.f32.mrf.mxu0
        %v9687 = vadd.f32 %v9638, %v9686
        %9688 = vmatmul.bf16.gmra.mxu0 %v7055
        %v9689 = vpop.f32.mrf.mxu0
        %v9690 = vadd.f32 %v9641, %v9689
        %v9691 = vpop.f32.mrf.mxu0
        %v9692 = vadd.f32 %v9643, %v9691
        %9693 = vmatmul.bf16.gmra.mxu0 %v7063
        %v9694 = vpop.f32.mrf.mxu0
        %v9695 = vadd.f32 %v9646, %v9694
        %v9696 = vpop.f32.mrf.mxu0
        %v9697 = vadd.f32 %v9648, %v9696
        %9698 = vmatmul.bf16.gmra.mxu0 %v7071
        %v9699 = vpop.f32.mrf.mxu0
        %v9700 = vadd.f32 %v9651, %v9699
        %v9701 = vpop.f32.mrf.mxu0
        %v9702 = vadd.f32 %v9653, %v9701
        %9703 = vmatmul.bf16.gmra.mxu0 %v7079
        %v9704 = vpop.f32.mrf.mxu0
        %v9705 = vadd.f32 %v9656, %v9704
        %v9706 = vpop.f32.mrf.mxu0
        %v9707 = vadd.f32 %v9658, %v9706
        %9708 = vmatmul.bf16.gmra.mxu0 %v7087
        %v9709 = vpop.f32.mrf.mxu0
        %v9710 = vadd.f32 %v9661, %v9709
        %v9711 = vpop.f32.mrf.mxu0
        %v9712 = vadd.f32 %v9663, %v9711
        %9713 = vdwg.mxu0
        %9714 = vmatpush.bf16.msra.mxu0 %v8346
        %9715 = vmatpush.bf16.msra.mxu0 %v8342
        %9716 = vmatpush.bf16.msra.mxu0 %v8338
        %9717 = vmatpush.bf16.msra.mxu0 %v8334
        %9718 = vmatpush.bf16.msra.mxu0 %v8330
        %9719 = vmatpush.bf16.msra.mxu0 %v8326
        %9720 = vmatpush.bf16.msra.mxu0 %v8322
        %9721 = vmatpush.bf16.msra.mxu0 %v8318
        %9722 = vmatmul.bf16.gmra.mxu0 %v7032
        %v9723 = vpop.f32.mrf.mxu0
        %v9724 = vadd.f32 %v9675, %v9723
        %v9725 = vpop.f32.mrf.mxu0
        %v9726 = vadd.f32 %v9677, %v9725
        %9727 = vmatmul.bf16.gmra.mxu0 %v7040
        %v9728 = vpop.f32.mrf.mxu0
        %v9729 = vadd.f32 %v9680, %v9728
        %v9730 = vpop.f32.mrf.mxu0
        %v9731 = vadd.f32 %v9682, %v9730
        %9732 = vmatmul.bf16.gmra.mxu0 %v7048
        %v9733 = vpop.f32.mrf.mxu0
        %v9734 = vadd.f32 %v9685, %v9733
        %v9735 = vpop.f32.mrf.mxu0
        %v9736 = vadd.f32 %v9687, %v9735
        %9737 = vmatmul.bf16.gmra.mxu0 %v7056
        %v9738 = vpop.f32.mrf.mxu0
        %v9739 = vadd.f32 %v9690, %v9738
        %v9740 = vpop.f32.mrf.mxu0
        %v9741 = vadd.f32 %v9692, %v9740
        %9742 = vmatmul.bf16.gmra.mxu0 %v7064
        %v9743 = vpop.f32.mrf.mxu0
        %v9744 = vadd.f32 %v9695, %v9743
        %v9745 = vpop.f32.mrf.mxu0
        %v9746 = vadd.f32 %v9697, %v9745
        %9747 = vmatmul.bf16.gmra.mxu0 %v7072
        %v9748 = vpop.f32.mrf.mxu0
        %v9749 = vadd.f32 %v9700, %v9748
        %v9750 = vpop.f32.mrf.mxu0
        %v9751 = vadd.f32 %v9702, %v9750
        %9752 = vmatmul.bf16.gmra.mxu0 %v7080
        %v9753 = vpop.f32.mrf.mxu0
        %v9754 = vadd.f32 %v9705, %v9753
        %v9755 = vpop.f32.mrf.mxu0
        %v9756 = vadd.f32 %v9707, %v9755
        %9757 = vmatmul.bf16.gmra.mxu0 %v7088
        %v9758 = vpop.f32.mrf.mxu0
        %v9759 = vadd.f32 %v9710, %v9758
        %v9760 = vpop.f32.mrf.mxu0
        %v9761 = vadd.f32 %v9712, %v9760
        %9762 = vdwg.mxu0
        %9763 = vmatpush.bf16.msra.mxu0 %v8378
        %9764 = vmatpush.bf16.msra.mxu0 %v8374
        %9765 = vmatpush.bf16.msra.mxu0 %v8370
        %9766 = vmatpush.bf16.msra.mxu0 %v8366
        %9767 = vmatpush.bf16.msra.mxu0 %v8362
        %9768 = vmatpush.bf16.msra.mxu0 %v8358
        %9769 = vmatpush.bf16.msra.mxu0 %v8354
        %9770 = vmatpush.bf16.msra.mxu0 %v8350
        %9771 = vmatmul.bf16.gmra.mxu0 %v7033
        %v9772 = vpop.f32.mrf.mxu0
        %v9773 = vadd.f32 %v9724, %v9772
        %v9774 = vpop.f32.mrf.mxu0
        %v9775 = vadd.f32 %v9726, %v9774
        %9776 = vmatmul.bf16.gmra.mxu0 %v7041
        %v9777 = vpop.f32.mrf.mxu0
        %v9778 = vadd.f32 %v9729, %v9777
        %v9779 = vpop.f32.mrf.mxu0
        %v9780 = vadd.f32 %v9731, %v9779
        %9781 = vmatmul.bf16.gmra.mxu0 %v7049
        %v9782 = vpop.f32.mrf.mxu0
        %v9783 = vadd.f32 %v9734, %v9782
        %v9784 = vpop.f32.mrf.mxu0
        %v9785 = vadd.f32 %v9736, %v9784
        %9786 = vmatmul.bf16.gmra.mxu0 %v7057
        %v9787 = vpop.f32.mrf.mxu0
        %v9788 = vadd.f32 %v9739, %v9787
        %v9789 = vpop.f32.mrf.mxu0
        %v9790 = vadd.f32 %v9741, %v9789
        %9791 = vmatmul.bf16.gmra.mxu0 %v7065
        %v9792 = vpop.f32.mrf.mxu0
        %v9793 = vadd.f32 %v9744, %v9792
        %v9794 = vpop.f32.mrf.mxu0
        %v9795 = vadd.f32 %v9746, %v9794
        %9796 = vmatmul.bf16.gmra.mxu0 %v7073
        %v9797 = vpop.f32.mrf.mxu0
        %v9798 = vadd.f32 %v9749, %v9797
        %v9799 = vpop.f32.mrf.mxu0
        %v9800 = vadd.f32 %v9751, %v9799
        %9801 = vmatmul.bf16.gmra.mxu0 %v7081
        %v9802 = vpop.f32.mrf.mxu0
        %v9803 = vadd.f32 %v9754, %v9802
        %v9804 = vpop.f32.mrf.mxu0
        %v9805 = vadd.f32 %v9756, %v9804
        %9806 = vmatmul.bf16.gmra.mxu0 %v7089
        %v9807 = vpop.f32.mrf.mxu0
        %v9808 = vadd.f32 %v9759, %v9807
        %v9809 = vpop.f32.mrf.mxu0
        %v9810 = vadd.f32 %v9761, %v9809
        %9811 = vdwg.mxu0
        %9812 = vmatpush.bf16.msra.mxu0 %v8155
        %9813 = vmatpush.bf16.msra.mxu0 %v8151
        %9814 = vmatpush.bf16.msra.mxu0 %v8147
        %9815 = vmatpush.bf16.msra.mxu0 %v8143
        %9816 = vmatpush.bf16.msra.mxu0 %v8139
        %9817 = vmatpush.bf16.msra.mxu0 %v8135
        %9818 = vmatpush.bf16.msra.mxu0 %v8131
        %9819 = vmatpush.bf16.msra.mxu0 %v8127
        %9820 = vmatmul.bf16.gmra.mxu0 %v7026
        %v9821 = vpop.f32.mrf.mxu0
        %v9822 = vadd.f32 %v7351, %v9821
        %v9823 = vpop.f32.mrf.mxu0
        %v9824 = vadd.f32 %v7351, %v9823
        %9825 = vmatmul.bf16.gmra.mxu0 %v7034
        %v9826 = vpop.f32.mrf.mxu0
        %v9827 = vadd.f32 %v7351, %v9826
        %v9828 = vpop.f32.mrf.mxu0
        %v9829 = vadd.f32 %v7351, %v9828
        %9830 = vmatmul.bf16.gmra.mxu0 %v7042
        %v9831 = vpop.f32.mrf.mxu0
        %v9832 = vadd.f32 %v7351, %v9831
        %v9833 = vpop.f32.mrf.mxu0
        %v9834 = vadd.f32 %v7351, %v9833
        %9835 = vmatmul.bf16.gmra.mxu0 %v7050
        %v9836 = vpop.f32.mrf.mxu0
        %v9837 = vadd.f32 %v7351, %v9836
        %v9838 = vpop.f32.mrf.mxu0
        %v9839 = vadd.f32 %v7351, %v9838
        %9840 = vmatmul.bf16.gmra.mxu0 %v7058
        %v9841 = vpop.f32.mrf.mxu0
        %v9842 = vadd.f32 %v7351, %v9841
        %v9843 = vpop.f32.mrf.mxu0
        %v9844 = vadd.f32 %v7351, %v9843
        %9845 = vmatmul.bf16.gmra.mxu0 %v7066
        %v9846 = vpop.f32.mrf.mxu0
        %v9847 = vadd.f32 %v7351, %v9846
        %v9848 = vpop.f32.mrf.mxu0
        %v9849 = vadd.f32 %v7351, %v9848
        %9850 = vmatmul.bf16.gmra.mxu0 %v7074
        %v9851 = vpop.f32.mrf.mxu0
        %v9852 = vadd.f32 %v7351, %v9851
        %v9853 = vpop.f32.mrf.mxu0
        %v9854 = vadd.f32 %v7351, %v9853
        %9855 = vmatmul.bf16.gmra.mxu0 %v7082
        %v9856 = vpop.f32.mrf.mxu0
        %v9857 = vadd.f32 %v7351, %v9856
        %v9858 = vpop.f32.mrf.mxu0
        %v9859 = vadd.f32 %v7351, %v9858
        %9860 = vdwg.mxu0
        %9861 = vmatpush.bf16.msra.mxu0 %v8187
        %9862 = vmatpush.bf16.msra.mxu0 %v8183
        %9863 = vmatpush.bf16.msra.mxu0 %v8179
        %9864 = vmatpush.bf16.msra.mxu0 %v8175
        %9865 = vmatpush.bf16.msra.mxu0 %v8171
        %9866 = vmatpush.bf16.msra.mxu0 %v8167
        %9867 = vmatpush.bf16.msra.mxu0 %v8163
        %9868 = vmatpush.bf16.msra.mxu0 %v8159
        %9869 = vmatmul.bf16.gmra.mxu0 %v7027
        %v9870 = vpop.f32.mrf.mxu0
        %v9871 = vadd.f32 %v9822, %v9870
        %v9872 = vpop.f32.mrf.mxu0
        %v9873 = vadd.f32 %v9824, %v9872
        %9874 = vmatmul.bf16.gmra.mxu0 %v7035
        %v9875 = vpop.f32.mrf.mxu0
        %v9876 = vadd.f32 %v9827, %v9875
        %v9877 = vpop.f32.mrf.mxu0
        %v9878 = vadd.f32 %v9829, %v9877
        %9879 = vmatmul.bf16.gmra.mxu0 %v7043
        %v9880 = vpop.f32.mrf.mxu0
        %v9881 = vadd.f32 %v9832, %v9880
        %v9882 = vpop.f32.mrf.mxu0
        %v9883 = vadd.f32 %v9834, %v9882
        %9884 = vmatmul.bf16.gmra.mxu0 %v7051
        %v9885 = vpop.f32.mrf.mxu0
        %v9886 = vadd.f32 %v9837, %v9885
        %v9887 = vpop.f32.mrf.mxu0
        %v9888 = vadd.f32 %v9839, %v9887
        %9889 = vmatmul.bf16.gmra.mxu0 %v7059
        %v9890 = vpop.f32.mrf.mxu0
        %v9891 = vadd.f32 %v9842, %v9890
        %v9892 = vpop.f32.mrf.mxu0
        %v9893 = vadd.f32 %v9844, %v9892
        %9894 = vmatmul.bf16.gmra.mxu0 %v7067
        %v9895 = vpop.f32.mrf.mxu0
        %v9896 = vadd.f32 %v9847, %v9895
        %v9897 = vpop.f32.mrf.mxu0
        %v9898 = vadd.f32 %v9849, %v9897
        %9899 = vmatmul.bf16.gmra.mxu0 %v7075
        %v9900 = vpop.f32.mrf.mxu0
        %v9901 = vadd.f32 %v9852, %v9900
        %v9902 = vpop.f32.mrf.mxu0
        %v9903 = vadd.f32 %v9854, %v9902
        %9904 = vmatmul.bf16.gmra.mxu0 %v7083
        %v9905 = vpop.f32.mrf.mxu0
        %v9906 = vadd.f32 %v9857, %v9905
        %v9907 = vpop.f32.mrf.mxu0
        %v9908 = vadd.f32 %v9859, %v9907
        %9909 = vdwg.mxu0
        %9910 = vmatpush.bf16.msra.mxu0 %v8219
        %9911 = vmatpush.bf16.msra.mxu0 %v8215
        %9912 = vmatpush.bf16.msra.mxu0 %v8211
        %9913 = vmatpush.bf16.msra.mxu0 %v8207
        %9914 = vmatpush.bf16.msra.mxu0 %v8203
        %9915 = vmatpush.bf16.msra.mxu0 %v8199
        %9916 = vmatpush.bf16.msra.mxu0 %v8195
        %9917 = vmatpush.bf16.msra.mxu0 %v8191
        %9918 = vmatmul.bf16.gmra.mxu0 %v7028
        %v9919 = vpop.f32.mrf.mxu0
        %v9920 = vadd.f32 %v9871, %v9919
        %v9921 = vpop.f32.mrf.mxu0
        %v9922 = vadd.f32 %v9873, %v9921
        %9923 = vmatmul.bf16.gmra.mxu0 %v7036
        %v9924 = vpop.f32.mrf.mxu0
        %v9925 = vadd.f32 %v9876, %v9924
        %v9926 = vpop.f32.mrf.mxu0
        %v9927 = vadd.f32 %v9878, %v9926
        %9928 = vmatmul.bf16.gmra.mxu0 %v7044
        %v9929 = vpop.f32.mrf.mxu0
        %v9930 = vadd.f32 %v9881, %v9929
        %v9931 = vpop.f32.mrf.mxu0
        %v9932 = vadd.f32 %v9883, %v9931
        %9933 = vmatmul.bf16.gmra.mxu0 %v7052
        %v9934 = vpop.f32.mrf.mxu0
        %v9935 = vadd.f32 %v9886, %v9934
        %v9936 = vpop.f32.mrf.mxu0
        %v9937 = vadd.f32 %v9888, %v9936
        %9938 = vmatmul.bf16.gmra.mxu0 %v7060
        %v9939 = vpop.f32.mrf.mxu0
        %v9940 = vadd.f32 %v9891, %v9939
        %v9941 = vpop.f32.mrf.mxu0
        %v9942 = vadd.f32 %v9893, %v9941
        %9943 = vmatmul.bf16.gmra.mxu0 %v7068
        %v9944 = vpop.f32.mrf.mxu0
        %v9945 = vadd.f32 %v9896, %v9944
        %v9946 = vpop.f32.mrf.mxu0
        %v9947 = vadd.f32 %v9898, %v9946
        %9948 = vmatmul.bf16.gmra.mxu0 %v7076
        %v9949 = vpop.f32.mrf.mxu0
        %v9950 = vadd.f32 %v9901, %v9949
        %v9951 = vpop.f32.mrf.mxu0
        %v9952 = vadd.f32 %v9903, %v9951
        %9953 = vmatmul.bf16.gmra.mxu0 %v7084
        %v9954 = vpop.f32.mrf.mxu0
        %v9955 = vadd.f32 %v9906, %v9954
        %v9956 = vpop.f32.mrf.mxu0
        %v9957 = vadd.f32 %v9908, %v9956
        %9958 = vdwg.mxu0
        %9959 = vmatpush.bf16.msra.mxu0 %v8251
        %9960 = vmatpush.bf16.msra.mxu0 %v8247
        %9961 = vmatpush.bf16.msra.mxu0 %v8243
        %9962 = vmatpush.bf16.msra.mxu0 %v8239
        %9963 = vmatpush.bf16.msra.mxu0 %v8235
        %9964 = vmatpush.bf16.msra.mxu0 %v8231
        %9965 = vmatpush.bf16.msra.mxu0 %v8227
        %9966 = vmatpush.bf16.msra.mxu0 %v8223
        %9967 = vmatmul.bf16.gmra.mxu0 %v7029
        %v9968 = vpop.f32.mrf.mxu0
        %v9969 = vadd.f32 %v9920, %v9968
        %v9970 = vpop.f32.mrf.mxu0
        %v9971 = vadd.f32 %v9922, %v9970
        %9972 = vmatmul.bf16.gmra.mxu0 %v7037
        %v9973 = vpop.f32.mrf.mxu0
        %v9974 = vadd.f32 %v9925, %v9973
        %v9975 = vpop.f32.mrf.mxu0
        %v9976 = vadd.f32 %v9927, %v9975
        %9977 = vmatmul.bf16.gmra.mxu0 %v7045
        %v9978 = vpop.f32.mrf.mxu0
        %v9979 = vadd.f32 %v9930, %v9978
        %v9980 = vpop.f32.mrf.mxu0
        %v9981 = vadd.f32 %v9932, %v9980
        %9982 = vmatmul.bf16.gmra.mxu0 %v7053
        %v9983 = vpop.f32.mrf.mxu0
        %v9984 = vadd.f32 %v9935, %v9983
        %v9985 = vpop.f32.mrf.mxu0
        %v9986 = vadd.f32 %v9937, %v9985
        %9987 = vmatmul.bf16.gmra.mxu0 %v7061
        %v9988 = vpop.f32.mrf.mxu0
        %v9989 = vadd.f32 %v9940, %v9988
        %v9990 = vpop.f32.mrf.mxu0
        %v9991 = vadd.f32 %v9942, %v9990
        %9992 = vmatmul.bf16.gmra.mxu0 %v7069
        %v9993 = vpop.f32.mrf.mxu0
        %v9994 = vadd.f32 %v9945, %v9993
        %v9995 = vpop.f32.mrf.mxu0
        %v9996 = vadd.f32 %v9947, %v9995
        %9997 = vmatmul.bf16.gmra.mxu0 %v7077
        %v9998 = vpop.f32.mrf.mxu0
        %v9999 = vadd.f32 %v9950, %v9998
        %v10000 = vpop.f32.mrf.mxu0
        %v10001 = vadd.f32 %v9952, %v10000
        %10002 = vmatmul.bf16.gmra.mxu0 %v7085
        %v10003 = vpop.f32.mrf.mxu0
        %v10004 = vadd.f32 %v9955, %v10003
        %v10005 = vpop.f32.mrf.mxu0
        %v10006 = vadd.f32 %v9957, %v10005
        %10007 = vdwg.mxu0
        %10008 = vmatpush.bf16.msra.mxu0 %v8283
        %10009 = vmatpush.bf16.msra.mxu0 %v8279
        %10010 = vmatpush.bf16.msra.mxu0 %v8275
        %10011 = vmatpush.bf16.msra.mxu0 %v8271
        %10012 = vmatpush.bf16.msra.mxu0 %v8267
        %10013 = vmatpush.bf16.msra.mxu0 %v8263
        %10014 = vmatpush.bf16.msra.mxu0 %v8259
        %10015 = vmatpush.bf16.msra.mxu0 %v8255
        %10016 = vmatmul.bf16.gmra.mxu0 %v7030
        %v10017 = vpop.f32.mrf.mxu0
        %v10018 = vadd.f32 %v9969, %v10017
        %v10019 = vpop.f32.mrf.mxu0
        %v10020 = vadd.f32 %v9971, %v10019
        %10021 = vmatmul.bf16.gmra.mxu0 %v7038
        %v10022 = vpop.f32.mrf.mxu0
        %v10023 = vadd.f32 %v9974, %v10022
        %v10024 = vpop.f32.mrf.mxu0
        %v10025 = vadd.f32 %v9976, %v10024
        %10026 = vmatmul.bf16.gmra.mxu0 %v7046
        %v10027 = vpop.f32.mrf.mxu0
        %v10028 = vadd.f32 %v9979, %v10027
        %v10029 = vpop.f32.mrf.mxu0
        %v10030 = vadd.f32 %v9981, %v10029
        %10031 = vmatmul.bf16.gmra.mxu0 %v7054
        %v10032 = vpop.f32.mrf.mxu0
        %v10033 = vadd.f32 %v9984, %v10032
        %v10034 = vpop.f32.mrf.mxu0
        %v10035 = vadd.f32 %v9986, %v10034
        %10036 = vmatmul.bf16.gmra.mxu0 %v7062
        %v10037 = vpop.f32.mrf.mxu0
        %v10038 = vadd.f32 %v9989, %v10037
        %v10039 = vpop.f32.mrf.mxu0
        %v10040 = vadd.f32 %v9991, %v10039
        %10041 = vmatmul.bf16.gmra.mxu0 %v7070
        %v10042 = vpop.f32.mrf.mxu0
        %v10043 = vadd.f32 %v9994, %v10042
        %v10044 = vpop.f32.mrf.mxu0
        %v10045 = vadd.f32 %v9996, %v10044
        %10046 = vmatmul.bf16.gmra.mxu0 %v7078
        %v10047 = vpop.f32.mrf.mxu0
        %v10048 = vadd.f32 %v9999, %v10047
        %v10049 = vpop.f32.mrf.mxu0
        %v10050 = vadd.f32 %v10001, %v10049
        %10051 = vmatmul.bf16.gmra.mxu0 %v7086
        %v10052 = vpop.f32.mrf.mxu0
        %v10053 = vadd.f32 %v10004, %v10052
        %v10054 = vpop.f32.mrf.mxu0
        %v10055 = vadd.f32 %v10006, %v10054
        %10056 = vdwg.mxu0
        %10057 = vmatpush.bf16.msra.mxu0 %v8315
        %10058 = vmatpush.bf16.msra.mxu0 %v8311
        %10059 = vmatpush.bf16.msra.mxu0 %v8307
        %10060 = vmatpush.bf16.msra.mxu0 %v8303
        %10061 = vmatpush.bf16.msra.mxu0 %v8299
        %10062 = vmatpush.bf16.msra.mxu0 %v8295
        %10063 = vmatpush.bf16.msra.mxu0 %v8291
        %10064 = vmatpush.bf16.msra.mxu0 %v8287
        %10065 = vmatmul.bf16.gmra.mxu0 %v7031
        %v10066 = vpop.f32.mrf.mxu0
        %v10067 = vadd.f32 %v10018, %v10066
        %v10068 = vpop.f32.mrf.mxu0
        %v10069 = vadd.f32 %v10020, %v10068
        %10070 = vmatmul.bf16.gmra.mxu0 %v7039
        %v10071 = vpop.f32.mrf.mxu0
        %v10072 = vadd.f32 %v10023, %v10071
        %v10073 = vpop.f32.mrf.mxu0
        %v10074 = vadd.f32 %v10025, %v10073
        %10075 = vmatmul.bf16.gmra.mxu0 %v7047
        %v10076 = vpop.f32.mrf.mxu0
        %v10077 = vadd.f32 %v10028, %v10076
        %v10078 = vpop.f32.mrf.mxu0
        %v10079 = vadd.f32 %v10030, %v10078
        %10080 = vmatmul.bf16.gmra.mxu0 %v7055
        %v10081 = vpop.f32.mrf.mxu0
        %v10082 = vadd.f32 %v10033, %v10081
        %v10083 = vpop.f32.mrf.mxu0
        %v10084 = vadd.f32 %v10035, %v10083
        %10085 = vmatmul.bf16.gmra.mxu0 %v7063
        %v10086 = vpop.f32.mrf.mxu0
        %v10087 = vadd.f32 %v10038, %v10086
        %v10088 = vpop.f32.mrf.mxu0
        %v10089 = vadd.f32 %v10040, %v10088
        %10090 = vmatmul.bf16.gmra.mxu0 %v7071
        %v10091 = vpop.f32.mrf.mxu0
        %v10092 = vadd.f32 %v10043, %v10091
        %v10093 = vpop.f32.mrf.mxu0
        %v10094 = vadd.f32 %v10045, %v10093
        %10095 = vmatmul.bf16.gmra.mxu0 %v7079
        %v10096 = vpop.f32.mrf.mxu0
        %v10097 = vadd.f32 %v10048, %v10096
        %v10098 = vpop.f32.mrf.mxu0
        %v10099 = vadd.f32 %v10050, %v10098
        %10100 = vmatmul.bf16.gmra.mxu0 %v7087
        %v10101 = vpop.f32.mrf.mxu0
        %v10102 = vadd.f32 %v10053, %v10101
        %v10103 = vpop.f32.mrf.mxu0
        %v10104 = vadd.f32 %v10055, %v10103
        %10105 = vdwg.mxu0
        %10106 = vmatpush.bf16.msra.mxu0 %v8347
        %10107 = vmatpush.bf16.msra.mxu0 %v8343
        %10108 = vmatpush.bf16.msra.mxu0 %v8339
        %10109 = vmatpush.bf16.msra.mxu0 %v8335
        %10110 = vmatpush.bf16.msra.mxu0 %v8331
        %10111 = vmatpush.bf16.msra.mxu0 %v8327
        %10112 = vmatpush.bf16.msra.mxu0 %v8323
        %10113 = vmatpush.bf16.msra.mxu0 %v8319
        %10114 = vmatmul.bf16.gmra.mxu0 %v7032
        %v10115 = vpop.f32.mrf.mxu0
        %v10116 = vadd.f32 %v10067, %v10115
        %v10117 = vpop.f32.mrf.mxu0
        %v10118 = vadd.f32 %v10069, %v10117
        %10119 = vmatmul.bf16.gmra.mxu0 %v7040
        %v10120 = vpop.f32.mrf.mxu0
        %v10121 = vadd.f32 %v10072, %v10120
        %v10122 = vpop.f32.mrf.mxu0
        %v10123 = vadd.f32 %v10074, %v10122
        %10124 = vmatmul.bf16.gmra.mxu0 %v7048
        %v10125 = vpop.f32.mrf.mxu0
        %v10126 = vadd.f32 %v10077, %v10125
        %v10127 = vpop.f32.mrf.mxu0
        %v10128 = vadd.f32 %v10079, %v10127
        %10129 = vmatmul.bf16.gmra.mxu0 %v7056
        %v10130 = vpop.f32.mrf.mxu0
        %v10131 = vadd.f32 %v10082, %v10130
        %v10132 = vpop.f32.mrf.mxu0
        %v10133 = vadd.f32 %v10084, %v10132
        %10134 = vmatmul.bf16.gmra.mxu0 %v7064
        %v10135 = vpop.f32.mrf.mxu0
        %v10136 = vadd.f32 %v10087, %v10135
        %v10137 = vpop.f32.mrf.mxu0
        %v10138 = vadd.f32 %v10089, %v10137
        %10139 = vmatmul.bf16.gmra.mxu0 %v7072
        %v10140 = vpop.f32.mrf.mxu0
        %v10141 = vadd.f32 %v10092, %v10140
        %v10142 = vpop.f32.mrf.mxu0
        %v10143 = vadd.f32 %v10094, %v10142
        %10144 = vmatmul.bf16.gmra.mxu0 %v7080
        %v10145 = vpop.f32.mrf.mxu0
        %v10146 = vadd.f32 %v10097, %v10145
        %v10147 = vpop.f32.mrf.mxu0
        %v10148 = vadd.f32 %v10099, %v10147
        %10149 = vmatmul.bf16.gmra.mxu0 %v7088
        %v10150 = vpop.f32.mrf.mxu0
        %v10151 = vadd.f32 %v10102, %v10150
        %v10152 = vpop.f32.mrf.mxu0
        %v10153 = vadd.f32 %v10104, %v10152
        %10154 = vdwg.mxu0
        %10155 = vmatpush.bf16.msra.mxu0 %v8379
        %10156 = vmatpush.bf16.msra.mxu0 %v8375
        %10157 = vmatpush.bf16.msra.mxu0 %v8371
        %10158 = vmatpush.bf16.msra.mxu0 %v8367
        %10159 = vmatpush.bf16.msra.mxu0 %v8363
        %10160 = vmatpush.bf16.msra.mxu0 %v8359
        %10161 = vmatpush.bf16.msra.mxu0 %v8355
        %10162 = vmatpush.bf16.msra.mxu0 %v8351
        %10163 = vmatmul.bf16.gmra.mxu0 %v7033
        %v10164 = vpop.f32.mrf.mxu0
        %v10165 = vadd.f32 %v10116, %v10164
        %v10166 = vpop.f32.mrf.mxu0
        %v10167 = vadd.f32 %v10118, %v10166
        %10168 = vmatmul.bf16.gmra.mxu0 %v7041
        %v10169 = vpop.f32.mrf.mxu0
        %v10170 = vadd.f32 %v10121, %v10169
        %v10171 = vpop.f32.mrf.mxu0
        %v10172 = vadd.f32 %v10123, %v10171
        %10173 = vmatmul.bf16.gmra.mxu0 %v7049
        %v10174 = vpop.f32.mrf.mxu0
        %v10175 = vadd.f32 %v10126, %v10174
        %v10176 = vpop.f32.mrf.mxu0
        %v10177 = vadd.f32 %v10128, %v10176
        %10178 = vmatmul.bf16.gmra.mxu0 %v7057
        %v10179 = vpop.f32.mrf.mxu0
        %v10180 = vadd.f32 %v10131, %v10179
        %v10181 = vpop.f32.mrf.mxu0
        %v10182 = vadd.f32 %v10133, %v10181
        %10183 = vmatmul.bf16.gmra.mxu0 %v7065
        %v10184 = vpop.f32.mrf.mxu0
        %v10185 = vadd.f32 %v10136, %v10184
        %v10186 = vpop.f32.mrf.mxu0
        %v10187 = vadd.f32 %v10138, %v10186
        %10188 = vmatmul.bf16.gmra.mxu0 %v7073
        %v10189 = vpop.f32.mrf.mxu0
        %v10190 = vadd.f32 %v10141, %v10189
        %v10191 = vpop.f32.mrf.mxu0
        %v10192 = vadd.f32 %v10143, %v10191
        %10193 = vmatmul.bf16.gmra.mxu0 %v7081
        %v10194 = vpop.f32.mrf.mxu0
        %v10195 = vadd.f32 %v10146, %v10194
        %v10196 = vpop.f32.mrf.mxu0
        %v10197 = vadd.f32 %v10148, %v10196
        %10198 = vmatmul.bf16.gmra.mxu0 %v7089
        %v10199 = vpop.f32.mrf.mxu0
        %v10200 = vadd.f32 %v10151, %v10199
        %v10201 = vpop.f32.mrf.mxu0
        %v10202 = vadd.f32 %v10153, %v10201
        %10203 = vdwg.mxu0
        %v10204 = vmax.f32 %v8989, 0.0
        %v10205 = vmax.f32 %v9381, 0.0
        %v10206 = vmax.f32 %v9773, 0.0
        %v10207 = vmax.f32 %v10165, 0.0
        %v10208 = vmax.f32 %v8991, 0.0
        %v10209 = vmax.f32 %v9383, 0.0
        %v10210 = vmax.f32 %v9775, 0.0
        %v10211 = vmax.f32 %v10167, 0.0
        %v10212 = vmax.f32 %v8994, 0.0
        %v10213 = vmax.f32 %v9386, 0.0
        %v10214 = vmax.f32 %v9778, 0.0
        %v10215 = vmax.f32 %v10170, 0.0
        %v10216 = vmax.f32 %v8996, 0.0
        %v10217 = vmax.f32 %v9388, 0.0
        %v10218 = vmax.f32 %v9780, 0.0
        %v10219 = vmax.f32 %v10172, 0.0
        %v10220 = vmax.f32 %v8999, 0.0
        %v10221 = vmax.f32 %v9391, 0.0
        %v10222 = vmax.f32 %v9783, 0.0
        %v10223 = vmax.f32 %v10175, 0.0
        %v10224 = vmax.f32 %v9001, 0.0
        %v10225 = vmax.f32 %v9393, 0.0
        %v10226 = vmax.f32 %v9785, 0.0
        %v10227 = vmax.f32 %v10177, 0.0
        %v10228 = vmax.f32 %v9004, 0.0
        %v10229 = vmax.f32 %v9396, 0.0
        %v10230 = vmax.f32 %v9788, 0.0
        %v10231 = vmax.f32 %v10180, 0.0
        %v10232 = vmax.f32 %v9006, 0.0
        %v10233 = vmax.f32 %v9398, 0.0
        %v10234 = vmax.f32 %v9790, 0.0
        %v10235 = vmax.f32 %v10182, 0.0
        %v10236 = vmax.f32 %v9009, 0.0
        %v10237 = vmax.f32 %v9401, 0.0
        %v10238 = vmax.f32 %v9793, 0.0
        %v10239 = vmax.f32 %v10185, 0.0
        %v10240 = vmax.f32 %v9011, 0.0
        %v10241 = vmax.f32 %v9403, 0.0
        %v10242 = vmax.f32 %v9795, 0.0
        %v10243 = vmax.f32 %v10187, 0.0
        %v10244 = vmax.f32 %v9014, 0.0
        %v10245 = vmax.f32 %v9406, 0.0
        %v10246 = vmax.f32 %v9798, 0.0
        %v10247 = vmax.f32 %v10190, 0.0
        %v10248 = vmax.f32 %v9016, 0.0
        %v10249 = vmax.f32 %v9408, 0.0
        %v10250 = vmax.f32 %v9800, 0.0
        %v10251 = vmax.f32 %v10192, 0.0
        %v10252 = vmax.f32 %v9019, 0.0
        %v10253 = vmax.f32 %v9411, 0.0
        %v10254 = vmax.f32 %v9803, 0.0
        %v10255 = vmax.f32 %v10195, 0.0
        %v10256 = vmax.f32 %v9021, 0.0
        %v10257 = vmax.f32 %v9413, 0.0
        %v10258 = vmax.f32 %v9805, 0.0
        %v10259 = vmax.f32 %v10197, 0.0
        %v10260 = vmax.f32 %v9024, 0.0
        %v10261 = vmax.f32 %v9416, 0.0
        %v10262 = vmax.f32 %v9808, 0.0
        %v10263 = vmax.f32 %v10200, 0.0
        %v10264 = vmax.f32 %v9026, 0.0
        %v10265 = vmax.f32 %v9418, 0.0
        %v10266 = vmax.f32 %v9810, 0.0
        %v10267 = vmax.f32 %v10202, 0.0
        %v10268 = vpack.c.bf16 %v10208, %v10204
        %v10269 = vpack.c.bf16 %v10209, %v10205
        %v10270 = vpack.c.bf16 %v10210, %v10206
        %v10271 = vpack.c.bf16 %v10211, %v10207
        %v10272 = vpack.c.bf16 %v10216, %v10212
        %v10273 = vpack.c.bf16 %v10217, %v10213
        %v10274 = vpack.c.bf16 %v10218, %v10214
        %v10275 = vpack.c.bf16 %v10219, %v10215
        %v10276 = vpack.c.bf16 %v10224, %v10220
        %v10277 = vpack.c.bf16 %v10225, %v10221
        %v10278 = vpack.c.bf16 %v10226, %v10222
        %v10279 = vpack.c.bf16 %v10227, %v10223
        %v10280 = vpack.c.bf16 %v10232, %v10228
        %v10281 = vpack.c.bf16 %v10233, %v10229
        %v10282 = vpack.c.bf16 %v10234, %v10230
        %v10283 = vpack.c.bf16 %v10235, %v10231
        %v10284 = vpack.c.bf16 %v10240, %v10236
        %v10285 = vpack.c.bf16 %v10241, %v10237
        %v10286 = vpack.c.bf16 %v10242, %v10238
        %v10287 = vpack.c.bf16 %v10243, %v10239
        %v10288 = vpack.c.bf16 %v10248, %v10244
        %v10289 = vpack.c.bf16 %v10249, %v10245
        %v10290 = vpack.c.bf16 %v10250, %v10246
        %v10291 = vpack.c.bf16 %v10251, %v10247
        %v10292 = vpack.c.bf16 %v10256, %v10252
        %v10293 = vpack.c.bf16 %v10257, %v10253
        %v10294 = vpack.c.bf16 %v10258, %v10254
        %v10295 = vpack.c.bf16 %v10259, %v10255
        %v10296 = vpack.c.bf16 %v10264, %v10260
        %v10297 = vpack.c.bf16 %v10265, %v10261
        %v10298 = vpack.c.bf16 %v10266, %v10262
        %v10299 = vpack.c.bf16 %v10267, %v10263
        %v10300 = vld [vmem:[#allocation11] sm:$0xff]
        %v10301 = vld [vmem:[#allocation11 + $0x8] sm:$0xff]
        %v10302 = vld [vmem:[#allocation11 + $0x10] sm:$0xff]
        %v10303 = vld [vmem:[#allocation11 + $0x18] sm:$0xff]
        %v10304 = vld [vmem:[#allocation11 + $0x20] sm:$0xff]
        %v10305 = vld [vmem:[#allocation11 + $0x28] sm:$0xff]
        %v10306 = vld [vmem:[#allocation11 + $0x30] sm:$0xff]
        %v10307 = vld [vmem:[#allocation11 + $0x38] sm:$0xff]
        %v10308 = vld [vmem:[#allocation11 + $0x40] sm:$0xff]
        %v10309 = vld [vmem:[#allocation11 + $0x48] sm:$0xff]
        %v10310 = vld [vmem:[#allocation11 + $0x50] sm:$0xff]
        %v10311 = vld [vmem:[#allocation11 + $0x58] sm:$0xff]
        %v10312 = vld [vmem:[#allocation11 + $0x60] sm:$0xff]
        %v10313 = vld [vmem:[#allocation11 + $0x68] sm:$0xff]
        %v10314 = vld [vmem:[#allocation11 + $0x70] sm:$0xff]
        %v10315 = vld [vmem:[#allocation11 + $0x78] sm:$0xff]
        %v10316 = vld [vmem:[#allocation11 + $0x80] sm:$0xff]
        %v10317 = vld [vmem:[#allocation11 + $0x88] sm:$0xff]
        %v10318 = vld [vmem:[#allocation11 + $0x90] sm:$0xff]
        %v10319 = vld [vmem:[#allocation11 + $0x98] sm:$0xff]
        %v10320 = vld [vmem:[#allocation11 + $0xa0] sm:$0xff]
        %v10321 = vld [vmem:[#allocation11 + $0xa8] sm:$0xff]
        %v10322 = vld [vmem:[#allocation11 + $0xb0] sm:$0xff]
        %v10323 = vld [vmem:[#allocation11 + $0xb8] sm:$0xff]
        %v10324 = vld [vmem:[#allocation11 + $0xc0] sm:$0xff]
        %v10325 = vld [vmem:[#allocation11 + $0xc8] sm:$0xff]
        %v10326 = vld [vmem:[#allocation11 + $0xd0] sm:$0xff]
        %v10327 = vld [vmem:[#allocation11 + $0xd8] sm:$0xff]
        %v10328 = vld [vmem:[#allocation11 + $0xe0] sm:$0xff]
        %v10329 = vld [vmem:[#allocation11 + $0xe8] sm:$0xff]
        %v10330 = vld [vmem:[#allocation11 + $0xf0] sm:$0xff]
        %v10331 = vld [vmem:[#allocation11 + $0xf8] sm:$0xff]
        %v10332 = vld [vmem:[#allocation11 + $0x100] sm:$0xff]
        %v10333 = vld [vmem:[#allocation11 + $0x108] sm:$0xff]
        %v10334 = vld [vmem:[#allocation11 + $0x110] sm:$0xff]
        %v10335 = vld [vmem:[#allocation11 + $0x118] sm:$0xff]
        %v10336 = vld [vmem:[#allocation11 + $0x120] sm:$0xff]
        %v10337 = vld [vmem:[#allocation11 + $0x128] sm:$0xff]
        %v10338 = vld [vmem:[#allocation11 + $0x130] sm:$0xff]
        %v10339 = vld [vmem:[#allocation11 + $0x138] sm:$0xff]
        %v10340 = vld [vmem:[#allocation11 + $0x140] sm:$0xff]
        %v10341 = vld [vmem:[#allocation11 + $0x148] sm:$0xff]
        %v10342 = vld [vmem:[#allocation11 + $0x150] sm:$0xff]
        %v10343 = vld [vmem:[#allocation11 + $0x158] sm:$0xff]
        %v10344 = vld [vmem:[#allocation11 + $0x160] sm:$0xff]
        %v10345 = vld [vmem:[#allocation11 + $0x168] sm:$0xff]
        %v10346 = vld [vmem:[#allocation11 + $0x170] sm:$0xff]
        %v10347 = vld [vmem:[#allocation11 + $0x178] sm:$0xff]
        %v10348 = vld [vmem:[#allocation11 + $0x180] sm:$0xff]
        %v10349 = vld [vmem:[#allocation11 + $0x188] sm:$0xff]
        %v10350 = vld [vmem:[#allocation11 + $0x190] sm:$0xff]
        %v10351 = vld [vmem:[#allocation11 + $0x198] sm:$0xff]
        %v10352 = vld [vmem:[#allocation11 + $0x1a0] sm:$0xff]
        %v10353 = vld [vmem:[#allocation11 + $0x1a8] sm:$0xff]
        %v10354 = vld [vmem:[#allocation11 + $0x1b0] sm:$0xff]
        %v10355 = vld [vmem:[#allocation11 + $0x1b8] sm:$0xff]
        %v10356 = vld [vmem:[#allocation11 + $0x1c0] sm:$0xff]
        %v10357 = vld [vmem:[#allocation11 + $0x1c8] sm:$0xff]
        %v10358 = vld [vmem:[#allocation11 + $0x1d0] sm:$0xff]
        %v10359 = vld [vmem:[#allocation11 + $0x1d8] sm:$0xff]
        %v10360 = vld [vmem:[#allocation11 + $0x1e0] sm:$0xff]
        %v10361 = vld [vmem:[#allocation11 + $0x1e8] sm:$0xff]
        %v10362 = vld [vmem:[#allocation11 + $0x1f0] sm:$0xff]
        %v10363 = vld [vmem:[#allocation11 + $0x1f8] sm:$0xff]
        %v10364 = vld [vmem:[#allocation13] sm:$0x3]
        %v10366 = vperm.slane %v10364, 0
        %v10367 = vperm.slane %v10364, 1
        %v10434 = vunpack.c.l.b16 %v10300
        %v10435 = vunpack.c.h.b16 %v10300
        %v10436 = vunpack.c.l.b16 %v10301
        %v10437 = vunpack.c.h.b16 %v10301
        %v10438 = vunpack.c.l.b16 %v10302
        %v10439 = vunpack.c.h.b16 %v10302
        %v10440 = vunpack.c.l.b16 %v10303
        %v10441 = vunpack.c.h.b16 %v10303
        %v10442 = vunpack.c.l.b16 %v10304
        %v10443 = vunpack.c.h.b16 %v10304
        %v10444 = vunpack.c.l.b16 %v10305
        %v10445 = vunpack.c.h.b16 %v10305
        %v10446 = vunpack.c.l.b16 %v10306
        %v10447 = vunpack.c.h.b16 %v10306
        %v10448 = vunpack.c.l.b16 %v10307
        %v10449 = vunpack.c.h.b16 %v10307
        %v10450 = vunpack.c.l.b16 %v10308
        %v10451 = vunpack.c.h.b16 %v10308
        %v10452 = vunpack.c.l.b16 %v10309
        %v10453 = vunpack.c.h.b16 %v10309
        %v10454 = vunpack.c.l.b16 %v10310
        %v10455 = vunpack.c.h.b16 %v10310
        %v10456 = vunpack.c.l.b16 %v10311
        %v10457 = vunpack.c.h.b16 %v10311
        %v10458 = vunpack.c.l.b16 %v10312
        %v10459 = vunpack.c.h.b16 %v10312
        %v10460 = vunpack.c.l.b16 %v10313
        %v10461 = vunpack.c.h.b16 %v10313
        %v10462 = vunpack.c.l.b16 %v10314
        %v10463 = vunpack.c.h.b16 %v10314
        %v10464 = vunpack.c.l.b16 %v10315
        %v10465 = vunpack.c.h.b16 %v10315
        %v10466 = vunpack.c.l.b16 %v10316
        %v10467 = vunpack.c.h.b16 %v10316
        %v10468 = vunpack.c.l.b16 %v10317
        %v10469 = vunpack.c.h.b16 %v10317
        %v10470 = vunpack.c.l.b16 %v10318
        %v10471 = vunpack.c.h.b16 %v10318
        %v10472 = vunpack.c.l.b16 %v10319
        %v10473 = vunpack.c.h.b16 %v10319
        %v10474 = vunpack.c.l.b16 %v10320
        %v10475 = vunpack.c.h.b16 %v10320
        %v10476 = vunpack.c.l.b16 %v10321
        %v10477 = vunpack.c.h.b16 %v10321
        %v10478 = vunpack.c.l.b16 %v10322
        %v10479 = vunpack.c.h.b16 %v10322
        %v10480 = vunpack.c.l.b16 %v10323
        %v10481 = vunpack.c.h.b16 %v10323
        %v10482 = vunpack.c.l.b16 %v10324
        %v10483 = vunpack.c.h.b16 %v10324
        %v10484 = vunpack.c.l.b16 %v10325
        %v10485 = vunpack.c.h.b16 %v10325
        %v10486 = vunpack.c.l.b16 %v10326
        %v10487 = vunpack.c.h.b16 %v10326
        %v10488 = vunpack.c.l.b16 %v10327
        %v10489 = vunpack.c.h.b16 %v10327
        %v10490 = vunpack.c.l.b16 %v10328
        %v10491 = vunpack.c.h.b16 %v10328
        %v10492 = vunpack.c.l.b16 %v10329
        %v10493 = vunpack.c.h.b16 %v10329
        %v10494 = vunpack.c.l.b16 %v10330
        %v10495 = vunpack.c.h.b16 %v10330
        %v10496 = vunpack.c.l.b16 %v10331
        %v10497 = vunpack.c.h.b16 %v10331
        %v10498 = vunpack.c.l.b16 %v10332
        %v10499 = vunpack.c.h.b16 %v10332
        %v10500 = vunpack.c.l.b16 %v10333
        %v10501 = vunpack.c.h.b16 %v10333
        %v10502 = vunpack.c.l.b16 %v10334
        %v10503 = vunpack.c.h.b16 %v10334
        %v10504 = vunpack.c.l.b16 %v10335
        %v10505 = vunpack.c.h.b16 %v10335
        %v10506 = vunpack.c.l.b16 %v10336
        %v10507 = vunpack.c.h.b16 %v10336
        %v10508 = vunpack.c.l.b16 %v10337
        %v10509 = vunpack.c.h.b16 %v10337
        %v10510 = vunpack.c.l.b16 %v10338
        %v10511 = vunpack.c.h.b16 %v10338
        %v10512 = vunpack.c.l.b16 %v10339
        %v10513 = vunpack.c.h.b16 %v10339
        %v10514 = vunpack.c.l.b16 %v10340
        %v10515 = vunpack.c.h.b16 %v10340
        %v10516 = vunpack.c.l.b16 %v10341
        %v10517 = vunpack.c.h.b16 %v10341
        %v10518 = vunpack.c.l.b16 %v10342
        %v10519 = vunpack.c.h.b16 %v10342
        %v10520 = vunpack.c.l.b16 %v10343
        %v10521 = vunpack.c.h.b16 %v10343
        %v10522 = vunpack.c.l.b16 %v10344
        %v10523 = vunpack.c.h.b16 %v10344
        %v10524 = vunpack.c.l.b16 %v10345
        %v10525 = vunpack.c.h.b16 %v10345
        %v10526 = vunpack.c.l.b16 %v10346
        %v10527 = vunpack.c.h.b16 %v10346
        %v10528 = vunpack.c.l.b16 %v10347
        %v10529 = vunpack.c.h.b16 %v10347
        %v10530 = vunpack.c.l.b16 %v10348
        %v10531 = vunpack.c.h.b16 %v10348
        %v10532 = vunpack.c.l.b16 %v10349
        %v10533 = vunpack.c.h.b16 %v10349
        %v10534 = vunpack.c.l.b16 %v10350
        %v10535 = vunpack.c.h.b16 %v10350
        %v10536 = vunpack.c.l.b16 %v10351
        %v10537 = vunpack.c.h.b16 %v10351
        %v10538 = vunpack.c.l.b16 %v10352
        %v10539 = vunpack.c.h.b16 %v10352
        %v10540 = vunpack.c.l.b16 %v10353
        %v10541 = vunpack.c.h.b16 %v10353
        %v10542 = vunpack.c.l.b16 %v10354
        %v10543 = vunpack.c.h.b16 %v10354
        %v10544 = vunpack.c.l.b16 %v10355
        %v10545 = vunpack.c.h.b16 %v10355
        %v10546 = vunpack.c.l.b16 %v10356
        %v10547 = vunpack.c.h.b16 %v10356
        %v10548 = vunpack.c.l.b16 %v10357
        %v10549 = vunpack.c.h.b16 %v10357
        %v10550 = vunpack.c.l.b16 %v10358
        %v10551 = vunpack.c.h.b16 %v10358
        %v10552 = vunpack.c.l.b16 %v10359
        %v10553 = vunpack.c.h.b16 %v10359
        %v10554 = vunpack.c.l.b16 %v10360
        %v10555 = vunpack.c.h.b16 %v10360
        %v10556 = vunpack.c.l.b16 %v10361
        %v10557 = vunpack.c.h.b16 %v10361
        %v10558 = vunpack.c.l.b16 %v10362
        %v10559 = vunpack.c.h.b16 %v10362
        %v10560 = vunpack.c.l.b16 %v10363
        %v10561 = vunpack.c.h.b16 %v10363
        %v10562 = vpack.c.b16 %v10436, %v10434
        %v10563 = vpack.c.b16 %v10437, %v10435
        %v10564 = vpack.c.b16 %v10440, %v10438
        %v10565 = vpack.c.b16 %v10441, %v10439
        %v10566 = vpack.c.b16 %v10444, %v10442
        %v10567 = vpack.c.b16 %v10445, %v10443
        %v10568 = vpack.c.b16 %v10448, %v10446
        %v10569 = vpack.c.b16 %v10449, %v10447
        %v10570 = vpack.c.b16 %v10452, %v10450
        %v10571 = vpack.c.b16 %v10453, %v10451
        %v10572 = vpack.c.b16 %v10456, %v10454
        %v10573 = vpack.c.b16 %v10457, %v10455
        %v10574 = vpack.c.b16 %v10460, %v10458
        %v10575 = vpack.c.b16 %v10461, %v10459
        %v10576 = vpack.c.b16 %v10464, %v10462
        %v10577 = vpack.c.b16 %v10465, %v10463
        %v10578 = vpack.c.b16 %v10468, %v10466
        %v10579 = vpack.c.b16 %v10469, %v10467
        %v10580 = vpack.c.b16 %v10472, %v10470
        %v10581 = vpack.c.b16 %v10473, %v10471
        %v10582 = vpack.c.b16 %v10476, %v10474
        %v10583 = vpack.c.b16 %v10477, %v10475
        %v10584 = vpack.c.b16 %v10480, %v10478
        %v10585 = vpack.c.b16 %v10481, %v10479
        %v10586 = vpack.c.b16 %v10484, %v10482
        %v10587 = vpack.c.b16 %v10485, %v10483
        %v10588 = vpack.c.b16 %v10488, %v10486
        %v10589 = vpack.c.b16 %v10489, %v10487
        %v10590 = vpack.c.b16 %v10492, %v10490
        %v10591 = vpack.c.b16 %v10493, %v10491
        %v10592 = vpack.c.b16 %v10496, %v10494
        %v10593 = vpack.c.b16 %v10497, %v10495
        %v10594 = vpack.c.b16 %v10500, %v10498
        %v10595 = vpack.c.b16 %v10501, %v10499
        %v10596 = vpack.c.b16 %v10504, %v10502
        %v10597 = vpack.c.b16 %v10505, %v10503
        %v10598 = vpack.c.b16 %v10508, %v10506
        %v10599 = vpack.c.b16 %v10509, %v10507
        %v10600 = vpack.c.b16 %v10512, %v10510
        %v10601 = vpack.c.b16 %v10513, %v10511
        %v10602 = vpack.c.b16 %v10516, %v10514
        %v10603 = vpack.c.b16 %v10517, %v10515
        %v10604 = vpack.c.b16 %v10520, %v10518
        %v10605 = vpack.c.b16 %v10521, %v10519
        %v10606 = vpack.c.b16 %v10524, %v10522
        %v10607 = vpack.c.b16 %v10525, %v10523
        %v10608 = vpack.c.b16 %v10528, %v10526
        %v10609 = vpack.c.b16 %v10529, %v10527
        %v10610 = vpack.c.b16 %v10532, %v10530
        %v10611 = vpack.c.b16 %v10533, %v10531
        %v10612 = vpack.c.b16 %v10536, %v10534
        %v10613 = vpack.c.b16 %v10537, %v10535
        %v10614 = vpack.c.b16 %v10540, %v10538
        %v10615 = vpack.c.b16 %v10541, %v10539
        %v10616 = vpack.c.b16 %v10544, %v10542
        %v10617 = vpack.c.b16 %v10545, %v10543
        %v10618 = vpack.c.b16 %v10548, %v10546
        %v10619 = vpack.c.b16 %v10549, %v10547
        %v10620 = vpack.c.b16 %v10552, %v10550
        %v10621 = vpack.c.b16 %v10553, %v10551
        %v10622 = vpack.c.b16 %v10556, %v10554
        %v10623 = vpack.c.b16 %v10557, %v10555
        %v10624 = vpack.c.b16 %v10560, %v10558
        %v10625 = vpack.c.b16 %v10561, %v10559
        %10690 = vmatpush.bf16.msra.mxu0 %v10576
        %10691 = vmatpush.bf16.msra.mxu0 %v10574
        %10692 = vmatpush.bf16.msra.mxu0 %v10572
        %10693 = vmatpush.bf16.msra.mxu0 %v10570
        %10694 = vmatpush.bf16.msra.mxu0 %v10568
        %10695 = vmatpush.bf16.msra.mxu0 %v10566
        %10696 = vmatpush.bf16.msra.mxu0 %v10564
        %10697 = vmatpush.bf16.msra.mxu0 %v10562
        %10698 = vmatmul.bf16.gmra.mxu0 %v10268
        %v10699 = vpop.f32.mrf.mxu0
        %v10700 = vadd.f32 %v10366, %v10699
        %v10701 = vpop.f32.mrf.mxu0
        %v10702 = vadd.f32 %v10366, %v10701
        %10703 = vmatmul.bf16.gmra.mxu0 %v10272
        %v10704 = vpop.f32.mrf.mxu0
        %v10705 = vadd.f32 %v10366, %v10704
        %v10706 = vpop.f32.mrf.mxu0
        %v10707 = vadd.f32 %v10366, %v10706
        %10708 = vmatmul.bf16.gmra.mxu0 %v10276
        %v10709 = vpop.f32.mrf.mxu0
        %v10710 = vadd.f32 %v10366, %v10709
        %v10711 = vpop.f32.mrf.mxu0
        %v10712 = vadd.f32 %v10366, %v10711
        %10713 = vmatmul.bf16.gmra.mxu0 %v10280
        %v10714 = vpop.f32.mrf.mxu0
        %v10715 = vadd.f32 %v10366, %v10714
        %v10716 = vpop.f32.mrf.mxu0
        %v10717 = vadd.f32 %v10366, %v10716
        %10718 = vmatmul.bf16.gmra.mxu0 %v10284
        %v10719 = vpop.f32.mrf.mxu0
        %v10720 = vadd.f32 %v10366, %v10719
        %v10721 = vpop.f32.mrf.mxu0
        %v10722 = vadd.f32 %v10366, %v10721
        %10723 = vmatmul.bf16.gmra.mxu0 %v10288
        %v10724 = vpop.f32.mrf.mxu0
        %v10725 = vadd.f32 %v10366, %v10724
        %v10726 = vpop.f32.mrf.mxu0
        %v10727 = vadd.f32 %v10366, %v10726
        %10728 = vmatmul.bf16.gmra.mxu0 %v10292
        %v10729 = vpop.f32.mrf.mxu0
        %v10730 = vadd.f32 %v10366, %v10729
        %v10731 = vpop.f32.mrf.mxu0
        %v10732 = vadd.f32 %v10366, %v10731
        %10733 = vmatmul.bf16.gmra.mxu0 %v10296
        %v10734 = vpop.f32.mrf.mxu0
        %v10735 = vadd.f32 %v10366, %v10734
        %v10736 = vpop.f32.mrf.mxu0
        %v10737 = vadd.f32 %v10366, %v10736
        %10738 = vdwg.mxu0
        %10739 = vmatpush.bf16.msra.mxu0 %v10592
        %10740 = vmatpush.bf16.msra.mxu0 %v10590
        %10741 = vmatpush.bf16.msra.mxu0 %v10588
        %10742 = vmatpush.bf16.msra.mxu0 %v10586
        %10743 = vmatpush.bf16.msra.mxu0 %v10584
        %10744 = vmatpush.bf16.msra.mxu0 %v10582
        %10745 = vmatpush.bf16.msra.mxu0 %v10580
        %10746 = vmatpush.bf16.msra.mxu0 %v10578
        %10747 = vmatmul.bf16.gmra.mxu0 %v10269
        %v10748 = vpop.f32.mrf.mxu0
        %v10749 = vadd.f32 %v10700, %v10748
        %v10750 = vpop.f32.mrf.mxu0
        %v10751 = vadd.f32 %v10702, %v10750
        %10752 = vmatmul.bf16.gmra.mxu0 %v10273
        %v10753 = vpop.f32.mrf.mxu0
        %v10754 = vadd.f32 %v10705, %v10753
        %v10755 = vpop.f32.mrf.mxu0
        %v10756 = vadd.f32 %v10707, %v10755
        %10757 = vmatmul.bf16.gmra.mxu0 %v10277
        %v10758 = vpop.f32.mrf.mxu0
        %v10759 = vadd.f32 %v10710, %v10758
        %v10760 = vpop.f32.mrf.mxu0
        %v10761 = vadd.f32 %v10712, %v10760
        %10762 = vmatmul.bf16.gmra.mxu0 %v10281
        %v10763 = vpop.f32.mrf.mxu0
        %v10764 = vadd.f32 %v10715, %v10763
        %v10765 = vpop.f32.mrf.mxu0
        %v10766 = vadd.f32 %v10717, %v10765
        %10767 = vmatmul.bf16.gmra.mxu0 %v10285
        %v10768 = vpop.f32.mrf.mxu0
        %v10769 = vadd.f32 %v10720, %v10768
        %v10770 = vpop.f32.mrf.mxu0
        %v10771 = vadd.f32 %v10722, %v10770
        %10772 = vmatmul.bf16.gmra.mxu0 %v10289
        %v10773 = vpop.f32.mrf.mxu0
        %v10774 = vadd.f32 %v10725, %v10773
        %v10775 = vpop.f32.mrf.mxu0
        %v10776 = vadd.f32 %v10727, %v10775
        %10777 = vmatmul.bf16.gmra.mxu0 %v10293
        %v10778 = vpop.f32.mrf.mxu0
        %v10779 = vadd.f32 %v10730, %v10778
        %v10780 = vpop.f32.mrf.mxu0
        %v10781 = vadd.f32 %v10732, %v10780
        %10782 = vmatmul.bf16.gmra.mxu0 %v10297
        %v10783 = vpop.f32.mrf.mxu0
        %v10784 = vadd.f32 %v10735, %v10783
        %v10785 = vpop.f32.mrf.mxu0
        %v10786 = vadd.f32 %v10737, %v10785
        %10787 = vdwg.mxu0
        %10788 = vmatpush.bf16.msra.mxu0 %v10608
        %10789 = vmatpush.bf16.msra.mxu0 %v10606
        %10790 = vmatpush.bf16.msra.mxu0 %v10604
        %10791 = vmatpush.bf16.msra.mxu0 %v10602
        %10792 = vmatpush.bf16.msra.mxu0 %v10600
        %10793 = vmatpush.bf16.msra.mxu0 %v10598
        %10794 = vmatpush.bf16.msra.mxu0 %v10596
        %10795 = vmatpush.bf16.msra.mxu0 %v10594
        %10796 = vmatmul.bf16.gmra.mxu0 %v10270
        %v10797 = vpop.f32.mrf.mxu0
        %v10798 = vadd.f32 %v10749, %v10797
        %v10799 = vpop.f32.mrf.mxu0
        %v10800 = vadd.f32 %v10751, %v10799
        %10801 = vmatmul.bf16.gmra.mxu0 %v10274
        %v10802 = vpop.f32.mrf.mxu0
        %v10803 = vadd.f32 %v10754, %v10802
        %v10804 = vpop.f32.mrf.mxu0
        %v10805 = vadd.f32 %v10756, %v10804
        %10806 = vmatmul.bf16.gmra.mxu0 %v10278
        %v10807 = vpop.f32.mrf.mxu0
        %v10808 = vadd.f32 %v10759, %v10807
        %v10809 = vpop.f32.mrf.mxu0
        %v10810 = vadd.f32 %v10761, %v10809
        %10811 = vmatmul.bf16.gmra.mxu0 %v10282
        %v10812 = vpop.f32.mrf.mxu0
        %v10813 = vadd.f32 %v10764, %v10812
        %v10814 = vpop.f32.mrf.mxu0
        %v10815 = vadd.f32 %v10766, %v10814
        %10816 = vmatmul.bf16.gmra.mxu0 %v10286
        %v10817 = vpop.f32.mrf.mxu0
        %v10818 = vadd.f32 %v10769, %v10817
        %v10819 = vpop.f32.mrf.mxu0
        %v10820 = vadd.f32 %v10771, %v10819
        %10821 = vmatmul.bf16.gmra.mxu0 %v10290
        %v10822 = vpop.f32.mrf.mxu0
        %v10823 = vadd.f32 %v10774, %v10822
        %v10824 = vpop.f32.mrf.mxu0
        %v10825 = vadd.f32 %v10776, %v10824
        %10826 = vmatmul.bf16.gmra.mxu0 %v10294
        %v10827 = vpop.f32.mrf.mxu0
        %v10828 = vadd.f32 %v10779, %v10827
        %v10829 = vpop.f32.mrf.mxu0
        %v10830 = vadd.f32 %v10781, %v10829
        %10831 = vmatmul.bf16.gmra.mxu0 %v10298
        %v10832 = vpop.f32.mrf.mxu0
        %v10833 = vadd.f32 %v10784, %v10832
        %v10834 = vpop.f32.mrf.mxu0
        %v10835 = vadd.f32 %v10786, %v10834
        %10836 = vdwg.mxu0
        %10837 = vmatpush.bf16.msra.mxu0 %v10624
        %10838 = vmatpush.bf16.msra.mxu0 %v10622
        %10839 = vmatpush.bf16.msra.mxu0 %v10620
        %10840 = vmatpush.bf16.msra.mxu0 %v10618
        %10841 = vmatpush.bf16.msra.mxu0 %v10616
        %10842 = vmatpush.bf16.msra.mxu0 %v10614
        %10843 = vmatpush.bf16.msra.mxu0 %v10612
        %10844 = vmatpush.bf16.msra.mxu0 %v10610
        %10845 = vmatmul.bf16.gmra.mxu0 %v10271
        %v10846 = vpop.f32.mrf.mxu0
        %v10847 = vadd.f32 %v10798, %v10846
        %v10848 = vpop.f32.mrf.mxu0
        %v10849 = vadd.f32 %v10800, %v10848
        %10850 = vmatmul.bf16.gmra.mxu0 %v10275
        %v10851 = vpop.f32.mrf.mxu0
        %v10852 = vadd.f32 %v10803, %v10851
        %v10853 = vpop.f32.mrf.mxu0
        %v10854 = vadd.f32 %v10805, %v10853
        %10855 = vmatmul.bf16.gmra.mxu0 %v10279
        %v10856 = vpop.f32.mrf.mxu0
        %v10857 = vadd.f32 %v10808, %v10856
        %v10858 = vpop.f32.mrf.mxu0
        %v10859 = vadd.f32 %v10810, %v10858
        %10860 = vmatmul.bf16.gmra.mxu0 %v10283
        %v10861 = vpop.f32.mrf.mxu0
        %v10862 = vadd.f32 %v10813, %v10861
        %v10863 = vpop.f32.mrf.mxu0
        %v10864 = vadd.f32 %v10815, %v10863
        %10865 = vmatmul.bf16.gmra.mxu0 %v10287
        %v10866 = vpop.f32.mrf.mxu0
        %v10867 = vadd.f32 %v10818, %v10866
        %v10868 = vpop.f32.mrf.mxu0
        %v10869 = vadd.f32 %v10820, %v10868
        %10870 = vmatmul.bf16.gmra.mxu0 %v10291
        %v10871 = vpop.f32.mrf.mxu0
        %v10872 = vadd.f32 %v10823, %v10871
        %v10873 = vpop.f32.mrf.mxu0
        %v10874 = vadd.f32 %v10825, %v10873
        %10875 = vmatmul.bf16.gmra.mxu0 %v10295
        %v10876 = vpop.f32.mrf.mxu0
        %v10877 = vadd.f32 %v10828, %v10876
        %v10878 = vpop.f32.mrf.mxu0
        %v10879 = vadd.f32 %v10830, %v10878
        %10880 = vmatmul.bf16.gmra.mxu0 %v10299
        %v10881 = vpop.f32.mrf.mxu0
        %v10882 = vadd.f32 %v10833, %v10881
        %v10883 = vpop.f32.mrf.mxu0
        %v10884 = vadd.f32 %v10835, %v10883
        %10885 = vdwg.mxu0
        %10886 = vmatpush.bf16.msra.mxu0 %v10577
        %10887 = vmatpush.bf16.msra.mxu0 %v10575
        %10888 = vmatpush.bf16.msra.mxu0 %v10573
        %10889 = vmatpush.bf16.msra.mxu0 %v10571
        %10890 = vmatpush.bf16.msra.mxu0 %v10569
        %10891 = vmatpush.bf16.msra.mxu0 %v10567
        %10892 = vmatpush.bf16.msra.mxu0 %v10565
        %10893 = vmatpush.bf16.msra.mxu0 %v10563
        %10894 = vmatmul.bf16.gmra.mxu0 %v10268
        %v10895 = vpop.f32.mrf.mxu0
        %v10896 = vadd.f32 %v10367, %v10895
        %v10897 = vpop.f32.mrf.mxu0
        %v10898 = vadd.f32 %v10367, %v10897
        %10899 = vmatmul.bf16.gmra.mxu0 %v10272
        %v10900 = vpop.f32.mrf.mxu0
        %v10901 = vadd.f32 %v10367, %v10900
        %v10902 = vpop.f32.mrf.mxu0
        %v10903 = vadd.f32 %v10367, %v10902
        %10904 = vmatmul.bf16.gmra.mxu0 %v10276
        %v10905 = vpop.f32.mrf.mxu0
        %v10906 = vadd.f32 %v10367, %v10905
        %v10907 = vpop.f32.mrf.mxu0
        %v10908 = vadd.f32 %v10367, %v10907
        %10909 = vmatmul.bf16.gmra.mxu0 %v10280
        %v10910 = vpop.f32.mrf.mxu0
        %v10911 = vadd.f32 %v10367, %v10910
        %v10912 = vpop.f32.mrf.mxu0
        %v10913 = vadd.f32 %v10367, %v10912
        %10914 = vmatmul.bf16.gmra.mxu0 %v10284
        %v10915 = vpop.f32.mrf.mxu0
        %v10916 = vadd.f32 %v10367, %v10915
        %v10917 = vpop.f32.mrf.mxu0
        %v10918 = vadd.f32 %v10367, %v10917
        %10919 = vmatmul.bf16.gmra.mxu0 %v10288
        %v10920 = vpop.f32.mrf.mxu0
        %v10921 = vadd.f32 %v10367, %v10920
        %v10922 = vpop.f32.mrf.mxu0
        %v10923 = vadd.f32 %v10367, %v10922
        %10924 = vmatmul.bf16.gmra.mxu0 %v10292
        %v10925 = vpop.f32.mrf.mxu0
        %v10926 = vadd.f32 %v10367, %v10925
        %v10927 = vpop.f32.mrf.mxu0
        %v10928 = vadd.f32 %v10367, %v10927
        %10929 = vmatmul.bf16.gmra.mxu0 %v10296
        %v10930 = vpop.f32.mrf.mxu0
        %v10931 = vadd.f32 %v10367, %v10930
        %v10932 = vpop.f32.mrf.mxu0
        %v10933 = vadd.f32 %v10367, %v10932
        %10934 = vdwg.mxu0
        %10935 = vmatpush.bf16.msra.mxu0 %v10593
        %10936 = vmatpush.bf16.msra.mxu0 %v10591
        %10937 = vmatpush.bf16.msra.mxu0 %v10589
        %10938 = vmatpush.bf16.msra.mxu0 %v10587
        %10939 = vmatpush.bf16.msra.mxu0 %v10585
        %10940 = vmatpush.bf16.msra.mxu0 %v10583
        %10941 = vmatpush.bf16.msra.mxu0 %v10581
        %10942 = vmatpush.bf16.msra.mxu0 %v10579
        %10943 = vmatmul.bf16.gmra.mxu0 %v10269
        %v10944 = vpop.f32.mrf.mxu0
        %v10945 = vadd.f32 %v10896, %v10944
        %v10946 = vpop.f32.mrf.mxu0
        %v10947 = vadd.f32 %v10898, %v10946
        %10948 = vmatmul.bf16.gmra.mxu0 %v10273
        %v10949 = vpop.f32.mrf.mxu0
        %v10950 = vadd.f32 %v10901, %v10949
        %v10951 = vpop.f32.mrf.mxu0
        %v10952 = vadd.f32 %v10903, %v10951
        %10953 = vmatmul.bf16.gmra.mxu0 %v10277
        %v10954 = vpop.f32.mrf.mxu0
        %v10955 = vadd.f32 %v10906, %v10954
        %v10956 = vpop.f32.mrf.mxu0
        %v10957 = vadd.f32 %v10908, %v10956
        %10958 = vmatmul.bf16.gmra.mxu0 %v10281
        %v10959 = vpop.f32.mrf.mxu0
        %v10960 = vadd.f32 %v10911, %v10959
        %v10961 = vpop.f32.mrf.mxu0
        %v10962 = vadd.f32 %v10913, %v10961
        %10963 = vmatmul.bf16.gmra.mxu0 %v10285
        %v10964 = vpop.f32.mrf.mxu0
        %v10965 = vadd.f32 %v10916, %v10964
        %v10966 = vpop.f32.mrf.mxu0
        %v10967 = vadd.f32 %v10918, %v10966
        %10968 = vmatmul.bf16.gmra.mxu0 %v10289
        %v10969 = vpop.f32.mrf.mxu0
        %v10970 = vadd.f32 %v10921, %v10969
        %v10971 = vpop.f32.mrf.mxu0
        %v10972 = vadd.f32 %v10923, %v10971
        %10973 = vmatmul.bf16.gmra.mxu0 %v10293
        %v10974 = vpop.f32.mrf.mxu0
        %v10975 = vadd.f32 %v10926, %v10974
        %v10976 = vpop.f32.mrf.mxu0
        %v10977 = vadd.f32 %v10928, %v10976
        %10978 = vmatmul.bf16.gmra.mxu0 %v10297
        %v10979 = vpop.f32.mrf.mxu0
        %v10980 = vadd.f32 %v10931, %v10979
        %v10981 = vpop.f32.mrf.mxu0
        %v10982 = vadd.f32 %v10933, %v10981
        %10983 = vdwg.mxu0
        %10984 = vmatpush.bf16.msra.mxu0 %v10609
        %10985 = vmatpush.bf16.msra.mxu0 %v10607
        %10986 = vmatpush.bf16.msra.mxu0 %v10605
        %10987 = vmatpush.bf16.msra.mxu0 %v10603
        %10988 = vmatpush.bf16.msra.mxu0 %v10601
        %10989 = vmatpush.bf16.msra.mxu0 %v10599
        %10990 = vmatpush.bf16.msra.mxu0 %v10597
        %10991 = vmatpush.bf16.msra.mxu0 %v10595
        %10992 = vmatmul.bf16.gmra.mxu0 %v10270
        %v10993 = vpop.f32.mrf.mxu0
        %v10994 = vadd.f32 %v10945, %v10993
        %v10995 = vpop.f32.mrf.mxu0
        %v10996 = vadd.f32 %v10947, %v10995
        %10997 = vmatmul.bf16.gmra.mxu0 %v10274
        %v10998 = vpop.f32.mrf.mxu0
        %v10999 = vadd.f32 %v10950, %v10998
        %v11000 = vpop.f32.mrf.mxu0
        %v11001 = vadd.f32 %v10952, %v11000
        %11002 = vmatmul.bf16.gmra.mxu0 %v10278
        %v11003 = vpop.f32.mrf.mxu0
        %v11004 = vadd.f32 %v10955, %v11003
        %v11005 = vpop.f32.mrf.mxu0
        %v11006 = vadd.f32 %v10957, %v11005
        %11007 = vmatmul.bf16.gmra.mxu0 %v10282
        %v11008 = vpop.f32.mrf.mxu0
        %v11009 = vadd.f32 %v10960, %v11008
        %v11010 = vpop.f32.mrf.mxu0
        %v11011 = vadd.f32 %v10962, %v11010
        %11012 = vmatmul.bf16.gmra.mxu0 %v10286
        %v11013 = vpop.f32.mrf.mxu0
        %v11014 = vadd.f32 %v10965, %v11013
        %v11015 = vpop.f32.mrf.mxu0
        %v11016 = vadd.f32 %v10967, %v11015
        %11017 = vmatmul.bf16.gmra.mxu0 %v10290
        %v11018 = vpop.f32.mrf.mxu0
        %v11019 = vadd.f32 %v10970, %v11018
        %v11020 = vpop.f32.mrf.mxu0
        %v11021 = vadd.f32 %v10972, %v11020
        %11022 = vmatmul.bf16.gmra.mxu0 %v10294
        %v11023 = vpop.f32.mrf.mxu0
        %v11024 = vadd.f32 %v10975, %v11023
        %v11025 = vpop.f32.mrf.mxu0
        %v11026 = vadd.f32 %v10977, %v11025
        %11027 = vmatmul.bf16.gmra.mxu0 %v10298
        %v11028 = vpop.f32.mrf.mxu0
        %v11029 = vadd.f32 %v10980, %v11028
        %v11030 = vpop.f32.mrf.mxu0
        %v11031 = vadd.f32 %v10982, %v11030
        %11032 = vdwg.mxu0
        %11033 = vmatpush.bf16.msra.mxu0 %v10625
        %11034 = vmatpush.bf16.msra.mxu0 %v10623
        %11035 = vmatpush.bf16.msra.mxu0 %v10621
        %11036 = vmatpush.bf16.msra.mxu0 %v10619
        %11037 = vmatpush.bf16.msra.mxu0 %v10617
        %11038 = vmatpush.bf16.msra.mxu0 %v10615
        %11039 = vmatpush.bf16.msra.mxu0 %v10613
        %11040 = vmatpush.bf16.msra.mxu0 %v10611
        %11041 = vmatmul.bf16.gmra.mxu0 %v10271
        %v11042 = vpop.f32.mrf.mxu0
        %v11043 = vadd.f32 %v10994, %v11042
        %v11044 = vpop.f32.mrf.mxu0
        %v11045 = vadd.f32 %v10996, %v11044
        %11046 = vmatmul.bf16.gmra.mxu0 %v10275
        %v11047 = vpop.f32.mrf.mxu0
        %v11048 = vadd.f32 %v10999, %v11047
        %v11049 = vpop.f32.mrf.mxu0
        %v11050 = vadd.f32 %v11001, %v11049
        %11051 = vmatmul.bf16.gmra.mxu0 %v10279
        %v11052 = vpop.f32.mrf.mxu0
        %v11053 = vadd.f32 %v11004, %v11052
        %v11054 = vpop.f32.mrf.mxu0
        %v11055 = vadd.f32 %v11006, %v11054
        %11056 = vmatmul.bf16.gmra.mxu0 %v10283
        %v11057 = vpop.f32.mrf.mxu0
        %v11058 = vadd.f32 %v11009, %v11057
        %v11059 = vpop.f32.mrf.mxu0
        %v11060 = vadd.f32 %v11011, %v11059
        %11061 = vmatmul.bf16.gmra.mxu0 %v10287
        %v11062 = vpop.f32.mrf.mxu0
        %v11063 = vadd.f32 %v11014, %v11062
        %v11064 = vpop.f32.mrf.mxu0
        %v11065 = vadd.f32 %v11016, %v11064
        %11066 = vmatmul.bf16.gmra.mxu0 %v10291
        %v11067 = vpop.f32.mrf.mxu0
        %v11068 = vadd.f32 %v11019, %v11067
        %v11069 = vpop.f32.mrf.mxu0
        %v11070 = vadd.f32 %v11021, %v11069
        %11071 = vmatmul.bf16.gmra.mxu0 %v10295
        %v11072 = vpop.f32.mrf.mxu0
        %v11073 = vadd.f32 %v11024, %v11072
        %v11074 = vpop.f32.mrf.mxu0
        %v11075 = vadd.f32 %v11026, %v11074
        %11076 = vmatmul.bf16.gmra.mxu0 %v10299
        %v11077 = vpop.f32.mrf.mxu0
        %v11078 = vadd.f32 %v11029, %v11077
        %v11079 = vpop.f32.mrf.mxu0
        %v11080 = vadd.f32 %v11031, %v11079
        %11081 = vdwg.mxu0
        %v11082 = vmax.f32 %v10847, 0.0
        %v11083 = vmax.f32 %v11043, 0.0
        %v11084 = vmax.f32 %v10849, 0.0
        %v11085 = vmax.f32 %v11045, 0.0
        %v11086 = vmax.f32 %v10852, 0.0
        %v11087 = vmax.f32 %v11048, 0.0
        %v11088 = vmax.f32 %v10854, 0.0
        %v11089 = vmax.f32 %v11050, 0.0
        %v11090 = vmax.f32 %v10857, 0.0
        %v11091 = vmax.f32 %v11053, 0.0
        %v11092 = vmax.f32 %v10859, 0.0
        %v11093 = vmax.f32 %v11055, 0.0
        %v11094 = vmax.f32 %v10862, 0.0
        %v11095 = vmax.f32 %v11058, 0.0
        %v11096 = vmax.f32 %v10864, 0.0
        %v11097 = vmax.f32 %v11060, 0.0
        %v11098 = vmax.f32 %v10867, 0.0
        %v11099 = vmax.f32 %v11063, 0.0
        %v11100 = vmax.f32 %v10869, 0.0
        %v11101 = vmax.f32 %v11065, 0.0
        %v11102 = vmax.f32 %v10872, 0.0
        %v11103 = vmax.f32 %v11068, 0.0
        %v11104 = vmax.f32 %v10874, 0.0
        %v11105 = vmax.f32 %v11070, 0.0
        %v11106 = vmax.f32 %v10877, 0.0
        %v11107 = vmax.f32 %v11073, 0.0
        %v11108 = vmax.f32 %v10879, 0.0
        %v11109 = vmax.f32 %v11075, 0.0
        %v11110 = vmax.f32 %v10882, 0.0
        %v11111 = vmax.f32 %v11078, 0.0
        %v11112 = vmax.f32 %v10884, 0.0
        %v11113 = vmax.f32 %v11080, 0.0
        %v11114 = vpack.c.bf16 %v11084, %v11082
        %v11115 = vpack.c.bf16 %v11085, %v11083
        %v11116 = vpack.c.bf16 %v11088, %v11086
        %v11117 = vpack.c.bf16 %v11089, %v11087
        %v11118 = vpack.c.bf16 %v11092, %v11090
        %v11119 = vpack.c.bf16 %v11093, %v11091
        %v11120 = vpack.c.bf16 %v11096, %v11094
        %v11121 = vpack.c.bf16 %v11097, %v11095
        %v11122 = vpack.c.bf16 %v11100, %v11098
        %v11123 = vpack.c.bf16 %v11101, %v11099
        %v11124 = vpack.c.bf16 %v11104, %v11102
        %v11125 = vpack.c.bf16 %v11105, %v11103
        %v11126 = vpack.c.bf16 %v11108, %v11106
        %v11127 = vpack.c.bf16 %v11109, %v11107
        %v11128 = vpack.c.bf16 %v11112, %v11110
        %v11129 = vpack.c.bf16 %v11113, %v11111
        %v11130 = vld [vmem:[#allocation14] sm:$0xf]
        %v11131 = vld [vmem:[#allocation14 + $0x4] sm:$0xf]
        %v11132 = vld [vmem:[#allocation14 + $0x8] sm:$0xf]
        %v11133 = vld [vmem:[#allocation14 + $0xc] sm:$0xf]
        %v11134 = vld [vmem:[#allocation14 + $0x10] sm:$0xf]
        %v11135 = vld [vmem:[#allocation14 + $0x14] sm:$0xf]
        %v11136 = vld [vmem:[#allocation14 + $0x18] sm:$0xf]
        %v11137 = vld [vmem:[#allocation14 + $0x1c] sm:$0xf]
        %v11138 = vld [vmem:[#allocation14 + $0x20] sm:$0xf]
        %v11139 = vld [vmem:[#allocation14 + $0x24] sm:$0xf]
        %v11140 = vld [vmem:[#allocation14 + $0x28] sm:$0xf]
        %v11141 = vld [vmem:[#allocation14 + $0x2c] sm:$0xf]
        %v11142 = vld [vmem:[#allocation14 + $0x30] sm:$0xf]
        %v11143 = vld [vmem:[#allocation14 + $0x34] sm:$0xf]
        %v11144 = vld [vmem:[#allocation14 + $0x38] sm:$0xf]
        %v11145 = vld [vmem:[#allocation14 + $0x3c] sm:$0xf]
        %v11146 = vld [vmem:[#allocation14 + $0x40] sm:$0xf]
        %v11147 = vld [vmem:[#allocation14 + $0x44] sm:$0xf]
        %v11148 = vld [vmem:[#allocation14 + $0x48] sm:$0xf]
        %v11149 = vld [vmem:[#allocation14 + $0x4c] sm:$0xf]
        %v11150 = vld [vmem:[#allocation14 + $0x50] sm:$0xf]
        %v11151 = vld [vmem:[#allocation14 + $0x54] sm:$0xf]
        %v11152 = vld [vmem:[#allocation14 + $0x58] sm:$0xf]
        %v11153 = vld [vmem:[#allocation14 + $0x5c] sm:$0xf]
        %v11154 = vld [vmem:[#allocation14 + $0x60] sm:$0xf]
        %v11155 = vld [vmem:[#allocation14 + $0x64] sm:$0xf]
        %v11156 = vld [vmem:[#allocation14 + $0x68] sm:$0xf]
        %v11157 = vld [vmem:[#allocation14 + $0x6c] sm:$0xf]
        %v11158 = vld [vmem:[#allocation14 + $0x70] sm:$0xf]
        %v11159 = vld [vmem:[#allocation14 + $0x74] sm:$0xf]
        %v11160 = vld [vmem:[#allocation14 + $0x78] sm:$0xf]
        %v11161 = vld [vmem:[#allocation14 + $0x7c] sm:$0xf]
        %v11162 = vld [vmem:[#allocation16] sm:$0x1]
        %v11164 = vperm.slane %v11162, 0
        %v11198 = vunpack.c.l.b16 %v11130
        %v11199 = vunpack.c.l.b16 %v11131
        %v11200 = vunpack.c.l.b16 %v11132
        %v11201 = vunpack.c.l.b16 %v11133
        %v11202 = vunpack.c.l.b16 %v11134
        %v11203 = vunpack.c.l.b16 %v11135
        %v11204 = vunpack.c.l.b16 %v11136
        %v11205 = vunpack.c.l.b16 %v11137
        %v11206 = vunpack.c.l.b16 %v11138
        %v11207 = vunpack.c.l.b16 %v11139
        %v11208 = vunpack.c.l.b16 %v11140
        %v11209 = vunpack.c.l.b16 %v11141
        %v11210 = vunpack.c.l.b16 %v11142
        %v11211 = vunpack.c.l.b16 %v11143
        %v11212 = vunpack.c.l.b16 %v11144
        %v11213 = vunpack.c.l.b16 %v11145
        %v11214 = vunpack.c.l.b16 %v11146
        %v11215 = vunpack.c.l.b16 %v11147
        %v11216 = vunpack.c.l.b16 %v11148
        %v11217 = vunpack.c.l.b16 %v11149
        %v11218 = vunpack.c.l.b16 %v11150
        %v11219 = vunpack.c.l.b16 %v11151
        %v11220 = vunpack.c.l.b16 %v11152
        %v11221 = vunpack.c.l.b16 %v11153
        %v11222 = vunpack.c.l.b16 %v11154
        %v11223 = vunpack.c.l.b16 %v11155
        %v11224 = vunpack.c.l.b16 %v11156
        %v11225 = vunpack.c.l.b16 %v11157
        %v11226 = vunpack.c.l.b16 %v11158
        %v11227 = vunpack.c.l.b16 %v11159
        %v11228 = vunpack.c.l.b16 %v11160
        %v11229 = vunpack.c.l.b16 %v11161
        %v11230 = vpack.c.b16 %v11199, %v11198
        %v11231 = vpack.c.b16 %v11201, %v11200
        %v11232 = vpack.c.b16 %v11203, %v11202
        %v11233 = vpack.c.b16 %v11205, %v11204
        %v11234 = vpack.c.b16 %v11207, %v11206
        %v11235 = vpack.c.b16 %v11209, %v11208
        %v11236 = vpack.c.b16 %v11211, %v11210
        %v11237 = vpack.c.b16 %v11213, %v11212
        %v11238 = vpack.c.b16 %v11215, %v11214
        %v11239 = vpack.c.b16 %v11217, %v11216
        %v11240 = vpack.c.b16 %v11219, %v11218
        %v11241 = vpack.c.b16 %v11221, %v11220
        %v11242 = vpack.c.b16 %v11223, %v11222
        %v11243 = vpack.c.b16 %v11225, %v11224
        %v11244 = vpack.c.b16 %v11227, %v11226
        %v11245 = vpack.c.b16 %v11229, %v11228
        %11262 = vmatpush.bf16.msra.mxu0 %v11237
        %11263 = vmatpush.bf16.msra.mxu0 %v11236
        %11264 = vmatpush.bf16.msra.mxu0 %v11235
        %11265 = vmatpush.bf16.msra.mxu0 %v11234
        %11266 = vmatpush.bf16.msra.mxu0 %v11233
        %11267 = vmatpush.bf16.msra.mxu0 %v11232
        %11268 = vmatpush.bf16.msra.mxu0 %v11231
        %11269 = vmatpush.bf16.msra.mxu0 %v11230
        %11270 = vmatmul.bf16.gmra.mxu0 %v11114
        %v11271 = vpop.f32.mrf.mxu0
        %v11272 = vadd.f32 %v11164, %v11271
        %v11273 = vpop.f32.mrf.mxu0
        %v11274 = vadd.f32 %v11164, %v11273
        %11275 = vmatmul.bf16.gmra.mxu0 %v11116
        %v11276 = vpop.f32.mrf.mxu0
        %v11277 = vadd.f32 %v11164, %v11276
        %v11278 = vpop.f32.mrf.mxu0
        %v11279 = vadd.f32 %v11164, %v11278
        %11280 = vmatmul.bf16.gmra.mxu0 %v11118
        %v11281 = vpop.f32.mrf.mxu0
        %v11282 = vadd.f32 %v11164, %v11281
        %v11283 = vpop.f32.mrf.mxu0
        %v11284 = vadd.f32 %v11164, %v11283
        %11285 = vmatmul.bf16.gmra.mxu0 %v11120
        %v11286 = vpop.f32.mrf.mxu0
        %v11287 = vadd.f32 %v11164, %v11286
        %v11288 = vpop.f32.mrf.mxu0
        %v11289 = vadd.f32 %v11164, %v11288
        %11290 = vmatmul.bf16.gmra.mxu0 %v11122
        %v11291 = vpop.f32.mrf.mxu0
        %v11292 = vadd.f32 %v11164, %v11291
        %v11293 = vpop.f32.mrf.mxu0
        %v11294 = vadd.f32 %v11164, %v11293
        %11295 = vmatmul.bf16.gmra.mxu0 %v11124
        %v11296 = vpop.f32.mrf.mxu0
        %v11297 = vadd.f32 %v11164, %v11296
        %v11298 = vpop.f32.mrf.mxu0
        %v11299 = vadd.f32 %v11164, %v11298
        %11300 = vmatmul.bf16.gmra.mxu0 %v11126
        %v11301 = vpop.f32.mrf.mxu0
        %v11302 = vadd.f32 %v11164, %v11301
        %v11303 = vpop.f32.mrf.mxu0
        %v11304 = vadd.f32 %v11164, %v11303
        %11305 = vmatmul.bf16.gmra.mxu0 %v11128
        %v11306 = vpop.f32.mrf.mxu0
        %v11307 = vadd.f32 %v11164, %v11306
        %v11308 = vpop.f32.mrf.mxu0
        %v11309 = vadd.f32 %v11164, %v11308
        %11310 = vdwg.mxu0
        %11311 = vmatpush.bf16.msra.mxu0 %v11245
        %11312 = vmatpush.bf16.msra.mxu0 %v11244
        %11313 = vmatpush.bf16.msra.mxu0 %v11243
        %11314 = vmatpush.bf16.msra.mxu0 %v11242
        %11315 = vmatpush.bf16.msra.mxu0 %v11241
        %11316 = vmatpush.bf16.msra.mxu0 %v11240
        %11317 = vmatpush.bf16.msra.mxu0 %v11239
        %11318 = vmatpush.bf16.msra.mxu0 %v11238
        %11319 = vmatmul.bf16.gmra.mxu0 %v11115
        %v11320 = vpop.f32.mrf.mxu0
        %v11321 = vadd.f32 %v11272, %v11320
        %v11322 = vpop.f32.mrf.mxu0
        %v11323 = vadd.f32 %v11274, %v11322
        %11324 = vmatmul.bf16.gmra.mxu0 %v11117
        %v11325 = vpop.f32.mrf.mxu0
        %v11326 = vadd.f32 %v11277, %v11325
        %v11327 = vpop.f32.mrf.mxu0
        %v11328 = vadd.f32 %v11279, %v11327
        %11329 = vmatmul.bf16.gmra.mxu0 %v11119
        %v11330 = vpop.f32.mrf.mxu0
        %v11331 = vadd.f32 %v11282, %v11330
        %v11332 = vpop.f32.mrf.mxu0
        %v11333 = vadd.f32 %v11284, %v11332
        %11334 = vmatmul.bf16.gmra.mxu0 %v11121
        %v11335 = vpop.f32.mrf.mxu0
        %v11336 = vadd.f32 %v11287, %v11335
        %v11337 = vpop.f32.mrf.mxu0
        %v11338 = vadd.f32 %v11289, %v11337
        %11339 = vmatmul.bf16.gmra.mxu0 %v11123
        %v11340 = vpop.f32.mrf.mxu0
        %v11341 = vadd.f32 %v11292, %v11340
        %v11342 = vpop.f32.mrf.mxu0
        %v11343 = vadd.f32 %v11294, %v11342
        %11344 = vmatmul.bf16.gmra.mxu0 %v11125
        %v11345 = vpop.f32.mrf.mxu0
        %v11346 = vadd.f32 %v11297, %v11345
        %v11347 = vpop.f32.mrf.mxu0
        %v11348 = vadd.f32 %v11299, %v11347
        %11349 = vmatmul.bf16.gmra.mxu0 %v11127
        %v11350 = vpop.f32.mrf.mxu0
        %v11351 = vadd.f32 %v11302, %v11350
        %v11352 = vpop.f32.mrf.mxu0
        %v11353 = vadd.f32 %v11304, %v11352
        %11354 = vmatmul.bf16.gmra.mxu0 %v11129
        %v11355 = vpop.f32.mrf.mxu0
        %v11356 = vadd.f32 %v11307, %v11355
        %v11357 = vpop.f32.mrf.mxu0
        %v11358 = vadd.f32 %v11309, %v11357
        %11359 = vdwg.mxu0
        %11360 = vst [vmem:[%s477] sm:$0xff] %v11321
        %11361 = vst [vmem:[%s477 + $0x8] sm:$0xff] %v11323
        %11362 = vst [vmem:[%s477 + $0x10] sm:$0xff] %v11326
        %11363 = vst [vmem:[%s477 + $0x18] sm:$0xff] %v11328
        %11364 = vst [vmem:[%s477 + $0x20] sm:$0xff] %v11331
        %11365 = vst [vmem:[%s477 + $0x28] sm:$0xff] %v11333
        %11366 = vst [vmem:[%s477 + $0x30] sm:$0xff] %v11336
        %11367 = vst [vmem:[%s477 + $0x38] sm:$0xff] %v11338
        %11368 = vst [vmem:[%s477 + $0x40] sm:$0xff] %v11341
        %11369 = vst [vmem:[%s477 + $0x48] sm:$0xff] %v11343
        %11370 = vst [vmem:[%s477 + $0x50] sm:$0xff] %v11346
        %11371 = vst [vmem:[%s477 + $0x58] sm:$0xff] %v11348
        %11372 = vst [vmem:[%s477 + $0x60] sm:$0xff] %v11351
        %11373 = vst [vmem:[%s477 + $0x68] sm:$0xff] %v11353
        %11374 = vst [vmem:[%s477 + $0x70] sm:$0xff] %v11356
        %11375 = vst [vmem:[%s477 + $0x78] sm:$0xff] %v11358
        %s11376 = sand.u32 %s232, 1
        %s11377 = scalar_lea.sflag [#allocation4], %s11376
        %s11378 = sand.u32 %s232, 1
        %s11379 = smul.addr %s11378, 128
        %s11380 = scalar_lea.vmem [#allocation17], %s11379
        // Predicated region
        $region93: #{tpu_custom_call.1} parent=55 // pred_check
          %p11381 = pneg %p242
        $region94: #{tpu_custom_call.1} parent=55 // pred_check_branch
          %11383 = sbr.rel (%p11381) target = $region96
        $region95: #{tpu_custom_call.1} parent=55 // pred_region
          %s11384 = smul.u32 16, %s30
          %11386 = vsyncadd %s11377, 0
          %s11387 = smul.addr %s11384, 8
          %s11388 = scalar_lea.hbm %s9, %s11387
          %s11389 = sshll.u32 %s11380, 4
          %s11390 = int_to_ptr.vmem [resolvable:$true] %s11389
          %s11391 = sshll.u32 %s11388, 4
          %s11392 = int_to_ptr.hbm [resolvable:$true] %s11391
          %11397 = dma.vmem_to_hbm [thread:$0]  %s11390, 2048, %s11392, %s11377, 128, 128, 8
        $region96: #{tpu_custom_call.1} parent=55 // pred_fallthru
          _
      $region56: #{tpu_custom_call.1} parent=5 // pred_fallthru
        _
      %p11398 = scmp.le.s32.totalorder 2, %s25
      // Predicated region
      $region97: #{tpu_custom_call.1} parent=5 // pred_check
        %p11399 = pneg %p11398
      $region98: #{tpu_custom_call.1} parent=5 // pred_check_branch
        %11401 = sbr.rel (%p11399) target = $region100
      $region99: #{tpu_custom_call.1} parent=5 // pred_region
        %s11402 = ssub.s32 %s25, 2
        // Predicated region
        $region101: #{tpu_custom_call.1} parent=99 // pred_check
          %p11403 = pneg %p248
        $region102: #{tpu_custom_call.1} parent=99 // pred_check_branch
          %11405 = sbr.rel (%p11403) target = $region104
        $region103: #{tpu_custom_call.1} parent=99 // pred_region
          %s11406 = sand.u32 %s233, 1
          %s11407 = scalar_lea.sflag [#allocation4], %s11406
          %s11408 = sand.u32 %s233, 1
          %s11409 = smul.addr %s11408, 128
          %s11410 = scalar_lea.vmem [#allocation17], %s11409
          %11412 = dma.done %s11407, 2048
        $region104: #{tpu_custom_call.1} parent=99 // pred_fallthru
          _
      $region100: #{tpu_custom_call.1} parent=5 // pred_fallthru
        _
    $region6: #{tpu_custom_call.1} parent=1 // loop_footer
      %s29 = sadd.s32 1, %s25
    $region7: #{tpu_custom_call.1} parent=1 // loop_footer_branch
      %24 = sbr.rel target = $region3
    $region8: #{tpu_custom_call.1} parent=1 // loop_exit
      _
    %11413 = vsyncpa [#allocation3], 1
    %s11414 = scalar_lea.sflag [#allocation3], 1
    %11415 = vsyncpa %s11414, 1
    %11416 = vsyncpa [#allocation6], 1
    %11417 = vsyncpa [#allocation9], 1
    %11418 = vsyncpa [#allocation12], 1
    %11419 = vsyncpa [#allocation15], 1
    %11420 = vsyncpa [#allocation4], 1
    %s11421 = scalar_lea.sflag [#allocation4], 1
    %11422 = vsyncpa %s11421, 1

</llo_original>
